<compile_context>
chip_gen: v5e
topology: v5e:2x2
jax: 0.10.0
libtpu: 0.0.40
codegen_flags: <defaults>
</compile_context>

<pallas_src>
import functools

import jax
import jax.numpy as jnp
from jax.experimental import pallas as pl
from jax.experimental.pallas import tpu as pltpu


# ---------------------------------------------------------------------------
# Helpers
# ---------------------------------------------------------------------------

def _pick_tile(n, candidates):
    """Largest candidate tile that evenly divides n; else the full dim."""
    for c in candidates:
        if c <= n and n % c == 0:
            return c
    return n


# ---------------------------------------------------------------------------
# Fused MHA (+ residual + LayerNorm) kernel, online softmax over Nk tiles
# ---------------------------------------------------------------------------

def _mha_ln_kernel(*refs, num_heads, has_qpos, has_kpos, has_mask):
    it = iter(refs)
    q_ref = next(it)
    qpos_ref = next(it) if has_qpos else None
    kv_ref = next(it)
    kpos_ref = next(it) if has_kpos else None
    mask_ref = next(it) if has_mask else None
    wq_ref = next(it); bq_ref = next(it)
    wk_ref = next(it); bk_ref = next(it)
    wv_ref = next(it); bv_ref = next(it)
    wo_ref = next(it); bo_ref = next(it)
    g_ref = next(it); beta_ref = next(it)
    out_ref = next(it)
    q_sc = next(it); m_sc = next(it); l_sc = next(it); acc_sc = next(it)

    nk = pl.program_id(2)
    H = num_heads
    TQ, D = q_ref.shape
    TK = kv_ref.shape[0]
    hd = D // H
    scale = 1.0 / (float(hd) ** 0.5)

    # ---- init (once per (batch, q-tile)): project Q, zero accumulators ----
    @pl.when(nk == 0)
    def _init():
        q = q_ref[...].astype(jnp.float32)
        if has_qpos:
            q = q + qpos_ref[...].astype(jnp.float32)
        qp = jnp.dot(q.astype(jnp.bfloat16), wq_ref[...],
                     preferred_element_type=jnp.float32) + bq_ref[...]
        qp = qp * scale
        q_sc[...] = qp.reshape(TQ, H, hd).transpose(1, 0, 2).astype(jnp.bfloat16)
        m_sc[...] = jnp.full(m_sc.shape, -jnp.inf, m_sc.dtype)
        l_sc[...] = jnp.zeros(l_sc.shape, l_sc.dtype)
        acc_sc[...] = jnp.zeros(acc_sc.shape, acc_sc.dtype)

    # ---- per Nk tile: project K/V and online-softmax update ----
    kv = kv_ref[...].astype(jnp.float32)                       # (TK, D)
    k_in = kv + kpos_ref[...].astype(jnp.float32) if has_kpos else kv
    kp = jnp.dot(k_in.astype(jnp.bfloat16), wk_ref[...],
                 preferred_element_type=jnp.float32) + bk_ref[...]
    vp = jnp.dot(kv.astype(jnp.bfloat16), wv_ref[...],
                 preferred_element_type=jnp.float32) + bv_ref[...]
    kh = kp.reshape(TK, H, hd).transpose(1, 0, 2).astype(jnp.bfloat16)  # (H,TK,hd)
    vh = vp.reshape(TK, H, hd).transpose(1, 0, 2).astype(jnp.bfloat16)  # (H,TK,hd)

    s = jnp.einsum('hqd,hkd->hqk', q_sc[...], kh,
                   preferred_element_type=jnp.float32)          # (H, TQ, TK)
    if has_mask:
        s = s + mask_ref[...].astype(jnp.float32)[None, :, :]

    m_prev = m_sc[...]
    m_new = jnp.maximum(m_prev, jnp.max(s, axis=-1, keepdims=True))
    alpha = jnp.exp(m_prev - m_new)
    p = jnp.exp(s - m_new)
    l_sc[...] = alpha * l_sc[...] + jnp.sum(p, axis=-1, keepdims=True)
    acc_sc[...] = alpha * acc_sc[...] + jnp.einsum(
        'hqk,hkd->hqd', p.astype(jnp.bfloat16), vh,
        preferred_element_type=jnp.float32)
    m_sc[...] = m_new

    # ---- finalize: output projection + residual + LayerNorm ----
    @pl.when(nk == pl.num_programs(2) - 1)
    def _finalize():
        # TODO(synk): approx reciprocal changes the NaN edge case of fully
        # -inf-masked rows (PyTorch would also produce NaN there).
        inv_l = pl.reciprocal(l_sc[...], approx=True)
        ctx = (acc_sc[...] * inv_l).transpose(1, 0, 2).reshape(TQ, D)
        out = jnp.dot(ctx.astype(jnp.bfloat16), wo_ref[...],
                      preferred_element_type=jnp.float32) + bo_ref[...]
        out = out + q_ref[...].astype(jnp.float32)              # + query (residual)
        mu = jnp.mean(out, axis=-1, keepdims=True)
        var = jnp.mean((out - mu) ** 2, axis=-1, keepdims=True)
        y = (out - mu) * jax.lax.rsqrt(var + 1e-5)
        out_ref[...] = (y * g_ref[...] + beta_ref[...]).astype(out_ref.dtype)


def mha_ln(query, query_pos, kv, key_pos, attn_mask, attn_p, ln_p, num_heads):
    """Fused: MHA(query+qpos, kv+kpos, kv) + query, then LayerNorm."""
    B, Nq, D = query.shape
    Nk = kv.shape[1]
    H = num_heads
    hd = D // H
    has_qpos = query_pos is not None
    has_kpos = key_pos is not None
    has_mask = attn_mask is not None

    TQ = _pick_tile(Nq, (256, 128, 64, 32, 16, 8))
    if has_mask:
        # mask block's last dim must be a multiple of 128 (or the full Nk)
        TK = _pick_tile(Nk, (512, 256, 128))
    else:
        TK = _pick_tile(Nk, (512, 256, 128, 64, 32, 16, 8))

    grid = (B, Nq // TQ, Nk // TK)

    seq_q = pl.BlockSpec((None, TQ, D), lambda b, i, k: (b, i, 0))
    seq_k = pl.BlockSpec((None, TK, D), lambda b, i, k: (b, k, 0))
    w_spec = pl.BlockSpec((D, D), lambda b, i, k: (0, 0))
    v_spec = pl.BlockSpec((1, D), lambda b, i, k: (0, 0))

    inputs = [query]
    in_specs = [seq_q]
    if has_qpos:
        inputs.append(query_pos); in_specs.append(seq_q)
    inputs.append(kv); in_specs.append(seq_k)
    if has_kpos:
        inputs.append(key_pos); in_specs.append(seq_k)
    if has_mask:
        inputs.append(attn_mask)
        in_specs.append(pl.BlockSpec((None, TQ, TK), lambda b, i, k: (b, i, k)))
    inputs += [attn_p["wq"], attn_p["bq"], attn_p["wk"], attn_p["bk"],
               attn_p["wv"], attn_p["bv"], attn_p["wo"], attn_p["bo"],
               ln_p["gamma"], ln_p["beta"]]
    in_specs += [w_spec, v_spec, w_spec, v_spec, w_spec, v_spec,
                 w_spec, v_spec, v_spec, v_spec]

    kern = functools.partial(_mha_ln_kernel, num_heads=H, has_qpos=has_qpos,
                             has_kpos=has_kpos, has_mask=has_mask)

    return pl.pallas_call(
        kern,
        out_shape=jax.ShapeDtypeStruct((B, Nq, D), query.dtype),
        grid=grid,
        in_specs=in_specs,
        out_specs=pl.BlockSpec((None, TQ, D), lambda b, i, k: (b, i, 0)),
        scratch_shapes=[
            pltpu.VMEM((H, TQ, hd), jnp.bfloat16),   # scaled, projected Q
            pltpu.VMEM((H, TQ, 1), jnp.float32),     # running row max
            pltpu.VMEM((H, TQ, 1), jnp.float32),     # running denominator
            pltpu.VMEM((H, TQ, hd), jnp.float32),    # output accumulator
        ],
        compiler_params=pltpu.CompilerParams(
            dimension_semantics=("parallel", "parallel", "arbitrary")),
    )(*inputs)


# ---------------------------------------------------------------------------
# Fused FFN (+ residual + LayerNorm) kernel, row-tiled
# ---------------------------------------------------------------------------

def _ffn_ln_kernel(x_ref, w1_ref, b1_ref, w2_ref, b2_ref, g_ref, beta_ref,
                   out_ref):
    x = x_ref[...].astype(jnp.float32)                          # (TR, D)
    h = jnp.dot(x.astype(jnp.bfloat16), w1_ref[...],
                preferred_element_type=jnp.float32) + b1_ref[...]
    h = jnp.maximum(h, 0.0)
    y = jnp.dot(h.astype(jnp.bfloat16), w2_ref[...],
                preferred_element_type=jnp.float32) + b2_ref[...]
    y = y + x                                                    # residual
    mu = jnp.mean(y, axis=-1, keepdims=True)
    var = jnp.mean((y - mu) ** 2, axis=-1, keepdims=True)
    out = (y - mu) * jax.lax.rsqrt(var + 1e-5) * g_ref[...] + beta_ref[...]
    out_ref[...] = out.astype(out_ref.dtype)


def ffn_ln(x, ffn_p, ln_p):
    B, N, D = x.shape
    rows = B * N
    F_dim = ffn_p["w1"].shape[1]
    TR = _pick_tile(rows, (512, 256, 128, 64, 32, 16, 8))
    xf = x.reshape(rows, D)
    out = pl.pallas_call(
        _ffn_ln_kernel,
        out_shape=jax.ShapeDtypeStruct((rows, D), x.dtype),
        grid=(rows // TR,),
        in_specs=[
            pl.BlockSpec((TR, D), lambda r: (r, 0)),
            pl.BlockSpec((D, F_dim), lambda r: (0, 0)),
            pl.BlockSpec((1, F_dim), lambda r: (0, 0)),
            pl.BlockSpec((F_dim, D), lambda r: (0, 0)),
            pl.BlockSpec((1, D), lambda r: (0, 0)),
            pl.BlockSpec((1, D), lambda r: (0, 0)),
            pl.BlockSpec((1, D), lambda r: (0, 0)),
        ],
        out_specs=pl.BlockSpec((TR, D), lambda r: (r, 0)),
        compiler_params=pltpu.CompilerParams(
            dimension_semantics=("parallel",)),
    )(xf, ffn_p["w1"], ffn_p["b1"], ffn_p["w2"], ffn_p["b2"],
      ln_p["gamma"], ln_p["beta"])
    return out.reshape(B, N, D)


# ---------------------------------------------------------------------------
# Decoder layer / decoder (plain-JAX glue)
# ---------------------------------------------------------------------------

def decoder_layer(query, key, query_pos, key_pos, attn_mask, params, num_heads,
                  temp_memory=None, temp_pos=None):
    if temp_memory is not None:
        temp_key = jnp.concatenate([query, temp_memory], axis=1)
        t_pos = (None if query_pos is None
                 else jnp.concatenate([query_pos, temp_pos], axis=1))
    else:
        temp_key = query
        t_pos = query_pos

    # self-attention (key == value == temp_key) + residual + LN1
    x = mha_ln(query, query_pos, temp_key, t_pos, attn_mask,
               params["self_attn"], params["ln1"], num_heads)
    # cross-attention (key == value == key, attn_mask=None) + residual + LN2
    x = mha_ln(x, query_pos, key, key_pos, None,
               params["cross_attn"], params["ln2"], num_heads)
    # FFN + residual + LN3
    x = ffn_ln(x, params["ffn"], params["ln3"])
    return x


def petr_transformer_decoder(query, key, params, num_heads,
                             query_pos=None, key_pos=None, attn_mask=None,
                             temp_memory=None, temp_pos=None):
    outs = []
    for layer_params in params:
        query = decoder_layer(query, key, query_pos, key_pos, attn_mask,
                              layer_params, num_heads, temp_memory, temp_pos)
        outs.append(query)
    return jnp.stack(outs, axis=0)   # (num_layers, B, Nq, D)


# ---------------------------------------------------------------------------
# Deterministic parameter init (matmul weights stored bf16, rest f32)
# ---------------------------------------------------------------------------

def _init_attn(key, D):
    ks = jax.random.split(key, 8)
    s = 0.05
    bf, f = jnp.bfloat16, jnp.float32
    return dict(
        wq=(jax.random.normal(ks[0], (D, D), f) * s).astype(bf),
        bq=jax.random.normal(ks[1], (1, D), f) * s,
        wk=(jax.random.normal(ks[2], (D, D), f) * s).astype(bf),
        bk=jax.random.normal(ks[3], (1, D), f) * s,
        wv=(jax.random.normal(ks[4], (D, D), f) * s).astype(bf),
        bv=jax.random.normal(ks[5], (1, D), f) * s,
        wo=(jax.random.normal(ks[6], (D, D), f) * s).astype(bf),
        bo=jax.random.normal(ks[7], (1, D), f) * s,
    )


def _init_ln(D):
    return dict(gamma=jnp.ones((1, D), jnp.float32),
                beta=jnp.zeros((1, D), jnp.float32))


def _init_ffn(key, D, F):
    ks = jax.random.split(key, 4)
    s = 0.05
    bf, f = jnp.bfloat16, jnp.float32
    return dict(
        w1=(jax.random.normal(ks[0], (D, F), f) * s).astype(bf),
        b1=jax.random.normal(ks[1], (1, F), f) * s,
        w2=(jax.random.normal(ks[2], (F, D), f) * s).astype(bf),
        b2=jax.random.normal(ks[3], (1, D), f) * s,
    )


def init_decoder_params(key, num_layers, D, F):
    params = []
    for _ in range(num_layers):
        k0, k1, k2, key = jax.random.split(key, 4)
        params.append(dict(
            self_attn=_init_attn(k0, D),
            ln1=_init_ln(D),
            cross_attn=_init_attn(k1, D),
            ln2=_init_ln(D),
            ffn=_init_ffn(k2, D, F),
            ln3=_init_ln(D),
        ))
    return params


# ---------------------------------------------------------------------------
# Demo
# ---------------------------------------------------------------------------

if __name__ == "__main__":
    num_layers = 2
    embed_dims = 32
    num_heads = 4
    feedforward_dims = 64
    B, Nq, Nk = 2, 8, 16

    root = jax.random.PRNGKey(0)
    k_q, k_k, k_qp, k_kp, k_p = jax.random.split(root, 5)

    query = jax.random.normal(k_q, (B, Nq, embed_dims), jnp.float32)
    key_feat = jax.random.normal(k_k, (B, Nk, embed_dims), jnp.float32)
    query_pos = jax.random.normal(k_qp, (B, Nq, embed_dims), jnp.float32)
    key_pos = jax.random.normal(k_kp, (B, Nk, embed_dims), jnp.float32)

    params = init_decoder_params(k_p, num_layers, embed_dims, feedforward_dims)

    fwd = jax.jit(functools.partial(petr_transformer_decoder,
                                    num_heads=num_heads))
    out = fwd(query, key_feat, params, query_pos=query_pos, key_pos=key_pos)
    out = jax.block_until_ready(out)

    assert out.shape == (num_layers, B, Nq, embed_dims), out.shape
    assert bool(jnp.all(jnp.isfinite(out)))
    print("KERNEL_OK")
</pallas_src>

<mosaic_0001>
module attributes {stable_mosaic.version = 11 : i64} {
  func.func @_ffn_ln_kernel(%arg0: i32, %arg1: memref<16x32xf32, #tpu.memory_space<vmem>>, %arg2: memref<32x64xbf16, #tpu.memory_space<vmem>>, %arg3: memref<1x64xf32, #tpu.memory_space<vmem>>, %arg4: memref<64x32xbf16, #tpu.memory_space<vmem>>, %arg5: memref<1x32xf32, #tpu.memory_space<vmem>>, %arg6: memref<1x32xf32, #tpu.memory_space<vmem>>, %arg7: memref<1x32xf32, #tpu.memory_space<vmem>>, %arg8: memref<16x32xf32, #tpu.memory_space<vmem>>) attributes {dimension_semantics = [#tpu.dimension_semantics<parallel>], iteration_bounds = array<i64: 1>, scalar_prefetch = 0 : i64, scratch_operands = 0 : i64, tpu.core_type = #tpu.core_type<tc>, window_params = [{transform_indices = @transform_0, window_bounds = array<i64: 16, 32>}, {pipeline_mode = #tpu.pipeline_mode<synchronous>, transform_indices = @transform_1, window_bounds = array<i64: 32, 64>}, {pipeline_mode = #tpu.pipeline_mode<synchronous>, transform_indices = @transform_2, window_bounds = array<i64: 1, 64>}, {pipeline_mode = #tpu.pipeline_mode<synchronous>, transform_indices = @transform_3, window_bounds = array<i64: 64, 32>}, {pipeline_mode = #tpu.pipeline_mode<synchronous>, transform_indices = @transform_4, window_bounds = array<i64: 1, 32>}, {pipeline_mode = #tpu.pipeline_mode<synchronous>, transform_indices = @transform_5, window_bounds = array<i64: 1, 32>}, {pipeline_mode = #tpu.pipeline_mode<synchronous>, transform_indices = @transform_6, window_bounds = array<i64: 1, 32>}, {transform_indices = @transform_7, window_bounds = array<i64: 16, 32>}]} {
    %c0 = arith.constant 0 : index
    %c0_0 = arith.constant 0 : index
    %0 = vector.load %arg1[%c0, %c0_0] : memref<16x32xf32, #tpu.memory_space<vmem>>, vector<16x32xf32>
    %1 = arith.truncf %0 : vector<16x32xf32> to vector<16x32xbf16>
    %c0_1 = arith.constant 0 : index
    %c0_2 = arith.constant 0 : index
    %2 = vector.load %arg2[%c0_1, %c0_2] : memref<32x64xbf16, #tpu.memory_space<vmem>>, vector<32x64xbf16>
    %cst = arith.constant dense<0.000000e+00> : vector<16x64xf32>
    %3 = tpu.matmul %1, %2, %cst {dimension_numbers = #tpu.dot_dimension_numbers<[1], [0], [0], [1], [0, 0, 1, 1], [], []>} : vector<16x32xbf16>, vector<32x64xbf16>, vector<16x64xf32> -> vector<16x64xf32>
    %c0_3 = arith.constant 0 : index
    %c0_4 = arith.constant 0 : index
    %4 = vector.load %arg3[%c0_3, %c0_4] : memref<1x64xf32, #tpu.memory_space<vmem>>, vector<1x64xf32>
    %5 = vector.broadcast %4 : vector<1x64xf32> to vector<16x64xf32>
    %6 = arith.addf %3, %5 : vector<16x64xf32>
    %cst_5 = arith.constant 0.000000e+00 : f32
    %7 = vector.broadcast %cst_5 : f32 to vector<16x64xf32>
    %8 = arith.maximumf %6, %7 : vector<16x64xf32>
    %9 = arith.truncf %8 : vector<16x64xf32> to vector<16x64xbf16>
    %c0_6 = arith.constant 0 : index
    %c0_7 = arith.constant 0 : index
    %10 = vector.load %arg4[%c0_6, %c0_7] : memref<64x32xbf16, #tpu.memory_space<vmem>>, vector<64x32xbf16>
    %cst_8 = arith.constant dense<0.000000e+00> : vector<16x32xf32>
    %11 = tpu.matmul %9, %10, %cst_8 {dimension_numbers = #tpu.dot_dimension_numbers<[1], [0], [0], [1], [0, 0, 1, 1], [], []>} : vector<16x64xbf16>, vector<64x32xbf16>, vector<16x32xf32> -> vector<16x32xf32>
    %c0_9 = arith.constant 0 : index
    %c0_10 = arith.constant 0 : index
    %12 = vector.load %arg5[%c0_9, %c0_10] : memref<1x32xf32, #tpu.memory_space<vmem>>, vector<1x32xf32>
    %13 = vector.broadcast %12 : vector<1x32xf32> to vector<16x32xf32>
    %14 = arith.addf %11, %13 : vector<16x32xf32>
    %15 = arith.addf %14, %0 : vector<16x32xf32>
    %cst_11 = arith.constant dense<0.000000e+00> : vector<16xf32>
    %16 = vector.multi_reduction <add>, %15, %cst_11 [1] : vector<16x32xf32> to vector<16xf32>
    %17 = vector.shape_cast %16 : vector<16xf32> to vector<16x1xf32>
    %cst_12 = arith.constant 3.200000e+01 : f32
    %18 = vector.broadcast %cst_12 : f32 to vector<16x1xf32>
    %19 = arith.divf %17, %18 : vector<16x1xf32>
    %20 = vector.broadcast %19 : vector<16x1xf32> to vector<16x32xf32>
    %21 = arith.subf %15, %20 : vector<16x32xf32>
    %22 = arith.mulf %21, %21 : vector<16x32xf32>
    %cst_13 = arith.constant dense<0.000000e+00> : vector<16xf32>
    %23 = vector.multi_reduction <add>, %22, %cst_13 [1] : vector<16x32xf32> to vector<16xf32>
    %24 = vector.shape_cast %23 : vector<16xf32> to vector<16x1xf32>
    %cst_14 = arith.constant 3.200000e+01 : f32
    %25 = vector.broadcast %cst_14 : f32 to vector<16x1xf32>
    %26 = arith.divf %24, %25 : vector<16x1xf32>
    %27 = vector.broadcast %19 : vector<16x1xf32> to vector<16x32xf32>
    %28 = arith.subf %15, %27 : vector<16x32xf32>
    %cst_15 = arith.constant 9.99999974E-6 : f32
    %29 = vector.broadcast %cst_15 : f32 to vector<16x1xf32>
    %30 = arith.addf %26, %29 : vector<16x1xf32>
    %31 = math.rsqrt %30 : vector<16x1xf32>
    %32 = vector.broadcast %31 : vector<16x1xf32> to vector<16x32xf32>
    %33 = arith.mulf %28, %32 : vector<16x32xf32>
    %c0_16 = arith.constant 0 : index
    %c0_17 = arith.constant 0 : index
    %34 = vector.load %arg6[%c0_16, %c0_17] : memref<1x32xf32, #tpu.memory_space<vmem>>, vector<1x32xf32>
    %35 = vector.broadcast %34 : vector<1x32xf32> to vector<16x32xf32>
    %36 = arith.mulf %33, %35 : vector<16x32xf32>
    %c0_18 = arith.constant 0 : index
    %c0_19 = arith.constant 0 : index
    %37 = vector.load %arg7[%c0_18, %c0_19] : memref<1x32xf32, #tpu.memory_space<vmem>>, vector<1x32xf32>
    %38 = vector.broadcast %37 : vector<1x32xf32> to vector<16x32xf32>
    %39 = arith.addf %36, %38 : vector<16x32xf32>
    %c0_20 = arith.constant 0 : index
    %c0_21 = arith.constant 0 : index
    %40 = vector.load %arg8[%c0_20, %c0_21] : memref<16x32xf32, #tpu.memory_space<vmem>>, vector<16x32xf32>
    tpu.vector_store %arg8[%c0_20, %c0_21], %39 {strides = array<i32>} : memref<16x32xf32, #tpu.memory_space<vmem>>, vector<16x32xf32>,
    return
  }
  func.func @transform_0(%arg0: i32) -> (i32, i32) {
    %c0_i32 = arith.constant 0 : i32
    %c0_i32_0 = arith.constant 0 : i32
    return %arg0, %c0_i32 : i32, i32
  }
  func.func @transform_1(%arg0: i32) -> (i32, i32) {
    %c0_i32 = arith.constant 0 : i32
    %c0_i32_0 = arith.constant 0 : i32
    %c0_i32_1 = arith.constant 0 : i32
    return %c0_i32, %c0_i32_0 : i32, i32
  }
  func.func @transform_2(%arg0: i32) -> (i32, i32) {
    %c0_i32 = arith.constant 0 : i32
    %c0_i32_0 = arith.constant 0 : i32
    %c0_i32_1 = arith.constant 0 : i32
    return %c0_i32, %c0_i32_0 : i32, i32
  }
  func.func @transform_3(%arg0: i32) -> (i32, i32) {
    %c0_i32 = arith.constant 0 : i32
    %c0_i32_0 = arith.constant 0 : i32
    %c0_i32_1 = arith.constant 0 : i32
    return %c0_i32, %c0_i32_0 : i32, i32
  }
  func.func @transform_4(%arg0: i32) -> (i32, i32) {
    %c0_i32 = arith.constant 0 : i32
    %c0_i32_0 = arith.constant 0 : i32
    %c0_i32_1 = arith.constant 0 : i32
    return %c0_i32, %c0_i32_0 : i32, i32
  }
  func.func @transform_5(%arg0: i32) -> (i32, i32) {
    %c0_i32 = arith.constant 0 : i32
    %c0_i32_0 = arith.constant 0 : i32
    %c0_i32_1 = arith.constant 0 : i32
    return %c0_i32, %c0_i32_0 : i32, i32
  }
  func.func @transform_6(%arg0: i32) -> (i32, i32) {
    %c0_i32 = arith.constant 0 : i32
    %c0_i32_0 = arith.constant 0 : i32
    %c0_i32_1 = arith.constant 0 : i32
    return %c0_i32, %c0_i32_0 : i32, i32
  }
  func.func @transform_7(%arg0: i32) -> (i32, i32) {
    %c0_i32 = arith.constant 0 : i32
    %c0_i32_0 = arith.constant 0 : i32
    return %arg0, %c0_i32 : i32, i32
  }
}

module attributes {stable_mosaic.version = 11 : i64} {
  func.func @_mha_ln_kernel(%arg0: i32, %arg1: i32, %arg2: i32, %arg3: memref<1x8x32xf32, #tpu.memory_space<vmem>>, %arg4: memref<1x8x32xf32, #tpu.memory_space<vmem>>, %arg5: memref<1x8x32xf32, #tpu.memory_space<vmem>>, %arg6: memref<1x8x32xf32, #tpu.memory_space<vmem>>, %arg7: memref<32x32xbf16, #tpu.memory_space<vmem>>, %arg8: memref<1x32xf32, #tpu.memory_space<vmem>>, %arg9: memref<32x32xbf16, #tpu.memory_space<vmem>>, %arg10: memref<1x32xf32, #tpu.memory_space<vmem>>, %arg11: memref<32x32xbf16, #tpu.memory_space<vmem>>, %arg12: memref<1x32xf32, #tpu.memory_space<vmem>>, %arg13: memref<32x32xbf16, #tpu.memory_space<vmem>>, %arg14: memref<1x32xf32, #tpu.memory_space<vmem>>, %arg15: memref<1x32xf32, #tpu.memory_space<vmem>>, %arg16: memref<1x32xf32, #tpu.memory_space<vmem>>, %arg17: memref<1x8x32xf32, #tpu.memory_space<vmem>>, %arg18: memref<4x8x8xbf16, #tpu.memory_space<vmem>>, %arg19: memref<4x8x1xf32, #tpu.memory_space<vmem>>, %arg20: memref<4x8x1xf32, #tpu.memory_space<vmem>>, %arg21: memref<4x8x8xf32, #tpu.memory_space<vmem>>) attributes {dimension_semantics = [#tpu.dimension_semantics<parallel>, #tpu.dimension_semantics<parallel>, #tpu.dimension_semantics<arbitrary>], iteration_bounds = array<i64: 2, 1, 1>, scalar_prefetch = 0 : i64, scratch_operands = 4 : i64, tpu.core_type = #tpu.core_type<tc>, window_params = [{transform_indices = @transform_0, window_bounds = array<i64: 1, 8, 32>}, {transform_indices = @transform_1, window_bounds = array<i64: 1, 8, 32>}, {transform_indices = @transform_2, window_bounds = array<i64: 1, 8, 32>}, {transform_indices = @transform_3, window_bounds = array<i64: 1, 8, 32>}, {pipeline_mode = #tpu.pipeline_mode<synchronous>, transform_indices = @transform_4, window_bounds = array<i64: 32, 32>}, {pipeline_mode = #tpu.pipeline_mode<synchronous>, transform_indices = @transform_5, window_bounds = array<i64: 1, 32>}, {pipeline_mode = #tpu.pipeline_mode<synchronous>, transform_indices = @transform_6, window_bounds = array<i64: 32, 32>}, {pipeline_mode = #tpu.pipeline_mode<synchronous>, transform_indices = @transform_7, window_bounds = array<i64: 1, 32>}, {pipeline_mode = #tpu.pipeline_mode<synchronous>, transform_indices = @transform_8, window_bounds = array<i64: 32, 32>}, {pipeline_mode = #tpu.pipeline_mode<synchronous>, transform_indices = @transform_9, window_bounds = array<i64: 1, 32>}, {pipeline_mode = #tpu.pipeline_mode<synchronous>, transform_indices = @transform_10, window_bounds = array<i64: 32, 32>}, {pipeline_mode = #tpu.pipeline_mode<synchronous>, transform_indices = @transform_11, window_bounds = array<i64: 1, 32>}, {pipeline_mode = #tpu.pipeline_mode<synchronous>, transform_indices = @transform_12, window_bounds = array<i64: 1, 32>}, {pipeline_mode = #tpu.pipeline_mode<synchronous>, transform_indices = @transform_13, window_bounds = array<i64: 1, 32>}, {transform_indices = @transform_14, window_bounds = array<i64: 1, 8, 32>}]} {
    %c0_i32 = arith.constant 0 : i32
    %0 = arith.cmpi eq, %arg2, %c0_i32 : i32
    %1 = arith.extui %0 : i1 to i32
    %c0_i32_0 = arith.constant 0 : i32
    %2 = arith.cmpi ne, %1, %c0_i32_0 : i32
    scf.if %2 {
      %c0_42 = arith.constant 0 : index
      %c0_43 = arith.constant 0 : index
      %c0_44 = arith.constant 0 : index
      %54 = vector.load %arg3[%c0_42, %c0_43, %c0_44] : memref<1x8x32xf32, #tpu.memory_space<vmem>>, vector<1x8x32xf32>
      %55 = vector.shape_cast %54 : vector<1x8x32xf32> to vector<8x32xf32>
      %c0_45 = arith.constant 0 : index
      %c0_46 = arith.constant 0 : index
      %c0_47 = arith.constant 0 : index
      %56 = vector.load %arg4[%c0_45, %c0_46, %c0_47] : memref<1x8x32xf32, #tpu.memory_space<vmem>>, vector<1x8x32xf32>
      %57 = vector.shape_cast %56 : vector<1x8x32xf32> to vector<8x32xf32>
      %58 = arith.addf %55, %57 : vector<8x32xf32>
      %59 = arith.truncf %58 : vector<8x32xf32> to vector<8x32xbf16>
      %c0_48 = arith.constant 0 : index
      %c0_49 = arith.constant 0 : index
      %60 = vector.load %arg7[%c0_48, %c0_49] : memref<32x32xbf16, #tpu.memory_space<vmem>>, vector<32x32xbf16>
      %cst_50 = arith.constant dense<0.000000e+00> : vector<8x32xf32>
      %61 = tpu.matmul %59, %60, %cst_50 {dimension_numbers = #tpu.dot_dimension_numbers<[1], [0], [0], [1], [0, 0, 1, 1], [], []>} : vector<8x32xbf16>, vector<32x32xbf16>, vector<8x32xf32> -> vector<8x32xf32>
      %c0_51 = arith.constant 0 : index
      %c0_52 = arith.constant 0 : index
      %62 = vector.load %arg8[%c0_51, %c0_52] : memref<1x32xf32, #tpu.memory_space<vmem>>, vector<1x32xf32>
      %63 = vector.broadcast %62 : vector<1x32xf32> to vector<8x32xf32>
      %64 = arith.addf %61, %63 : vector<8x32xf32>
      %cst_53 = arith.constant 0.353553385 : f32
      %65 = vector.broadcast %cst_53 : f32 to vector<8x32xf32>
      %66 = arith.mulf %64, %65 : vector<8x32xf32>
      %67 = vector.shape_cast %66 : vector<8x32xf32> to vector<8x4x8xf32>
      %68 = tpu.transpose %67, [1, 0, 2] : vector<8x4x8xf32> -> vector<4x8x8xf32>
      %69 = arith.truncf %68 : vector<4x8x8xf32> to vector<4x8x8xbf16>
      %c0_54 = arith.constant 0 : index
      %c0_55 = arith.constant 0 : index
      %c0_56 = arith.constant 0 : index
      %70 = vector.load %arg18[%c0_54, %c0_55, %c0_56] : memref<4x8x8xbf16, #tpu.memory_space<vmem>>, vector<4x8x8xbf16>
      tpu.vector_store %arg18[%c0_54, %c0_55, %c0_56], %69 {strides = array<i32>} : memref<4x8x8xbf16, #tpu.memory_space<vmem>>, vector<4x8x8xbf16>,
      %cst_57 = arith.constant 0xFF800000 : f32
      %71 = vector.broadcast %cst_57 : f32 to vector<4x8x1xf32>
      %c0_58 = arith.constant 0 : index
      %c0_59 = arith.constant 0 : index
      %c0_60 = arith.constant 0 : index
      %72 = vector.load %arg19[%c0_58, %c0_59, %c0_60] : memref<4x8x1xf32, #tpu.memory_space<vmem>>, vector<4x8x1xf32>
      tpu.vector_store %arg19[%c0_58, %c0_59, %c0_60], %71 {strides = array<i32>} : memref<4x8x1xf32, #tpu.memory_space<vmem>>, vector<4x8x1xf32>,
      %cst_61 = arith.constant 0.000000e+00 : f32
      %73 = vector.broadcast %cst_61 : f32 to vector<4x8x1xf32>
      %c0_62 = arith.constant 0 : index
      %c0_63 = arith.constant 0 : index
      %c0_64 = arith.constant 0 : index
      %74 = vector.load %arg20[%c0_62, %c0_63, %c0_64] : memref<4x8x1xf32, #tpu.memory_space<vmem>>, vector<4x8x1xf32>
      tpu.vector_store %arg20[%c0_62, %c0_63, %c0_64], %73 {strides = array<i32>} : memref<4x8x1xf32, #tpu.memory_space<vmem>>, vector<4x8x1xf32>,
      %cst_65 = arith.constant 0.000000e+00 : f32
      %75 = vector.broadcast %cst_65 : f32 to vector<4x8x8xf32>
      %c0_66 = arith.constant 0 : index
      %c0_67 = arith.constant 0 : index
      %c0_68 = arith.constant 0 : index
      %76 = vector.load %arg21[%c0_66, %c0_67, %c0_68] : memref<4x8x8xf32, #tpu.memory_space<vmem>>, vector<4x8x8xf32>
      tpu.vector_store %arg21[%c0_66, %c0_67, %c0_68], %75 {strides = array<i32>} : memref<4x8x8xf32, #tpu.memory_space<vmem>>, vector<4x8x8xf32>,
    } else {
    }
    %c0 = arith.constant 0 : index
    %c0_1 = arith.constant 0 : index
    %c0_2 = arith.constant 0 : index
    %3 = vector.load %arg5[%c0, %c0_1, %c0_2] : memref<1x8x32xf32, #tpu.memory_space<vmem>>, vector<1x8x32xf32>
    %4 = vector.shape_cast %3 : vector<1x8x32xf32> to vector<8x32xf32>
    %c0_3 = arith.constant 0 : index
    %c0_4 = arith.constant 0 : index
    %c0_5 = arith.constant 0 : index
    %5 = vector.load %arg6[%c0_3, %c0_4, %c0_5] : memref<1x8x32xf32, #tpu.memory_space<vmem>>, vector<1x8x32xf32>
    %6 = vector.shape_cast %5 : vector<1x8x32xf32> to vector<8x32xf32>
    %7 = arith.addf %4, %6 : vector<8x32xf32>
    %8 = arith.truncf %7 : vector<8x32xf32> to vector<8x32xbf16>
    %c0_6 = arith.constant 0 : index
    %c0_7 = arith.constant 0 : index
    %9 = vector.load %arg9[%c0_6, %c0_7] : memref<32x32xbf16, #tpu.memory_space<vmem>>, vector<32x32xbf16>
    %cst = arith.constant dense<0.000000e+00> : vector<8x32xf32>
    %10 = tpu.matmul %8, %9, %cst {dimension_numbers = #tpu.dot_dimension_numbers<[1], [0], [0], [1], [0, 0, 1, 1], [], []>} : vector<8x32xbf16>, vector<32x32xbf16>, vector<8x32xf32> -> vector<8x32xf32>
    %c0_8 = arith.constant 0 : index
    %c0_9 = arith.constant 0 : index
    %11 = vector.load %arg10[%c0_8, %c0_9] : memref<1x32xf32, #tpu.memory_space<vmem>>, vector<1x32xf32>
    %12 = vector.broadcast %11 : vector<1x32xf32> to vector<8x32xf32>
    %13 = arith.addf %10, %12 : vector<8x32xf32>
    %14 = arith.truncf %4 : vector<8x32xf32> to vector<8x32xbf16>
    %c0_10 = arith.constant 0 : index
    %c0_11 = arith.constant 0 : index
    %15 = vector.load %arg11[%c0_10, %c0_11] : memref<32x32xbf16, #tpu.memory_space<vmem>>, vector<32x32xbf16>
    %cst_12 = arith.constant dense<0.000000e+00> : vector<8x32xf32>
    %16 = tpu.matmul %14, %15, %cst_12 {dimension_numbers = #tpu.dot_dimension_numbers<[1], [0], [0], [1], [0, 0, 1, 1], [], []>} : vector<8x32xbf16>, vector<32x32xbf16>, vector<8x32xf32> -> vector<8x32xf32>
    %c0_13 = arith.constant 0 : index
    %c0_14 = arith.constant 0 : index
    %17 = vector.load %arg12[%c0_13, %c0_14] : memref<1x32xf32, #tpu.memory_space<vmem>>, vector<1x32xf32>
    %18 = vector.broadcast %17 : vector<1x32xf32> to vector<8x32xf32>
    %19 = arith.addf %16, %18 : vector<8x32xf32>
    %20 = vector.shape_cast %13 : vector<8x32xf32> to vector<8x4x8xf32>
    %21 = tpu.transpose %20, [1, 0, 2] : vector<8x4x8xf32> -> vector<4x8x8xf32>
    %22 = arith.truncf %21 : vector<4x8x8xf32> to vector<4x8x8xbf16>
    %23 = vector.shape_cast %19 : vector<8x32xf32> to vector<8x4x8xf32>
    %24 = tpu.transpose %23, [1, 0, 2] : vector<8x4x8xf32> -> vector<4x8x8xf32>
    %25 = arith.truncf %24 : vector<4x8x8xf32> to vector<4x8x8xbf16>
    %c0_15 = arith.constant 0 : index
    %c0_16 = arith.constant 0 : index
    %c0_17 = arith.constant 0 : index
    %26 = vector.load %arg18[%c0_15, %c0_16, %c0_17] : memref<4x8x8xbf16, #tpu.memory_space<vmem>>, vector<4x8x8xbf16>
    "tpu.trace_start"() <{level = 10 : i32, message = "hqd,hkd->hqk"}> : () -> ()
    %cst_18 = arith.constant dense<0.000000e+00> : vector<4x8x8xf32>
    %27 = tpu.matmul %26, %22, %cst_18 {dimension_numbers = #tpu.dot_dimension_numbers<[2], [2], [1], [1], [0, 0, 0, 1, 1, 1], [0], [0]>} : vector<4x8x8xbf16>, vector<4x8x8xbf16>, vector<4x8x8xf32> -> vector<4x8x8xf32>
    "tpu.trace_stop"() : () -> ()
    %c0_19 = arith.constant 0 : index
    %c0_20 = arith.constant 0 : index
    %c0_21 = arith.constant 0 : index
    %28 = vector.load %arg19[%c0_19, %c0_20, %c0_21] : memref<4x8x1xf32, #tpu.memory_space<vmem>>, vector<4x8x1xf32>
    %cst_22 = arith.constant dense<0xFF800000> : vector<4x8xf32>
    %29 = vector.multi_reduction <maximumf>, %27, %cst_22 [2] : vector<4x8x8xf32> to vector<4x8xf32>
    %30 = vector.shape_cast %29 : vector<4x8xf32> to vector<4x8x1xf32>
    %31 = arith.maximumf %28, %30 : vector<4x8x1xf32>
    %32 = arith.subf %28, %31 : vector<4x8x1xf32>
    %33 = math.exp %32 : vector<4x8x1xf32>
    %34 = vector.broadcast %31 : vector<4x8x1xf32> to vector<4x8x8xf32>
    %35 = arith.subf %27, %34 : vector<4x8x8xf32>
    %36 = math.exp %35 : vector<4x8x8xf32>
    %c0_23 = arith.constant 0 : index
    %c0_24 = arith.constant 0 : index
    %c0_25 = arith.constant 0 : index
    %37 = vector.load %arg20[%c0_23, %c0_24, %c0_25] : memref<4x8x1xf32, #tpu.memory_space<vmem>>, vector<4x8x1xf32>
    %38 = arith.mulf %33, %37 : vector<4x8x1xf32>
    %cst_26 = arith.constant dense<0.000000e+00> : vector<4x8xf32>
    %39 = vector.multi_reduction <add>, %36, %cst_26 [2] : vector<4x8x8xf32> to vector<4x8xf32>
    %40 = vector.shape_cast %39 : vector<4x8xf32> to vector<4x8x1xf32>
    %41 = arith.addf %38, %40 : vector<4x8x1xf32>
    %c0_27 = arith.constant 0 : index
    %c0_28 = arith.constant 0 : index
    %c0_29 = arith.constant 0 : index
    %42 = vector.load %arg20[%c0_27, %c0_28, %c0_29] : memref<4x8x1xf32, #tpu.memory_space<vmem>>, vector<4x8x1xf32>
    tpu.vector_store %arg20[%c0_27, %c0_28, %c0_29], %41 {strides = array<i32>} : memref<4x8x1xf32, #tpu.memory_space<vmem>>, vector<4x8x1xf32>,
    %c0_30 = arith.constant 0 : index
    %c0_31 = arith.constant 0 : index
    %c0_32 = arith.constant 0 : index
    %43 = vector.load %arg21[%c0_30, %c0_31, %c0_32] : memref<4x8x8xf32, #tpu.memory_space<vmem>>, vector<4x8x8xf32>
    %44 = vector.broadcast %33 : vector<4x8x1xf32> to vector<4x8x8xf32>
    %45 = arith.mulf %44, %43 : vector<4x8x8xf32>
    %46 = arith.truncf %36 : vector<4x8x8xf32> to vector<4x8x8xbf16>
    "tpu.trace_start"() <{level = 10 : i32, message = "hqk,hkd->hqd"}> : () -> ()
    %cst_33 = arith.constant dense<0.000000e+00> : vector<4x8x8xf32>
    %47 = tpu.matmul %46, %25, %cst_33 {dimension_numbers = #tpu.dot_dimension_numbers<[2], [1], [1], [2], [0, 0, 0, 1, 1, 2], [0], [0]>} : vector<4x8x8xbf16>, vector<4x8x8xbf16>, vector<4x8x8xf32> -> vector<4x8x8xf32>
    "tpu.trace_stop"() : () -> ()
    %48 = arith.addf %45, %47 : vector<4x8x8xf32>
    %c0_34 = arith.constant 0 : index
    %c0_35 = arith.constant 0 : index
    %c0_36 = arith.constant 0 : index
    %49 = vector.load %arg21[%c0_34, %c0_35, %c0_36] : memref<4x8x8xf32, #tpu.memory_space<vmem>>, vector<4x8x8xf32>
    tpu.vector_store %arg21[%c0_34, %c0_35, %c0_36], %48 {strides = array<i32>} : memref<4x8x8xf32, #tpu.memory_space<vmem>>, vector<4x8x8xf32>,
    %c0_37 = arith.constant 0 : index
    %c0_38 = arith.constant 0 : index
    %c0_39 = arith.constant 0 : index
    %50 = vector.load %arg19[%c0_37, %c0_38, %c0_39] : memref<4x8x1xf32, #tpu.memory_space<vmem>>, vector<4x8x1xf32>
    tpu.vector_store %arg19[%c0_37, %c0_38, %c0_39], %31 {strides = array<i32>} : memref<4x8x1xf32, #tpu.memory_space<vmem>>, vector<4x8x1xf32>,
    %c0_i32_40 = arith.constant 0 : i32
    %51 = arith.cmpi eq, %arg2, %c0_i32_40 : i32
    %52 = arith.extui %51 : i1 to i32
    %c0_i32_41 = arith.constant 0 : i32
    %53 = arith.cmpi ne, %52, %c0_i32_41 : i32
    scf.if %53 {
      %c0_42 = arith.constant 0 : index
      %c0_43 = arith.constant 0 : index
      %c0_44 = arith.constant 0 : index
      %54 = vector.load %arg20[%c0_42, %c0_43, %c0_44] : memref<4x8x1xf32, #tpu.memory_space<vmem>>, vector<4x8x1xf32>
      %55 = tpu.reciprocal %54 {approx = true} : vector<4x8x1xf32> -> vector<4x8x1xf32>
      %c0_45 = arith.constant 0 : index
      %c0_46 = arith.constant 0 : index
      %c0_47 = arith.constant 0 : index
      %56 = vector.load %arg21[%c0_45, %c0_46, %c0_47] : memref<4x8x8xf32, #tpu.memory_space<vmem>>, vector<4x8x8xf32>
      %57 = vector.broadcast %55 : vector<4x8x1xf32> to vector<4x8x8xf32>
      %58 = arith.mulf %56, %57 : vector<4x8x8xf32>
      %59 = tpu.transpose %58, [1, 0, 2] : vector<4x8x8xf32> -> vector<8x4x8xf32>
      %60 = vector.shape_cast %59 : vector<8x4x8xf32> to vector<8x32xf32>
      %61 = arith.truncf %60 : vector<8x32xf32> to vector<8x32xbf16>
      %c0_48 = arith.constant 0 : index
      %c0_49 = arith.constant 0 : index
      %62 = vector.load %arg13[%c0_48, %c0_49] : memref<32x32xbf16, #tpu.memory_space<vmem>>, vector<32x32xbf16>
      %cst_50 = arith.constant dense<0.000000e+00> : vector<8x32xf32>
      %63 = tpu.matmul %61, %62, %cst_50 {dimension_numbers = #tpu.dot_dimension_numbers<[1], [0], [0], [1], [0, 0, 1, 1], [], []>} : vector<8x32xbf16>, vector<32x32xbf16>, vector<8x32xf32> -> vector<8x32xf32>
      %c0_51 = arith.constant 0 : index
      %c0_52 = arith.constant 0 : index
      %64 = vector.load %arg14[%c0_51, %c0_52] : memref<1x32xf32, #tpu.memory_space<vmem>>, vector<1x32xf32>
      %65 = vector.broadcast %64 : vector<1x32xf32> to vector<8x32xf32>
      %66 = arith.addf %63, %65 : vector<8x32xf32>
      %c0_53 = arith.constant 0 : index
      %c0_54 = arith.constant 0 : index
      %c0_55 = arith.constant 0 : index
      %67 = vector.load %arg3[%c0_53, %c0_54, %c0_55] : memref<1x8x32xf32, #tpu.memory_space<vmem>>, vector<1x8x32xf32>
      %68 = vector.shape_cast %67 : vector<1x8x32xf32> to vector<8x32xf32>
      %69 = arith.addf %66, %68 : vector<8x32xf32>
      %cst_56 = arith.constant dense<0.000000e+00> : vector<8xf32>
      %70 = vector.multi_reduction <add>, %69, %cst_56 [1] : vector<8x32xf32> to vector<8xf32>
      %71 = vector.shape_cast %70 : vector<8xf32> to vector<8x1xf32>
      %cst_57 = arith.constant 3.200000e+01 : f32
      %72 = vector.broadcast %cst_57 : f32 to vector<8x1xf32>
      %73 = arith.divf %71, %72 : vector<8x1xf32>
      %74 = vector.broadcast %73 : vector<8x1xf32> to vector<8x32xf32>
      %75 = arith.subf %69, %74 : vector<8x32xf32>
      %76 = arith.mulf %75, %75 : vector<8x32xf32>
      %cst_58 = arith.constant dense<0.000000e+00> : vector<8xf32>
      %77 = vector.multi_reduction <add>, %76, %cst_58 [1] : vector<8x32xf32> to vector<8xf32>
      %78 = vector.shape_cast %77 : vector<8xf32> to vector<8x1xf32>
      %cst_59 = arith.constant 3.200000e+01 : f32
      %79 = vector.broadcast %cst_59 : f32 to vector<8x1xf32>
      %80 = arith.divf %78, %79 : vector<8x1xf32>
      %81 = vector.broadcast %73 : vector<8x1xf32> to vector<8x32xf32>
      %82 = arith.subf %69, %81 : vector<8x32xf32>
      %cst_60 = arith.constant 9.99999974E-6 : f32
      %83 = vector.broadcast %cst_60 : f32 to vector<8x1xf32>
      %84 = arith.addf %80, %83 : vector<8x1xf32>
      %85 = math.rsqrt %84 : vector<8x1xf32>
      %86 = vector.broadcast %85 : vector<8x1xf32> to vector<8x32xf32>
      %87 = arith.mulf %82, %86 : vector<8x32xf32>
      %c0_61 = arith.constant 0 : index
      %c0_62 = arith.constant 0 : index
      %88 = vector.load %arg15[%c0_61, %c0_62] : memref<1x32xf32, #tpu.memory_space<vmem>>, vector<1x32xf32>
      %89 = vector.broadcast %88 : vector<1x32xf32> to vector<8x32xf32>
      %90 = arith.mulf %87, %89 : vector<8x32xf32>
      %c0_63 = arith.constant 0 : index
      %c0_64 = arith.constant 0 : index
      %91 = vector.load %arg16[%c0_63, %c0_64] : memref<1x32xf32, #tpu.memory_space<vmem>>, vector<1x32xf32>
      %92 = vector.broadcast %91 : vector<1x32xf32> to vector<8x32xf32>
      %93 = arith.addf %90, %92 : vector<8x32xf32>
      %c0_65 = arith.constant 0 : index
      %c0_66 = arith.constant 0 : index
      %c0_67 = arith.constant 0 : index
      %94 = vector.load %arg17[%c0_65, %c0_66, %c0_67] : memref<1x8x32xf32, #tpu.memory_space<vmem>>, vector<1x8x32xf32>
      %95 = vector.shape_cast %94 : vector<1x8x32xf32> to vector<8x32xf32>
      %96 = vector.shape_cast %93 : vector<8x32xf32> to vector<1x8x32xf32>
      tpu.vector_store %arg17[%c0_65, %c0_66, %c0_67], %96 {strides = array<i32>} : memref<1x8x32xf32, #tpu.memory_space<vmem>>, vector<1x8x32xf32>,
    } else {
    }
    return
  }
  func.func @transform_0(%arg0: i32, %arg1: i32, %arg2: i32) -> (i32, i32, i32) {
    %c0_i32 = arith.constant 0 : i32
    %c0_i32_0 = arith.constant 0 : i32
    return %arg0, %arg1, %c0_i32 : i32, i32, i32
  }
  func.func @transform_1(%arg0: i32, %arg1: i32, %arg2: i32) -> (i32, i32, i32) {
    %c0_i32 = arith.constant 0 : i32
    %c0_i32_0 = arith.constant 0 : i32
    return %arg0, %arg1, %c0_i32 : i32, i32, i32
  }
  func.func @transform_2(%arg0: i32, %arg1: i32, %arg2: i32) -> (i32, i32, i32) {
    %c0_i32 = arith.constant 0 : i32
    %c0_i32_0 = arith.constant 0 : i32
    return %arg0, %arg2, %c0_i32 : i32, i32, i32
  }
  func.func @transform_3(%arg0: i32, %arg1: i32, %arg2: i32) -> (i32, i32, i32) {
    %c0_i32 = arith.constant 0 : i32
    %c0_i32_0 = arith.constant 0 : i32
    return %arg0, %arg2, %c0_i32 : i32, i32, i32
  }
  func.func @transform_4(%arg0: i32, %arg1: i32, %arg2: i32) -> (i32, i32) {
    %c0_i32 = arith.constant 0 : i32
    %c0_i32_0 = arith.constant 0 : i32
    %c0_i32_1 = arith.constant 0 : i32
    return %c0_i32, %c0_i32_0 : i32, i32
  }
  func.func @transform_5(%arg0: i32, %arg1: i32, %arg2: i32) -> (i32, i32) {
    %c0_i32 = arith.constant 0 : i32
    %c0_i32_0 = arith.constant 0 : i32
    %c0_i32_1 = arith.constant 0 : i32
    return %c0_i32, %c0_i32_0 : i32, i32
  }
  func.func @transform_6(%arg0: i32, %arg1: i32, %arg2: i32) -> (i32, i32) {
    %c0_i32 = arith.constant 0 : i32
    %c0_i32_0 = arith.constant 0 : i32
    %c0_i32_1 = arith.constant 0 : i32
    return %c0_i32, %c0_i32_0 : i32, i32
  }
  func.func @transform_7(%arg0: i32, %arg1: i32, %arg2: i32) -> (i32, i32) {
    %c0_i32 = arith.constant 0 : i32
    %c0_i32_0 = arith.constant 0 : i32
    %c0_i32_1 = arith.constant 0 : i32
    return %c0_i32, %c0_i32_0 : i32, i32
  }
  func.func @transform_8(%arg0: i32, %arg1: i32, %arg2: i32) -> (i32, i32) {
    %c0_i32 = arith.constant 0 : i32
    %c0_i32_0 = arith.constant 0 : i32
    %c0_i32_1 = arith.constant 0 : i32
    return %c0_i32, %c0_i32_0 : i32, i32
  }
  func.func @transform_9(%arg0: i32, %arg1: i32, %arg2: i32) -> (i32, i32) {
    %c0_i32 = arith.constant 0 : i32
    %c0_i32_0 = arith.constant 0 : i32
    %c0_i32_1 = arith.constant 0 : i32
    return %c0_i32, %c0_i32_0 : i32, i32
  }
  func.func @transform_10(%arg0: i32, %arg1: i32, %arg2: i32) -> (i32, i32) {
    %c0_i32 = arith.constant 0 : i32
    %c0_i32_0 = arith.constant 0 : i32
    %c0_i32_1 = arith.constant 0 : i32
    return %c0_i32, %c0_i32_0 : i32, i32
  }
  func.func @transform_11(%arg0: i32, %arg1: i32, %arg2: i32) -> (i32, i32) {
    %c0_i32 = arith.constant 0 : i32
    %c0_i32_0 = arith.constant 0 : i32
    %c0_i32_1 = arith.constant 0 : i32
    return %c0_i32, %c0_i32_0 : i32, i32
  }
  func.func @transform_12(%arg0: i32, %arg1: i32, %arg2: i32) -> (i32, i32) {
    %c0_i32 = arith.constant 0 : i32
    %c0_i32_0 = arith.constant 0 : i32
    %c0_i32_1 = arith.constant 0 : i32
    return %c0_i32, %c0_i32_0 : i32, i32
  }
  func.func @transform_13(%arg0: i32, %arg1: i32, %arg2: i32) -> (i32, i32) {
    %c0_i32 = arith.constant 0 : i32
    %c0_i32_0 = arith.constant 0 : i32
    %c0_i32_1 = arith.constant 0 : i32
    return %c0_i32, %c0_i32_0 : i32, i32
  }
  func.func @transform_14(%arg0: i32, %arg1: i32, %arg2: i32) -> (i32, i32, i32) {
    %c0_i32 = arith.constant 0 : i32
    %c0_i32_0 = arith.constant 0 : i32
    return %arg0, %arg1, %c0_i32 : i32, i32, i32
  }
}

module attributes {stable_mosaic.version = 11 : i64} {
  func.func @_mha_ln_kernel(%arg0: i32, %arg1: i32, %arg2: i32, %arg3: memref<1x8x32xf32, #tpu.memory_space<vmem>>, %arg4: memref<1x8x32xf32, #tpu.memory_space<vmem>>, %arg5: memref<1x16x32xf32, #tpu.memory_space<vmem>>, %arg6: memref<1x16x32xf32, #tpu.memory_space<vmem>>, %arg7: memref<32x32xbf16, #tpu.memory_space<vmem>>, %arg8: memref<1x32xf32, #tpu.memory_space<vmem>>, %arg9: memref<32x32xbf16, #tpu.memory_space<vmem>>, %arg10: memref<1x32xf32, #tpu.memory_space<vmem>>, %arg11: memref<32x32xbf16, #tpu.memory_space<vmem>>, %arg12: memref<1x32xf32, #tpu.memory_space<vmem>>, %arg13: memref<32x32xbf16, #tpu.memory_space<vmem>>, %arg14: memref<1x32xf32, #tpu.memory_space<vmem>>, %arg15: memref<1x32xf32, #tpu.memory_space<vmem>>, %arg16: memref<1x32xf32, #tpu.memory_space<vmem>>, %arg17: memref<1x8x32xf32, #tpu.memory_space<vmem>>, %arg18: memref<4x8x8xbf16, #tpu.memory_space<vmem>>, %arg19: memref<4x8x1xf32, #tpu.memory_space<vmem>>, %arg20: memref<4x8x1xf32, #tpu.memory_space<vmem>>, %arg21: memref<4x8x8xf32, #tpu.memory_space<vmem>>) attributes {dimension_semantics = [#tpu.dimension_semantics<parallel>, #tpu.dimension_semantics<parallel>, #tpu.dimension_semantics<arbitrary>], iteration_bounds = array<i64: 2, 1, 1>, scalar_prefetch = 0 : i64, scratch_operands = 4 : i64, tpu.core_type = #tpu.core_type<tc>, window_params = [{transform_indices = @transform_0, window_bounds = array<i64: 1, 8, 32>}, {transform_indices = @transform_1, window_bounds = array<i64: 1, 8, 32>}, {transform_indices = @transform_2, window_bounds = array<i64: 1, 16, 32>}, {transform_indices = @transform_3, window_bounds = array<i64: 1, 16, 32>}, {pipeline_mode = #tpu.pipeline_mode<synchronous>, transform_indices = @transform_4, window_bounds = array<i64: 32, 32>}, {pipeline_mode = #tpu.pipeline_mode<synchronous>, transform_indices = @transform_5, window_bounds = array<i64: 1, 32>}, {pipeline_mode = #tpu.pipeline_mode<synchronous>, transform_indices = @transform_6, window_bounds = array<i64: 32, 32>}, {pipeline_mode = #tpu.pipeline_mode<synchronous>, transform_indices = @transform_7, window_bounds = array<i64: 1, 32>}, {pipeline_mode = #tpu.pipeline_mode<synchronous>, transform_indices = @transform_8, window_bounds = array<i64: 32, 32>}, {pipeline_mode = #tpu.pipeline_mode<synchronous>, transform_indices = @transform_9, window_bounds = array<i64: 1, 32>}, {pipeline_mode = #tpu.pipeline_mode<synchronous>, transform_indices = @transform_10, window_bounds = array<i64: 32, 32>}, {pipeline_mode = #tpu.pipeline_mode<synchronous>, transform_indices = @transform_11, window_bounds = array<i64: 1, 32>}, {pipeline_mode = #tpu.pipeline_mode<synchronous>, transform_indices = @transform_12, window_bounds = array<i64: 1, 32>}, {pipeline_mode = #tpu.pipeline_mode<synchronous>, transform_indices = @transform_13, window_bounds = array<i64: 1, 32>}, {transform_indices = @transform_14, window_bounds = array<i64: 1, 8, 32>}]} {
    %c0_i32 = arith.constant 0 : i32
    %0 = arith.cmpi eq, %arg2, %c0_i32 : i32
    %1 = arith.extui %0 : i1 to i32
    %c0_i32_0 = arith.constant 0 : i32
    %2 = arith.cmpi ne, %1, %c0_i32_0 : i32
    scf.if %2 {
      %c0_42 = arith.constant 0 : index
      %c0_43 = arith.constant 0 : index
      %c0_44 = arith.constant 0 : index
      %54 = vector.load %arg3[%c0_42, %c0_43, %c0_44] : memref<1x8x32xf32, #tpu.memory_space<vmem>>, vector<1x8x32xf32>
      %55 = vector.shape_cast %54 : vector<1x8x32xf32> to vector<8x32xf32>
      %c0_45 = arith.constant 0 : index
      %c0_46 = arith.constant 0 : index
      %c0_47 = arith.constant 0 : index
      %56 = vector.load %arg4[%c0_45, %c0_46, %c0_47] : memref<1x8x32xf32, #tpu.memory_space<vmem>>, vector<1x8x32xf32>
      %57 = vector.shape_cast %56 : vector<1x8x32xf32> to vector<8x32xf32>
      %58 = arith.addf %55, %57 : vector<8x32xf32>
      %59 = arith.truncf %58 : vector<8x32xf32> to vector<8x32xbf16>
      %c0_48 = arith.constant 0 : index
      %c0_49 = arith.constant 0 : index
      %60 = vector.load %arg7[%c0_48, %c0_49] : memref<32x32xbf16, #tpu.memory_space<vmem>>, vector<32x32xbf16>
      %cst_50 = arith.constant dense<0.000000e+00> : vector<8x32xf32>
      %61 = tpu.matmul %59, %60, %cst_50 {dimension_numbers = #tpu.dot_dimension_numbers<[1], [0], [0], [1], [0, 0, 1, 1], [], []>} : vector<8x32xbf16>, vector<32x32xbf16>, vector<8x32xf32> -> vector<8x32xf32>
      %c0_51 = arith.constant 0 : index
      %c0_52 = arith.constant 0 : index
      %62 = vector.load %arg8[%c0_51, %c0_52] : memref<1x32xf32, #tpu.memory_space<vmem>>, vector<1x32xf32>
      %63 = vector.broadcast %62 : vector<1x32xf32> to vector<8x32xf32>
      %64 = arith.addf %61, %63 : vector<8x32xf32>
      %cst_53 = arith.constant 0.353553385 : f32
      %65 = vector.broadcast %cst_53 : f32 to vector<8x32xf32>
      %66 = arith.mulf %64, %65 : vector<8x32xf32>
      %67 = vector.shape_cast %66 : vector<8x32xf32> to vector<8x4x8xf32>
      %68 = tpu.transpose %67, [1, 0, 2] : vector<8x4x8xf32> -> vector<4x8x8xf32>
      %69 = arith.truncf %68 : vector<4x8x8xf32> to vector<4x8x8xbf16>
      %c0_54 = arith.constant 0 : index
      %c0_55 = arith.constant 0 : index
      %c0_56 = arith.constant 0 : index
      %70 = vector.load %arg18[%c0_54, %c0_55, %c0_56] : memref<4x8x8xbf16, #tpu.memory_space<vmem>>, vector<4x8x8xbf16>
      tpu.vector_store %arg18[%c0_54, %c0_55, %c0_56], %69 {strides = array<i32>} : memref<4x8x8xbf16, #tpu.memory_space<vmem>>, vector<4x8x8xbf16>,
      %cst_57 = arith.constant 0xFF800000 : f32
      %71 = vector.broadcast %cst_57 : f32 to vector<4x8x1xf32>
      %c0_58 = arith.constant 0 : index
      %c0_59 = arith.constant 0 : index
      %c0_60 = arith.constant 0 : index
      %72 = vector.load %arg19[%c0_58, %c0_59, %c0_60] : memref<4x8x1xf32, #tpu.memory_space<vmem>>, vector<4x8x1xf32>
      tpu.vector_store %arg19[%c0_58, %c0_59, %c0_60], %71 {strides = array<i32>} : memref<4x8x1xf32, #tpu.memory_space<vmem>>, vector<4x8x1xf32>,
      %cst_61 = arith.constant 0.000000e+00 : f32
      %73 = vector.broadcast %cst_61 : f32 to vector<4x8x1xf32>
      %c0_62 = arith.constant 0 : index
      %c0_63 = arith.constant 0 : index
      %c0_64 = arith.constant 0 : index
      %74 = vector.load %arg20[%c0_62, %c0_63, %c0_64] : memref<4x8x1xf32, #tpu.memory_space<vmem>>, vector<4x8x1xf32>
      tpu.vector_store %arg20[%c0_62, %c0_63, %c0_64], %73 {strides = array<i32>} : memref<4x8x1xf32, #tpu.memory_space<vmem>>, vector<4x8x1xf32>,
      %cst_65 = arith.constant 0.000000e+00 : f32
      %75 = vector.broadcast %cst_65 : f32 to vector<4x8x8xf32>
      %c0_66 = arith.constant 0 : index
      %c0_67 = arith.constant 0 : index
      %c0_68 = arith.constant 0 : index
      %76 = vector.load %arg21[%c0_66, %c0_67, %c0_68] : memref<4x8x8xf32, #tpu.memory_space<vmem>>, vector<4x8x8xf32>
      tpu.vector_store %arg21[%c0_66, %c0_67, %c0_68], %75 {strides = array<i32>} : memref<4x8x8xf32, #tpu.memory_space<vmem>>, vector<4x8x8xf32>,
    } else {
    }
    %c0 = arith.constant 0 : index
    %c0_1 = arith.constant 0 : index
    %c0_2 = arith.constant 0 : index
    %3 = vector.load %arg5[%c0, %c0_1, %c0_2] : memref<1x16x32xf32, #tpu.memory_space<vmem>>, vector<1x16x32xf32>
    %4 = vector.shape_cast %3 : vector<1x16x32xf32> to vector<16x32xf32>
    %c0_3 = arith.constant 0 : index
    %c0_4 = arith.constant 0 : index
    %c0_5 = arith.constant 0 : index
    %5 = vector.load %arg6[%c0_3, %c0_4, %c0_5] : memref<1x16x32xf32, #tpu.memory_space<vmem>>, vector<1x16x32xf32>
    %6 = vector.shape_cast %5 : vector<1x16x32xf32> to vector<16x32xf32>
    %7 = arith.addf %4, %6 : vector<16x32xf32>
    %8 = arith.truncf %7 : vector<16x32xf32> to vector<16x32xbf16>
    %c0_6 = arith.constant 0 : index
    %c0_7 = arith.constant 0 : index
    %9 = vector.load %arg9[%c0_6, %c0_7] : memref<32x32xbf16, #tpu.memory_space<vmem>>, vector<32x32xbf16>
    %cst = arith.constant dense<0.000000e+00> : vector<16x32xf32>
    %10 = tpu.matmul %8, %9, %cst {dimension_numbers = #tpu.dot_dimension_numbers<[1], [0], [0], [1], [0, 0, 1, 1], [], []>} : vector<16x32xbf16>, vector<32x32xbf16>, vector<16x32xf32> -> vector<16x32xf32>
    %c0_8 = arith.constant 0 : index
    %c0_9 = arith.constant 0 : index
    %11 = vector.load %arg10[%c0_8, %c0_9] : memref<1x32xf32, #tpu.memory_space<vmem>>, vector<1x32xf32>
    %12 = vector.broadcast %11 : vector<1x32xf32> to vector<16x32xf32>
    %13 = arith.addf %10, %12 : vector<16x32xf32>
    %14 = arith.truncf %4 : vector<16x32xf32> to vector<16x32xbf16>
    %c0_10 = arith.constant 0 : index
    %c0_11 = arith.constant 0 : index
    %15 = vector.load %arg11[%c0_10, %c0_11] : memref<32x32xbf16, #tpu.memory_space<vmem>>, vector<32x32xbf16>
    %cst_12 = arith.constant dense<0.000000e+00> : vector<16x32xf32>
    %16 = tpu.matmul %14, %15, %cst_12 {dimension_numbers = #tpu.dot_dimension_numbers<[1], [0], [0], [1], [0, 0, 1, 1], [], []>} : vector<16x32xbf16>, vector<32x32xbf16>, vector<16x32xf32> -> vector<16x32xf32>
    %c0_13 = arith.constant 0 : index
    %c0_14 = arith.constant 0 : index
    %17 = vector.load %arg12[%c0_13, %c0_14] : memref<1x32xf32, #tpu.memory_space<vmem>>, vector<1x32xf32>
    %18 = vector.broadcast %17 : vector<1x32xf32> to vector<16x32xf32>
    %19 = arith.addf %16, %18 : vector<16x32xf32>
    %20 = vector.shape_cast %13 : vector<16x32xf32> to vector<16x4x8xf32>
    %21 = tpu.transpose %20, [1, 0, 2] : vector<16x4x8xf32> -> vector<4x16x8xf32>
    %22 = arith.truncf %21 : vector<4x16x8xf32> to vector<4x16x8xbf16>
    %23 = vector.shape_cast %19 : vector<16x32xf32> to vector<16x4x8xf32>
    %24 = tpu.transpose %23, [1, 0, 2] : vector<16x4x8xf32> -> vector<4x16x8xf32>
    %25 = arith.truncf %24 : vector<4x16x8xf32> to vector<4x16x8xbf16>
    %c0_15 = arith.constant 0 : index
    %c0_16 = arith.constant 0 : index
    %c0_17 = arith.constant 0 : index
    %26 = vector.load %arg18[%c0_15, %c0_16, %c0_17] : memref<4x8x8xbf16, #tpu.memory_space<vmem>>, vector<4x8x8xbf16>
    "tpu.trace_start"() <{level = 10 : i32, message = "hqd,hkd->hqk"}> : () -> ()
    %cst_18 = arith.constant dense<0.000000e+00> : vector<4x8x16xf32>
    %27 = tpu.matmul %26, %22, %cst_18 {dimension_numbers = #tpu.dot_dimension_numbers<[2], [2], [1], [1], [0, 0, 0, 1, 1, 1], [0], [0]>} : vector<4x8x8xbf16>, vector<4x16x8xbf16>, vector<4x8x16xf32> -> vector<4x8x16xf32>
    "tpu.trace_stop"() : () -> ()
    %c0_19 = arith.constant 0 : index
    %c0_20 = arith.constant 0 : index
    %c0_21 = arith.constant 0 : index
    %28 = vector.load %arg19[%c0_19, %c0_20, %c0_21] : memref<4x8x1xf32, #tpu.memory_space<vmem>>, vector<4x8x1xf32>
    %cst_22 = arith.constant dense<0xFF800000> : vector<4x8xf32>
    %29 = vector.multi_reduction <maximumf>, %27, %cst_22 [2] : vector<4x8x16xf32> to vector<4x8xf32>
    %30 = vector.shape_cast %29 : vector<4x8xf32> to vector<4x8x1xf32>
    %31 = arith.maximumf %28, %30 : vector<4x8x1xf32>
    %32 = arith.subf %28, %31 : vector<4x8x1xf32>
    %33 = math.exp %32 : vector<4x8x1xf32>
    %34 = vector.broadcast %31 : vector<4x8x1xf32> to vector<4x8x16xf32>
    %35 = arith.subf %27, %34 : vector<4x8x16xf32>
    %36 = math.exp %35 : vector<4x8x16xf32>
    %c0_23 = arith.constant 0 : index
    %c0_24 = arith.constant 0 : index
    %c0_25 = arith.constant 0 : index
    %37 = vector.load %arg20[%c0_23, %c0_24, %c0_25] : memref<4x8x1xf32, #tpu.memory_space<vmem>>, vector<4x8x1xf32>
    %38 = arith.mulf %33, %37 : vector<4x8x1xf32>
    %cst_26 = arith.constant dense<0.000000e+00> : vector<4x8xf32>
    %39 = vector.multi_reduction <add>, %36, %cst_26 [2] : vector<4x8x16xf32> to vector<4x8xf32>
    %40 = vector.shape_cast %39 : vector<4x8xf32> to vector<4x8x1xf32>
    %41 = arith.addf %38, %40 : vector<4x8x1xf32>
    %c0_27 = arith.constant 0 : index
    %c0_28 = arith.constant 0 : index
    %c0_29 = arith.constant 0 : index
    %42 = vector.load %arg20[%c0_27, %c0_28, %c0_29] : memref<4x8x1xf32, #tpu.memory_space<vmem>>, vector<4x8x1xf32>
    tpu.vector_store %arg20[%c0_27, %c0_28, %c0_29], %41 {strides = array<i32>} : memref<4x8x1xf32, #tpu.memory_space<vmem>>, vector<4x8x1xf32>,
    %c0_30 = arith.constant 0 : index
    %c0_31 = arith.constant 0 : index
    %c0_32 = arith.constant 0 : index
    %43 = vector.load %arg21[%c0_30, %c0_31, %c0_32] : memref<4x8x8xf32, #tpu.memory_space<vmem>>, vector<4x8x8xf32>
    %44 = vector.broadcast %33 : vector<4x8x1xf32> to vector<4x8x8xf32>
    %45 = arith.mulf %44, %43 : vector<4x8x8xf32>
    %46 = arith.truncf %36 : vector<4x8x16xf32> to vector<4x8x16xbf16>
    "tpu.trace_start"() <{level = 10 : i32, message = "hqk,hkd->hqd"}> : () -> ()
    %cst_33 = arith.constant dense<0.000000e+00> : vector<4x8x8xf32>
    %47 = tpu.matmul %46, %25, %cst_33 {dimension_numbers = #tpu.dot_dimension_numbers<[2], [1], [1], [2], [0, 0, 0, 1, 1, 2], [0], [0]>} : vector<4x8x16xbf16>, vector<4x16x8xbf16>, vector<4x8x8xf32> -> vector<4x8x8xf32>
    "tpu.trace_stop"() : () -> ()
    %48 = arith.addf %45, %47 : vector<4x8x8xf32>
    %c0_34 = arith.constant 0 : index
    %c0_35 = arith.constant 0 : index
    %c0_36 = arith.constant 0 : index
    %49 = vector.load %arg21[%c0_34, %c0_35, %c0_36] : memref<4x8x8xf32, #tpu.memory_space<vmem>>, vector<4x8x8xf32>
    tpu.vector_store %arg21[%c0_34, %c0_35, %c0_36], %48 {strides = array<i32>} : memref<4x8x8xf32, #tpu.memory_space<vmem>>, vector<4x8x8xf32>,
    %c0_37 = arith.constant 0 : index
    %c0_38 = arith.constant 0 : index
    %c0_39 = arith.constant 0 : index
    %50 = vector.load %arg19[%c0_37, %c0_38, %c0_39] : memref<4x8x1xf32, #tpu.memory_space<vmem>>, vector<4x8x1xf32>
    tpu.vector_store %arg19[%c0_37, %c0_38, %c0_39], %31 {strides = array<i32>} : memref<4x8x1xf32, #tpu.memory_space<vmem>>, vector<4x8x1xf32>,
    %c0_i32_40 = arith.constant 0 : i32
    %51 = arith.cmpi eq, %arg2, %c0_i32_40 : i32
    %52 = arith.extui %51 : i1 to i32
    %c0_i32_41 = arith.constant 0 : i32
    %53 = arith.cmpi ne, %52, %c0_i32_41 : i32
    scf.if %53 {
      %c0_42 = arith.constant 0 : index
      %c0_43 = arith.constant 0 : index
      %c0_44 = arith.constant 0 : index
      %54 = vector.load %arg20[%c0_42, %c0_43, %c0_44] : memref<4x8x1xf32, #tpu.memory_space<vmem>>, vector<4x8x1xf32>
      %55 = tpu.reciprocal %54 {approx = true} : vector<4x8x1xf32> -> vector<4x8x1xf32>
      %c0_45 = arith.constant 0 : index
      %c0_46 = arith.constant 0 : index
      %c0_47 = arith.constant 0 : index
      %56 = vector.load %arg21[%c0_45, %c0_46, %c0_47] : memref<4x8x8xf32, #tpu.memory_space<vmem>>, vector<4x8x8xf32>
      %57 = vector.broadcast %55 : vector<4x8x1xf32> to vector<4x8x8xf32>
      %58 = arith.mulf %56, %57 : vector<4x8x8xf32>
      %59 = tpu.transpose %58, [1, 0, 2] : vector<4x8x8xf32> -> vector<8x4x8xf32>
      %60 = vector.shape_cast %59 : vector<8x4x8xf32> to vector<8x32xf32>
      %61 = arith.truncf %60 : vector<8x32xf32> to vector<8x32xbf16>
      %c0_48 = arith.constant 0 : index
      %c0_49 = arith.constant 0 : index
      %62 = vector.load %arg13[%c0_48, %c0_49] : memref<32x32xbf16, #tpu.memory_space<vmem>>, vector<32x32xbf16>
      %cst_50 = arith.constant dense<0.000000e+00> : vector<8x32xf32>
      %63 = tpu.matmul %61, %62, %cst_50 {dimension_numbers = #tpu.dot_dimension_numbers<[1], [0], [0], [1], [0, 0, 1, 1], [], []>} : vector<8x32xbf16>, vector<32x32xbf16>, vector<8x32xf32> -> vector<8x32xf32>
      %c0_51 = arith.constant 0 : index
      %c0_52 = arith.constant 0 : index
      %64 = vector.load %arg14[%c0_51, %c0_52] : memref<1x32xf32, #tpu.memory_space<vmem>>, vector<1x32xf32>
      %65 = vector.broadcast %64 : vector<1x32xf32> to vector<8x32xf32>
      %66 = arith.addf %63, %65 : vector<8x32xf32>
      %c0_53 = arith.constant 0 : index
      %c0_54 = arith.constant 0 : index
      %c0_55 = arith.constant 0 : index
      %67 = vector.load %arg3[%c0_53, %c0_54, %c0_55] : memref<1x8x32xf32, #tpu.memory_space<vmem>>, vector<1x8x32xf32>
      %68 = vector.shape_cast %67 : vector<1x8x32xf32> to vector<8x32xf32>
      %69 = arith.addf %66, %68 : vector<8x32xf32>
      %cst_56 = arith.constant dense<0.000000e+00> : vector<8xf32>
      %70 = vector.multi_reduction <add>, %69, %cst_56 [1] : vector<8x32xf32> to vector<8xf32>
      %71 = vector.shape_cast %70 : vector<8xf32> to vector<8x1xf32>
      %cst_57 = arith.constant 3.200000e+01 : f32
      %72 = vector.broadcast %cst_57 : f32 to vector<8x1xf32>
      %73 = arith.divf %71, %72 : vector<8x1xf32>
      %74 = vector.broadcast %73 : vector<8x1xf32> to vector<8x32xf32>
      %75 = arith.subf %69, %74 : vector<8x32xf32>
      %76 = arith.mulf %75, %75 : vector<8x32xf32>
      %cst_58 = arith.constant dense<0.000000e+00> : vector<8xf32>
      %77 = vector.multi_reduction <add>, %76, %cst_58 [1] : vector<8x32xf32> to vector<8xf32>
      %78 = vector.shape_cast %77 : vector<8xf32> to vector<8x1xf32>
      %cst_59 = arith.constant 3.200000e+01 : f32
      %79 = vector.broadcast %cst_59 : f32 to vector<8x1xf32>
      %80 = arith.divf %78, %79 : vector<8x1xf32>
      %81 = vector.broadcast %73 : vector<8x1xf32> to vector<8x32xf32>
      %82 = arith.subf %69, %81 : vector<8x32xf32>
      %cst_60 = arith.constant 9.99999974E-6 : f32
      %83 = vector.broadcast %cst_60 : f32 to vector<8x1xf32>
      %84 = arith.addf %80, %83 : vector<8x1xf32>
      %85 = math.rsqrt %84 : vector<8x1xf32>
      %86 = vector.broadcast %85 : vector<8x1xf32> to vector<8x32xf32>
      %87 = arith.mulf %82, %86 : vector<8x32xf32>
      %c0_61 = arith.constant 0 : index
      %c0_62 = arith.constant 0 : index
      %88 = vector.load %arg15[%c0_61, %c0_62] : memref<1x32xf32, #tpu.memory_space<vmem>>, vector<1x32xf32>
      %89 = vector.broadcast %88 : vector<1x32xf32> to vector<8x32xf32>
      %90 = arith.mulf %87, %89 : vector<8x32xf32>
      %c0_63 = arith.constant 0 : index
      %c0_64 = arith.constant 0 : index
      %91 = vector.load %arg16[%c0_63, %c0_64] : memref<1x32xf32, #tpu.memory_space<vmem>>, vector<1x32xf32>
      %92 = vector.broadcast %91 : vector<1x32xf32> to vector<8x32xf32>
      %93 = arith.addf %90, %92 : vector<8x32xf32>
      %c0_65 = arith.constant 0 : index
      %c0_66 = arith.constant 0 : index
      %c0_67 = arith.constant 0 : index
      %94 = vector.load %arg17[%c0_65, %c0_66, %c0_67] : memref<1x8x32xf32, #tpu.memory_space<vmem>>, vector<1x8x32xf32>
      %95 = vector.shape_cast %94 : vector<1x8x32xf32> to vector<8x32xf32>
      %96 = vector.shape_cast %93 : vector<8x32xf32> to vector<1x8x32xf32>
      tpu.vector_store %arg17[%c0_65, %c0_66, %c0_67], %96 {strides = array<i32>} : memref<1x8x32xf32, #tpu.memory_space<vmem>>, vector<1x8x32xf32>,
    } else {
    }
    return
  }
  func.func @transform_0(%arg0: i32, %arg1: i32, %arg2: i32) -> (i32, i32, i32) {
    %c0_i32 = arith.constant 0 : i32
    %c0_i32_0 = arith.constant 0 : i32
    return %arg0, %arg1, %c0_i32 : i32, i32, i32
  }
  func.func @transform_1(%arg0: i32, %arg1: i32, %arg2: i32) -> (i32, i32, i32) {
    %c0_i32 = arith.constant 0 : i32
    %c0_i32_0 = arith.constant 0 : i32
    return %arg0, %arg1, %c0_i32 : i32, i32, i32
  }
  func.func @transform_2(%arg0: i32, %arg1: i32, %arg2: i32) -> (i32, i32, i32) {
    %c0_i32 = arith.constant 0 : i32
    %c0_i32_0 = arith.constant 0 : i32
    return %arg0, %arg2, %c0_i32 : i32, i32, i32
  }
  func.func @transform_3(%arg0: i32, %arg1: i32, %arg2: i32) -> (i32, i32, i32) {
    %c0_i32 = arith.constant 0 : i32
    %c0_i32_0 = arith.constant 0 : i32
    return %arg0, %arg2, %c0_i32 : i32, i32, i32
  }
  func.func @transform_4(%arg0: i32, %arg1: i32, %arg2: i32) -> (i32, i32) {
    %c0_i32 = arith.constant 0 : i32
    %c0_i32_0 = arith.constant 0 : i32
    %c0_i32_1 = arith.constant 0 : i32
    return %c0_i32, %c0_i32_0 : i32, i32
  }
  func.func @transform_5(%arg0: i32, %arg1: i32, %arg2: i32) -> (i32, i32) {
    %c0_i32 = arith.constant 0 : i32
    %c0_i32_0 = arith.constant 0 : i32
    %c0_i32_1 = arith.constant 0 : i32
    return %c0_i32, %c0_i32_0 : i32, i32
  }
  func.func @transform_6(%arg0: i32, %arg1: i32, %arg2: i32) -> (i32, i32) {
    %c0_i32 = arith.constant 0 : i32
    %c0_i32_0 = arith.constant 0 : i32
    %c0_i32_1 = arith.constant 0 : i32
    return %c0_i32, %c0_i32_0 : i32, i32
  }
  func.func @transform_7(%arg0: i32, %arg1: i32, %arg2: i32) -> (i32, i32) {
    %c0_i32 = arith.constant 0 : i32
    %c0_i32_0 = arith.constant 0 : i32
    %c0_i32_1 = arith.constant 0 : i32
    return %c0_i32, %c0_i32_0 : i32, i32
  }
  func.func @transform_8(%arg0: i32, %arg1: i32, %arg2: i32) -> (i32, i32) {
    %c0_i32 = arith.constant 0 : i32
    %c0_i32_0 = arith.constant 0 : i32
    %c0_i32_1 = arith.constant 0 : i32
    return %c0_i32, %c0_i32_0 : i32, i32
  }
  func.func @transform_9(%arg0: i32, %arg1: i32, %arg2: i32) -> (i32, i32) {
    %c0_i32 = arith.constant 0 : i32
    %c0_i32_0 = arith.constant 0 : i32
    %c0_i32_1 = arith.constant 0 : i32
    return %c0_i32, %c0_i32_0 : i32, i32
  }
  func.func @transform_10(%arg0: i32, %arg1: i32, %arg2: i32) -> (i32, i32) {
    %c0_i32 = arith.constant 0 : i32
    %c0_i32_0 = arith.constant 0 : i32
    %c0_i32_1 = arith.constant 0 : i32
    return %c0_i32, %c0_i32_0 : i32, i32
  }
  func.func @transform_11(%arg0: i32, %arg1: i32, %arg2: i32) -> (i32, i32) {
    %c0_i32 = arith.constant 0 : i32
    %c0_i32_0 = arith.constant 0 : i32
    %c0_i32_1 = arith.constant 0 : i32
    return %c0_i32, %c0_i32_0 : i32, i32
  }
  func.func @transform_12(%arg0: i32, %arg1: i32, %arg2: i32) -> (i32, i32) {
    %c0_i32 = arith.constant 0 : i32
    %c0_i32_0 = arith.constant 0 : i32
    %c0_i32_1 = arith.constant 0 : i32
    return %c0_i32, %c0_i32_0 : i32, i32
  }
  func.func @transform_13(%arg0: i32, %arg1: i32, %arg2: i32) -> (i32, i32) {
    %c0_i32 = arith.constant 0 : i32
    %c0_i32_0 = arith.constant 0 : i32
    %c0_i32_1 = arith.constant 0 : i32
    return %c0_i32, %c0_i32_0 : i32, i32
  }
  func.func @transform_14(%arg0: i32, %arg1: i32, %arg2: i32) -> (i32, i32, i32) {
    %c0_i32 = arith.constant 0 : i32
    %c0_i32_0 = arith.constant 0 : i32
    return %arg0, %arg1, %c0_i32 : i32, i32, i32
  }
}

module attributes {stable_mosaic.version = 11 : i64} {
  func.func @_mha_ln_kernel(%arg0: i32, %arg1: i32, %arg2: i32, %arg3: memref<1x8x32xf32, #tpu.memory_space<vmem>>, %arg4: memref<1x8x32xf32, #tpu.memory_space<vmem>>, %arg5: memref<1x8x32xf32, #tpu.memory_space<vmem>>, %arg6: memref<1x8x32xf32, #tpu.memory_space<vmem>>, %arg7: memref<32x32xbf16, #tpu.memory_space<vmem>>, %arg8: memref<1x32xf32, #tpu.memory_space<vmem>>, %arg9: memref<32x32xbf16, #tpu.memory_space<vmem>>, %arg10: memref<1x32xf32, #tpu.memory_space<vmem>>, %arg11: memref<32x32xbf16, #tpu.memory_space<vmem>>, %arg12: memref<1x32xf32, #tpu.memory_space<vmem>>, %arg13: memref<32x32xbf16, #tpu.memory_space<vmem>>, %arg14: memref<1x32xf32, #tpu.memory_space<vmem>>, %arg15: memref<1x32xf32, #tpu.memory_space<vmem>>, %arg16: memref<1x32xf32, #tpu.memory_space<vmem>>, %arg17: memref<1x8x32xf32, #tpu.memory_space<vmem>>, %arg18: memref<4x8x8xbf16, #tpu.memory_space<vmem>>, %arg19: memref<4x8x1xf32, #tpu.memory_space<vmem>>, %arg20: memref<4x8x1xf32, #tpu.memory_space<vmem>>, %arg21: memref<4x8x8xf32, #tpu.memory_space<vmem>>) attributes {dimension_semantics = [#tpu.dimension_semantics<parallel>, #tpu.dimension_semantics<parallel>, #tpu.dimension_semantics<arbitrary>], iteration_bounds = array<i64: 2, 1, 1>, scalar_prefetch = 0 : i64, scratch_operands = 4 : i64, tpu.core_type = #tpu.core_type<tc>, window_params = [{transform_indices = @transform_0, window_bounds = array<i64: 1, 8, 32>}, {transform_indices = @transform_1, window_bounds = array<i64: 1, 8, 32>}, {transform_indices = @transform_2, window_bounds = array<i64: 1, 8, 32>}, {transform_indices = @transform_3, window_bounds = array<i64: 1, 8, 32>}, {pipeline_mode = #tpu.pipeline_mode<synchronous>, transform_indices = @transform_4, window_bounds = array<i64: 32, 32>}, {pipeline_mode = #tpu.pipeline_mode<synchronous>, transform_indices = @transform_5, window_bounds = array<i64: 1, 32>}, {pipeline_mode = #tpu.pipeline_mode<synchronous>, transform_indices = @transform_6, window_bounds = array<i64: 32, 32>}, {pipeline_mode = #tpu.pipeline_mode<synchronous>, transform_indices = @transform_7, window_bounds = array<i64: 1, 32>}, {pipeline_mode = #tpu.pipeline_mode<synchronous>, transform_indices = @transform_8, window_bounds = array<i64: 32, 32>}, {pipeline_mode = #tpu.pipeline_mode<synchronous>, transform_indices = @transform_9, window_bounds = array<i64: 1, 32>}, {pipeline_mode = #tpu.pipeline_mode<synchronous>, transform_indices = @transform_10, window_bounds = array<i64: 32, 32>}, {pipeline_mode = #tpu.pipeline_mode<synchronous>, transform_indices = @transform_11, window_bounds = array<i64: 1, 32>}, {pipeline_mode = #tpu.pipeline_mode<synchronous>, transform_indices = @transform_12, window_bounds = array<i64: 1, 32>}, {pipeline_mode = #tpu.pipeline_mode<synchronous>, transform_indices = @transform_13, window_bounds = array<i64: 1, 32>}, {transform_indices = @transform_14, window_bounds = array<i64: 1, 8, 32>}]} {
    %c0_i32 = arith.constant 0 : i32
    %0 = arith.cmpi eq, %arg2, %c0_i32 : i32
    %1 = arith.extui %0 : i1 to i32
    %c0_i32_0 = arith.constant 0 : i32
    %2 = arith.cmpi ne, %1, %c0_i32_0 : i32
    scf.if %2 {
      %c0_42 = arith.constant 0 : index
      %c0_43 = arith.constant 0 : index
      %c0_44 = arith.constant 0 : index
      %54 = vector.load %arg3[%c0_42, %c0_43, %c0_44] : memref<1x8x32xf32, #tpu.memory_space<vmem>>, vector<1x8x32xf32>
      %55 = vector.shape_cast %54 : vector<1x8x32xf32> to vector<8x32xf32>
      %c0_45 = arith.constant 0 : index
      %c0_46 = arith.constant 0 : index
      %c0_47 = arith.constant 0 : index
      %56 = vector.load %arg4[%c0_45, %c0_46, %c0_47] : memref<1x8x32xf32, #tpu.memory_space<vmem>>, vector<1x8x32xf32>
      %57 = vector.shape_cast %56 : vector<1x8x32xf32> to vector<8x32xf32>
      %58 = arith.addf %55, %57 : vector<8x32xf32>
      %59 = arith.truncf %58 : vector<8x32xf32> to vector<8x32xbf16>
      %c0_48 = arith.constant 0 : index
      %c0_49 = arith.constant 0 : index
      %60 = vector.load %arg7[%c0_48, %c0_49] : memref<32x32xbf16, #tpu.memory_space<vmem>>, vector<32x32xbf16>
      %cst_50 = arith.constant dense<0.000000e+00> : vector<8x32xf32>
      %61 = tpu.matmul %59, %60, %cst_50 {dimension_numbers = #tpu.dot_dimension_numbers<[1], [0], [0], [1], [0, 0, 1, 1], [], []>} : vector<8x32xbf16>, vector<32x32xbf16>, vector<8x32xf32> -> vector<8x32xf32>
      %c0_51 = arith.constant 0 : index
      %c0_52 = arith.constant 0 : index
      %62 = vector.load %arg8[%c0_51, %c0_52] : memref<1x32xf32, #tpu.memory_space<vmem>>, vector<1x32xf32>
      %63 = vector.broadcast %62 : vector<1x32xf32> to vector<8x32xf32>
      %64 = arith.addf %61, %63 : vector<8x32xf32>
      %cst_53 = arith.constant 0.353553385 : f32
      %65 = vector.broadcast %cst_53 : f32 to vector<8x32xf32>
      %66 = arith.mulf %64, %65 : vector<8x32xf32>
      %67 = vector.shape_cast %66 : vector<8x32xf32> to vector<8x4x8xf32>
      %68 = tpu.transpose %67, [1, 0, 2] : vector<8x4x8xf32> -> vector<4x8x8xf32>
      %69 = arith.truncf %68 : vector<4x8x8xf32> to vector<4x8x8xbf16>
      %c0_54 = arith.constant 0 : index
      %c0_55 = arith.constant 0 : index
      %c0_56 = arith.constant 0 : index
      %70 = vector.load %arg18[%c0_54, %c0_55, %c0_56] : memref<4x8x8xbf16, #tpu.memory_space<vmem>>, vector<4x8x8xbf16>
      tpu.vector_store %arg18[%c0_54, %c0_55, %c0_56], %69 {strides = array<i32>} : memref<4x8x8xbf16, #tpu.memory_space<vmem>>, vector<4x8x8xbf16>,
      %cst_57 = arith.constant 0xFF800000 : f32
      %71 = vector.broadcast %cst_57 : f32 to vector<4x8x1xf32>
      %c0_58 = arith.constant 0 : index
      %c0_59 = arith.constant 0 : index
      %c0_60 = arith.constant 0 : index
      %72 = vector.load %arg19[%c0_58, %c0_59, %c0_60] : memref<4x8x1xf32, #tpu.memory_space<vmem>>, vector<4x8x1xf32>
      tpu.vector_store %arg19[%c0_58, %c0_59, %c0_60], %71 {strides = array<i32>} : memref<4x8x1xf32, #tpu.memory_space<vmem>>, vector<4x8x1xf32>,
      %cst_61 = arith.constant 0.000000e+00 : f32
      %73 = vector.broadcast %cst_61 : f32 to vector<4x8x1xf32>
      %c0_62 = arith.constant 0 : index
      %c0_63 = arith.constant 0 : index
      %c0_64 = arith.constant 0 : index
      %74 = vector.load %arg20[%c0_62, %c0_63, %c0_64] : memref<4x8x1xf32, #tpu.memory_space<vmem>>, vector<4x8x1xf32>
      tpu.vector_store %arg20[%c0_62, %c0_63, %c0_64], %73 {strides = array<i32>} : memref<4x8x1xf32, #tpu.memory_space<vmem>>, vector<4x8x1xf32>,
      %cst_65 = arith.constant 0.000000e+00 : f32
      %75 = vector.broadcast %cst_65 : f32 to vector<4x8x8xf32>
      %c0_66 = arith.constant 0 : index
      %c0_67 = arith.constant 0 : index
      %c0_68 = arith.constant 0 : index
      %76 = vector.load %arg21[%c0_66, %c0_67, %c0_68] : memref<4x8x8xf32, #tpu.memory_space<vmem>>, vector<4x8x8xf32>
      tpu.vector_store %arg21[%c0_66, %c0_67, %c0_68], %75 {strides = array<i32>} : memref<4x8x8xf32, #tpu.memory_space<vmem>>, vector<4x8x8xf32>,
    } else {
    }
    %c0 = arith.constant 0 : index
    %c0_1 = arith.constant 0 : index
    %c0_2 = arith.constant 0 : index
    %3 = vector.load %arg5[%c0, %c0_1, %c0_2] : memref<1x8x32xf32, #tpu.memory_space<vmem>>, vector<1x8x32xf32>
    %4 = vector.shape_cast %3 : vector<1x8x32xf32> to vector<8x32xf32>
    %c0_3 = arith.constant 0 : index
    %c0_4 = arith.constant 0 : index
    %c0_5 = arith.constant 0 : index
    %5 = vector.load %arg6[%c0_3, %c0_4, %c0_5] : memref<1x8x32xf32, #tpu.memory_space<vmem>>, vector<1x8x32xf32>
    %6 = vector.shape_cast %5 : vector<1x8x32xf32> to vector<8x32xf32>
    %7 = arith.addf %4, %6 : vector<8x32xf32>
    %8 = arith.truncf %7 : vector<8x32xf32> to vector<8x32xbf16>
    %c0_6 = arith.constant 0 : index
    %c0_7 = arith.constant 0 : index
    %9 = vector.load %arg9[%c0_6, %c0_7] : memref<32x32xbf16, #tpu.memory_space<vmem>>, vector<32x32xbf16>
    %cst = arith.constant dense<0.000000e+00> : vector<8x32xf32>
    %10 = tpu.matmul %8, %9, %cst {dimension_numbers = #tpu.dot_dimension_numbers<[1], [0], [0], [1], [0, 0, 1, 1], [], []>} : vector<8x32xbf16>, vector<32x32xbf16>, vector<8x32xf32> -> vector<8x32xf32>
    %c0_8 = arith.constant 0 : index
    %c0_9 = arith.constant 0 : index
    %11 = vector.load %arg10[%c0_8, %c0_9] : memref<1x32xf32, #tpu.memory_space<vmem>>, vector<1x32xf32>
    %12 = vector.broadcast %11 : vector<1x32xf32> to vector<8x32xf32>
    %13 = arith.addf %10, %12 : vector<8x32xf32>
    %14 = arith.truncf %4 : vector<8x32xf32> to vector<8x32xbf16>
    %c0_10 = arith.constant 0 : index
    %c0_11 = arith.constant 0 : index
    %15 = vector.load %arg11[%c0_10, %c0_11] : memref<32x32xbf16, #tpu.memory_space<vmem>>, vector<32x32xbf16>
    %cst_12 = arith.constant dense<0.000000e+00> : vector<8x32xf32>
    %16 = tpu.matmul %14, %15, %cst_12 {dimension_numbers = #tpu.dot_dimension_numbers<[1], [0], [0], [1], [0, 0, 1, 1], [], []>} : vector<8x32xbf16>, vector<32x32xbf16>, vector<8x32xf32> -> vector<8x32xf32>
    %c0_13 = arith.constant 0 : index
    %c0_14 = arith.constant 0 : index
    %17 = vector.load %arg12[%c0_13, %c0_14] : memref<1x32xf32, #tpu.memory_space<vmem>>, vector<1x32xf32>
    %18 = vector.broadcast %17 : vector<1x32xf32> to vector<8x32xf32>
    %19 = arith.addf %16, %18 : vector<8x32xf32>
    %20 = vector.shape_cast %13 : vector<8x32xf32> to vector<8x4x8xf32>
    %21 = tpu.transpose %20, [1, 0, 2] : vector<8x4x8xf32> -> vector<4x8x8xf32>
    %22 = arith.truncf %21 : vector<4x8x8xf32> to vector<4x8x8xbf16>
    %23 = vector.shape_cast %19 : vector<8x32xf32> to vector<8x4x8xf32>
    %24 = tpu.transpose %23, [1, 0, 2] : vector<8x4x8xf32> -> vector<4x8x8xf32>
    %25 = arith.truncf %24 : vector<4x8x8xf32> to vector<4x8x8xbf16>
    %c0_15 = arith.constant 0 : index
    %c0_16 = arith.constant 0 : index
    %c0_17 = arith.constant 0 : index
    %26 = vector.load %arg18[%c0_15, %c0_16, %c0_17] : memref<4x8x8xbf16, #tpu.memory_space<vmem>>, vector<4x8x8xbf16>
    "tpu.trace_start"() <{level = 10 : i32, message = "hqd,hkd->hqk"}> : () -> ()
    %cst_18 = arith.constant dense<0.000000e+00> : vector<4x8x8xf32>
    %27 = tpu.matmul %26, %22, %cst_18 {dimension_numbers = #tpu.dot_dimension_numbers<[2], [2], [1], [1], [0, 0, 0, 1, 1, 1], [0], [0]>} : vector<4x8x8xbf16>, vector<4x8x8xbf16>, vector<4x8x8xf32> -> vector<4x8x8xf32>
    "tpu.trace_stop"() : () -> ()
    %c0_19 = arith.constant 0 : index
    %c0_20 = arith.constant 0 : index
    %c0_21 = arith.constant 0 : index
    %28 = vector.load %arg19[%c0_19, %c0_20, %c0_21] : memref<4x8x1xf32, #tpu.memory_space<vmem>>, vector<4x8x1xf32>
    %cst_22 = arith.constant dense<0xFF800000> : vector<4x8xf32>
    %29 = vector.multi_reduction <maximumf>, %27, %cst_22 [2] : vector<4x8x8xf32> to vector<4x8xf32>
    %30 = vector.shape_cast %29 : vector<4x8xf32> to vector<4x8x1xf32>
    %31 = arith.maximumf %28, %30 : vector<4x8x1xf32>
    %32 = arith.subf %28, %31 : vector<4x8x1xf32>
    %33 = math.exp %32 : vector<4x8x1xf32>
    %34 = vector.broadcast %31 : vector<4x8x1xf32> to vector<4x8x8xf32>
    %35 = arith.subf %27, %34 : vector<4x8x8xf32>
    %36 = math.exp %35 : vector<4x8x8xf32>
    %c0_23 = arith.constant 0 : index
    %c0_24 = arith.constant 0 : index
    %c0_25 = arith.constant 0 : index
    %37 = vector.load %arg20[%c0_23, %c0_24, %c0_25] : memref<4x8x1xf32, #tpu.memory_space<vmem>>, vector<4x8x1xf32>
    %38 = arith.mulf %33, %37 : vector<4x8x1xf32>
    %cst_26 = arith.constant dense<0.000000e+00> : vector<4x8xf32>
    %39 = vector.multi_reduction <add>, %36, %cst_26 [2] : vector<4x8x8xf32> to vector<4x8xf32>
    %40 = vector.shape_cast %39 : vector<4x8xf32> to vector<4x8x1xf32>
    %41 = arith.addf %38, %40 : vector<4x8x1xf32>
    %c0_27 = arith.constant 0 : index
    %c0_28 = arith.constant 0 : index
    %c0_29 = arith.constant 0 : index
    %42 = vector.load %arg20[%c0_27, %c0_28, %c0_29] : memref<4x8x1xf32, #tpu.memory_space<vmem>>, vector<4x8x1xf32>
    tpu.vector_store %arg20[%c0_27, %c0_28, %c0_29], %41 {strides = array<i32>} : memref<4x8x1xf32, #tpu.memory_space<vmem>>, vector<4x8x1xf32>,
    %c0_30 = arith.constant 0 : index
    %c0_31 = arith.constant 0 : index
    %c0_32 = arith.constant 0 : index
    %43 = vector.load %arg21[%c0_30, %c0_31, %c0_32] : memref<4x8x8xf32, #tpu.memory_space<vmem>>, vector<4x8x8xf32>
    %44 = vector.broadcast %33 : vector<4x8x1xf32> to vector<4x8x8xf32>
    %45 = arith.mulf %44, %43 : vector<4x8x8xf32>
    %46 = arith.truncf %36 : vector<4x8x8xf32> to vector<4x8x8xbf16>
    "tpu.trace_start"() <{level = 10 : i32, message = "hqk,hkd->hqd"}> : () -> ()
    %cst_33 = arith.constant dense<0.000000e+00> : vector<4x8x8xf32>
    %47 = tpu.matmul %46, %25, %cst_33 {dimension_numbers = #tpu.dot_dimension_numbers<[2], [1], [1], [2], [0, 0, 0, 1, 1, 2], [0], [0]>} : vector<4x8x8xbf16>, vector<4x8x8xbf16>, vector<4x8x8xf32> -> vector<4x8x8xf32>
    "tpu.trace_stop"() : () -> ()
    %48 = arith.addf %45, %47 : vector<4x8x8xf32>
    %c0_34 = arith.constant 0 : index
    %c0_35 = arith.constant 0 : index
    %c0_36 = arith.constant 0 : index
    %49 = vector.load %arg21[%c0_34, %c0_35, %c0_36] : memref<4x8x8xf32, #tpu.memory_space<vmem>>, vector<4x8x8xf32>
    tpu.vector_store %arg21[%c0_34, %c0_35, %c0_36], %48 {strides = array<i32>} : memref<4x8x8xf32, #tpu.memory_space<vmem>>, vector<4x8x8xf32>,
    %c0_37 = arith.constant 0 : index
    %c0_38 = arith.constant 0 : index
    %c0_39 = arith.constant 0 : index
    %50 = vector.load %arg19[%c0_37, %c0_38, %c0_39] : memref<4x8x1xf32, #tpu.memory_space<vmem>>, vector<4x8x1xf32>
    tpu.vector_store %arg19[%c0_37, %c0_38, %c0_39], %31 {strides = array<i32>} : memref<4x8x1xf32, #tpu.memory_space<vmem>>, vector<4x8x1xf32>,
    %c0_i32_40 = arith.constant 0 : i32
    %51 = arith.cmpi eq, %arg2, %c0_i32_40 : i32
    %52 = arith.extui %51 : i1 to i32
    %c0_i32_41 = arith.constant 0 : i32
    %53 = arith.cmpi ne, %52, %c0_i32_41 : i32
    scf.if %53 {
      %c0_42 = arith.constant 0 : index
      %c0_43 = arith.constant 0 : index
      %c0_44 = arith.constant 0 : index
      %54 = vector.load %arg20[%c0_42, %c0_43, %c0_44] : memref<4x8x1xf32, #tpu.memory_space<vmem>>, vector<4x8x1xf32>
      %55 = tpu.reciprocal %54 {approx = true} : vector<4x8x1xf32> -> vector<4x8x1xf32>
      %c0_45 = arith.constant 0 : index
      %c0_46 = arith.constant 0 : index
      %c0_47 = arith.constant 0 : index
      %56 = vector.load %arg21[%c0_45, %c0_46, %c0_47] : memref<4x8x8xf32, #tpu.memory_space<vmem>>, vector<4x8x8xf32>
      %57 = vector.broadcast %55 : vector<4x8x1xf32> to vector<4x8x8xf32>
      %58 = arith.mulf %56, %57 : vector<4x8x8xf32>
      %59 = tpu.transpose %58, [1, 0, 2] : vector<4x8x8xf32> -> vector<8x4x8xf32>
      %60 = vector.shape_cast %59 : vector<8x4x8xf32> to vector<8x32xf32>
      %61 = arith.truncf %60 : vector<8x32xf32> to vector<8x32xbf16>
      %c0_48 = arith.constant 0 : index
      %c0_49 = arith.constant 0 : index
      %62 = vector.load %arg13[%c0_48, %c0_49] : memref<32x32xbf16, #tpu.memory_space<vmem>>, vector<32x32xbf16>
      %cst_50 = arith.constant dense<0.000000e+00> : vector<8x32xf32>
      %63 = tpu.matmul %61, %62, %cst_50 {dimension_numbers = #tpu.dot_dimension_numbers<[1], [0], [0], [1], [0, 0, 1, 1], [], []>} : vector<8x32xbf16>, vector<32x32xbf16>, vector<8x32xf32> -> vector<8x32xf32>
      %c0_51 = arith.constant 0 : index
      %c0_52 = arith.constant 0 : index
      %64 = vector.load %arg14[%c0_51, %c0_52] : memref<1x32xf32, #tpu.memory_space<vmem>>, vector<1x32xf32>
      %65 = vector.broadcast %64 : vector<1x32xf32> to vector<8x32xf32>
      %66 = arith.addf %63, %65 : vector<8x32xf32>
      %c0_53 = arith.constant 0 : index
      %c0_54 = arith.constant 0 : index
      %c0_55 = arith.constant 0 : index
      %67 = vector.load %arg3[%c0_53, %c0_54, %c0_55] : memref<1x8x32xf32, #tpu.memory_space<vmem>>, vector<1x8x32xf32>
      %68 = vector.shape_cast %67 : vector<1x8x32xf32> to vector<8x32xf32>
      %69 = arith.addf %66, %68 : vector<8x32xf32>
      %cst_56 = arith.constant dense<0.000000e+00> : vector<8xf32>
      %70 = vector.multi_reduction <add>, %69, %cst_56 [1] : vector<8x32xf32> to vector<8xf32>
      %71 = vector.shape_cast %70 : vector<8xf32> to vector<8x1xf32>
      %cst_57 = arith.constant 3.200000e+01 : f32
      %72 = vector.broadcast %cst_57 : f32 to vector<8x1xf32>
      %73 = arith.divf %71, %72 : vector<8x1xf32>
      %74 = vector.broadcast %73 : vector<8x1xf32> to vector<8x32xf32>
      %75 = arith.subf %69, %74 : vector<8x32xf32>
      %76 = arith.mulf %75, %75 : vector<8x32xf32>
      %cst_58 = arith.constant dense<0.000000e+00> : vector<8xf32>
      %77 = vector.multi_reduction <add>, %76, %cst_58 [1] : vector<8x32xf32> to vector<8xf32>
      %78 = vector.shape_cast %77 : vector<8xf32> to vector<8x1xf32>
      %cst_59 = arith.constant 3.200000e+01 : f32
      %79 = vector.broadcast %cst_59 : f32 to vector<8x1xf32>
      %80 = arith.divf %78, %79 : vector<8x1xf32>
      %81 = vector.broadcast %73 : vector<8x1xf32> to vector<8x32xf32>
      %82 = arith.subf %69, %81 : vector<8x32xf32>
      %cst_60 = arith.constant 9.99999974E-6 : f32
      %83 = vector.broadcast %cst_60 : f32 to vector<8x1xf32>
      %84 = arith.addf %80, %83 : vector<8x1xf32>
      %85 = math.rsqrt %84 : vector<8x1xf32>
      %86 = vector.broadcast %85 : vector<8x1xf32> to vector<8x32xf32>
      %87 = arith.mulf %82, %86 : vector<8x32xf32>
      %c0_61 = arith.constant 0 : index
      %c0_62 = arith.constant 0 : index
      %88 = vector.load %arg15[%c0_61, %c0_62] : memref<1x32xf32, #tpu.memory_space<vmem>>, vector<1x32xf32>
      %89 = vector.broadcast %88 : vector<1x32xf32> to vector<8x32xf32>
      %90 = arith.mulf %87, %89 : vector<8x32xf32>
      %c0_63 = arith.constant 0 : index
      %c0_64 = arith.constant 0 : index
      %91 = vector.load %arg16[%c0_63, %c0_64] : memref<1x32xf32, #tpu.memory_space<vmem>>, vector<1x32xf32>
      %92 = vector.broadcast %91 : vector<1x32xf32> to vector<8x32xf32>
      %93 = arith.addf %90, %92 : vector<8x32xf32>
      %c0_65 = arith.constant 0 : index
      %c0_66 = arith.constant 0 : index
      %c0_67 = arith.constant 0 : index
      %94 = vector.load %arg17[%c0_65, %c0_66, %c0_67] : memref<1x8x32xf32, #tpu.memory_space<vmem>>, vector<1x8x32xf32>
      %95 = vector.shape_cast %94 : vector<1x8x32xf32> to vector<8x32xf32>
      %96 = vector.shape_cast %93 : vector<8x32xf32> to vector<1x8x32xf32>
      tpu.vector_store %arg17[%c0_65, %c0_66, %c0_67], %96 {strides = array<i32>} : memref<1x8x32xf32, #tpu.memory_space<vmem>>, vector<1x8x32xf32>,
    } else {
    }
    return
  }
  func.func @transform_0(%arg0: i32, %arg1: i32, %arg2: i32) -> (i32, i32, i32) {
    %c0_i32 = arith.constant 0 : i32
    %c0_i32_0 = arith.constant 0 : i32
    return %arg0, %arg1, %c0_i32 : i32, i32, i32
  }
  func.func @transform_1(%arg0: i32, %arg1: i32, %arg2: i32) -> (i32, i32, i32) {
    %c0_i32 = arith.constant 0 : i32
    %c0_i32_0 = arith.constant 0 : i32
    return %arg0, %arg1, %c0_i32 : i32, i32, i32
  }
  func.func @transform_2(%arg0: i32, %arg1: i32, %arg2: i32) -> (i32, i32, i32) {
    %c0_i32 = arith.constant 0 : i32
    %c0_i32_0 = arith.constant 0 : i32
    return %arg0, %arg2, %c0_i32 : i32, i32, i32
  }
  func.func @transform_3(%arg0: i32, %arg1: i32, %arg2: i32) -> (i32, i32, i32) {
    %c0_i32 = arith.constant 0 : i32
    %c0_i32_0 = arith.constant 0 : i32
    return %arg0, %arg2, %c0_i32 : i32, i32, i32
  }
  func.func @transform_4(%arg0: i32, %arg1: i32, %arg2: i32) -> (i32, i32) {
    %c0_i32 = arith.constant 0 : i32
    %c0_i32_0 = arith.constant 0 : i32
    %c0_i32_1 = arith.constant 0 : i32
    return %c0_i32, %c0_i32_0 : i32, i32
  }
  func.func @transform_5(%arg0: i32, %arg1: i32, %arg2: i32) -> (i32, i32) {
    %c0_i32 = arith.constant 0 : i32
    %c0_i32_0 = arith.constant 0 : i32
    %c0_i32_1 = arith.constant 0 : i32
    return %c0_i32, %c0_i32_0 : i32, i32
  }
  func.func @transform_6(%arg0: i32, %arg1: i32, %arg2: i32) -> (i32, i32) {
    %c0_i32 = arith.constant 0 : i32
    %c0_i32_0 = arith.constant 0 : i32
    %c0_i32_1 = arith.constant 0 : i32
    return %c0_i32, %c0_i32_0 : i32, i32
  }
  func.func @transform_7(%arg0: i32, %arg1: i32, %arg2: i32) -> (i32, i32) {
    %c0_i32 = arith.constant 0 : i32
    %c0_i32_0 = arith.constant 0 : i32
    %c0_i32_1 = arith.constant 0 : i32
    return %c0_i32, %c0_i32_0 : i32, i32
  }
  func.func @transform_8(%arg0: i32, %arg1: i32, %arg2: i32) -> (i32, i32) {
    %c0_i32 = arith.constant 0 : i32
    %c0_i32_0 = arith.constant 0 : i32
    %c0_i32_1 = arith.constant 0 : i32
    return %c0_i32, %c0_i32_0 : i32, i32
  }
  func.func @transform_9(%arg0: i32, %arg1: i32, %arg2: i32) -> (i32, i32) {
    %c0_i32 = arith.constant 0 : i32
    %c0_i32_0 = arith.constant 0 : i32
    %c0_i32_1 = arith.constant 0 : i32
    return %c0_i32, %c0_i32_0 : i32, i32
  }
  func.func @transform_10(%arg0: i32, %arg1: i32, %arg2: i32) -> (i32, i32) {
    %c0_i32 = arith.constant 0 : i32
    %c0_i32_0 = arith.constant 0 : i32
    %c0_i32_1 = arith.constant 0 : i32
    return %c0_i32, %c0_i32_0 : i32, i32
  }
  func.func @transform_11(%arg0: i32, %arg1: i32, %arg2: i32) -> (i32, i32) {
    %c0_i32 = arith.constant 0 : i32
    %c0_i32_0 = arith.constant 0 : i32
    %c0_i32_1 = arith.constant 0 : i32
    return %c0_i32, %c0_i32_0 : i32, i32
  }
  func.func @transform_12(%arg0: i32, %arg1: i32, %arg2: i32) -> (i32, i32) {
    %c0_i32 = arith.constant 0 : i32
    %c0_i32_0 = arith.constant 0 : i32
    %c0_i32_1 = arith.constant 0 : i32
    return %c0_i32, %c0_i32_0 : i32, i32
  }
  func.func @transform_13(%arg0: i32, %arg1: i32, %arg2: i32) -> (i32, i32) {
    %c0_i32 = arith.constant 0 : i32
    %c0_i32_0 = arith.constant 0 : i32
    %c0_i32_1 = arith.constant 0 : i32
    return %c0_i32, %c0_i32_0 : i32, i32
  }
  func.func @transform_14(%arg0: i32, %arg1: i32, %arg2: i32) -> (i32, i32, i32) {
    %c0_i32 = arith.constant 0 : i32
    %c0_i32_0 = arith.constant 0 : i32
    return %arg0, %arg1, %c0_i32 : i32, i32, i32
  }
}

module attributes {stable_mosaic.version = 11 : i64} {
  func.func @_mha_ln_kernel(%arg0: i32, %arg1: i32, %arg2: i32, %arg3: memref<1x8x32xf32, #tpu.memory_space<vmem>>, %arg4: memref<1x8x32xf32, #tpu.memory_space<vmem>>, %arg5: memref<1x16x32xf32, #tpu.memory_space<vmem>>, %arg6: memref<1x16x32xf32, #tpu.memory_space<vmem>>, %arg7: memref<32x32xbf16, #tpu.memory_space<vmem>>, %arg8: memref<1x32xf32, #tpu.memory_space<vmem>>, %arg9: memref<32x32xbf16, #tpu.memory_space<vmem>>, %arg10: memref<1x32xf32, #tpu.memory_space<vmem>>, %arg11: memref<32x32xbf16, #tpu.memory_space<vmem>>, %arg12: memref<1x32xf32, #tpu.memory_space<vmem>>, %arg13: memref<32x32xbf16, #tpu.memory_space<vmem>>, %arg14: memref<1x32xf32, #tpu.memory_space<vmem>>, %arg15: memref<1x32xf32, #tpu.memory_space<vmem>>, %arg16: memref<1x32xf32, #tpu.memory_space<vmem>>, %arg17: memref<1x8x32xf32, #tpu.memory_space<vmem>>, %arg18: memref<4x8x8xbf16, #tpu.memory_space<vmem>>, %arg19: memref<4x8x1xf32, #tpu.memory_space<vmem>>, %arg20: memref<4x8x1xf32, #tpu.memory_space<vmem>>, %arg21: memref<4x8x8xf32, #tpu.memory_space<vmem>>) attributes {dimension_semantics = [#tpu.dimension_semantics<parallel>, #tpu.dimension_semantics<parallel>, #tpu.dimension_semantics<arbitrary>], iteration_bounds = array<i64: 2, 1, 1>, scalar_prefetch = 0 : i64, scratch_operands = 4 : i64, tpu.core_type = #tpu.core_type<tc>, window_params = [{transform_indices = @transform_0, window_bounds = array<i64: 1, 8, 32>}, {transform_indices = @transform_1, window_bounds = array<i64: 1, 8, 32>}, {transform_indices = @transform_2, window_bounds = array<i64: 1, 16, 32>}, {transform_indices = @transform_3, window_bounds = array<i64: 1, 16, 32>}, {pipeline_mode = #tpu.pipeline_mode<synchronous>, transform_indices = @transform_4, window_bounds = array<i64: 32, 32>}, {pipeline_mode = #tpu.pipeline_mode<synchronous>, transform_indices = @transform_5, window_bounds = array<i64: 1, 32>}, {pipeline_mode = #tpu.pipeline_mode<synchronous>, transform_indices = @transform_6, window_bounds = array<i64: 32, 32>}, {pipeline_mode = #tpu.pipeline_mode<synchronous>, transform_indices = @transform_7, window_bounds = array<i64: 1, 32>}, {pipeline_mode = #tpu.pipeline_mode<synchronous>, transform_indices = @transform_8, window_bounds = array<i64: 32, 32>}, {pipeline_mode = #tpu.pipeline_mode<synchronous>, transform_indices = @transform_9, window_bounds = array<i64: 1, 32>}, {pipeline_mode = #tpu.pipeline_mode<synchronous>, transform_indices = @transform_10, window_bounds = array<i64: 32, 32>}, {pipeline_mode = #tpu.pipeline_mode<synchronous>, transform_indices = @transform_11, window_bounds = array<i64: 1, 32>}, {pipeline_mode = #tpu.pipeline_mode<synchronous>, transform_indices = @transform_12, window_bounds = array<i64: 1, 32>}, {pipeline_mode = #tpu.pipeline_mode<synchronous>, transform_indices = @transform_13, window_bounds = array<i64: 1, 32>}, {transform_indices = @transform_14, window_bounds = array<i64: 1, 8, 32>}]} {
    %c0_i32 = arith.constant 0 : i32
    %0 = arith.cmpi eq, %arg2, %c0_i32 : i32
    %1 = arith.extui %0 : i1 to i32
    %c0_i32_0 = arith.constant 0 : i32
    %2 = arith.cmpi ne, %1, %c0_i32_0 : i32
    scf.if %2 {
      %c0_42 = arith.constant 0 : index
      %c0_43 = arith.constant 0 : index
      %c0_44 = arith.constant 0 : index
      %54 = vector.load %arg3[%c0_42, %c0_43, %c0_44] : memref<1x8x32xf32, #tpu.memory_space<vmem>>, vector<1x8x32xf32>
      %55 = vector.shape_cast %54 : vector<1x8x32xf32> to vector<8x32xf32>
      %c0_45 = arith.constant 0 : index
      %c0_46 = arith.constant 0 : index
      %c0_47 = arith.constant 0 : index
      %56 = vector.load %arg4[%c0_45, %c0_46, %c0_47] : memref<1x8x32xf32, #tpu.memory_space<vmem>>, vector<1x8x32xf32>
      %57 = vector.shape_cast %56 : vector<1x8x32xf32> to vector<8x32xf32>
      %58 = arith.addf %55, %57 : vector<8x32xf32>
      %59 = arith.truncf %58 : vector<8x32xf32> to vector<8x32xbf16>
      %c0_48 = arith.constant 0 : index
      %c0_49 = arith.constant 0 : index
      %60 = vector.load %arg7[%c0_48, %c0_49] : memref<32x32xbf16, #tpu.memory_space<vmem>>, vector<32x32xbf16>
      %cst_50 = arith.constant dense<0.000000e+00> : vector<8x32xf32>
      %61 = tpu.matmul %59, %60, %cst_50 {dimension_numbers = #tpu.dot_dimension_numbers<[1], [0], [0], [1], [0, 0, 1, 1], [], []>} : vector<8x32xbf16>, vector<32x32xbf16>, vector<8x32xf32> -> vector<8x32xf32>
      %c0_51 = arith.constant 0 : index
      %c0_52 = arith.constant 0 : index
      %62 = vector.load %arg8[%c0_51, %c0_52] : memref<1x32xf32, #tpu.memory_space<vmem>>, vector<1x32xf32>
      %63 = vector.broadcast %62 : vector<1x32xf32> to vector<8x32xf32>
      %64 = arith.addf %61, %63 : vector<8x32xf32>
      %cst_53 = arith.constant 0.353553385 : f32
      %65 = vector.broadcast %cst_53 : f32 to vector<8x32xf32>
      %66 = arith.mulf %64, %65 : vector<8x32xf32>
      %67 = vector.shape_cast %66 : vector<8x32xf32> to vector<8x4x8xf32>
      %68 = tpu.transpose %67, [1, 0, 2] : vector<8x4x8xf32> -> vector<4x8x8xf32>
      %69 = arith.truncf %68 : vector<4x8x8xf32> to vector<4x8x8xbf16>
      %c0_54 = arith.constant 0 : index
      %c0_55 = arith.constant 0 : index
      %c0_56 = arith.constant 0 : index
      %70 = vector.load %arg18[%c0_54, %c0_55, %c0_56] : memref<4x8x8xbf16, #tpu.memory_space<vmem>>, vector<4x8x8xbf16>
      tpu.vector_store %arg18[%c0_54, %c0_55, %c0_56], %69 {strides = array<i32>} : memref<4x8x8xbf16, #tpu.memory_space<vmem>>, vector<4x8x8xbf16>,
      %cst_57 = arith.constant 0xFF800000 : f32
      %71 = vector.broadcast %cst_57 : f32 to vector<4x8x1xf32>
      %c0_58 = arith.constant 0 : index
      %c0_59 = arith.constant 0 : index
      %c0_60 = arith.constant 0 : index
      %72 = vector.load %arg19[%c0_58, %c0_59, %c0_60] : memref<4x8x1xf32, #tpu.memory_space<vmem>>, vector<4x8x1xf32>
      tpu.vector_store %arg19[%c0_58, %c0_59, %c0_60], %71 {strides = array<i32>} : memref<4x8x1xf32, #tpu.memory_space<vmem>>, vector<4x8x1xf32>,
      %cst_61 = arith.constant 0.000000e+00 : f32
      %73 = vector.broadcast %cst_61 : f32 to vector<4x8x1xf32>
      %c0_62 = arith.constant 0 : index
      %c0_63 = arith.constant 0 : index
      %c0_64 = arith.constant 0 : index
      %74 = vector.load %arg20[%c0_62, %c0_63, %c0_64] : memref<4x8x1xf32, #tpu.memory_space<vmem>>, vector<4x8x1xf32>
      tpu.vector_store %arg20[%c0_62, %c0_63, %c0_64], %73 {strides = array<i32>} : memref<4x8x1xf32, #tpu.memory_space<vmem>>, vector<4x8x1xf32>,
      %cst_65 = arith.constant 0.000000e+00 : f32
      %75 = vector.broadcast %cst_65 : f32 to vector<4x8x8xf32>
      %c0_66 = arith.constant 0 : index
      %c0_67 = arith.constant 0 : index
      %c0_68 = arith.constant 0 : index
      %76 = vector.load %arg21[%c0_66, %c0_67, %c0_68] : memref<4x8x8xf32, #tpu.memory_space<vmem>>, vector<4x8x8xf32>
      tpu.vector_store %arg21[%c0_66, %c0_67, %c0_68], %75 {strides = array<i32>} : memref<4x8x8xf32, #tpu.memory_space<vmem>>, vector<4x8x8xf32>,
    } else {
    }
    %c0 = arith.constant 0 : index
    %c0_1 = arith.constant 0 : index
    %c0_2 = arith.constant 0 : index
    %3 = vector.load %arg5[%c0, %c0_1, %c0_2] : memref<1x16x32xf32, #tpu.memory_space<vmem>>, vector<1x16x32xf32>
    %4 = vector.shape_cast %3 : vector<1x16x32xf32> to vector<16x32xf32>
    %c0_3 = arith.constant 0 : index
    %c0_4 = arith.constant 0 : index
    %c0_5 = arith.constant 0 : index
    %5 = vector.load %arg6[%c0_3, %c0_4, %c0_5] : memref<1x16x32xf32, #tpu.memory_space<vmem>>, vector<1x16x32xf32>
    %6 = vector.shape_cast %5 : vector<1x16x32xf32> to vector<16x32xf32>
    %7 = arith.addf %4, %6 : vector<16x32xf32>
    %8 = arith.truncf %7 : vector<16x32xf32> to vector<16x32xbf16>
    %c0_6 = arith.constant 0 : index
    %c0_7 = arith.constant 0 : index
    %9 = vector.load %arg9[%c0_6, %c0_7] : memref<32x32xbf16, #tpu.memory_space<vmem>>, vector<32x32xbf16>
    %cst = arith.constant dense<0.000000e+00> : vector<16x32xf32>
    %10 = tpu.matmul %8, %9, %cst {dimension_numbers = #tpu.dot_dimension_numbers<[1], [0], [0], [1], [0, 0, 1, 1], [], []>} : vector<16x32xbf16>, vector<32x32xbf16>, vector<16x32xf32> -> vector<16x32xf32>
    %c0_8 = arith.constant 0 : index
    %c0_9 = arith.constant 0 : index
    %11 = vector.load %arg10[%c0_8, %c0_9] : memref<1x32xf32, #tpu.memory_space<vmem>>, vector<1x32xf32>
    %12 = vector.broadcast %11 : vector<1x32xf32> to vector<16x32xf32>
    %13 = arith.addf %10, %12 : vector<16x32xf32>
    %14 = arith.truncf %4 : vector<16x32xf32> to vector<16x32xbf16>
    %c0_10 = arith.constant 0 : index
    %c0_11 = arith.constant 0 : index
    %15 = vector.load %arg11[%c0_10, %c0_11] : memref<32x32xbf16, #tpu.memory_space<vmem>>, vector<32x32xbf16>
    %cst_12 = arith.constant dense<0.000000e+00> : vector<16x32xf32>
    %16 = tpu.matmul %14, %15, %cst_12 {dimension_numbers = #tpu.dot_dimension_numbers<[1], [0], [0], [1], [0, 0, 1, 1], [], []>} : vector<16x32xbf16>, vector<32x32xbf16>, vector<16x32xf32> -> vector<16x32xf32>
    %c0_13 = arith.constant 0 : index
    %c0_14 = arith.constant 0 : index
    %17 = vector.load %arg12[%c0_13, %c0_14] : memref<1x32xf32, #tpu.memory_space<vmem>>, vector<1x32xf32>
    %18 = vector.broadcast %17 : vector<1x32xf32> to vector<16x32xf32>
    %19 = arith.addf %16, %18 : vector<16x32xf32>
    %20 = vector.shape_cast %13 : vector<16x32xf32> to vector<16x4x8xf32>
    %21 = tpu.transpose %20, [1, 0, 2] : vector<16x4x8xf32> -> vector<4x16x8xf32>
    %22 = arith.truncf %21 : vector<4x16x8xf32> to vector<4x16x8xbf16>
    %23 = vector.shape_cast %19 : vector<16x32xf32> to vector<16x4x8xf32>
    %24 = tpu.transpose %23, [1, 0, 2] : vector<16x4x8xf32> -> vector<4x16x8xf32>
    %25 = arith.truncf %24 : vector<4x16x8xf32> to vector<4x16x8xbf16>
    %c0_15 = arith.constant 0 : index
    %c0_16 = arith.constant 0 : index
    %c0_17 = arith.constant 0 : index
    %26 = vector.load %arg18[%c0_15, %c0_16, %c0_17] : memref<4x8x8xbf16, #tpu.memory_space<vmem>>, vector<4x8x8xbf16>
    "tpu.trace_start"() <{level = 10 : i32, message = "hqd,hkd->hqk"}> : () -> ()
    %cst_18 = arith.constant dense<0.000000e+00> : vector<4x8x16xf32>
    %27 = tpu.matmul %26, %22, %cst_18 {dimension_numbers = #tpu.dot_dimension_numbers<[2], [2], [1], [1], [0, 0, 0, 1, 1, 1], [0], [0]>} : vector<4x8x8xbf16>, vector<4x16x8xbf16>, vector<4x8x16xf32> -> vector<4x8x16xf32>
    "tpu.trace_stop"() : () -> ()
    %c0_19 = arith.constant 0 : index
    %c0_20 = arith.constant 0 : index
    %c0_21 = arith.constant 0 : index
    %28 = vector.load %arg19[%c0_19, %c0_20, %c0_21] : memref<4x8x1xf32, #tpu.memory_space<vmem>>, vector<4x8x1xf32>
    %cst_22 = arith.constant dense<0xFF800000> : vector<4x8xf32>
    %29 = vector.multi_reduction <maximumf>, %27, %cst_22 [2] : vector<4x8x16xf32> to vector<4x8xf32>
    %30 = vector.shape_cast %29 : vector<4x8xf32> to vector<4x8x1xf32>
    %31 = arith.maximumf %28, %30 : vector<4x8x1xf32>
    %32 = arith.subf %28, %31 : vector<4x8x1xf32>
    %33 = math.exp %32 : vector<4x8x1xf32>
    %34 = vector.broadcast %31 : vector<4x8x1xf32> to vector<4x8x16xf32>
    %35 = arith.subf %27, %34 : vector<4x8x16xf32>
    %36 = math.exp %35 : vector<4x8x16xf32>
    %c0_23 = arith.constant 0 : index
    %c0_24 = arith.constant 0 : index
    %c0_25 = arith.constant 0 : index
    %37 = vector.load %arg20[%c0_23, %c0_24, %c0_25] : memref<4x8x1xf32, #tpu.memory_space<vmem>>, vector<4x8x1xf32>
    %38 = arith.mulf %33, %37 : vector<4x8x1xf32>
    %cst_26 = arith.constant dense<0.000000e+00> : vector<4x8xf32>
    %39 = vector.multi_reduction <add>, %36, %cst_26 [2] : vector<4x8x16xf32> to vector<4x8xf32>
    %40 = vector.shape_cast %39 : vector<4x8xf32> to vector<4x8x1xf32>
    %41 = arith.addf %38, %40 : vector<4x8x1xf32>
    %c0_27 = arith.constant 0 : index
    %c0_28 = arith.constant 0 : index
    %c0_29 = arith.constant 0 : index
    %42 = vector.load %arg20[%c0_27, %c0_28, %c0_29] : memref<4x8x1xf32, #tpu.memory_space<vmem>>, vector<4x8x1xf32>
    tpu.vector_store %arg20[%c0_27, %c0_28, %c0_29], %41 {strides = array<i32>} : memref<4x8x1xf32, #tpu.memory_space<vmem>>, vector<4x8x1xf32>,
    %c0_30 = arith.constant 0 : index
    %c0_31 = arith.constant 0 : index
    %c0_32 = arith.constant 0 : index
    %43 = vector.load %arg21[%c0_30, %c0_31, %c0_32] : memref<4x8x8xf32, #tpu.memory_space<vmem>>, vector<4x8x8xf32>
    %44 = vector.broadcast %33 : vector<4x8x1xf32> to vector<4x8x8xf32>
    %45 = arith.mulf %44, %43 : vector<4x8x8xf32>
    %46 = arith.truncf %36 : vector<4x8x16xf32> to vector<4x8x16xbf16>
    "tpu.trace_start"() <{level = 10 : i32, message = "hqk,hkd->hqd"}> : () -> ()
    %cst_33 = arith.constant dense<0.000000e+00> : vector<4x8x8xf32>
    %47 = tpu.matmul %46, %25, %cst_33 {dimension_numbers = #tpu.dot_dimension_numbers<[2], [1], [1], [2], [0, 0, 0, 1, 1, 2], [0], [0]>} : vector<4x8x16xbf16>, vector<4x16x8xbf16>, vector<4x8x8xf32> -> vector<4x8x8xf32>
    "tpu.trace_stop"() : () -> ()
    %48 = arith.addf %45, %47 : vector<4x8x8xf32>
    %c0_34 = arith.constant 0 : index
    %c0_35 = arith.constant 0 : index
    %c0_36 = arith.constant 0 : index
    %49 = vector.load %arg21[%c0_34, %c0_35, %c0_36] : memref<4x8x8xf32, #tpu.memory_space<vmem>>, vector<4x8x8xf32>
    tpu.vector_store %arg21[%c0_34, %c0_35, %c0_36], %48 {strides = array<i32>} : memref<4x8x8xf32, #tpu.memory_space<vmem>>, vector<4x8x8xf32>,
    %c0_37 = arith.constant 0 : index
    %c0_38 = arith.constant 0 : index
    %c0_39 = arith.constant 0 : index
    %50 = vector.load %arg19[%c0_37, %c0_38, %c0_39] : memref<4x8x1xf32, #tpu.memory_space<vmem>>, vector<4x8x1xf32>
    tpu.vector_store %arg19[%c0_37, %c0_38, %c0_39], %31 {strides = array<i32>} : memref<4x8x1xf32, #tpu.memory_space<vmem>>, vector<4x8x1xf32>,
    %c0_i32_40 = arith.constant 0 : i32
    %51 = arith.cmpi eq, %arg2, %c0_i32_40 : i32
    %52 = arith.extui %51 : i1 to i32
    %c0_i32_41 = arith.constant 0 : i32
    %53 = arith.cmpi ne, %52, %c0_i32_41 : i32
    scf.if %53 {
      %c0_42 = arith.constant 0 : index
      %c0_43 = arith.constant 0 : index
      %c0_44 = arith.constant 0 : index
      %54 = vector.load %arg20[%c0_42, %c0_43, %c0_44] : memref<4x8x1xf32, #tpu.memory_space<vmem>>, vector<4x8x1xf32>
      %55 = tpu.reciprocal %54 {approx = true} : vector<4x8x1xf32> -> vector<4x8x1xf32>
      %c0_45 = arith.constant 0 : index
      %c0_46 = arith.constant 0 : index
      %c0_47 = arith.constant 0 : index
      %56 = vector.load %arg21[%c0_45, %c0_46, %c0_47] : memref<4x8x8xf32, #tpu.memory_space<vmem>>, vector<4x8x8xf32>
      %57 = vector.broadcast %55 : vector<4x8x1xf32> to vector<4x8x8xf32>
      %58 = arith.mulf %56, %57 : vector<4x8x8xf32>
      %59 = tpu.transpose %58, [1, 0, 2] : vector<4x8x8xf32> -> vector<8x4x8xf32>
      %60 = vector.shape_cast %59 : vector<8x4x8xf32> to vector<8x32xf32>
      %61 = arith.truncf %60 : vector<8x32xf32> to vector<8x32xbf16>
      %c0_48 = arith.constant 0 : index
      %c0_49 = arith.constant 0 : index
      %62 = vector.load %arg13[%c0_48, %c0_49] : memref<32x32xbf16, #tpu.memory_space<vmem>>, vector<32x32xbf16>
      %cst_50 = arith.constant dense<0.000000e+00> : vector<8x32xf32>
      %63 = tpu.matmul %61, %62, %cst_50 {dimension_numbers = #tpu.dot_dimension_numbers<[1], [0], [0], [1], [0, 0, 1, 1], [], []>} : vector<8x32xbf16>, vector<32x32xbf16>, vector<8x32xf32> -> vector<8x32xf32>
      %c0_51 = arith.constant 0 : index
      %c0_52 = arith.constant 0 : index
      %64 = vector.load %arg14[%c0_51, %c0_52] : memref<1x32xf32, #tpu.memory_space<vmem>>, vector<1x32xf32>
      %65 = vector.broadcast %64 : vector<1x32xf32> to vector<8x32xf32>
      %66 = arith.addf %63, %65 : vector<8x32xf32>
      %c0_53 = arith.constant 0 : index
      %c0_54 = arith.constant 0 : index
      %c0_55 = arith.constant 0 : index
      %67 = vector.load %arg3[%c0_53, %c0_54, %c0_55] : memref<1x8x32xf32, #tpu.memory_space<vmem>>, vector<1x8x32xf32>
      %68 = vector.shape_cast %67 : vector<1x8x32xf32> to vector<8x32xf32>
      %69 = arith.addf %66, %68 : vector<8x32xf32>
      %cst_56 = arith.constant dense<0.000000e+00> : vector<8xf32>
      %70 = vector.multi_reduction <add>, %69, %cst_56 [1] : vector<8x32xf32> to vector<8xf32>
      %71 = vector.shape_cast %70 : vector<8xf32> to vector<8x1xf32>
      %cst_57 = arith.constant 3.200000e+01 : f32
      %72 = vector.broadcast %cst_57 : f32 to vector<8x1xf32>
      %73 = arith.divf %71, %72 : vector<8x1xf32>
      %74 = vector.broadcast %73 : vector<8x1xf32> to vector<8x32xf32>
      %75 = arith.subf %69, %74 : vector<8x32xf32>
      %76 = arith.mulf %75, %75 : vector<8x32xf32>
      %cst_58 = arith.constant dense<0.000000e+00> : vector<8xf32>
      %77 = vector.multi_reduction <add>, %76, %cst_58 [1] : vector<8x32xf32> to vector<8xf32>
      %78 = vector.shape_cast %77 : vector<8xf32> to vector<8x1xf32>
      %cst_59 = arith.constant 3.200000e+01 : f32
      %79 = vector.broadcast %cst_59 : f32 to vector<8x1xf32>
      %80 = arith.divf %78, %79 : vector<8x1xf32>
      %81 = vector.broadcast %73 : vector<8x1xf32> to vector<8x32xf32>
      %82 = arith.subf %69, %81 : vector<8x32xf32>
      %cst_60 = arith.constant 9.99999974E-6 : f32
      %83 = vector.broadcast %cst_60 : f32 to vector<8x1xf32>
      %84 = arith.addf %80, %83 : vector<8x1xf32>
      %85 = math.rsqrt %84 : vector<8x1xf32>
      %86 = vector.broadcast %85 : vector<8x1xf32> to vector<8x32xf32>
      %87 = arith.mulf %82, %86 : vector<8x32xf32>
      %c0_61 = arith.constant 0 : index
      %c0_62 = arith.constant 0 : index
      %88 = vector.load %arg15[%c0_61, %c0_62] : memref<1x32xf32, #tpu.memory_space<vmem>>, vector<1x32xf32>
      %89 = vector.broadcast %88 : vector<1x32xf32> to vector<8x32xf32>
      %90 = arith.mulf %87, %89 : vector<8x32xf32>
      %c0_63 = arith.constant 0 : index
      %c0_64 = arith.constant 0 : index
      %91 = vector.load %arg16[%c0_63, %c0_64] : memref<1x32xf32, #tpu.memory_space<vmem>>, vector<1x32xf32>
      %92 = vector.broadcast %91 : vector<1x32xf32> to vector<8x32xf32>
      %93 = arith.addf %90, %92 : vector<8x32xf32>
      %c0_65 = arith.constant 0 : index
      %c0_66 = arith.constant 0 : index
      %c0_67 = arith.constant 0 : index
      %94 = vector.load %arg17[%c0_65, %c0_66, %c0_67] : memref<1x8x32xf32, #tpu.memory_space<vmem>>, vector<1x8x32xf32>
      %95 = vector.shape_cast %94 : vector<1x8x32xf32> to vector<8x32xf32>
      %96 = vector.shape_cast %93 : vector<8x32xf32> to vector<1x8x32xf32>
      tpu.vector_store %arg17[%c0_65, %c0_66, %c0_67], %96 {strides = array<i32>} : memref<1x8x32xf32, #tpu.memory_space<vmem>>, vector<1x8x32xf32>,
    } else {
    }
    return
  }
  func.func @transform_0(%arg0: i32, %arg1: i32, %arg2: i32) -> (i32, i32, i32) {
    %c0_i32 = arith.constant 0 : i32
    %c0_i32_0 = arith.constant 0 : i32
    return %arg0, %arg1, %c0_i32 : i32, i32, i32
  }
  func.func @transform_1(%arg0: i32, %arg1: i32, %arg2: i32) -> (i32, i32, i32) {
    %c0_i32 = arith.constant 0 : i32
    %c0_i32_0 = arith.constant 0 : i32
    return %arg0, %arg1, %c0_i32 : i32, i32, i32
  }
  func.func @transform_2(%arg0: i32, %arg1: i32, %arg2: i32) -> (i32, i32, i32) {
    %c0_i32 = arith.constant 0 : i32
    %c0_i32_0 = arith.constant 0 : i32
    return %arg0, %arg2, %c0_i32 : i32, i32, i32
  }
  func.func @transform_3(%arg0: i32, %arg1: i32, %arg2: i32) -> (i32, i32, i32) {
    %c0_i32 = arith.constant 0 : i32
    %c0_i32_0 = arith.constant 0 : i32
    return %arg0, %arg2, %c0_i32 : i32, i32, i32
  }
  func.func @transform_4(%arg0: i32, %arg1: i32, %arg2: i32) -> (i32, i32) {
    %c0_i32 = arith.constant 0 : i32
    %c0_i32_0 = arith.constant 0 : i32
    %c0_i32_1 = arith.constant 0 : i32
    return %c0_i32, %c0_i32_0 : i32, i32
  }
  func.func @transform_5(%arg0: i32, %arg1: i32, %arg2: i32) -> (i32, i32) {
    %c0_i32 = arith.constant 0 : i32
    %c0_i32_0 = arith.constant 0 : i32
    %c0_i32_1 = arith.constant 0 : i32
    return %c0_i32, %c0_i32_0 : i32, i32
  }
  func.func @transform_6(%arg0: i32, %arg1: i32, %arg2: i32) -> (i32, i32) {
    %c0_i32 = arith.constant 0 : i32
    %c0_i32_0 = arith.constant 0 : i32
    %c0_i32_1 = arith.constant 0 : i32
    return %c0_i32, %c0_i32_0 : i32, i32
  }
  func.func @transform_7(%arg0: i32, %arg1: i32, %arg2: i32) -> (i32, i32) {
    %c0_i32 = arith.constant 0 : i32
    %c0_i32_0 = arith.constant 0 : i32
    %c0_i32_1 = arith.constant 0 : i32
    return %c0_i32, %c0_i32_0 : i32, i32
  }
  func.func @transform_8(%arg0: i32, %arg1: i32, %arg2: i32) -> (i32, i32) {
    %c0_i32 = arith.constant 0 : i32
    %c0_i32_0 = arith.constant 0 : i32
    %c0_i32_1 = arith.constant 0 : i32
    return %c0_i32, %c0_i32_0 : i32, i32
  }
  func.func @transform_9(%arg0: i32, %arg1: i32, %arg2: i32) -> (i32, i32) {
    %c0_i32 = arith.constant 0 : i32
    %c0_i32_0 = arith.constant 0 : i32
    %c0_i32_1 = arith.constant 0 : i32
    return %c0_i32, %c0_i32_0 : i32, i32
  }
  func.func @transform_10(%arg0: i32, %arg1: i32, %arg2: i32) -> (i32, i32) {
    %c0_i32 = arith.constant 0 : i32
    %c0_i32_0 = arith.constant 0 : i32
    %c0_i32_1 = arith.constant 0 : i32
    return %c0_i32, %c0_i32_0 : i32, i32
  }
  func.func @transform_11(%arg0: i32, %arg1: i32, %arg2: i32) -> (i32, i32) {
    %c0_i32 = arith.constant 0 : i32
    %c0_i32_0 = arith.constant 0 : i32
    %c0_i32_1 = arith.constant 0 : i32
    return %c0_i32, %c0_i32_0 : i32, i32
  }
  func.func @transform_12(%arg0: i32, %arg1: i32, %arg2: i32) -> (i32, i32) {
    %c0_i32 = arith.constant 0 : i32
    %c0_i32_0 = arith.constant 0 : i32
    %c0_i32_1 = arith.constant 0 : i32
    return %c0_i32, %c0_i32_0 : i32, i32
  }
  func.func @transform_13(%arg0: i32, %arg1: i32, %arg2: i32) -> (i32, i32) {
    %c0_i32 = arith.constant 0 : i32
    %c0_i32_0 = arith.constant 0 : i32
    %c0_i32_1 = arith.constant 0 : i32
    return %c0_i32, %c0_i32_0 : i32, i32
  }
  func.func @transform_14(%arg0: i32, %arg1: i32, %arg2: i32) -> (i32, i32, i32) {
    %c0_i32 = arith.constant 0 : i32
    %c0_i32_0 = arith.constant 0 : i32
    return %arg0, %arg1, %c0_i32 : i32, i32, i32
  }
}

module attributes {stable_mosaic.version = 11 : i64} {
  func.func @_ffn_ln_kernel(%arg0: i32, %arg1: memref<16x32xf32, #tpu.memory_space<vmem>>, %arg2: memref<32x64xbf16, #tpu.memory_space<vmem>>, %arg3: memref<1x64xf32, #tpu.memory_space<vmem>>, %arg4: memref<64x32xbf16, #tpu.memory_space<vmem>>, %arg5: memref<1x32xf32, #tpu.memory_space<vmem>>, %arg6: memref<1x32xf32, #tpu.memory_space<vmem>>, %arg7: memref<1x32xf32, #tpu.memory_space<vmem>>, %arg8: memref<16x32xf32, #tpu.memory_space<vmem>>) attributes {dimension_semantics = [#tpu.dimension_semantics<parallel>], iteration_bounds = array<i64: 1>, scalar_prefetch = 0 : i64, scratch_operands = 0 : i64, tpu.core_type = #tpu.core_type<tc>, window_params = [{transform_indices = @transform_0, window_bounds = array<i64: 16, 32>}, {pipeline_mode = #tpu.pipeline_mode<synchronous>, transform_indices = @transform_1, window_bounds = array<i64: 32, 64>}, {pipeline_mode = #tpu.pipeline_mode<synchronous>, transform_indices = @transform_2, window_bounds = array<i64: 1, 64>}, {pipeline_mode = #tpu.pipeline_mode<synchronous>, transform_indices = @transform_3, window_bounds = array<i64: 64, 32>}, {pipeline_mode = #tpu.pipeline_mode<synchronous>, transform_indices = @transform_4, window_bounds = array<i64: 1, 32>}, {pipeline_mode = #tpu.pipeline_mode<synchronous>, transform_indices = @transform_5, window_bounds = array<i64: 1, 32>}, {pipeline_mode = #tpu.pipeline_mode<synchronous>, transform_indices = @transform_6, window_bounds = array<i64: 1, 32>}, {transform_indices = @transform_7, window_bounds = array<i64: 16, 32>}]} {
    %c0 = arith.constant 0 : index
    %c0_0 = arith.constant 0 : index
    %0 = vector.load %arg1[%c0, %c0_0] : memref<16x32xf32, #tpu.memory_space<vmem>>, vector<16x32xf32>
    %1 = arith.truncf %0 : vector<16x32xf32> to vector<16x32xbf16>
    %c0_1 = arith.constant 0 : index
    %c0_2 = arith.constant 0 : index
    %2 = vector.load %arg2[%c0_1, %c0_2] : memref<32x64xbf16, #tpu.memory_space<vmem>>, vector<32x64xbf16>
    %cst = arith.constant dense<0.000000e+00> : vector<16x64xf32>
    %3 = tpu.matmul %1, %2, %cst {dimension_numbers = #tpu.dot_dimension_numbers<[1], [0], [0], [1], [0, 0, 1, 1], [], []>} : vector<16x32xbf16>, vector<32x64xbf16>, vector<16x64xf32> -> vector<16x64xf32>
    %c0_3 = arith.constant 0 : index
    %c0_4 = arith.constant 0 : index
    %4 = vector.load %arg3[%c0_3, %c0_4] : memref<1x64xf32, #tpu.memory_space<vmem>>, vector<1x64xf32>
    %5 = vector.broadcast %4 : vector<1x64xf32> to vector<16x64xf32>
    %6 = arith.addf %3, %5 : vector<16x64xf32>
    %cst_5 = arith.constant 0.000000e+00 : f32
    %7 = vector.broadcast %cst_5 : f32 to vector<16x64xf32>
    %8 = arith.maximumf %6, %7 : vector<16x64xf32>
    %9 = arith.truncf %8 : vector<16x64xf32> to vector<16x64xbf16>
    %c0_6 = arith.constant 0 : index
    %c0_7 = arith.constant 0 : index
    %10 = vector.load %arg4[%c0_6, %c0_7] : memref<64x32xbf16, #tpu.memory_space<vmem>>, vector<64x32xbf16>
    %cst_8 = arith.constant dense<0.000000e+00> : vector<16x32xf32>
    %11 = tpu.matmul %9, %10, %cst_8 {dimension_numbers = #tpu.dot_dimension_numbers<[1], [0], [0], [1], [0, 0, 1, 1], [], []>} : vector<16x64xbf16>, vector<64x32xbf16>, vector<16x32xf32> -> vector<16x32xf32>
    %c0_9 = arith.constant 0 : index
    %c0_10 = arith.constant 0 : index
    %12 = vector.load %arg5[%c0_9, %c0_10] : memref<1x32xf32, #tpu.memory_space<vmem>>, vector<1x32xf32>
    %13 = vector.broadcast %12 : vector<1x32xf32> to vector<16x32xf32>
    %14 = arith.addf %11, %13 : vector<16x32xf32>
    %15 = arith.addf %14, %0 : vector<16x32xf32>
    %cst_11 = arith.constant dense<0.000000e+00> : vector<16xf32>
    %16 = vector.multi_reduction <add>, %15, %cst_11 [1] : vector<16x32xf32> to vector<16xf32>
    %17 = vector.shape_cast %16 : vector<16xf32> to vector<16x1xf32>
    %cst_12 = arith.constant 3.200000e+01 : f32
    %18 = vector.broadcast %cst_12 : f32 to vector<16x1xf32>
    %19 = arith.divf %17, %18 : vector<16x1xf32>
    %20 = vector.broadcast %19 : vector<16x1xf32> to vector<16x32xf32>
    %21 = arith.subf %15, %20 : vector<16x32xf32>
    %22 = arith.mulf %21, %21 : vector<16x32xf32>
    %cst_13 = arith.constant dense<0.000000e+00> : vector<16xf32>
    %23 = vector.multi_reduction <add>, %22, %cst_13 [1] : vector<16x32xf32> to vector<16xf32>
    %24 = vector.shape_cast %23 : vector<16xf32> to vector<16x1xf32>
    %cst_14 = arith.constant 3.200000e+01 : f32
    %25 = vector.broadcast %cst_14 : f32 to vector<16x1xf32>
    %26 = arith.divf %24, %25 : vector<16x1xf32>
    %27 = vector.broadcast %19 : vector<16x1xf32> to vector<16x32xf32>
    %28 = arith.subf %15, %27 : vector<16x32xf32>
    %cst_15 = arith.constant 9.99999974E-6 : f32
    %29 = vector.broadcast %cst_15 : f32 to vector<16x1xf32>
    %30 = arith.addf %26, %29 : vector<16x1xf32>
    %31 = math.rsqrt %30 : vector<16x1xf32>
    %32 = vector.broadcast %31 : vector<16x1xf32> to vector<16x32xf32>
    %33 = arith.mulf %28, %32 : vector<16x32xf32>
    %c0_16 = arith.constant 0 : index
    %c0_17 = arith.constant 0 : index
    %34 = vector.load %arg6[%c0_16, %c0_17] : memref<1x32xf32, #tpu.memory_space<vmem>>, vector<1x32xf32>
    %35 = vector.broadcast %34 : vector<1x32xf32> to vector<16x32xf32>
    %36 = arith.mulf %33, %35 : vector<16x32xf32>
    %c0_18 = arith.constant 0 : index
    %c0_19 = arith.constant 0 : index
    %37 = vector.load %arg7[%c0_18, %c0_19] : memref<1x32xf32, #tpu.memory_space<vmem>>, vector<1x32xf32>
    %38 = vector.broadcast %37 : vector<1x32xf32> to vector<16x32xf32>
    %39 = arith.addf %36, %38 : vector<16x32xf32>
    %c0_20 = arith.constant 0 : index
    %c0_21 = arith.constant 0 : index
    %40 = vector.load %arg8[%c0_20, %c0_21] : memref<16x32xf32, #tpu.memory_space<vmem>>, vector<16x32xf32>
    tpu.vector_store %arg8[%c0_20, %c0_21], %39 {strides = array<i32>} : memref<16x32xf32, #tpu.memory_space<vmem>>, vector<16x32xf32>,
    return
  }
  func.func @transform_0(%arg0: i32) -> (i32, i32) {
    %c0_i32 = arith.constant 0 : i32
    %c0_i32_0 = arith.constant 0 : i32
    return %arg0, %c0_i32 : i32, i32
  }
  func.func @transform_1(%arg0: i32) -> (i32, i32) {
    %c0_i32 = arith.constant 0 : i32
    %c0_i32_0 = arith.constant 0 : i32
    %c0_i32_1 = arith.constant 0 : i32
    return %c0_i32, %c0_i32_0 : i32, i32
  }
  func.func @transform_2(%arg0: i32) -> (i32, i32) {
    %c0_i32 = arith.constant 0 : i32
    %c0_i32_0 = arith.constant 0 : i32
    %c0_i32_1 = arith.constant 0 : i32
    return %c0_i32, %c0_i32_0 : i32, i32
  }
  func.func @transform_3(%arg0: i32) -> (i32, i32) {
    %c0_i32 = arith.constant 0 : i32
    %c0_i32_0 = arith.constant 0 : i32
    %c0_i32_1 = arith.constant 0 : i32
    return %c0_i32, %c0_i32_0 : i32, i32
  }
  func.func @transform_4(%arg0: i32) -> (i32, i32) {
    %c0_i32 = arith.constant 0 : i32
    %c0_i32_0 = arith.constant 0 : i32
    %c0_i32_1 = arith.constant 0 : i32
    return %c0_i32, %c0_i32_0 : i32, i32
  }
  func.func @transform_5(%arg0: i32) -> (i32, i32) {
    %c0_i32 = arith.constant 0 : i32
    %c0_i32_0 = arith.constant 0 : i32
    %c0_i32_1 = arith.constant 0 : i32
    return %c0_i32, %c0_i32_0 : i32, i32
  }
  func.func @transform_6(%arg0: i32) -> (i32, i32) {
    %c0_i32 = arith.constant 0 : i32
    %c0_i32_0 = arith.constant 0 : i32
    %c0_i32_1 = arith.constant 0 : i32
    return %c0_i32, %c0_i32_0 : i32, i32
  }
  func.func @transform_7(%arg0: i32) -> (i32, i32) {
    %c0_i32 = arith.constant 0 : i32
    %c0_i32_0 = arith.constant 0 : i32
    return %arg0, %c0_i32 : i32, i32
  }
}

</mosaic_0001>

<llo_original>
// kernel: petr_transformer_decoder.8
$region0: #{petr_transformer_decoder.8}
  #allocation0 [shape = 'u32[]', space=smem, size = 0x4, offset = 0x4, fixed_abs, tag = 'smem constant byte address 0x4 - core index']
  #allocation1 [shape = 'u32[72,128]{1,0:T(1,128)}', space=vmem, size = 0x9000, scoped, tag = 'internal scratch']
  %s0 = inlined_call_operand.vmem [shape: f32[16,32], index: 0, kind: input, shape index: {}]
  %s1 = inlined_call_operand.hbm [shape: bf16[32,64], index: 1, kind: input, shape index: {}]
  %s2 = inlined_call_operand.vmem [shape: f32[1,64], index: 2, kind: input, shape index: {}]
  %s3 = inlined_call_operand.vmem [shape: bf16[64,32], index: 3, kind: input, shape index: {}]
  %s4 = inlined_call_operand.vmem [shape: f32[1,32], index: 4, kind: input, shape index: {}]
  %s5 = inlined_call_operand.hbm [shape: f32[1,32], index: 5, kind: input, shape index: {}]
  %s6 = inlined_call_operand.hbm [shape: f32[1,32], index: 6, kind: input, shape index: {}]
  %s7 = inlined_call_operand.vmem [shape: f32[16,32], index: 7, kind: output, shape index: {}]
  %s8 = sld [smem:[#allocation0]]
  $region50: #{petr_transformer_decoder.8} parent=0
    _
  %s10 = ssub.s32 1, %s8
  %s11 = scalar_select 0, %s10, %s8
  $region1: #{petr_transformer_decoder.8} parent=0
    #allocation2 [shape = 'u8[8192]{0}', space=vmem, size = 0x2000, scoped, tag = 'input window, operand 1, single buffered']
    #allocation3 [shape = 's32[1]{0}', space=sflag, size = 0x4, scoped, tag = 'scoped memory for petr_transformer_decoder.8']
    #allocation4 [shape = 'u8[512]{0}', space=vmem, size = 0x400, scoped, tag = 'input window, operand 5, single buffered']
    #allocation5 [shape = 's32[1]{0}', space=sflag, size = 0x4, scoped, tag = 'scoped memory for petr_transformer_decoder.8']
    #allocation6 [shape = 'u8[512]{0}', space=vmem, size = 0x400, scoped, tag = 'input window, operand 6, single buffered']
    %12 = vsyncpa [#allocation3], 0
    %13 = vsyncpa [#allocation5], 0
    // Predicated region
    $region2: #{petr_transformer_decoder.8} parent=1 // pred_check
      _
    $region3: #{petr_transformer_decoder.8} parent=1 // pred_check_branch
      %15 = sbr.rel (0) target = $region5
    $region4: #{petr_transformer_decoder.8} parent=1 // pred_region
      _
    $region5: #{petr_transformer_decoder.8} parent=1 // pred_fallthru
      _
    // Predicated region
    $region6: #{petr_transformer_decoder.8} parent=1 // pred_check
      _
    $region7: #{petr_transformer_decoder.8} parent=1 // pred_check_branch
      %17 = sbr.rel (0) target = $region9
    $region8: #{petr_transformer_decoder.8} parent=1 // pred_region
      %19 = vsyncadd [#allocation3], 0
      %s20 = sshll.u32 %s1, 4
      %s21 = int_to_ptr.hbm [resolvable:$true] %s20
      %s22 = sshll.u32 [#allocation2], 4
      %s23 = int_to_ptr.vmem [resolvable:$true] %s22
      %28 = dma.hbm_to_vmem [thread:$0]  %s21, 256, %s23, [#allocation3], 64, 64, 4
    $region9: #{petr_transformer_decoder.8} parent=1 // pred_fallthru
      _
    // Predicated region
    $region10: #{petr_transformer_decoder.8} parent=1 // pred_check
      _
    $region11: #{petr_transformer_decoder.8} parent=1 // pred_check_branch
      %30 = sbr.rel (0) target = $region13
    $region12: #{petr_transformer_decoder.8} parent=1 // pred_region
      _
    $region13: #{petr_transformer_decoder.8} parent=1 // pred_fallthru
      _
    // Predicated region
    $region14: #{petr_transformer_decoder.8} parent=1 // pred_check
      _
    $region15: #{petr_transformer_decoder.8} parent=1 // pred_check_branch
      %32 = sbr.rel (0) target = $region17
    $region16: #{petr_transformer_decoder.8} parent=1 // pred_region
      _
    $region17: #{petr_transformer_decoder.8} parent=1 // pred_fallthru
      _
    // Predicated region
    $region18: #{petr_transformer_decoder.8} parent=1 // pred_check
      _
    $region19: #{petr_transformer_decoder.8} parent=1 // pred_check_branch
      %34 = sbr.rel (0) target = $region21
    $region20: #{petr_transformer_decoder.8} parent=1 // pred_region
      _
    $region21: #{petr_transformer_decoder.8} parent=1 // pred_fallthru
      _
    // Predicated region
    $region22: #{petr_transformer_decoder.8} parent=1 // pred_check
      _
    $region23: #{petr_transformer_decoder.8} parent=1 // pred_check_branch
      %36 = sbr.rel (0) target = $region25
    $region24: #{petr_transformer_decoder.8} parent=1 // pred_region
      %38 = vsyncadd [#allocation5], 0
      %s40 = sshll.u32 %s5, 4
      %s41 = int_to_ptr.hbm [resolvable:$true] %s40
      %s42 = sshll.u32 [#allocation4], 4
      %s43 = int_to_ptr.vmem [resolvable:$true] %s42
      %45 = dma.hbm_to_vmem [thread:$0]  %s41, 16, %s43, [#allocation5]
    $region25: #{petr_transformer_decoder.8} parent=1 // pred_fallthru
      _
    // Predicated region
    $region26: #{petr_transformer_decoder.8} parent=1 // pred_check
      _
    $region27: #{petr_transformer_decoder.8} parent=1 // pred_check_branch
      %47 = sbr.rel (0) target = $region29
    $region28: #{petr_transformer_decoder.8} parent=1 // pred_region
      %49 = vsyncadd [#allocation5], 0
      %s51 = sshll.u32 %s6, 4
      %s52 = int_to_ptr.hbm [resolvable:$true] %s51
      %s53 = sshll.u32 [#allocation6], 4
      %s54 = int_to_ptr.vmem [resolvable:$true] %s53
      %56 = dma.hbm_to_vmem [thread:$0]  %s52, 16, %s54, [#allocation5]
    $region29: #{petr_transformer_decoder.8} parent=1 // pred_fallthru
      _
    // Predicated region
    $region30: #{petr_transformer_decoder.8} parent=1 // pred_check
      _
    $region31: #{petr_transformer_decoder.8} parent=1 // pred_check_branch
      %58 = sbr.rel (0) target = $region33
    $region32: #{petr_transformer_decoder.8} parent=1 // pred_region
      %60 = dma.done [#allocation3], 256
    $region33: #{petr_transformer_decoder.8} parent=1 // pred_fallthru
      _
    // Predicated region
    $region34: #{petr_transformer_decoder.8} parent=1 // pred_check
      _
    $region35: #{petr_transformer_decoder.8} parent=1 // pred_check_branch
      %62 = sbr.rel (0) target = $region37
    $region36: #{petr_transformer_decoder.8} parent=1 // pred_region
      %64 = dma.done [#allocation5], 16
    $region37: #{petr_transformer_decoder.8} parent=1 // pred_fallthru
      _
    // Predicated region
    $region38: #{petr_transformer_decoder.8} parent=1 // pred_check
      _
    $region39: #{petr_transformer_decoder.8} parent=1 // pred_check_branch
      %66 = sbr.rel (0) target = $region41
    $region40: #{petr_transformer_decoder.8} parent=1 // pred_region
      %68 = dma.done [#allocation5], 16
    $region41: #{petr_transformer_decoder.8} parent=1 // pred_fallthru
      _
    %v70 = vld [vmem:[%s0] sm:$0xff]
    %v71 = vld [vmem:[%s0 + $0x8] sm:$0xff]
    %v72 = vpack.c.bf16 %v71, %v70
    %v73 = vld [vmem:[#allocation2] sm:$0xf]
    %v74 = vld [vmem:[#allocation2 + $0x4] sm:$0xf]
    %v75 = vld [vmem:[#allocation2 + $0x8] sm:$0xf]
    %v76 = vld [vmem:[#allocation2 + $0xc] sm:$0xf]
    %v77 = vld [vmem:[%s2] sm:$0x1]
    %v79 = vperm.slane %v77, 0
    %v85 = vunpack.c.l.b16 %v73
    %v86 = vunpack.c.l.b16 %v74
    %v87 = vunpack.c.l.b16 %v75
    %v88 = vunpack.c.l.b16 %v76
    %v89 = vpack.c.b16 %v86, %v85
    %v90 = vpack.c.b16 %v88, %v87
    %vm93 = vcmask 261120
    %v95 = vsel %vm93, %v72, 0
    %97 = vmatpush.bf16.msra.mxu0 0
    %98 = vmatpush.bf16.msra.mxu0 0
    %99 = vmatpush.bf16.msra.mxu0 0
    %100 = vmatpush.bf16.msra.mxu0 0
    %101 = vmatpush.bf16.msra.mxu0 0
    %102 = vmatpush.bf16.msra.mxu0 0
    %103 = vmatpush.bf16.msra.mxu0 %v90
    %104 = vmatpush.bf16.msra.mxu0 %v89
    %105 = vmatmul.bf16.gmra.mxu0 %v95
    %v106 = vpop.f32.mrf.mxu0
    %v107 = vadd.f32 %v79, %v106
    %v108 = vpop.f32.mrf.mxu0
    %v109 = vadd.f32 %v79, %v108
    %110 = vdwg.mxu0
    %v111 = vmax.f32 %v107, 0.0
    %v112 = vmax.f32 %v109, 0.0
    %v113 = vpack.c.bf16 %v112, %v111
    %v114 = vld [vmem:[%s3] sm:$0xf]
    %v115 = vld [vmem:[%s3 + $0x4] sm:$0xf]
    %v116 = vld [vmem:[%s3 + $0x8] sm:$0xf]
    %v117 = vld [vmem:[%s3 + $0xc] sm:$0xf]
    %v118 = vld [vmem:[%s3 + $0x10] sm:$0xf]
    %v119 = vld [vmem:[%s3 + $0x14] sm:$0xf]
    %v120 = vld [vmem:[%s3 + $0x18] sm:$0xf]
    %v121 = vld [vmem:[%s3 + $0x1c] sm:$0xf]
    %v122 = vld [vmem:[%s4] sm:$0x1]
    %v124 = vperm.slane %v122, 0
    %v134 = vunpack.c.l.b16 %v114
    %v135 = vunpack.c.l.b16 %v115
    %v136 = vunpack.c.l.b16 %v116
    %v137 = vunpack.c.l.b16 %v117
    %v138 = vunpack.c.l.b16 %v118
    %v139 = vunpack.c.l.b16 %v119
    %v140 = vunpack.c.l.b16 %v120
    %v141 = vunpack.c.l.b16 %v121
    %v142 = vpack.c.b16 %v135, %v134
    %v143 = vpack.c.b16 %v137, %v136
    %v144 = vpack.c.b16 %v139, %v138
    %v145 = vpack.c.b16 %v141, %v140
    %vm150 = vcmask 523264
    %v152 = vsel %vm150, %v113, 0
    %154 = vmatpush.bf16.msra.mxu0 0
    %155 = vmatpush.bf16.msra.mxu0 0
    %156 = vmatpush.bf16.msra.mxu0 0
    %157 = vmatpush.bf16.msra.mxu0 0
    %158 = vmatpush.bf16.msra.mxu0 %v145
    %159 = vmatpush.bf16.msra.mxu0 %v144
    %160 = vmatpush.bf16.msra.mxu0 %v143
    %161 = vmatpush.bf16.msra.mxu0 %v142
    %162 = vmatmul.bf16.gmra.mxu0 %v152
    %v163 = vpop.f32.mrf.mxu0
    %v164 = vadd.f32 %v124, %v163
    %v165 = vpop.f32.mrf.mxu0
    %v166 = vadd.f32 %v124, %v165
    %167 = vdwg.mxu0
    %v168 = vadd.f32 %v164, %v70
    %v169 = vadd.f32 %v166, %v71
    %v170 = vsel %vm93, %v168, 0.0
    %171 = vadd.xlane.f32.xlu0 %v170
    %v172 = vpop.xlane.xlu0 %171
    %v173 = vsel %vm93, %v169, 0.0
    %174 = vadd.xlane.f32.xlu0 %v173
    %v175 = vpop.xlane.xlu0 %174
    %v176 = vrcp.pop 32.0
    %v177 = vmul.f32 32.0, %v176
    %v178 = vsub.f32 1.0, %v177
    %v179 = vmul.f32 %v176, %v178
    %v180 = vadd.f32 %v176, %v179
    %vm181 = vweird.f32 %v176
    %v182 = vsel %vm181, %v176, %v180
    %v183 = vmul.f32 %v172, %v182
    %v184 = vmul.f32 %v175, %v182
    %v185 = vsub.f32 %v168, %v183
    %v186 = vsub.f32 %v169, %v184
    %v187 = vmul.f32 %v185, %v185
    %v188 = vmul.f32 %v186, %v186
    %v189 = vsel %vm93, %v187, 0.0
    %190 = vadd.xlane.f32.xlu0 %v189
    %v191 = vpop.xlane.xlu0 %190
    %v192 = vsel %vm93, %v188, 0.0
    %193 = vadd.xlane.f32.xlu0 %v192
    %v194 = vpop.xlane.xlu0 %193
    %v195 = vmul.f32 %v191, %v182
    %v196 = vmul.f32 %v194, %v182
    %v197 = vadd.f32 %v195, 1e-05
    %v198 = vadd.f32 %v196, 1e-05
    %v199 = vrsqrt.pop %v197
    %v200 = vmul.f32 %v199, %v197
    %v201 = vmul.f32 %v200, %v199
    %v202 = vmul.f32 0.5, %v201
    %v203 = vsub.f32 1.5, %v202
    %v204 = vmul.f32 %v199, %v203
    %vm205 = vweird.f32 %v197
    %vm206 = vweird.f32 %v199
    %vm207 = vmor %vm205, %vm206
    %v208 = vsel %vm207, %v199, %v204
    %v209 = vrsqrt.pop %v198
    %v210 = vmul.f32 %v209, %v198
    %v211 = vmul.f32 %v210, %v209
    %v212 = vmul.f32 0.5, %v211
    %v213 = vsub.f32 1.5, %v212
    %v214 = vmul.f32 %v209, %v213
    %vm215 = vweird.f32 %v198
    %vm216 = vweird.f32 %v209
    %vm217 = vmor %vm215, %vm216
    %v218 = vsel %vm217, %v209, %v214
    %v219 = vmul.f32 %v185, %v208
    %v220 = vmul.f32 %v186, %v218
    %v221 = vld [vmem:[#allocation4] sm:$0x1]
    %v223 = vperm.slane %v221, 0
    %v225 = vmul.f32 %v219, %v223
    %v226 = vmul.f32 %v220, %v223
    %v227 = vld [vmem:[#allocation6] sm:$0x1]
    %v229 = vperm.slane %v227, 0
    %v231 = vadd.f32 %v225, %v229
    %v232 = vadd.f32 %v226, %v229
    %233 = vst.msk [vmem:[%s7] sm:$0xff] %vm93, %v231
    %234 = vst.msk [vmem:[%s7 + $0x8] sm:$0xff] %vm93, %v232
    // Predicated region
    $region42: #{petr_transformer_decoder.8} parent=1 // pred_check
      _
    $region43: #{petr_transformer_decoder.8} parent=1 // pred_check_branch
      %236 = sbr.rel (0) target = $region45
    $region44: #{petr_transformer_decoder.8} parent=1 // pred_region
      _
    $region45: #{petr_transformer_decoder.8} parent=1 // pred_fallthru
      _
    // Predicated region
    $region46: #{petr_transformer_decoder.8} parent=1 // pred_check
      _
    $region47: #{petr_transformer_decoder.8} parent=1 // pred_check_branch
      %238 = sbr.rel (0) target = $region49
    $region48: #{petr_transformer_decoder.8} parent=1 // pred_region
      _
    $region49: #{petr_transformer_decoder.8} parent=1 // pred_fallthru
      _
    %239 = vsyncpa [#allocation3], 1
    %240 = vsyncpa [#allocation5], 1

// kernel: petr_transformer_decoder.6
$region0: #{petr_transformer_decoder.6}
  #allocation0 [shape = 'u32[]', space=smem, size = 0x4, offset = 0x4, fixed_abs, tag = 'smem constant byte address 0x4 - core index']
  #allocation1 [shape = 'u32[72,128]{1,0:T(1,128)}', space=vmem, size = 0x9000, scoped, tag = 'internal scratch']
  #allocation2 [shape = 'bf16[4,8,8]{2,1,0:T(8,128)(2,1)}', space=vmem, size = 0x2000, scoped, tag = 'scratch operand']
  #allocation3 [shape = 'f32[4,8,1]{2,1,0:T(8,128)}', space=vmem, size = 0x4000, scoped, tag = 'scratch operand']
  #allocation4 [shape = 'f32[4,8,1]{2,1,0:T(8,128)}', space=vmem, size = 0x4000, scoped, tag = 'scratch operand']
  #allocation5 [shape = 'f32[4,8,8]{2,1,0:T(8,128)}', space=vmem, size = 0x4000, scoped, tag = 'scratch operand']
  %s0 = inlined_call_operand.hbm [shape: f32[2,8,32], index: 0, kind: input, shape index: {}, may-alias: {0,2}]
  %s1 = inlined_call_operand.hbm [shape: f32[2,8,32], index: 1, kind: input, shape index: {}, may-alias: {1,3}]
  %s2 = inlined_call_operand.hbm [shape: f32[2,8,32], index: 2, kind: input, shape index: {}, may-alias: {0,2}]
  %s3 = inlined_call_operand.hbm [shape: f32[2,8,32], index: 3, kind: input, shape index: {}, may-alias: {1,3}]
  %s4 = inlined_call_operand.vmem [shape: bf16[32,32], index: 4, kind: input, shape index: {}]
  %s5 = inlined_call_operand.vmem [shape: f32[1,32], index: 5, kind: input, shape index: {}]
  %s6 = inlined_call_operand.hbm [shape: bf16[32,32], index: 6, kind: input, shape index: {}]
  %s7 = inlined_call_operand.vmem [shape: f32[1,32], index: 7, kind: input, shape index: {}]
  %s8 = inlined_call_operand.hbm [shape: bf16[32,32], index: 8, kind: input, shape index: {}]
  %s9 = inlined_call_operand.hbm [shape: f32[1,32], index: 9, kind: input, shape index: {}]
  %s10 = inlined_call_operand.hbm [shape: bf16[32,32], index: 10, kind: input, shape index: {}]
  %s11 = inlined_call_operand.hbm [shape: f32[1,32], index: 11, kind: input, shape index: {}]
  %s12 = inlined_call_operand.hbm [shape: f32[1,32], index: 12, kind: input, shape index: {}]
  %s13 = inlined_call_operand.hbm [shape: f32[1,32], index: 13, kind: input, shape index: {}]
  %s14 = inlined_call_operand.vmem [shape: f32[2,8,32], index: 14, kind: output, shape index: {}]
  %s15 = sld [smem:[#allocation0]]
  $region141: #{petr_transformer_decoder.6} parent=0
    _
  %s17 = ssub.s32 1, %s15
  %s18 = scalar_select 0, %s17, %s15
  $region1: #{petr_transformer_decoder.6} parent=0
    #allocation6 [shape = 'u8[8192]{0}', space=vmem, size = 0x2000, scoped, tag = 'input window, operand 0']
    #allocation7 [shape = 's32[2]{0}', space=sflag, size = 0x8, scoped, tag = 'scoped memory for petr_transformer_decoder.6']
    #allocation8 [shape = 'u8[8192]{0}', space=vmem, size = 0x2000, scoped, tag = 'input window, operand 1']
    #allocation9 [shape = 's32[2]{0}', space=sflag, size = 0x8, scoped, tag = 'scoped memory for petr_transformer_decoder.6']
    #allocation10 [shape = 'u8[8192]{0}', space=vmem, size = 0x2000, scoped, tag = 'input window, operand 2']
    #allocation11 [shape = 'u8[8192]{0}', space=vmem, size = 0x2000, scoped, tag = 'input window, operand 3']
    #allocation12 [shape = 's32[2]{0}', space=sflag, size = 0x8, scoped, tag = 'scoped memory for petr_transformer_decoder.6']
    #allocation13 [shape = 'u8[8192]{0}', space=vmem, size = 0x2000, scoped, tag = 'input window, operand 6, single buffered']
    #allocation14 [shape = 'u8[8192]{0}', space=vmem, size = 0x2000, scoped, tag = 'input window, operand 8, single buffered']
    #allocation15 [shape = 's32[1]{0}', space=sflag, size = 0x4, scoped, tag = 'scoped memory for petr_transformer_decoder.6']
    #allocation16 [shape = 'u8[512]{0}', space=vmem, size = 0x400, scoped, tag = 'input window, operand 9, single buffered']
    #allocation17 [shape = 'u8[8192]{0}', space=vmem, size = 0x2000, scoped, tag = 'input window, operand 10, single buffered']
    #allocation18 [shape = 's32[1]{0}', space=sflag, size = 0x4, scoped, tag = 'scoped memory for petr_transformer_decoder.6']
    #allocation19 [shape = 'u8[512]{0}', space=vmem, size = 0x400, scoped, tag = 'input window, operand 11, single buffered']
    #allocation20 [shape = 'u8[512]{0}', space=vmem, size = 0x400, scoped, tag = 'input window, operand 12, single buffered']
    #allocation21 [shape = 's32[1]{0}', space=sflag, size = 0x4, scoped, tag = 'scoped memory for petr_transformer_decoder.6']
    #allocation22 [shape = 'u8[512]{0}', space=vmem, size = 0x400, scoped, tag = 'input window, operand 13, single buffered']
    %19 = vsyncpa [#allocation7], 0
    %s20 = scalar_lea.sflag [#allocation7], 1
    %21 = vsyncpa %s20, 0
    %22 = vsyncpa [#allocation9], 0
    %s23 = scalar_lea.sflag [#allocation9], 1
    %24 = vsyncpa %s23, 0
    %25 = vsyncpa [#allocation12], 0
    %s26 = scalar_lea.sflag [#allocation12], 1
    %27 = vsyncpa %s26, 0
    %28 = vsyncpa [#allocation15], 0
    %29 = vsyncpa [#allocation18], 0
    %30 = vsyncpa [#allocation21], 0
    loop: start=0, step=1, limit=4
    $region2: #{petr_transformer_decoder.6} parent=1 // loop_pre_header
      _
    $region3: #{petr_transformer_decoder.6} parent=1 // loop_header
      %s32 = sphi 0, %s36
      %p33 = scmp.ge.s32.totalorder %s32, 4
      %s39 = sphi 0, %s58
      %s40 = sphi 0, %s54
      %s41 = sphi 0, %s50
      %s42 = sphi 0, %s39
      %s43 = sphi 0, %s40
      %s44 = sphi 0, %s41
      %s45 = sphi 0, %s42
      %s46 = sphi 0, %s43
      %s47 = sphi 0, %s44
      %s63 = sphi 0, %s65
      %s66 = sphi 0, %s63
      %s67 = sphi 0, %s66
      %s83 = sphi 0, %s67
      %s91 = sphi 0, %s93
      %s94 = sphi 0, %s91
      %s95 = sphi 0, %s94
      %s111 = sphi 0, %s95
      %s119 = sphi 0, %s121
      %s122 = sphi 0, %s119
      %s123 = sphi 0, %s122
      %s139 = sphi 0, %s123
      %s147 = sphi 0, %s149
      %s150 = sphi 0, %s147
      %s151 = sphi 0, %s150
      %s167 = sphi 0, %s151
      %s171 = sphi 0, %s171
      %s173 = sphi 0, %s171
      %s174 = sphi 0, %s173
      %s188 = sphi 0, %s174
      %s192 = sphi 0, %s192
      %s194 = sphi 0, %s192
      %s195 = sphi 0, %s194
      %s209 = sphi 0, %s195
      %s213 = sphi 0, %s213
      %s215 = sphi 0, %s213
      %s216 = sphi 0, %s215
      %s230 = sphi 0, %s216
      %s234 = sphi 0, %s234
      %s236 = sphi 0, %s234
      %s237 = sphi 0, %s236
      %s251 = sphi 0, %s237
      %s255 = sphi 0, %s255
      %s257 = sphi 0, %s255
      %s258 = sphi 0, %s257
      %s272 = sphi 0, %s258
      %s276 = sphi 0, %s276
      %s278 = sphi 0, %s276
      %s279 = sphi 0, %s278
      %s293 = sphi 0, %s279
      %s297 = sphi 0, %s297
      %s299 = sphi 0, %s297
      %s300 = sphi 0, %s299
      %s314 = sphi 0, %s300
      %s318 = sphi 0, %s318
      %s320 = sphi 0, %s318
      %s321 = sphi 0, %s320
      %s335 = sphi 0, %s321
      %s339 = sphi 0, %s339
      %s341 = sphi 0, %s339
      %s342 = sphi 0, %s341
      %s356 = sphi 0, %s342
      %s360 = sphi 0, %s360
      %s362 = sphi 0, %s360
      %s363 = sphi 0, %s362
      %s377 = sphi 0, %s363
      %s385 = sphi 0, %s387
      %s388 = sphi 0, %s385
      %s389 = sphi 0, %s388
      %s405 = sphi 0, %s389
    $region4: #{petr_transformer_decoder.6} parent=1 // loop_header_branch
      %35 = sbr.rel (%p33) target = $region8
    $region5: #{petr_transformer_decoder.6} parent=1 // loop_body
      %s37 = ssub.s32 %s32, 1
      %s38 = ssub.s32 %s32, 2
      %s48 = sadd.s32 1, %s41
      %p49 = scmp.ge.s32.totalorder %s48, 1
      %s50 = scalar_select %p49, 0, %s48
      %s51 = sadd.s32 1, %s40
      %s52 = scalar_select %p49, %s51, %s40
      %p53 = scmp.ge.s32.totalorder %s52, 1
      %s54 = scalar_select %p53, 0, %s52
      %s55 = sadd.s32 1, %s39
      %s56 = scalar_select %p53, %s55, %s39
      %p57 = scmp.ge.s32.totalorder %s56, 2
      %s58 = scalar_select %p57, 0, %s56
      %s59 = ssub.s32 %s39, %s58
      %s60 = ssub.s32 %s40, %s54
      %s61 = sor.u32 %s59, %s60
      %p62 = scmp.eq.s32.totalorder %s61, 0
      %s64 = sadd.s32 %s63, 1
      %s65 = scalar_select %p62, %s63, %s64
      %p68 = pneg %p62
      %p69 = scmp.eq.s32.totalorder %s32, 1
      %p70 = por %p68, %p69
      %p71 = scmp.ne.s32.totalorder %s63, %s66
      %p72 = scmp.eq.s32.totalorder %s32, 0
      %p73 = por %p71, %p72
      %p74 = scmp.ne.s32.totalorder %s63, %s66
      %p75 = scmp.eq.s32.totalorder %s37, 1
      %p76 = por %p74, %p75
      %p77 = scmp.ne.s32.totalorder %s66, %s67
      %p78 = scmp.eq.s32.totalorder %s37, 0
      %p79 = por %p77, %p78
      %p80 = scmp.ne.s32.totalorder %s66, %s67
      %p81 = scmp.eq.s32.totalorder %s38, 1
      %p82 = por %p80, %p81
      %p84 = scmp.ne.s32.totalorder %s67, %s83
      %p85 = scmp.eq.s32.totalorder %s38, 0
      %p86 = por %p84, %p85
      %s87 = ssub.s32 %s39, %s58
      %s88 = ssub.s32 %s40, %s54
      %s89 = sor.u32 %s87, %s88
      %p90 = scmp.eq.s32.totalorder %s89, 0
      %s92 = sadd.s32 %s91, 1
      %s93 = scalar_select %p90, %s91, %s92
      %p96 = pneg %p90
      %p97 = scmp.eq.s32.totalorder %s32, 1
      %p98 = por %p96, %p97
      %p99 = scmp.ne.s32.totalorder %s91, %s94
      %p100 = scmp.eq.s32.totalorder %s32, 0
      %p101 = por %p99, %p100
      %p102 = scmp.ne.s32.totalorder %s91, %s94
      %p103 = scmp.eq.s32.totalorder %s37, 1
      %p104 = por %p102, %p103
      %p105 = scmp.ne.s32.totalorder %s94, %s95
      %p106 = scmp.eq.s32.totalorder %s37, 0
      %p107 = por %p105, %p106
      %p108 = scmp.ne.s32.totalorder %s94, %s95
      %p109 = scmp.eq.s32.totalorder %s38, 1
      %p110 = por %p108, %p109
      %p112 = scmp.ne.s32.totalorder %s95, %s111
      %p113 = scmp.eq.s32.totalorder %s38, 0
      %p114 = por %p112, %p113
      %s115 = ssub.s32 %s39, %s58
      %s116 = ssub.s32 %s41, %s50
      %s117 = sor.u32 %s115, %s116
      %p118 = scmp.eq.s32.totalorder %s117, 0
      %s120 = sadd.s32 %s119, 1
      %s121 = scalar_select %p118, %s119, %s120
      %p124 = pneg %p118
      %p125 = scmp.eq.s32.totalorder %s32, 1
      %p126 = por %p124, %p125
      %p127 = scmp.ne.s32.totalorder %s119, %s122
      %p128 = scmp.eq.s32.totalorder %s32, 0
      %p129 = por %p127, %p128
      %p130 = scmp.ne.s32.totalorder %s119, %s122
      %p131 = scmp.eq.s32.totalorder %s37, 1
      %p132 = por %p130, %p131
      %p133 = scmp.ne.s32.totalorder %s122, %s123
      %p134 = scmp.eq.s32.totalorder %s37, 0
      %p135 = por %p133, %p134
      %p136 = scmp.ne.s32.totalorder %s122, %s123
      %p137 = scmp.eq.s32.totalorder %s38, 1
      %p138 = por %p136, %p137
      %p140 = scmp.ne.s32.totalorder %s123, %s139
      %p141 = scmp.eq.s32.totalorder %s38, 0
      %p142 = por %p140, %p141
      %s143 = ssub.s32 %s39, %s58
      %s144 = ssub.s32 %s41, %s50
      %s145 = sor.u32 %s143, %s144
      %p146 = scmp.eq.s32.totalorder %s145, 0
      %s148 = sadd.s32 %s147, 1
      %s149 = scalar_select %p146, %s147, %s148
      %p152 = pneg %p146
      %p153 = scmp.eq.s32.totalorder %s32, 1
      %p154 = por %p152, %p153
      %p155 = scmp.ne.s32.totalorder %s147, %s150
      %p156 = scmp.eq.s32.totalorder %s32, 0
      %p157 = por %p155, %p156
      %p158 = scmp.ne.s32.totalorder %s147, %s150
      %p159 = scmp.eq.s32.totalorder %s37, 1
      %p160 = por %p158, %p159
      %p161 = scmp.ne.s32.totalorder %s150, %s151
      %p162 = scmp.eq.s32.totalorder %s37, 0
      %p163 = por %p161, %p162
      %p164 = scmp.ne.s32.totalorder %s150, %s151
      %p165 = scmp.eq.s32.totalorder %s38, 1
      %p166 = por %p164, %p165
      %p168 = scmp.ne.s32.totalorder %s151, %s167
      %p169 = scmp.eq.s32.totalorder %s38, 0
      %p170 = por %p168, %p169
      %s172 = sadd.s32 %s171, 1
      %p175 = scmp.eq.s32.totalorder %s32, 1
      %p176 = scmp.ne.s32.totalorder %s171, %s173
      %p177 = scmp.eq.s32.totalorder %s32, 0
      %p178 = por %p176, %p177
      %p179 = scmp.ne.s32.totalorder %s171, %s173
      %p180 = scmp.eq.s32.totalorder %s37, 1
      %p181 = por %p179, %p180
      %p182 = scmp.ne.s32.totalorder %s173, %s174
      %p183 = scmp.eq.s32.totalorder %s37, 0
      %p184 = por %p182, %p183
      %p185 = scmp.ne.s32.totalorder %s173, %s174
      %p186 = scmp.eq.s32.totalorder %s38, 1
      %p187 = por %p185, %p186
      %p189 = scmp.ne.s32.totalorder %s174, %s188
      %p190 = scmp.eq.s32.totalorder %s38, 0
      %p191 = por %p189, %p190
      %s193 = sadd.s32 %s192, 1
      %p196 = scmp.eq.s32.totalorder %s32, 1
      %p197 = scmp.ne.s32.totalorder %s192, %s194
      %p198 = scmp.eq.s32.totalorder %s32, 0
      %p199 = por %p197, %p198
      %p200 = scmp.ne.s32.totalorder %s192, %s194
      %p201 = scmp.eq.s32.totalorder %s37, 1
      %p202 = por %p200, %p201
      %p203 = scmp.ne.s32.totalorder %s194, %s195
      %p204 = scmp.eq.s32.totalorder %s37, 0
      %p205 = por %p203, %p204
      %p206 = scmp.ne.s32.totalorder %s194, %s195
      %p207 = scmp.eq.s32.totalorder %s38, 1
      %p208 = por %p206, %p207
      %p210 = scmp.ne.s32.totalorder %s195, %s209
      %p211 = scmp.eq.s32.totalorder %s38, 0
      %p212 = por %p210, %p211
      %s214 = sadd.s32 %s213, 1
      %p217 = scmp.eq.s32.totalorder %s32, 1
      %p218 = scmp.ne.s32.totalorder %s213, %s215
      %p219 = scmp.eq.s32.totalorder %s32, 0
      %p220 = por %p218, %p219
      %p221 = scmp.ne.s32.totalorder %s213, %s215
      %p222 = scmp.eq.s32.totalorder %s37, 1
      %p223 = por %p221, %p222
      %p224 = scmp.ne.s32.totalorder %s215, %s216
      %p225 = scmp.eq.s32.totalorder %s37, 0
      %p226 = por %p224, %p225
      %p227 = scmp.ne.s32.totalorder %s215, %s216
      %p228 = scmp.eq.s32.totalorder %s38, 1
      %p229 = por %p227, %p228
      %p231 = scmp.ne.s32.totalorder %s216, %s230
      %p232 = scmp.eq.s32.totalorder %s38, 0
      %p233 = por %p231, %p232
      %s235 = sadd.s32 %s234, 1
      %p238 = scmp.eq.s32.totalorder %s32, 1
      %p239 = scmp.ne.s32.totalorder %s234, %s236
      %p240 = scmp.eq.s32.totalorder %s32, 0
      %p241 = por %p239, %p240
      %p242 = scmp.ne.s32.totalorder %s234, %s236
      %p243 = scmp.eq.s32.totalorder %s37, 1
      %p244 = por %p242, %p243
      %p245 = scmp.ne.s32.totalorder %s236, %s237
      %p246 = scmp.eq.s32.totalorder %s37, 0
      %p247 = por %p245, %p246
      %p248 = scmp.ne.s32.totalorder %s236, %s237
      %p249 = scmp.eq.s32.totalorder %s38, 1
      %p250 = por %p248, %p249
      %p252 = scmp.ne.s32.totalorder %s237, %s251
      %p253 = scmp.eq.s32.totalorder %s38, 0
      %p254 = por %p252, %p253
      %s256 = sadd.s32 %s255, 1
      %p259 = scmp.eq.s32.totalorder %s32, 1
      %p260 = scmp.ne.s32.totalorder %s255, %s257
      %p261 = scmp.eq.s32.totalorder %s32, 0
      %p262 = por %p260, %p261
      %p263 = scmp.ne.s32.totalorder %s255, %s257
      %p264 = scmp.eq.s32.totalorder %s37, 1
      %p265 = por %p263, %p264
      %p266 = scmp.ne.s32.totalorder %s257, %s258
      %p267 = scmp.eq.s32.totalorder %s37, 0
      %p268 = por %p266, %p267
      %p269 = scmp.ne.s32.totalorder %s257, %s258
      %p270 = scmp.eq.s32.totalorder %s38, 1
      %p271 = por %p269, %p270
      %p273 = scmp.ne.s32.totalorder %s258, %s272
      %p274 = scmp.eq.s32.totalorder %s38, 0
      %p275 = por %p273, %p274
      %s277 = sadd.s32 %s276, 1
      %p280 = scmp.eq.s32.totalorder %s32, 1
      %p281 = scmp.ne.s32.totalorder %s276, %s278
      %p282 = scmp.eq.s32.totalorder %s32, 0
      %p283 = por %p281, %p282
      %p284 = scmp.ne.s32.totalorder %s276, %s278
      %p285 = scmp.eq.s32.totalorder %s37, 1
      %p286 = por %p284, %p285
      %p287 = scmp.ne.s32.totalorder %s278, %s279
      %p288 = scmp.eq.s32.totalorder %s37, 0
      %p289 = por %p287, %p288
      %p290 = scmp.ne.s32.totalorder %s278, %s279
      %p291 = scmp.eq.s32.totalorder %s38, 1
      %p292 = por %p290, %p291
      %p294 = scmp.ne.s32.totalorder %s279, %s293
      %p295 = scmp.eq.s32.totalorder %s38, 0
      %p296 = por %p294, %p295
      %s298 = sadd.s32 %s297, 1
      %p301 = scmp.eq.s32.totalorder %s32, 1
      %p302 = scmp.ne.s32.totalorder %s297, %s299
      %p303 = scmp.eq.s32.totalorder %s32, 0
      %p304 = por %p302, %p303
      %p305 = scmp.ne.s32.totalorder %s297, %s299
      %p306 = scmp.eq.s32.totalorder %s37, 1
      %p307 = por %p305, %p306
      %p308 = scmp.ne.s32.totalorder %s299, %s300
      %p309 = scmp.eq.s32.totalorder %s37, 0
      %p310 = por %p308, %p309
      %p311 = scmp.ne.s32.totalorder %s299, %s300
      %p312 = scmp.eq.s32.totalorder %s38, 1
      %p313 = por %p311, %p312
      %p315 = scmp.ne.s32.totalorder %s300, %s314
      %p316 = scmp.eq.s32.totalorder %s38, 0
      %p317 = por %p315, %p316
      %s319 = sadd.s32 %s318, 1
      %p322 = scmp.eq.s32.totalorder %s32, 1
      %p323 = scmp.ne.s32.totalorder %s318, %s320
      %p324 = scmp.eq.s32.totalorder %s32, 0
      %p325 = por %p323, %p324
      %p326 = scmp.ne.s32.totalorder %s318, %s320
      %p327 = scmp.eq.s32.totalorder %s37, 1
      %p328 = por %p326, %p327
      %p329 = scmp.ne.s32.totalorder %s320, %s321
      %p330 = scmp.eq.s32.totalorder %s37, 0
      %p331 = por %p329, %p330
      %p332 = scmp.ne.s32.totalorder %s320, %s321
      %p333 = scmp.eq.s32.totalorder %s38, 1
      %p334 = por %p332, %p333
      %p336 = scmp.ne.s32.totalorder %s321, %s335
      %p337 = scmp.eq.s32.totalorder %s38, 0
      %p338 = por %p336, %p337
      %s340 = sadd.s32 %s339, 1
      %p343 = scmp.eq.s32.totalorder %s32, 1
      %p344 = scmp.ne.s32.totalorder %s339, %s341
      %p345 = scmp.eq.s32.totalorder %s32, 0
      %p346 = por %p344, %p345
      %p347 = scmp.ne.s32.totalorder %s339, %s341
      %p348 = scmp.eq.s32.totalorder %s37, 1
      %p349 = por %p347, %p348
      %p350 = scmp.ne.s32.totalorder %s341, %s342
      %p351 = scmp.eq.s32.totalorder %s37, 0
      %p352 = por %p350, %p351
      %p353 = scmp.ne.s32.totalorder %s341, %s342
      %p354 = scmp.eq.s32.totalorder %s38, 1
      %p355 = por %p353, %p354
      %p357 = scmp.ne.s32.totalorder %s342, %s356
      %p358 = scmp.eq.s32.totalorder %s38, 0
      %p359 = por %p357, %p358
      %s361 = sadd.s32 %s360, 1
      %p364 = scmp.eq.s32.totalorder %s32, 1
      %p365 = scmp.ne.s32.totalorder %s360, %s362
      %p366 = scmp.eq.s32.totalorder %s32, 0
      %p367 = por %p365, %p366
      %p368 = scmp.ne.s32.totalorder %s360, %s362
      %p369 = scmp.eq.s32.totalorder %s37, 1
      %p370 = por %p368, %p369
      %p371 = scmp.ne.s32.totalorder %s362, %s363
      %p372 = scmp.eq.s32.totalorder %s37, 0
      %p373 = por %p371, %p372
      %p374 = scmp.ne.s32.totalorder %s362, %s363
      %p375 = scmp.eq.s32.totalorder %s38, 1
      %p376 = por %p374, %p375
      %p378 = scmp.ne.s32.totalorder %s363, %s377
      %p379 = scmp.eq.s32.totalorder %s38, 0
      %p380 = por %p378, %p379
      %s381 = ssub.s32 %s39, %s58
      %s382 = ssub.s32 %s40, %s54
      %s383 = sor.u32 %s381, %s382
      %p384 = scmp.eq.s32.totalorder %s383, 0
      %s386 = sadd.s32 %s385, 1
      %s387 = scalar_select %p384, %s385, %s386
      %p390 = pneg %p384
      %p391 = scmp.eq.s32.totalorder %s32, 1
      %p392 = por %p390, %p391
      %p393 = scmp.ne.s32.totalorder %s385, %s388
      %p394 = scmp.eq.s32.totalorder %s32, 0
      %p395 = por %p393, %p394
      %p396 = scmp.ne.s32.totalorder %s385, %s388
      %p397 = scmp.eq.s32.totalorder %s37, 1
      %p398 = por %p396, %p397
      %p399 = scmp.ne.s32.totalorder %s388, %s389
      %p400 = scmp.eq.s32.totalorder %s37, 0
      %p401 = por %p399, %p400
      %p402 = scmp.ne.s32.totalorder %s388, %s389
      %p403 = scmp.eq.s32.totalorder %s38, 1
      %p404 = por %p402, %p403
      %p406 = scmp.ne.s32.totalorder %s389, %s405
      %p407 = scmp.eq.s32.totalorder %s38, 0
      %p408 = por %p406, %p407
      %p409 = scmp.le.s32.totalorder 1, %s32
      %p410 = scmp.lt.s32.totalorder %s32, 3
      %p411 = pnand %p409, %p410
      %p412 = pneg %p411
      // Predicated region
      $region9: #{petr_transformer_decoder.6} parent=5 // pred_check
        _
      $region10: #{petr_transformer_decoder.6} parent=5 // pred_check_branch
        %414 = sbr.rel (%p411) target = $region12
      $region11: #{petr_transformer_decoder.6} parent=5 // pred_region
        %s415 = ssub.s32 %s32, 1
        // Predicated region
        $region13: #{petr_transformer_decoder.6} parent=11 // pred_check
          %p416 = pneg %p184
        $region14: #{petr_transformer_decoder.6} parent=11 // pred_check_branch
          %418 = sbr.rel (%p416) target = $region16
        $region15: #{petr_transformer_decoder.6} parent=11 // pred_region
          _
        $region16: #{petr_transformer_decoder.6} parent=11 // pred_fallthru
          _
        // Predicated region
        $region17: #{petr_transformer_decoder.6} parent=11 // pred_check
          %p419 = pneg %p205
        $region18: #{petr_transformer_decoder.6} parent=11 // pred_check_branch
          %421 = sbr.rel (%p419) target = $region20
        $region19: #{petr_transformer_decoder.6} parent=11 // pred_region
          _
        $region20: #{petr_transformer_decoder.6} parent=11 // pred_fallthru
          _
        // Predicated region
        $region21: #{petr_transformer_decoder.6} parent=11 // pred_check
          %p422 = pneg %p226
        $region22: #{petr_transformer_decoder.6} parent=11 // pred_check_branch
          %424 = sbr.rel (%p422) target = $region24
        $region23: #{petr_transformer_decoder.6} parent=11 // pred_region
          %426 = vsyncadd [#allocation12], 0
          %s427 = sshll.u32 %s6, 4
          %s428 = int_to_ptr.hbm [resolvable:$true] %s427
          %s429 = sshll.u32 [#allocation13], 4
          %s430 = int_to_ptr.vmem [resolvable:$true] %s429
          %435 = dma.hbm_to_vmem [thread:$0]  %s428, 256, %s430, [#allocation12], 64, 64, 4
        $region24: #{petr_transformer_decoder.6} parent=11 // pred_fallthru
          _
        // Predicated region
        $region25: #{petr_transformer_decoder.6} parent=11 // pred_check
          %p436 = pneg %p247
        $region26: #{petr_transformer_decoder.6} parent=11 // pred_check_branch
          %438 = sbr.rel (%p436) target = $region28
        $region27: #{petr_transformer_decoder.6} parent=11 // pred_region
          _
        $region28: #{petr_transformer_decoder.6} parent=11 // pred_fallthru
          _
        // Predicated region
        $region29: #{petr_transformer_decoder.6} parent=11 // pred_check
          %p439 = pneg %p268
        $region30: #{petr_transformer_decoder.6} parent=11 // pred_check_branch
          %441 = sbr.rel (%p439) target = $region32
        $region31: #{petr_transformer_decoder.6} parent=11 // pred_region
          %443 = vsyncadd [#allocation15], 0
          %s444 = sshll.u32 %s8, 4
          %s445 = int_to_ptr.hbm [resolvable:$true] %s444
          %s446 = sshll.u32 [#allocation14], 4
          %s447 = int_to_ptr.vmem [resolvable:$true] %s446
          %452 = dma.hbm_to_vmem [thread:$0]  %s445, 256, %s447, [#allocation15], 64, 64, 4
        $region32: #{petr_transformer_decoder.6} parent=11 // pred_fallthru
          _
        // Predicated region
        $region33: #{petr_transformer_decoder.6} parent=11 // pred_check
          %p453 = pneg %p289
        $region34: #{petr_transformer_decoder.6} parent=11 // pred_check_branch
          %455 = sbr.rel (%p453) target = $region36
        $region35: #{petr_transformer_decoder.6} parent=11 // pred_region
          %457 = vsyncadd [#allocation15], 0
          %s459 = sshll.u32 %s9, 4
          %s460 = int_to_ptr.hbm [resolvable:$true] %s459
          %s461 = sshll.u32 [#allocation16], 4
          %s462 = int_to_ptr.vmem [resolvable:$true] %s461
          %464 = dma.hbm_to_vmem [thread:$0]  %s460, 16, %s462, [#allocation15]
        $region36: #{petr_transformer_decoder.6} parent=11 // pred_fallthru
          _
        // Predicated region
        $region37: #{petr_transformer_decoder.6} parent=11 // pred_check
          %p465 = pneg %p310
        $region38: #{petr_transformer_decoder.6} parent=11 // pred_check_branch
          %467 = sbr.rel (%p465) target = $region40
        $region39: #{petr_transformer_decoder.6} parent=11 // pred_region
          %469 = vsyncadd [#allocation18], 0
          %s470 = sshll.u32 %s10, 4
          %s471 = int_to_ptr.hbm [resolvable:$true] %s470
          %s472 = sshll.u32 [#allocation17], 4
          %s473 = int_to_ptr.vmem [resolvable:$true] %s472
          %478 = dma.hbm_to_vmem [thread:$0]  %s471, 256, %s473, [#allocation18], 64, 64, 4
        $region40: #{petr_transformer_decoder.6} parent=11 // pred_fallthru
          _
        // Predicated region
        $region41: #{petr_transformer_decoder.6} parent=11 // pred_check
          %p479 = pneg %p331
        $region42: #{petr_transformer_decoder.6} parent=11 // pred_check_branch
          %481 = sbr.rel (%p479) target = $region44
        $region43: #{petr_transformer_decoder.6} parent=11 // pred_region
          %483 = vsyncadd [#allocation18], 0
          %s485 = sshll.u32 %s11, 4
          %s486 = int_to_ptr.hbm [resolvable:$true] %s485
          %s487 = sshll.u32 [#allocation19], 4
          %s488 = int_to_ptr.vmem [resolvable:$true] %s487
          %490 = dma.hbm_to_vmem [thread:$0]  %s486, 16, %s488, [#allocation18]
        $region44: #{petr_transformer_decoder.6} parent=11 // pred_fallthru
          _
        // Predicated region
        $region45: #{petr_transformer_decoder.6} parent=11 // pred_check
          %p491 = pneg %p352
        $region46: #{petr_transformer_decoder.6} parent=11 // pred_check_branch
          %493 = sbr.rel (%p491) target = $region48
        $region47: #{petr_transformer_decoder.6} parent=11 // pred_region
          %495 = vsyncadd [#allocation21], 0
          %s497 = sshll.u32 %s12, 4
          %s498 = int_to_ptr.hbm [resolvable:$true] %s497
          %s499 = sshll.u32 [#allocation20], 4
          %s500 = int_to_ptr.vmem [resolvable:$true] %s499
          %502 = dma.hbm_to_vmem [thread:$0]  %s498, 16, %s500, [#allocation21]
        $region48: #{petr_transformer_decoder.6} parent=11 // pred_fallthru
          _
        // Predicated region
        $region49: #{petr_transformer_decoder.6} parent=11 // pred_check
          %p503 = pneg %p373
        $region50: #{petr_transformer_decoder.6} parent=11 // pred_check_branch
          %505 = sbr.rel (%p503) target = $region52
        $region51: #{petr_transformer_decoder.6} parent=11 // pred_region
          %507 = vsyncadd [#allocation21], 0
          %s509 = sshll.u32 %s13, 4
          %s510 = int_to_ptr.hbm [resolvable:$true] %s509
          %s511 = sshll.u32 [#allocation22], 4
          %s512 = int_to_ptr.vmem [resolvable:$true] %s511
          %514 = dma.hbm_to_vmem [thread:$0]  %s510, 16, %s512, [#allocation21]
        $region52: #{petr_transformer_decoder.6} parent=11 // pred_fallthru
          _
      $region12: #{petr_transformer_decoder.6} parent=5 // pred_fallthru
        _
      %p515 = scmp.lt.s32.totalorder %s32, 2
      // Predicated region
      $region53: #{petr_transformer_decoder.6} parent=5 // pred_check
        %p516 = pneg %p515
      $region54: #{petr_transformer_decoder.6} parent=5 // pred_check_branch
        %518 = sbr.rel (%p516) target = $region56
      $region55: #{petr_transformer_decoder.6} parent=5 // pred_region
        // Predicated region
        $region57: #{petr_transformer_decoder.6} parent=55 // pred_check
          %p519 = pneg %p73
        $region58: #{petr_transformer_decoder.6} parent=55 // pred_check_branch
          %521 = sbr.rel (%p519) target = $region60
        $region59: #{petr_transformer_decoder.6} parent=55 // pred_region
          %s522 = sand.u32 %s63, 1
          %s523 = scalar_lea.sflag [#allocation7], %s522
          %s524 = sand.u32 %s63, 1
          %s525 = smul.addr %s524, 8
          %s526 = scalar_lea.vmem [#allocation6], %s525
          %528 = vsyncadd %s523, 0
          %s529 = sadd.s32 %s40, %s39
          %s530 = smul.addr %s529, 8
          %s531 = scalar_lea.hbm %s0, %s530
          %s533 = sshll.u32 %s531, 4
          %s534 = int_to_ptr.hbm [resolvable:$true] %s533
          %s535 = sshll.u32 %s526, 4
          %s536 = int_to_ptr.vmem [resolvable:$true] %s535
          %538 = dma.hbm_to_vmem [thread:$0]  %s534, 128, %s536, %s523
        $region60: #{petr_transformer_decoder.6} parent=55 // pred_fallthru
          _
        // Predicated region
        $region61: #{petr_transformer_decoder.6} parent=55 // pred_check
          %p539 = pneg %p101
        $region62: #{petr_transformer_decoder.6} parent=55 // pred_check_branch
          %541 = sbr.rel (%p539) target = $region64
        $region63: #{petr_transformer_decoder.6} parent=55 // pred_region
          %s542 = sand.u32 %s32, 1
          %s543 = scalar_lea.sflag [#allocation9], %s542
          %s544 = sand.u32 %s91, 1
          %s545 = smul.addr %s544, 8
          %s546 = scalar_lea.vmem [#allocation8], %s545
          %548 = vsyncadd %s543, 0
          %s549 = sadd.s32 %s40, %s39
          %s550 = smul.addr %s549, 8
          %s551 = scalar_lea.hbm %s1, %s550
          %s553 = sshll.u32 %s551, 4
          %s554 = int_to_ptr.hbm [resolvable:$true] %s553
          %s555 = sshll.u32 %s546, 4
          %s556 = int_to_ptr.vmem [resolvable:$true] %s555
          %558 = dma.hbm_to_vmem [thread:$0]  %s554, 128, %s556, %s543
        $region64: #{petr_transformer_decoder.6} parent=55 // pred_fallthru
          _
        // Predicated region
        $region65: #{petr_transformer_decoder.6} parent=55 // pred_check
          %p559 = pneg %p129
        $region66: #{petr_transformer_decoder.6} parent=55 // pred_check_branch
          %561 = sbr.rel (%p559) target = $region68
        $region67: #{petr_transformer_decoder.6} parent=55 // pred_region
          %s562 = sand.u32 %s32, 1
          %s563 = scalar_lea.sflag [#allocation9], %s562
          %s564 = sand.u32 %s119, 1
          %s565 = smul.addr %s564, 8
          %s566 = scalar_lea.vmem [#allocation10], %s565
          %568 = vsyncadd %s563, 0
          %s569 = sadd.s32 %s41, %s39
          %s570 = smul.addr %s569, 8
          %s571 = scalar_lea.hbm %s2, %s570
          %s573 = sshll.u32 %s571, 4
          %s574 = int_to_ptr.hbm [resolvable:$true] %s573
          %s575 = sshll.u32 %s566, 4
          %s576 = int_to_ptr.vmem [resolvable:$true] %s575
          %578 = dma.hbm_to_vmem [thread:$0]  %s574, 128, %s576, %s563
        $region68: #{petr_transformer_decoder.6} parent=55 // pred_fallthru
          _
        // Predicated region
        $region69: #{petr_transformer_decoder.6} parent=55 // pred_check
          %p579 = pneg %p157
        $region70: #{petr_transformer_decoder.6} parent=55 // pred_check_branch
          %581 = sbr.rel (%p579) target = $region72
        $region71: #{petr_transformer_decoder.6} parent=55 // pred_region
          %s582 = sand.u32 %s32, 1
          %s583 = scalar_lea.sflag [#allocation12], %s582
          %s584 = sand.u32 %s147, 1
          %s585 = smul.addr %s584, 8
          %s586 = scalar_lea.vmem [#allocation11], %s585
          %588 = vsyncadd %s583, 0
          %s589 = sadd.s32 %s41, %s39
          %s590 = smul.addr %s589, 8
          %s591 = scalar_lea.hbm %s3, %s590
          %s593 = sshll.u32 %s591, 4
          %s594 = int_to_ptr.hbm [resolvable:$true] %s593
          %s595 = sshll.u32 %s586, 4
          %s596 = int_to_ptr.vmem [resolvable:$true] %s595
          %598 = dma.hbm_to_vmem [thread:$0]  %s594, 128, %s596, %s583
        $region72: #{petr_transformer_decoder.6} parent=55 // pred_fallthru
          _
      $region56: #{petr_transformer_decoder.6} parent=5 // pred_fallthru
        _
      %p599 = scmp.le.s32.totalorder 1, %s32
      %p600 = scmp.lt.s32.totalorder %s32, 3
      %p601 = pnand %p599, %p600
      %p602 = pneg %p601
      // Predicated region
      $region73: #{petr_transformer_decoder.6} parent=5 // pred_check
        _
      $region74: #{petr_transformer_decoder.6} parent=5 // pred_check_branch
        %604 = sbr.rel (%p601) target = $region76
      $region75: #{petr_transformer_decoder.6} parent=5 // pred_region
        %s605 = ssub.s32 %s32, 1
        %s606 = sand.u32 %s66, 1
        %s607 = scalar_lea.sflag [#allocation7], %s606
        %s608 = sand.u32 %s66, 1
        %s609 = smul.addr %s608, 8
        %s610 = scalar_lea.vmem [#allocation6], %s609
        // Predicated region
        $region77: #{petr_transformer_decoder.6} parent=75 // pred_check
          %p611 = pneg %p79
        $region78: #{petr_transformer_decoder.6} parent=75 // pred_check_branch
          %613 = sbr.rel (%p611) target = $region80
        $region79: #{petr_transformer_decoder.6} parent=75 // pred_region
          %615 = dma.done %s607, 128
        $region80: #{petr_transformer_decoder.6} parent=75 // pred_fallthru
          _
        %s616 = sand.u32 %s37, 1
        %s617 = scalar_lea.sflag [#allocation9], %s616
        %s618 = sand.u32 %s94, 1
        %s619 = smul.addr %s618, 8
        %s620 = scalar_lea.vmem [#allocation8], %s619
        // Predicated region
        $region81: #{petr_transformer_decoder.6} parent=75 // pred_check
          %p621 = pneg %p107
        $region82: #{petr_transformer_decoder.6} parent=75 // pred_check_branch
          %623 = sbr.rel (%p621) target = $region84
        $region83: #{petr_transformer_decoder.6} parent=75 // pred_region
          %625 = dma.done %s617, 128
        $region84: #{petr_transformer_decoder.6} parent=75 // pred_fallthru
          _
        %s626 = sand.u32 %s37, 1
        %s627 = scalar_lea.sflag [#allocation9], %s626
        %s628 = sand.u32 %s122, 1
        %s629 = smul.addr %s628, 8
        %s630 = scalar_lea.vmem [#allocation10], %s629
        // Predicated region
        $region85: #{petr_transformer_decoder.6} parent=75 // pred_check
          %p631 = pneg %p135
        $region86: #{petr_transformer_decoder.6} parent=75 // pred_check_branch
          %633 = sbr.rel (%p631) target = $region88
        $region87: #{petr_transformer_decoder.6} parent=75 // pred_region
          %635 = dma.done %s627, 128
        $region88: #{petr_transformer_decoder.6} parent=75 // pred_fallthru
          _
        %s636 = sand.u32 %s37, 1
        %s637 = scalar_lea.sflag [#allocation12], %s636
        %s638 = sand.u32 %s150, 1
        %s639 = smul.addr %s638, 8
        %s640 = scalar_lea.vmem [#allocation11], %s639
        // Predicated region
        $region89: #{petr_transformer_decoder.6} parent=75 // pred_check
          %p641 = pneg %p163
        $region90: #{petr_transformer_decoder.6} parent=75 // pred_check_branch
          %643 = sbr.rel (%p641) target = $region92
        $region91: #{petr_transformer_decoder.6} parent=75 // pred_region
          %645 = dma.done %s637, 128
        $region92: #{petr_transformer_decoder.6} parent=75 // pred_fallthru
          _
        // Predicated region
        $region93: #{petr_transformer_decoder.6} parent=75 // pred_check
          %p646 = pneg %p226
        $region94: #{petr_transformer_decoder.6} parent=75 // pred_check_branch
          %648 = sbr.rel (%p646) target = $region96
        $region95: #{petr_transformer_decoder.6} parent=75 // pred_region
          %650 = dma.done [#allocation12], 256
        $region96: #{petr_transformer_decoder.6} parent=75 // pred_fallthru
          _
        // Predicated region
        $region97: #{petr_transformer_decoder.6} parent=75 // pred_check
          %p651 = pneg %p268
        $region98: #{petr_transformer_decoder.6} parent=75 // pred_check_branch
          %653 = sbr.rel (%p651) target = $region100
        $region99: #{petr_transformer_decoder.6} parent=75 // pred_region
          %655 = dma.done [#allocation15], 256
        $region100: #{petr_transformer_decoder.6} parent=75 // pred_fallthru
          _
        // Predicated region
        $region101: #{petr_transformer_decoder.6} parent=75 // pred_check
          %p656 = pneg %p289
        $region102: #{petr_transformer_decoder.6} parent=75 // pred_check_branch
          %658 = sbr.rel (%p656) target = $region104
        $region103: #{petr_transformer_decoder.6} parent=75 // pred_region
          %660 = dma.done [#allocation15], 16
        $region104: #{petr_transformer_decoder.6} parent=75 // pred_fallthru
          _
        // Predicated region
        $region105: #{petr_transformer_decoder.6} parent=75 // pred_check
          %p661 = pneg %p310
        $region106: #{petr_transformer_decoder.6} parent=75 // pred_check_branch
          %663 = sbr.rel (%p661) target = $region108
        $region107: #{petr_transformer_decoder.6} parent=75 // pred_region
          %665 = dma.done [#allocation18], 256
        $region108: #{petr_transformer_decoder.6} parent=75 // pred_fallthru
          _
        // Predicated region
        $region109: #{petr_transformer_decoder.6} parent=75 // pred_check
          %p666 = pneg %p331
        $region110: #{petr_transformer_decoder.6} parent=75 // pred_check_branch
          %668 = sbr.rel (%p666) target = $region112
        $region111: #{petr_transformer_decoder.6} parent=75 // pred_region
          %670 = dma.done [#allocation18], 16
        $region112: #{petr_transformer_decoder.6} parent=75 // pred_fallthru
          _
        // Predicated region
        $region113: #{petr_transformer_decoder.6} parent=75 // pred_check
          %p671 = pneg %p352
        $region114: #{petr_transformer_decoder.6} parent=75 // pred_check_branch
          %673 = sbr.rel (%p671) target = $region116
        $region115: #{petr_transformer_decoder.6} parent=75 // pred_region
          %675 = dma.done [#allocation21], 16
        $region116: #{petr_transformer_decoder.6} parent=75 // pred_fallthru
          _
        // Predicated region
        $region117: #{petr_transformer_decoder.6} parent=75 // pred_check
          %p676 = pneg %p373
        $region118: #{petr_transformer_decoder.6} parent=75 // pred_check_branch
          %678 = sbr.rel (%p676) target = $region120
        $region119: #{petr_transformer_decoder.6} parent=75 // pred_region
          %680 = dma.done [#allocation21], 16
        $region120: #{petr_transformer_decoder.6} parent=75 // pred_fallthru
          _
        %s681 = sand.u32 %s66, 1
        %s682 = scalar_lea.sflag [#allocation7], %s681
        %s683 = sand.u32 %s66, 1
        %s684 = smul.addr %s683, 8
        %s685 = scalar_lea.vmem [#allocation6], %s684
        %p686 = pneg %p79
        %p687 = pneg %p76
        %s688 = sand.u32 %s37, 1
        %s689 = scalar_lea.sflag [#allocation9], %s688
        %s690 = sand.u32 %s94, 1
        %s691 = smul.addr %s690, 8
        %s692 = scalar_lea.vmem [#allocation8], %s691
        %p693 = pneg %p107
        %p694 = pneg %p104
        %s695 = sand.u32 %s37, 1
        %s696 = scalar_lea.sflag [#allocation9], %s695
        %s697 = sand.u32 %s122, 1
        %s698 = smul.addr %s697, 8
        %s699 = scalar_lea.vmem [#allocation10], %s698
        %p700 = pneg %p135
        %p701 = pneg %p132
        %s702 = sand.u32 %s37, 1
        %s703 = scalar_lea.sflag [#allocation12], %s702
        %s704 = sand.u32 %s150, 1
        %s705 = smul.addr %s704, 8
        %s706 = scalar_lea.vmem [#allocation11], %s705
        %p707 = pneg %p163
        %p708 = pneg %p160
        %p709 = pneg %p184
        %p710 = pneg %p181
        %p711 = pneg %p205
        %p712 = pneg %p202
        %p713 = pneg %p226
        %p714 = pneg %p223
        %p715 = pneg %p247
        %p716 = pneg %p244
        %p717 = pneg %p268
        %p718 = pneg %p265
        %p719 = pneg %p289
        %p720 = pneg %p286
        %p721 = pneg %p310
        %p722 = pneg %p307
        %p723 = pneg %p331
        %p724 = pneg %p328
        %p725 = pneg %p352
        %p726 = pneg %p349
        %p727 = pneg %p373
        %p728 = pneg %p370
        %p729 = pneg %p401
        %p730 = pneg %p398
        %p731 = scmp.lt.s32.totalorder %s42, 1
        %s732 = scalar_select %p731, %s42, 1
        %p733 = scmp.lt.s32.totalorder %s43, 0
        %s734 = scalar_select %p733, %s43, 0
        %s735 = sadd.s32 %s734, %s732
        %s736 = smul.addr %s735, 8
        %s737 = scalar_lea.vmem %s14, %s736
        %p738 = scmp.lt.s32.totalorder %s42, 1
        %s739 = scalar_select %p738, %s42, 1
        %p740 = scmp.lt.s32.totalorder %s43, 0
        %s741 = scalar_select %p740, %s43, 0
        %s742 = sadd.s32 %s741, %s739
        %s743 = smul.addr %s742, 8
        %s744 = scalar_lea.vmem %s14, %s743
        %p746 = scmp.eq.s32.totalorder %s44, 0
        // Predicated region
        $region121: #{petr_transformer_decoder.6} parent=75 // pred_check
          %p747 = pneg %p746
        $region122: #{petr_transformer_decoder.6} parent=75 // pred_check_branch
          %749 = sbr.rel (%p747) target = $region124
        $region123: #{petr_transformer_decoder.6} parent=75 // pred_region
          %v750 = vld [vmem:[%s610] sm:$0xff]
          %v751 = vld [vmem:[%s620] sm:$0xff]
          %v752 = vadd.f32 %v750, %v751
          %v753 = vpack.c.bf16 %v752, %v752
          %v754 = vld [vmem:[%s4] sm:$0xf]
          %v755 = vld [vmem:[%s4 + $0x4] sm:$0xf]
          %v756 = vld [vmem:[%s4 + $0x8] sm:$0xf]
          %v757 = vld [vmem:[%s4 + $0xc] sm:$0xf]
          %v758 = vld [vmem:[%s5] sm:$0x1]
          %v760 = vperm.slane %v758, 0
          %v766 = vunpack.c.l.b16 %v754
          %v767 = vunpack.c.l.b16 %v755
          %v768 = vunpack.c.l.b16 %v756
          %v769 = vunpack.c.l.b16 %v757
          %v770 = vpack.c.b16 %v767, %v766
          %v771 = vpack.c.b16 %v769, %v768
          %vm774 = vcmask 261120
          %v776 = vsel %vm774, %v753, 0
          %778 = vmatpush.bf16.msra.mxu0 0
          %779 = vmatpush.bf16.msra.mxu0 0
          %780 = vmatpush.bf16.msra.mxu0 0
          %781 = vmatpush.bf16.msra.mxu0 0
          %782 = vmatpush.bf16.msra.mxu0 0
          %783 = vmatpush.bf16.msra.mxu0 0
          %784 = vmatpush.bf16.msra.mxu0 %v771
          %785 = vmatpush.bf16.msra.mxu0 %v770
          %786 = vmatmul.bf16.gmra.mxu0 %v776
          %v787 = vpop.f32.mrf.mxu0
          %v788 = vadd.f32 %v760, %v787
          %v789 = vpop.f32.mrf.mxu0
          %790 = vdwg.mxu0
          %v791 = vmul.f32 %v788, 0.35355338
          %793 = vrot.lane.b32.xlu0 %v791, 120
          %v794 = vpop.permute.xlu0 %793
          %796 = vrot.lane.b32.xlu0 %v791, 112
          %v797 = vpop.permute.xlu0 %796
          %799 = vrot.lane.b32.xlu0 %v791, 104
          %v800 = vpop.permute.xlu0 %799
          %v802 = vrot.slane %v797, 4
          %vm803 = vcmask 1047556
          %v804 = vsel %vm803, %v802, %v791
          %v805 = vrot.slane %v791, 4
          %v806 = vsel %vm803, %v797, %v805
          %v808 = vunpack.c.l.s4 1983009808
          %v809 = vunpack.c.0.s8 %v808
          %v810 = vperm.slane %v804, %v809
          %v812 = vunpack.c.l.s4 1983009808
          %v813 = vunpack.c.0.s8 %v812
          %v814 = vperm.slane %v806, %v813
          %v815 = vrot.slane %v800, 4
          %v816 = vsel %vm803, %v815, %v794
          %v817 = vrot.slane %v794, 4
          %v818 = vsel %vm803, %v800, %v817
          %v820 = vunpack.c.l.s4 1983009808
          %v821 = vunpack.c.0.s8 %v820
          %v822 = vperm.slane %v816, %v821
          %v824 = vunpack.c.l.s4 1983009808
          %v825 = vunpack.c.0.s8 %v824
          %v826 = vperm.slane %v818, %v825
          %v827 = vrot.slane %v822, 4
          %v828 = vsel %vm803, %v827, %v810
          %v829 = vrot.slane %v810, 4
          %v830 = vsel %vm803, %v822, %v829
          %v832 = vunpack.c.l.s4 1934713408
          %v833 = vunpack.c.0.s8 %v832
          %v834 = vperm.slane %v828, %v833
          %v836 = vunpack.c.l.s4 1934713408
          %v837 = vunpack.c.0.s8 %v836
          %v838 = vperm.slane %v830, %v837
          %v839 = vrot.slane %v826, 4
          %v840 = vsel %vm803, %v839, %v814
          %v841 = vrot.slane %v814, 4
          %v842 = vsel %vm803, %v826, %v841
          %v844 = vunpack.c.l.s4 1934713408
          %v845 = vunpack.c.0.s8 %v844
          %v846 = vperm.slane %v840, %v845
          %v848 = vunpack.c.l.s4 1934713408
          %v849 = vunpack.c.0.s8 %v848
          %v850 = vperm.slane %v842, %v849
          %v851 = vrot.slane %v834, 4
          %v852 = vsel %vm803, 0.0, %v851
          %v853 = vrot.slane %v838, 4
          %v854 = vsel %vm803, 0.0, %v853
          %v855 = vrot.slane %v846, 4
          %v856 = vsel %vm803, 0.0, %v855
          %v857 = vrot.slane %v850, 4
          %v858 = vsel %vm803, 0.0, %v857
          %v859 = vsel %vm803, %v853, %v834
          %v861 = vunpack.c.l.s4 1983009808
          %v862 = vunpack.c.0.s8 %v861
          %v863 = vperm.slane %v859, %v862
          %v864 = vrot.slane %v854, 4
          %v865 = vsel %vm803, %v864, %v852
          %v867 = vunpack.c.l.s4 1983009808
          %v868 = vunpack.c.0.s8 %v867
          %v869 = vperm.slane %v865, %v868
          %v870 = vsel %vm803, %v857, %v846
          %v872 = vunpack.c.l.s4 1983009808
          %v873 = vunpack.c.0.s8 %v872
          %v874 = vperm.slane %v870, %v873
          %v875 = vrot.slane %v858, 4
          %v876 = vsel %vm803, %v875, %v856
          %v878 = vunpack.c.l.s4 1983009808
          %v879 = vunpack.c.0.s8 %v878
          %v880 = vperm.slane %v876, %v879
          %v881 = vrot.slane %v869, 4
          %v882 = vsel %vm803, %v881, %v863
          %v883 = vrot.slane %v863, 4
          %v884 = vsel %vm803, %v869, %v883
          %v886 = vunpack.c.l.s4 1934713408
          %v887 = vunpack.c.0.s8 %v886
          %v888 = vperm.slane %v882, %v887
          %v890 = vunpack.c.l.s4 1934713408
          %v891 = vunpack.c.0.s8 %v890
          %v892 = vperm.slane %v884, %v891
          %v893 = vrot.slane %v880, 4
          %v894 = vsel %vm803, %v893, %v874
          %v895 = vrot.slane %v874, 4
          %v896 = vsel %vm803, %v880, %v895
          %v898 = vunpack.c.l.s4 1934713408
          %v899 = vunpack.c.0.s8 %v898
          %v900 = vperm.slane %v894, %v899
          %v902 = vunpack.c.l.s4 1934713408
          %v903 = vunpack.c.0.s8 %v902
          %v904 = vperm.slane %v896, %v903
          %v905 = vrot.slane %v900, 4
          %v906 = vsel %vm803, %v905, %v888
          %v907 = vrot.slane %v888, 4
          %v908 = vsel %vm803, %v900, %v907
          %v909 = vrot.slane %v904, 4
          %v910 = vsel %vm803, %v909, %v892
          %v911 = vrot.slane %v892, 4
          %v912 = vsel %vm803, %v904, %v911
          %v913 = vpack.c.bf16 %v906, %v906
          %v914 = vpack.c.bf16 %v908, %v908
          %v915 = vpack.c.bf16 %v910, %v910
          %v916 = vpack.c.bf16 %v912, %v912
          %vm917 = vcmask 60416
          %918 = vst.msk [vmem:[#allocation2] sm:$0xf] %vm917, %v913
          %919 = vst.msk [vmem:[#allocation2 + $0x4] sm:$0xf] %vm917, %v914
          %920 = vst.msk [vmem:[#allocation2 + $0x8] sm:$0xf] %vm917, %v915
          %921 = vst.msk [vmem:[#allocation2 + $0xc] sm:$0xf] %vm917, %v916
          %vm922 = vcmask 7168
          %923 = vst.msk [vmem:[#allocation3] sm:$0xff] %vm922, -inf
          %924 = vst.msk [vmem:[#allocation3 + $0x8] sm:$0xff] %vm922, -inf
          %925 = vst.msk [vmem:[#allocation3 + $0x10] sm:$0xff] %vm922, -inf
          %926 = vst.msk [vmem:[#allocation3 + $0x18] sm:$0xff] %vm922, -inf
          %927 = vst.msk [vmem:[#allocation4] sm:$0xff] %vm922, 0.0
          %928 = vst.msk [vmem:[#allocation4 + $0x8] sm:$0xff] %vm922, 0.0
          %929 = vst.msk [vmem:[#allocation4 + $0x10] sm:$0xff] %vm922, 0.0
          %930 = vst.msk [vmem:[#allocation4 + $0x18] sm:$0xff] %vm922, 0.0
          %vm931 = vcmask 64512
          %932 = vst.msk [vmem:[#allocation5] sm:$0xff] %vm931, 0.0
          %933 = vst.msk [vmem:[#allocation5 + $0x8] sm:$0xff] %vm931, 0.0
          %934 = vst.msk [vmem:[#allocation5 + $0x10] sm:$0xff] %vm931, 0.0
          %935 = vst.msk [vmem:[#allocation5 + $0x18] sm:$0xff] %vm931, 0.0
        $region124: #{petr_transformer_decoder.6} parent=75 // pred_fallthru
          _
        %v936 = vld [vmem:[%s630] sm:$0xff]
        %v937 = vld [vmem:[%s640] sm:$0xff]
        %v938 = vadd.f32 %v936, %v937
        %v939 = vpack.c.bf16 %v938, %v938
        %v940 = vld [vmem:[#allocation13] sm:$0xf]
        %v941 = vld [vmem:[#allocation13 + $0x4] sm:$0xf]
        %v942 = vld [vmem:[#allocation13 + $0x8] sm:$0xf]
        %v943 = vld [vmem:[#allocation13 + $0xc] sm:$0xf]
        %v944 = vld [vmem:[%s7] sm:$0x1]
        %v946 = vperm.slane %v944, 0
        %v952 = vunpack.c.l.b16 %v940
        %v953 = vunpack.c.l.b16 %v941
        %v954 = vunpack.c.l.b16 %v942
        %v955 = vunpack.c.l.b16 %v943
        %v956 = vpack.c.b16 %v953, %v952
        %v957 = vpack.c.b16 %v955, %v954
        %vm960 = vcmask 261120
        %v962 = vsel %vm960, %v939, 0
        %964 = vmatpush.bf16.msra.mxu0 0
        %965 = vmatpush.bf16.msra.mxu0 0
        %966 = vmatpush.bf16.msra.mxu0 0
        %967 = vmatpush.bf16.msra.mxu0 0
        %968 = vmatpush.bf16.msra.mxu0 0
        %969 = vmatpush.bf16.msra.mxu0 0
        %970 = vmatpush.bf16.msra.mxu0 %v957
        %971 = vmatpush.bf16.msra.mxu0 %v956
        %972 = vmatmul.bf16.gmra.mxu0 %v962
        %v973 = vpop.f32.mrf.mxu0
        %v974 = vadd.f32 %v946, %v973
        %v975 = vpop.f32.mrf.mxu0
        %976 = vdwg.mxu0
        %v977 = vpack.c.bf16 %v936, %v936
        %v978 = vld [vmem:[#allocation14] sm:$0xf]
        %v979 = vld [vmem:[#allocation14 + $0x4] sm:$0xf]
        %v980 = vld [vmem:[#allocation14 + $0x8] sm:$0xf]
        %v981 = vld [vmem:[#allocation14 + $0xc] sm:$0xf]
        %v982 = vld [vmem:[#allocation16] sm:$0x1]
        %v984 = vperm.slane %v982, 0
        %v990 = vunpack.c.l.b16 %v978
        %v991 = vunpack.c.l.b16 %v979
        %v992 = vunpack.c.l.b16 %v980
        %v993 = vunpack.c.l.b16 %v981
        %v994 = vpack.c.b16 %v991, %v990
        %v995 = vpack.c.b16 %v993, %v992
        %v999 = vsel %vm960, %v977, 0
        %1001 = vmatpush.bf16.msra.mxu0 0
        %1002 = vmatpush.bf16.msra.mxu0 0
        %1003 = vmatpush.bf16.msra.mxu0 0
        %1004 = vmatpush.bf16.msra.mxu0 0
        %1005 = vmatpush.bf16.msra.mxu0 0
        %1006 = vmatpush.bf16.msra.mxu0 0
        %1007 = vmatpush.bf16.msra.mxu0 %v995
        %1008 = vmatpush.bf16.msra.mxu0 %v994
        %1009 = vmatmul.bf16.gmra.mxu0 %v999
        %v1010 = vpop.f32.mrf.mxu0
        %v1011 = vadd.f32 %v984, %v1010
        %v1012 = vpop.f32.mrf.mxu0
        %1013 = vdwg.mxu0
        %1015 = vrot.lane.b32.xlu0 %v974, 120
        %v1016 = vpop.permute.xlu0 %1015
        %1018 = vrot.lane.b32.xlu0 %v974, 112
        %v1019 = vpop.permute.xlu0 %1018
        %1021 = vrot.lane.b32.xlu0 %v974, 104
        %v1022 = vpop.permute.xlu0 %1021
        %v1024 = vrot.slane %v1019, 4
        %vm1025 = vcmask 1047556
        %v1026 = vsel %vm1025, %v1024, %v974
        %v1027 = vrot.slane %v974, 4
        %v1028 = vsel %vm1025, %v1019, %v1027
        %v1030 = vunpack.c.l.s4 1983009808
        %v1031 = vunpack.c.0.s8 %v1030
        %v1032 = vperm.slane %v1026, %v1031
        %v1034 = vunpack.c.l.s4 1983009808
        %v1035 = vunpack.c.0.s8 %v1034
        %v1036 = vperm.slane %v1028, %v1035
        %v1037 = vrot.slane %v1022, 4
        %v1038 = vsel %vm1025, %v1037, %v1016
        %v1039 = vrot.slane %v1016, 4
        %v1040 = vsel %vm1025, %v1022, %v1039
        %v1042 = vunpack.c.l.s4 1983009808
        %v1043 = vunpack.c.0.s8 %v1042
        %v1044 = vperm.slane %v1038, %v1043
        %v1046 = vunpack.c.l.s4 1983009808
        %v1047 = vunpack.c.0.s8 %v1046
        %v1048 = vperm.slane %v1040, %v1047
        %v1049 = vrot.slane %v1044, 4
        %v1050 = vsel %vm1025, %v1049, %v1032
        %v1051 = vrot.slane %v1032, 4
        %v1052 = vsel %vm1025, %v1044, %v1051
        %v1054 = vunpack.c.l.s4 1934713408
        %v1055 = vunpack.c.0.s8 %v1054
        %v1056 = vperm.slane %v1050, %v1055
        %v1058 = vunpack.c.l.s4 1934713408
        %v1059 = vunpack.c.0.s8 %v1058
        %v1060 = vperm.slane %v1052, %v1059
        %v1061 = vrot.slane %v1048, 4
        %v1062 = vsel %vm1025, %v1061, %v1036
        %v1063 = vrot.slane %v1036, 4
        %v1064 = vsel %vm1025, %v1048, %v1063
        %v1066 = vunpack.c.l.s4 1934713408
        %v1067 = vunpack.c.0.s8 %v1066
        %v1068 = vperm.slane %v1062, %v1067
        %v1070 = vunpack.c.l.s4 1934713408
        %v1071 = vunpack.c.0.s8 %v1070
        %v1072 = vperm.slane %v1064, %v1071
        %v1073 = vrot.slane %v1056, 4
        %v1074 = vsel %vm1025, 0.0, %v1073
        %v1075 = vrot.slane %v1060, 4
        %v1076 = vsel %vm1025, 0.0, %v1075
        %v1077 = vrot.slane %v1068, 4
        %v1078 = vsel %vm1025, 0.0, %v1077
        %v1079 = vrot.slane %v1072, 4
        %v1080 = vsel %vm1025, 0.0, %v1079
        %v1081 = vsel %vm1025, %v1075, %v1056
        %v1083 = vunpack.c.l.s4 1983009808
        %v1084 = vunpack.c.0.s8 %v1083
        %v1085 = vperm.slane %v1081, %v1084
        %v1086 = vrot.slane %v1076, 4
        %v1087 = vsel %vm1025, %v1086, %v1074
        %v1089 = vunpack.c.l.s4 1983009808
        %v1090 = vunpack.c.0.s8 %v1089
        %v1091 = vperm.slane %v1087, %v1090
        %v1092 = vsel %vm1025, %v1079, %v1068
        %v1094 = vunpack.c.l.s4 1983009808
        %v1095 = vunpack.c.0.s8 %v1094
        %v1096 = vperm.slane %v1092, %v1095
        %v1097 = vrot.slane %v1080, 4
        %v1098 = vsel %vm1025, %v1097, %v1078
        %v1100 = vunpack.c.l.s4 1983009808
        %v1101 = vunpack.c.0.s8 %v1100
        %v1102 = vperm.slane %v1098, %v1101
        %v1103 = vrot.slane %v1091, 4
        %v1104 = vsel %vm1025, %v1103, %v1085
        %v1105 = vrot.slane %v1085, 4
        %v1106 = vsel %vm1025, %v1091, %v1105
        %v1108 = vunpack.c.l.s4 1934713408
        %v1109 = vunpack.c.0.s8 %v1108
        %v1110 = vperm.slane %v1104, %v1109
        %v1112 = vunpack.c.l.s4 1934713408
        %v1113 = vunpack.c.0.s8 %v1112
        %v1114 = vperm.slane %v1106, %v1113
        %v1115 = vrot.slane %v1102, 4
        %v1116 = vsel %vm1025, %v1115, %v1096
        %v1117 = vrot.slane %v1096, 4
        %v1118 = vsel %vm1025, %v1102, %v1117
        %v1120 = vunpack.c.l.s4 1934713408
        %v1121 = vunpack.c.0.s8 %v1120
        %v1122 = vperm.slane %v1116, %v1121
        %v1124 = vunpack.c.l.s4 1934713408
        %v1125 = vunpack.c.0.s8 %v1124
        %v1126 = vperm.slane %v1118, %v1125
        %v1127 = vrot.slane %v1122, 4
        %v1128 = vsel %vm1025, %v1127, %v1110
        %v1129 = vrot.slane %v1110, 4
        %v1130 = vsel %vm1025, %v1122, %v1129
        %v1131 = vrot.slane %v1126, 4
        %v1132 = vsel %vm1025, %v1131, %v1114
        %v1133 = vrot.slane %v1114, 4
        %v1134 = vsel %vm1025, %v1126, %v1133
        %v1135 = vpack.c.bf16 %v1128, %v1128
        %v1136 = vpack.c.bf16 %v1130, %v1130
        %v1137 = vpack.c.bf16 %v1132, %v1132
        %v1138 = vpack.c.bf16 %v1134, %v1134
        %1140 = vrot.lane.b32.xlu0 %v1011, 120
        %v1141 = vpop.permute.xlu0 %1140
        %1143 = vrot.lane.b32.xlu0 %v1011, 112
        %v1144 = vpop.permute.xlu0 %1143
        %1146 = vrot.lane.b32.xlu0 %v1011, 104
        %v1147 = vpop.permute.xlu0 %1146
        %v1149 = vrot.slane %v1144, 4
        %v1150 = vsel %vm1025, %v1149, %v1011
        %v1151 = vrot.slane %v1011, 4
        %v1152 = vsel %vm1025, %v1144, %v1151
        %v1154 = vunpack.c.l.s4 1983009808
        %v1155 = vunpack.c.0.s8 %v1154
        %v1156 = vperm.slane %v1150, %v1155
        %v1158 = vunpack.c.l.s4 1983009808
        %v1159 = vunpack.c.0.s8 %v1158
        %v1160 = vperm.slane %v1152, %v1159
        %v1161 = vrot.slane %v1147, 4
        %v1162 = vsel %vm1025, %v1161, %v1141
        %v1163 = vrot.slane %v1141, 4
        %v1164 = vsel %vm1025, %v1147, %v1163
        %v1166 = vunpack.c.l.s4 1983009808
        %v1167 = vunpack.c.0.s8 %v1166
        %v1168 = vperm.slane %v1162, %v1167
        %v1170 = vunpack.c.l.s4 1983009808
        %v1171 = vunpack.c.0.s8 %v1170
        %v1172 = vperm.slane %v1164, %v1171
        %v1173 = vrot.slane %v1168, 4
        %v1174 = vsel %vm1025, %v1173, %v1156
        %v1175 = vrot.slane %v1156, 4
        %v1176 = vsel %vm1025, %v1168, %v1175
        %v1178 = vunpack.c.l.s4 1934713408
        %v1179 = vunpack.c.0.s8 %v1178
        %v1180 = vperm.slane %v1174, %v1179
        %v1182 = vunpack.c.l.s4 1934713408
        %v1183 = vunpack.c.0.s8 %v1182
        %v1184 = vperm.slane %v1176, %v1183
        %v1185 = vrot.slane %v1172, 4
        %v1186 = vsel %vm1025, %v1185, %v1160
        %v1187 = vrot.slane %v1160, 4
        %v1188 = vsel %vm1025, %v1172, %v1187
        %v1190 = vunpack.c.l.s4 1934713408
        %v1191 = vunpack.c.0.s8 %v1190
        %v1192 = vperm.slane %v1186, %v1191
        %v1194 = vunpack.c.l.s4 1934713408
        %v1195 = vunpack.c.0.s8 %v1194
        %v1196 = vperm.slane %v1188, %v1195
        %v1197 = vrot.slane %v1180, 4
        %v1198 = vsel %vm1025, 0.0, %v1197
        %v1199 = vrot.slane %v1184, 4
        %v1200 = vsel %vm1025, 0.0, %v1199
        %v1201 = vrot.slane %v1192, 4
        %v1202 = vsel %vm1025, 0.0, %v1201
        %v1203 = vrot.slane %v1196, 4
        %v1204 = vsel %vm1025, 0.0, %v1203
        %v1205 = vsel %vm1025, %v1199, %v1180
        %v1207 = vunpack.c.l.s4 1983009808
        %v1208 = vunpack.c.0.s8 %v1207
        %v1209 = vperm.slane %v1205, %v1208
        %v1210 = vrot.slane %v1200, 4
        %v1211 = vsel %vm1025, %v1210, %v1198
        %v1213 = vunpack.c.l.s4 1983009808
        %v1214 = vunpack.c.0.s8 %v1213
        %v1215 = vperm.slane %v1211, %v1214
        %v1216 = vsel %vm1025, %v1203, %v1192
        %v1218 = vunpack.c.l.s4 1983009808
        %v1219 = vunpack.c.0.s8 %v1218
        %v1220 = vperm.slane %v1216, %v1219
        %v1221 = vrot.slane %v1204, 4
        %v1222 = vsel %vm1025, %v1221, %v1202
        %v1224 = vunpack.c.l.s4 1983009808
        %v1225 = vunpack.c.0.s8 %v1224
        %v1226 = vperm.slane %v1222, %v1225
        %v1227 = vrot.slane %v1215, 4
        %v1228 = vsel %vm1025, %v1227, %v1209
        %v1229 = vrot.slane %v1209, 4
        %v1230 = vsel %vm1025, %v1215, %v1229
        %v1232 = vunpack.c.l.s4 1934713408
        %v1233 = vunpack.c.0.s8 %v1232
        %v1234 = vperm.slane %v1228, %v1233
        %v1236 = vunpack.c.l.s4 1934713408
        %v1237 = vunpack.c.0.s8 %v1236
        %v1238 = vperm.slane %v1230, %v1237
        %v1239 = vrot.slane %v1226, 4
        %v1240 = vsel %vm1025, %v1239, %v1220
        %v1241 = vrot.slane %v1220, 4
        %v1242 = vsel %vm1025, %v1226, %v1241
        %v1244 = vunpack.c.l.s4 1934713408
        %v1245 = vunpack.c.0.s8 %v1244
        %v1246 = vperm.slane %v1240, %v1245
        %v1248 = vunpack.c.l.s4 1934713408
        %v1249 = vunpack.c.0.s8 %v1248
        %v1250 = vperm.slane %v1242, %v1249
        %v1251 = vrot.slane %v1246, 4
        %v1252 = vsel %vm1025, %v1251, %v1234
        %v1253 = vrot.slane %v1234, 4
        %v1254 = vsel %vm1025, %v1246, %v1253
        %v1255 = vrot.slane %v1250, 4
        %v1256 = vsel %vm1025, %v1255, %v1238
        %v1257 = vrot.slane %v1238, 4
        %v1258 = vsel %vm1025, %v1250, %v1257
        %v1259 = vpack.c.bf16 %v1252, %v1252
        %v1260 = vpack.c.bf16 %v1254, %v1254
        %v1261 = vpack.c.bf16 %v1256, %v1256
        %v1262 = vpack.c.bf16 %v1258, %v1258
        %v1263 = vld [vmem:[#allocation2] sm:$0xf]
        %v1264 = vld [vmem:[#allocation2 + $0x4] sm:$0xf]
        %v1265 = vld [vmem:[#allocation2 + $0x8] sm:$0xf]
        %v1266 = vld [vmem:[#allocation2 + $0xc] sm:$0xf]
        %vm1267 = vcmask 64512
        %v1269 = vsel %vm1267, %v1263, 0
        %v1272 = vsel %vm1267, %v1135, 0
        %1274 = vmatpush.bf16.xpose.msra.mxu0 0
        %1275 = vmatpush.bf16.xpose.msra.mxu0 0
        %1276 = vmatpush.bf16.xpose.msra.mxu0 0
        %1277 = vmatpush.bf16.xpose.msra.mxu0 0
        %1278 = vmatpush.bf16.xpose.msra.mxu0 0
        %1279 = vmatpush.bf16.xpose.msra.mxu0 0
        %1280 = vmatpush.bf16.xpose.msra.mxu0 0
        %1281 = vmatpush.bf16.xpose.msra.mxu0 %v1272
        %1282 = vmatmul.bf16.gmra.mxu0 %v1269
        %v1283 = vpop.f32.mrf.mxu0
        %v1284 = vadd.f32 0.0, %v1283
        %v1285 = vpop.f32.mrf.mxu0
        %1286 = vdwg.mxu0
        %v1288 = vsel %vm1267, %v1264, 0
        %v1291 = vsel %vm1267, %v1136, 0
        %1293 = vmatpush.bf16.xpose.msra.mxu0 0
        %1294 = vmatpush.bf16.xpose.msra.mxu0 0
        %1295 = vmatpush.bf16.xpose.msra.mxu0 0
        %1296 = vmatpush.bf16.xpose.msra.mxu0 0
        %1297 = vmatpush.bf16.xpose.msra.mxu0 0
        %1298 = vmatpush.bf16.xpose.msra.mxu0 0
        %1299 = vmatpush.bf16.xpose.msra.mxu0 0
        %1300 = vmatpush.bf16.xpose.msra.mxu0 %v1291
        %1301 = vmatmul.bf16.gmra.mxu0 %v1288
        %v1302 = vpop.f32.mrf.mxu0
        %v1303 = vadd.f32 0.0, %v1302
        %v1304 = vpop.f32.mrf.mxu0
        %1305 = vdwg.mxu0
        %v1307 = vsel %vm1267, %v1265, 0
        %v1310 = vsel %vm1267, %v1137, 0
        %1312 = vmatpush.bf16.xpose.msra.mxu0 0
        %1313 = vmatpush.bf16.xpose.msra.mxu0 0
        %1314 = vmatpush.bf16.xpose.msra.mxu0 0
        %1315 = vmatpush.bf16.xpose.msra.mxu0 0
        %1316 = vmatpush.bf16.xpose.msra.mxu0 0
        %1317 = vmatpush.bf16.xpose.msra.mxu0 0
        %1318 = vmatpush.bf16.xpose.msra.mxu0 0
        %1319 = vmatpush.bf16.xpose.msra.mxu0 %v1310
        %1320 = vmatmul.bf16.gmra.mxu0 %v1307
        %v1321 = vpop.f32.mrf.mxu0
        %v1322 = vadd.f32 0.0, %v1321
        %v1323 = vpop.f32.mrf.mxu0
        %1324 = vdwg.mxu0
        %v1326 = vsel %vm1267, %v1266, 0
        %v1329 = vsel %vm1267, %v1138, 0
        %1331 = vmatpush.bf16.xpose.msra.mxu0 0
        %1332 = vmatpush.bf16.xpose.msra.mxu0 0
        %1333 = vmatpush.bf16.xpose.msra.mxu0 0
        %1334 = vmatpush.bf16.xpose.msra.mxu0 0
        %1335 = vmatpush.bf16.xpose.msra.mxu0 0
        %1336 = vmatpush.bf16.xpose.msra.mxu0 0
        %1337 = vmatpush.bf16.xpose.msra.mxu0 0
        %1338 = vmatpush.bf16.xpose.msra.mxu0 %v1329
        %1339 = vmatmul.bf16.gmra.mxu0 %v1326
        %v1340 = vpop.f32.mrf.mxu0
        %v1341 = vadd.f32 0.0, %v1340
        %v1342 = vpop.f32.mrf.mxu0
        %1343 = vdwg.mxu0
        %v1344 = vld [vmem:[#allocation3] sm:$0xff]
        %v1345 = vld [vmem:[#allocation3 + $0x8] sm:$0xff]
        %v1346 = vld [vmem:[#allocation3 + $0x10] sm:$0xff]
        %v1347 = vld [vmem:[#allocation3 + $0x18] sm:$0xff]
        %v1348 = vsel %vm1267, %v1284, -inf
        %1349 = vmax.xlane.f32.xlu0 %v1348
        %v1350 = vpop.xlane.xlu0 %1349
        %v1351 = vsel %vm1267, %v1303, -inf
        %1352 = vmax.xlane.f32.xlu0 %v1351
        %v1353 = vpop.xlane.xlu0 %1352
        %v1354 = vsel %vm1267, %v1322, -inf
        %1355 = vmax.xlane.f32.xlu0 %v1354
        %v1356 = vpop.xlane.xlu0 %1355
        %v1357 = vsel %vm1267, %v1341, -inf
        %1358 = vmax.xlane.f32.xlu0 %v1357
        %v1359 = vpop.xlane.xlu0 %1358
        %v1360 = vmax.f32 %v1344, %v1350
        %v1361 = vmax.f32 %v1345, %v1353
        %v1362 = vmax.f32 %v1346, %v1356
        %v1363 = vmax.f32 %v1347, %v1359
        %v1364 = vsub.f32 %v1344, %v1360
        %v1365 = vsub.f32 %v1345, %v1361
        %v1366 = vsub.f32 %v1346, %v1362
        %v1367 = vsub.f32 %v1347, %v1363
        %v1368 = vmul.f32 %v1364, 1.442695
        %v1369 = vpow.pop %v1368
        %v1370 = vmul.f32 %v1365, 1.442695
        %v1371 = vpow.pop %v1370
        %v1372 = vmul.f32 %v1366, 1.442695
        %v1373 = vpow.pop %v1372
        %v1374 = vmul.f32 %v1367, 1.442695
        %v1375 = vpow.pop %v1374
        %1377 = vset.pattern.permute.xlu0 0
        %1378 = vperm.xlu0 %1377, %v1360
        %v1379 = vpop.permute.xlu0 %1378
        %1382 = vset.pattern.permute.xlu0 0
        %1383 = vperm.xlu0 %1382, %v1361
        %v1384 = vpop.permute.xlu0 %1383
        %1387 = vset.pattern.permute.xlu0 0
        %1388 = vperm.xlu0 %1387, %v1362
        %v1389 = vpop.permute.xlu0 %1388
        %1392 = vset.pattern.permute.xlu0 0
        %1393 = vperm.xlu0 %1392, %v1363
        %v1394 = vpop.permute.xlu0 %1393
        %v1396 = vsub.f32 %v1284, %v1379
        %v1397 = vsub.f32 %v1303, %v1384
        %v1398 = vsub.f32 %v1322, %v1389
        %v1399 = vsub.f32 %v1341, %v1394
        %v1400 = vmul.f32 %v1396, 1.442695
        %v1401 = vpow.pop %v1400
        %v1402 = vmul.f32 %v1397, 1.442695
        %v1403 = vpow.pop %v1402
        %v1404 = vmul.f32 %v1398, 1.442695
        %v1405 = vpow.pop %v1404
        %v1406 = vmul.f32 %v1399, 1.442695
        %v1407 = vpow.pop %v1406
        %v1408 = vld [vmem:[#allocation4] sm:$0xff]
        %v1409 = vld [vmem:[#allocation4 + $0x8] sm:$0xff]
        %v1410 = vld [vmem:[#allocation4 + $0x10] sm:$0xff]
        %v1411 = vld [vmem:[#allocation4 + $0x18] sm:$0xff]
        %v1412 = vmul.f32 %v1369, %v1408
        %v1413 = vmul.f32 %v1371, %v1409
        %v1414 = vmul.f32 %v1373, %v1410
        %v1415 = vmul.f32 %v1375, %v1411
        %v1416 = vsel %vm1267, %v1401, 0.0
        %1417 = vadd.xlane.f32.xlu0 %v1416
        %v1418 = vpop.xlane.xlu0 %1417
        %v1419 = vsel %vm1267, %v1403, 0.0
        %1420 = vadd.xlane.f32.xlu0 %v1419
        %v1421 = vpop.xlane.xlu0 %1420
        %v1422 = vsel %vm1267, %v1405, 0.0
        %1423 = vadd.xlane.f32.xlu0 %v1422
        %v1424 = vpop.xlane.xlu0 %1423
        %v1425 = vsel %vm1267, %v1407, 0.0
        %1426 = vadd.xlane.f32.xlu0 %v1425
        %v1427 = vpop.xlane.xlu0 %1426
        %v1428 = vadd.f32 %v1412, %v1418
        %v1429 = vadd.f32 %v1413, %v1421
        %v1430 = vadd.f32 %v1414, %v1424
        %v1431 = vadd.f32 %v1415, %v1427
        %vm1432 = vcmask 7168
        %1433 = vst.msk [vmem:[#allocation4] sm:$0xff] %vm1432, %v1428
        %1434 = vst.msk [vmem:[#allocation4 + $0x8] sm:$0xff] %vm1432, %v1429
        %1435 = vst.msk [vmem:[#allocation4 + $0x10] sm:$0xff] %vm1432, %v1430
        %1436 = vst.msk [vmem:[#allocation4 + $0x18] sm:$0xff] %vm1432, %v1431
        %v1437 = vld [vmem:[#allocation5] sm:$0xff]
        %v1438 = vld [vmem:[#allocation5 + $0x8] sm:$0xff]
        %v1439 = vld [vmem:[#allocation5 + $0x10] sm:$0xff]
        %v1440 = vld [vmem:[#allocation5 + $0x18] sm:$0xff]
        %1442 = vset.pattern.permute.xlu0 0
        %1443 = vperm.xlu0 %1442, %v1369
        %v1444 = vpop.permute.xlu0 %1443
        %1447 = vset.pattern.permute.xlu0 0
        %1448 = vperm.xlu0 %1447, %v1371
        %v1449 = vpop.permute.xlu0 %1448
        %1452 = vset.pattern.permute.xlu0 0
        %1453 = vperm.xlu0 %1452, %v1373
        %v1454 = vpop.permute.xlu0 %1453
        %1457 = vset.pattern.permute.xlu0 0
        %1458 = vperm.xlu0 %1457, %v1375
        %v1459 = vpop.permute.xlu0 %1458
        %v1461 = vmul.f32 %v1444, %v1437
        %v1462 = vmul.f32 %v1449, %v1438
        %v1463 = vmul.f32 %v1454, %v1439
        %v1464 = vmul.f32 %v1459, %v1440
        %v1465 = vpack.c.bf16 %v1401, %v1401
        %v1466 = vpack.c.bf16 %v1403, %v1403
        %v1467 = vpack.c.bf16 %v1405, %v1405
        %v1468 = vpack.c.bf16 %v1407, %v1407
        %v1470 = vsel %vm1267, %v1465, 0
        %vm1472 = vcmask 1043456
        %v1474 = vsel %vm1472, %v1259, 0
        %1476 = vmatpush.bf16.msra.mxu0 0
        %1477 = vmatpush.bf16.msra.mxu0 0
        %1478 = vmatpush.bf16.msra.mxu0 0
        %1479 = vmatpush.bf16.msra.mxu0 0
        %1480 = vmatpush.bf16.msra.mxu0 0
        %1481 = vmatpush.bf16.msra.mxu0 0
        %1482 = vmatpush.bf16.msra.mxu0 0
        %1483 = vmatpush.bf16.msra.mxu0 %v1474
        %1484 = vmatmul.bf16.gmra.mxu0 %v1470
        %v1485 = vpop.f32.mrf.mxu0
        %v1486 = vadd.f32 0.0, %v1485
        %v1487 = vpop.f32.mrf.mxu0
        %1488 = vdwg.mxu0
        %v1490 = vsel %vm1267, %v1466, 0
        %v1493 = vsel %vm1472, %v1260, 0
        %1495 = vmatpush.bf16.msra.mxu0 0
        %1496 = vmatpush.bf16.msra.mxu0 0
        %1497 = vmatpush.bf16.msra.mxu0 0
        %1498 = vmatpush.bf16.msra.mxu0 0
        %1499 = vmatpush.bf16.msra.mxu0 0
        %1500 = vmatpush.bf16.msra.mxu0 0
        %1501 = vmatpush.bf16.msra.mxu0 0
        %1502 = vmatpush.bf16.msra.mxu0 %v1493
        %1503 = vmatmul.bf16.gmra.mxu0 %v1490
        %v1504 = vpop.f32.mrf.mxu0
        %v1505 = vadd.f32 0.0, %v1504
        %v1506 = vpop.f32.mrf.mxu0
        %1507 = vdwg.mxu0
        %v1509 = vsel %vm1267, %v1467, 0
        %v1512 = vsel %vm1472, %v1261, 0
        %1514 = vmatpush.bf16.msra.mxu0 0
        %1515 = vmatpush.bf16.msra.mxu0 0
        %1516 = vmatpush.bf16.msra.mxu0 0
        %1517 = vmatpush.bf16.msra.mxu0 0
        %1518 = vmatpush.bf16.msra.mxu0 0
        %1519 = vmatpush.bf16.msra.mxu0 0
        %1520 = vmatpush.bf16.msra.mxu0 0
        %1521 = vmatpush.bf16.msra.mxu0 %v1512
        %1522 = vmatmul.bf16.gmra.mxu0 %v1509
        %v1523 = vpop.f32.mrf.mxu0
        %v1524 = vadd.f32 0.0, %v1523
        %v1525 = vpop.f32.mrf.mxu0
        %1526 = vdwg.mxu0
        %v1528 = vsel %vm1267, %v1468, 0
        %v1531 = vsel %vm1472, %v1262, 0
        %1533 = vmatpush.bf16.msra.mxu0 0
        %1534 = vmatpush.bf16.msra.mxu0 0
        %1535 = vmatpush.bf16.msra.mxu0 0
        %1536 = vmatpush.bf16.msra.mxu0 0
        %1537 = vmatpush.bf16.msra.mxu0 0
        %1538 = vmatpush.bf16.msra.mxu0 0
        %1539 = vmatpush.bf16.msra.mxu0 0
        %1540 = vmatpush.bf16.msra.mxu0 %v1531
        %1541 = vmatmul.bf16.gmra.mxu0 %v1528
        %v1542 = vpop.f32.mrf.mxu0
        %v1543 = vadd.f32 0.0, %v1542
        %v1544 = vpop.f32.mrf.mxu0
        %1545 = vdwg.mxu0
        %v1546 = vadd.f32 %v1461, %v1486
        %v1547 = vadd.f32 %v1462, %v1505
        %v1548 = vadd.f32 %v1463, %v1524
        %v1549 = vadd.f32 %v1464, %v1543
        %1550 = vst.msk [vmem:[#allocation5] sm:$0xff] %vm1267, %v1546
        %1551 = vst.msk [vmem:[#allocation5 + $0x8] sm:$0xff] %vm1267, %v1547
        %1552 = vst.msk [vmem:[#allocation5 + $0x10] sm:$0xff] %vm1267, %v1548
        %1553 = vst.msk [vmem:[#allocation5 + $0x18] sm:$0xff] %vm1267, %v1549
        %1554 = vst.msk [vmem:[#allocation3] sm:$0xff] %vm1432, %v1360
        %1555 = vst.msk [vmem:[#allocation3 + $0x8] sm:$0xff] %vm1432, %v1361
        %1556 = vst.msk [vmem:[#allocation3 + $0x10] sm:$0xff] %vm1432, %v1362
        %1557 = vst.msk [vmem:[#allocation3 + $0x18] sm:$0xff] %vm1432, %v1363
        // Predicated region
        $region125: #{petr_transformer_decoder.6} parent=75 // pred_check
          %p1558 = pneg %p746
        $region126: #{petr_transformer_decoder.6} parent=75 // pred_check_branch
          %1560 = sbr.rel (%p1558) target = $region128
        $region127: #{petr_transformer_decoder.6} parent=75 // pred_region
          %v1561 = vld [vmem:[#allocation4] sm:$0xff]
          %v1562 = vld [vmem:[#allocation4 + $0x8] sm:$0xff]
          %v1563 = vld [vmem:[#allocation4 + $0x10] sm:$0xff]
          %v1564 = vld [vmem:[#allocation4 + $0x18] sm:$0xff]
          %v1565 = vrcp.pop %v1561
          %v1566 = vrcp.pop %v1562
          %v1567 = vrcp.pop %v1563
          %v1568 = vrcp.pop %v1564
          %v1569 = vld [vmem:[#allocation5] sm:$0xff]
          %v1570 = vld [vmem:[#allocation5 + $0x8] sm:$0xff]
          %v1571 = vld [vmem:[#allocation5 + $0x10] sm:$0xff]
          %v1572 = vld [vmem:[#allocation5 + $0x18] sm:$0xff]
          %1574 = vset.pattern.permute.xlu0 0
          %1575 = vperm.xlu0 %1574, %v1565
          %v1576 = vpop.permute.xlu0 %1575
          %1579 = vset.pattern.permute.xlu0 0
          %1580 = vperm.xlu0 %1579, %v1566
          %v1581 = vpop.permute.xlu0 %1580
          %1584 = vset.pattern.permute.xlu0 0
          %1585 = vperm.xlu0 %1584, %v1567
          %v1586 = vpop.permute.xlu0 %1585
          %1589 = vset.pattern.permute.xlu0 0
          %1590 = vperm.xlu0 %1589, %v1568
          %v1591 = vpop.permute.xlu0 %1590
          %v1593 = vmul.f32 %v1569, %v1576
          %v1594 = vmul.f32 %v1570, %v1581
          %v1595 = vmul.f32 %v1571, %v1586
          %v1596 = vmul.f32 %v1572, %v1591
          %v1597 = vrot.slane %v1595, 4
          %v1598 = vsel %vm1025, %v1597, %v1593
          %v1599 = vrot.slane %v1593, 4
          %v1600 = vsel %vm1025, %v1595, %v1599
          %v1602 = vunpack.c.l.s4 1983009808
          %v1603 = vunpack.c.0.s8 %v1602
          %v1604 = vperm.slane %v1598, %v1603
          %v1606 = vunpack.c.l.s4 1983009808
          %v1607 = vunpack.c.0.s8 %v1606
          %v1608 = vperm.slane %v1600, %v1607
          %v1609 = vrot.slane %v1596, 4
          %v1610 = vsel %vm1025, %v1609, %v1594
          %v1611 = vrot.slane %v1594, 4
          %v1612 = vsel %vm1025, %v1596, %v1611
          %v1614 = vunpack.c.l.s4 1983009808
          %v1615 = vunpack.c.0.s8 %v1614
          %v1616 = vperm.slane %v1610, %v1615
          %v1618 = vunpack.c.l.s4 1983009808
          %v1619 = vunpack.c.0.s8 %v1618
          %v1620 = vperm.slane %v1612, %v1619
          %v1621 = vrot.slane %v1616, 4
          %v1622 = vsel %vm1025, %v1621, %v1604
          %v1623 = vrot.slane %v1604, 4
          %v1624 = vsel %vm1025, %v1616, %v1623
          %v1626 = vunpack.c.l.s4 1934713408
          %v1627 = vunpack.c.0.s8 %v1626
          %v1628 = vperm.slane %v1622, %v1627
          %v1630 = vunpack.c.l.s4 1934713408
          %v1631 = vunpack.c.0.s8 %v1630
          %v1632 = vperm.slane %v1624, %v1631
          %v1633 = vrot.slane %v1620, 4
          %v1634 = vsel %vm1025, %v1633, %v1608
          %v1635 = vrot.slane %v1608, 4
          %v1636 = vsel %vm1025, %v1620, %v1635
          %v1638 = vunpack.c.l.s4 1934713408
          %v1639 = vunpack.c.0.s8 %v1638
          %v1640 = vperm.slane %v1634, %v1639
          %v1642 = vunpack.c.l.s4 1934713408
          %v1643 = vunpack.c.0.s8 %v1642
          %v1644 = vperm.slane %v1636, %v1643
          %v1645 = vrot.slane %v1628, 4
          %v1646 = vsel %vm1025, 0.0, %v1645
          %v1647 = vrot.slane %v1632, 4
          %v1648 = vsel %vm1025, 0.0, %v1647
          %v1649 = vrot.slane %v1640, 4
          %v1650 = vsel %vm1025, 0.0, %v1649
          %v1651 = vrot.slane %v1644, 4
          %v1652 = vsel %vm1025, 0.0, %v1651
          %v1653 = vsel %vm1025, %v1647, %v1628
          %v1655 = vunpack.c.l.s4 1983009808
          %v1656 = vunpack.c.0.s8 %v1655
          %v1657 = vperm.slane %v1653, %v1656
          %v1658 = vrot.slane %v1648, 4
          %v1659 = vsel %vm1025, %v1658, %v1646
          %v1661 = vunpack.c.l.s4 1983009808
          %v1662 = vunpack.c.0.s8 %v1661
          %v1663 = vperm.slane %v1659, %v1662
          %v1664 = vsel %vm1025, %v1651, %v1640
          %v1666 = vunpack.c.l.s4 1983009808
          %v1667 = vunpack.c.0.s8 %v1666
          %v1668 = vperm.slane %v1664, %v1667
          %v1669 = vrot.slane %v1652, 4
          %v1670 = vsel %vm1025, %v1669, %v1650
          %v1672 = vunpack.c.l.s4 1983009808
          %v1673 = vunpack.c.0.s8 %v1672
          %v1674 = vperm.slane %v1670, %v1673
          %v1675 = vrot.slane %v1663, 4
          %v1676 = vsel %vm1025, %v1675, %v1657
          %v1677 = vrot.slane %v1657, 4
          %v1678 = vsel %vm1025, %v1663, %v1677
          %v1680 = vunpack.c.l.s4 1934713408
          %v1681 = vunpack.c.0.s8 %v1680
          %v1682 = vperm.slane %v1676, %v1681
          %v1684 = vunpack.c.l.s4 1934713408
          %v1685 = vunpack.c.0.s8 %v1684
          %v1686 = vperm.slane %v1678, %v1685
          %v1687 = vrot.slane %v1674, 4
          %v1688 = vsel %vm1025, %v1687, %v1668
          %v1689 = vrot.slane %v1668, 4
          %v1690 = vsel %vm1025, %v1674, %v1689
          %v1692 = vunpack.c.l.s4 1934713408
          %v1693 = vunpack.c.0.s8 %v1692
          %v1694 = vperm.slane %v1688, %v1693
          %v1696 = vunpack.c.l.s4 1934713408
          %v1697 = vunpack.c.0.s8 %v1696
          %v1698 = vperm.slane %v1690, %v1697
          %v1699 = vrot.slane %v1694, 4
          %v1700 = vsel %vm1025, %v1699, %v1682
          %v1701 = vrot.slane %v1682, 4
          %v1702 = vsel %vm1025, %v1694, %v1701
          %v1703 = vrot.slane %v1698, 4
          %v1704 = vsel %vm1025, %v1703, %v1686
          %v1705 = vrot.slane %v1686, 4
          %v1706 = vsel %vm1025, %v1698, %v1705
          %1708 = vrot.lane.b32.xlu0 %v1702, 8
          %v1709 = vpop.permute.xlu0 %1708
          %1712 = vrot.lane.b32.xlu0 %v1704, 16
          %v1713 = vpop.permute.xlu0 %1712
          %1716 = vrot.lane.b32.xlu0 %v1706, 24
          %v1717 = vpop.permute.xlu0 %1716
          %v1719 = vsel %vm1267, %v1700, %v1709
          %vm1720 = vcmask 130048
          %v1721 = vsel %vm1720, %v1719, %v1713
          %vm1722 = vcmask 195584
          %v1723 = vsel %vm1722, %v1721, %v1717
          %v1724 = vpack.c.bf16 %v1723, %v1723
          %v1725 = vld [vmem:[#allocation17] sm:$0xf]
          %v1726 = vld [vmem:[#allocation17 + $0x4] sm:$0xf]
          %v1727 = vld [vmem:[#allocation17 + $0x8] sm:$0xf]
          %v1728 = vld [vmem:[#allocation17 + $0xc] sm:$0xf]
          %v1729 = vld [vmem:[#allocation19] sm:$0x1]
          %v1731 = vperm.slane %v1729, 0
          %v1737 = vunpack.c.l.b16 %v1725
          %v1738 = vunpack.c.l.b16 %v1726
          %v1739 = vunpack.c.l.b16 %v1727
          %v1740 = vunpack.c.l.b16 %v1728
          %v1741 = vpack.c.b16 %v1738, %v1737
          %v1742 = vpack.c.b16 %v1740, %v1739
          %v1746 = vsel %vm960, %v1724, 0
          %1748 = vmatpush.bf16.msra.mxu0 0
          %1749 = vmatpush.bf16.msra.mxu0 0
          %1750 = vmatpush.bf16.msra.mxu0 0
          %1751 = vmatpush.bf16.msra.mxu0 0
          %1752 = vmatpush.bf16.msra.mxu0 0
          %1753 = vmatpush.bf16.msra.mxu0 0
          %1754 = vmatpush.bf16.msra.mxu0 %v1742
          %1755 = vmatpush.bf16.msra.mxu0 %v1741
          %1756 = vmatmul.bf16.gmra.mxu0 %v1746
          %v1757 = vpop.f32.mrf.mxu0
          %v1758 = vadd.f32 %v1731, %v1757
          %v1759 = vpop.f32.mrf.mxu0
          %1760 = vdwg.mxu0
          %v1761 = vld [vmem:[%s610] sm:$0xff]
          %v1762 = vadd.f32 %v1758, %v1761
          %v1763 = vsel %vm960, %v1762, 0.0
          %1764 = vadd.xlane.f32.xlu0 %v1763
          %v1765 = vpop.xlane.xlu0 %1764
          %v1766 = vrcp.pop 32.0
          %v1767 = vmul.f32 32.0, %v1766
          %v1768 = vsub.f32 1.0, %v1767
          %v1769 = vmul.f32 %v1766, %v1768
          %v1770 = vadd.f32 %v1766, %v1769
          %vm1771 = vweird.f32 %v1766
          %v1772 = vsel %vm1771, %v1766, %v1770
          %v1773 = vmul.f32 %v1765, %v1772
          %v1774 = vsub.f32 %v1762, %v1773
          %v1775 = vmul.f32 %v1774, %v1774
          %v1776 = vsel %vm960, %v1775, 0.0
          %1777 = vadd.xlane.f32.xlu0 %v1776
          %v1778 = vpop.xlane.xlu0 %1777
          %v1779 = vmul.f32 %v1778, %v1772
          %v1780 = vadd.f32 %v1779, 1e-05
          %v1781 = vrsqrt.pop %v1780
          %v1782 = vmul.f32 %v1781, %v1780
          %v1783 = vmul.f32 %v1782, %v1781
          %v1784 = vmul.f32 0.5, %v1783
          %v1785 = vsub.f32 1.5, %v1784
          %v1786 = vmul.f32 %v1781, %v1785
          %vm1787 = vweird.f32 %v1780
          %vm1788 = vweird.f32 %v1781
          %vm1789 = vmor %vm1787, %vm1788
          %v1790 = vsel %vm1789, %v1781, %v1786
          %v1791 = vmul.f32 %v1774, %v1790
          %v1792 = vld [vmem:[#allocation20] sm:$0x1]
          %v1794 = vperm.slane %v1792, 0
          %v1796 = vmul.f32 %v1791, %v1794
          %v1797 = vld [vmem:[#allocation22] sm:$0x1]
          %v1799 = vperm.slane %v1797, 0
          %v1801 = vadd.f32 %v1796, %v1799
          %1802 = vst.msk [vmem:[%s744] sm:$0xff] %vm960, %v1801
        $region128: #{petr_transformer_decoder.6} parent=75 // pred_fallthru
          _
        %p1803 = scmp.lt.s32.totalorder %s42, 1
        %s1804 = scalar_select %p1803, %s42, 1
        %p1805 = scmp.lt.s32.totalorder %s43, 0
        %s1806 = scalar_select %p1805, %s43, 0
        %s1807 = sadd.s32 %s1806, %s1804
        %s1808 = smul.addr %s1807, 8
        %s1809 = scalar_lea.vmem %s14, %s1808
        // Predicated region
        $region129: #{petr_transformer_decoder.6} parent=75 // pred_check
          %p1810 = pneg %p398
        $region130: #{petr_transformer_decoder.6} parent=75 // pred_check_branch
          %1812 = sbr.rel (%p1810) target = $region132
        $region131: #{petr_transformer_decoder.6} parent=75 // pred_region
          _
        $region132: #{petr_transformer_decoder.6} parent=75 // pred_fallthru
          _
      $region76: #{petr_transformer_decoder.6} parent=5 // pred_fallthru
        _
      %p1813 = scmp.le.s32.totalorder 2, %s32
      // Predicated region
      $region133: #{petr_transformer_decoder.6} parent=5 // pred_check
        %p1814 = pneg %p1813
      $region134: #{petr_transformer_decoder.6} parent=5 // pred_check_branch
        %1816 = sbr.rel (%p1814) target = $region136
      $region135: #{petr_transformer_decoder.6} parent=5 // pred_region
        %s1817 = ssub.s32 %s32, 2
        // Predicated region
        $region137: #{petr_transformer_decoder.6} parent=135 // pred_check
          %p1818 = pneg %p404
        $region138: #{petr_transformer_decoder.6} parent=135 // pred_check_branch
          %1820 = sbr.rel (%p1818) target = $region140
        $region139: #{petr_transformer_decoder.6} parent=135 // pred_region
          %p1821 = scmp.lt.s32.totalorder %s45, 1
          %s1822 = scalar_select %p1821, %s45, 1
          %p1823 = scmp.lt.s32.totalorder %s46, 0
          %s1824 = scalar_select %p1823, %s46, 0
          %s1825 = sadd.s32 %s1824, %s1822
          %s1826 = smul.addr %s1825, 8
          %s1827 = scalar_lea.vmem %s14, %s1826
        $region140: #{petr_transformer_decoder.6} parent=135 // pred_fallthru
          _
      $region136: #{petr_transformer_decoder.6} parent=5 // pred_fallthru
        _
    $region6: #{petr_transformer_decoder.6} parent=1 // loop_footer
      %s36 = sadd.s32 1, %s32
    $region7: #{petr_transformer_decoder.6} parent=1 // loop_footer_branch
      %31 = sbr.rel target = $region3
    $region8: #{petr_transformer_decoder.6} parent=1 // loop_exit
      _
    %1828 = vsyncpa [#allocation7], 1
    %s1829 = scalar_lea.sflag [#allocation7], 1
    %1830 = vsyncpa %s1829, 1
    %1831 = vsyncpa [#allocation9], 1
    %s1832 = scalar_lea.sflag [#allocation9], 1
    %1833 = vsyncpa %s1832, 1
    %1834 = vsyncpa [#allocation12], 1
    %s1835 = scalar_lea.sflag [#allocation12], 1
    %1836 = vsyncpa %s1835, 1
    %1837 = vsyncpa [#allocation15], 1
    %1838 = vsyncpa [#allocation18], 1
    %1839 = vsyncpa [#allocation21], 1

// kernel: petr_transformer_decoder.7
$region0: #{petr_transformer_decoder.7}
  #allocation0 [shape = 'u32[]', space=smem, size = 0x4, offset = 0x4, fixed_abs, tag = 'smem constant byte address 0x4 - core index']
  #allocation1 [shape = 'u32[72,128]{1,0:T(1,128)}', space=vmem, size = 0x9000, scoped, tag = 'internal scratch']
  #allocation2 [shape = 'bf16[4,8,8]{2,1,0:T(8,128)(2,1)}', space=vmem, size = 0x2000, scoped, tag = 'scratch operand']
  #allocation3 [shape = 'f32[4,8,1]{2,1,0:T(8,128)}', space=vmem, size = 0x4000, scoped, tag = 'scratch operand']
  #allocation4 [shape = 'f32[4,8,1]{2,1,0:T(8,128)}', space=vmem, size = 0x4000, scoped, tag = 'scratch operand']
  #allocation5 [shape = 'f32[4,8,8]{2,1,0:T(8,128)}', space=vmem, size = 0x4000, scoped, tag = 'scratch operand']
  %s0 = inlined_call_operand.vmem [shape: f32[2,8,32], index: 0, kind: input, shape index: {}]
  %s1 = inlined_call_operand.hbm [shape: f32[2,8,32], index: 1, kind: input, shape index: {}]
  %s2 = inlined_call_operand.vmem [shape: f32[2,16,32], index: 2, kind: input, shape index: {}]
  %s3 = inlined_call_operand.hbm [shape: f32[2,16,32], index: 3, kind: input, shape index: {}]
  %s4 = inlined_call_operand.hbm [shape: bf16[32,32], index: 4, kind: input, shape index: {}]
  %s5 = inlined_call_operand.hbm [shape: f32[1,32], index: 5, kind: input, shape index: {}]
  %s6 = inlined_call_operand.hbm [shape: bf16[32,32], index: 6, kind: input, shape index: {}]
  %s7 = inlined_call_operand.hbm [shape: f32[1,32], index: 7, kind: input, shape index: {}]
  %s8 = inlined_call_operand.hbm [shape: bf16[32,32], index: 8, kind: input, shape index: {}]
  %s9 = inlined_call_operand.hbm [shape: f32[1,32], index: 9, kind: input, shape index: {}]
  %s10 = inlined_call_operand.hbm [shape: bf16[32,32], index: 10, kind: input, shape index: {}]
  %s11 = inlined_call_operand.hbm [shape: f32[1,32], index: 11, kind: input, shape index: {}]
  %s12 = inlined_call_operand.vmem [shape: f32[1,32], index: 12, kind: input, shape index: {}]
  %s13 = inlined_call_operand.hbm [shape: f32[1,32], index: 13, kind: input, shape index: {}]
  %s14 = inlined_call_operand.vmem [shape: f32[2,8,32], index: 14, kind: output, shape index: {}]
  %s15 = sld [smem:[#allocation0]]
  $region141: #{petr_transformer_decoder.7} parent=0
    _
  %s17 = ssub.s32 1, %s15
  %s18 = scalar_select 0, %s17, %s15
  $region1: #{petr_transformer_decoder.7} parent=0
    #allocation6 [shape = 'u8[8192]{0}', space=vmem, size = 0x2000, scoped, tag = 'input window, operand 1']
    #allocation7 [shape = 's32[2]{0}', space=sflag, size = 0x8, scoped, tag = 'scoped memory for petr_transformer_decoder.7']
    #allocation8 [shape = 'u8[16384]{0}', space=vmem, size = 0x4000, scoped, tag = 'input window, operand 3']
    #allocation9 [shape = 's32[2]{0}', space=sflag, size = 0x8, scoped, tag = 'scoped memory for petr_transformer_decoder.7']
    #allocation10 [shape = 'u8[8192]{0}', space=vmem, size = 0x2000, scoped, tag = 'input window, operand 4, single buffered']
    #allocation11 [shape = 'u8[512]{0}', space=vmem, size = 0x400, scoped, tag = 'input window, operand 5, single buffered']
    #allocation12 [shape = 's32[1]{0}', space=sflag, size = 0x4, scoped, tag = 'scoped memory for petr_transformer_decoder.7']
    #allocation13 [shape = 'u8[8192]{0}', space=vmem, size = 0x2000, scoped, tag = 'input window, operand 6, single buffered']
    #allocation14 [shape = 'u8[512]{0}', space=vmem, size = 0x400, scoped, tag = 'input window, operand 7, single buffered']
    #allocation15 [shape = 's32[1]{0}', space=sflag, size = 0x4, scoped, tag = 'scoped memory for petr_transformer_decoder.7']
    #allocation16 [shape = 'u8[8192]{0}', space=vmem, size = 0x2000, scoped, tag = 'input window, operand 8, single buffered']
    #allocation17 [shape = 'u8[512]{0}', space=vmem, size = 0x400, scoped, tag = 'input window, operand 9, single buffered']
    #allocation18 [shape = 's32[1]{0}', space=sflag, size = 0x4, scoped, tag = 'scoped memory for petr_transformer_decoder.7']
    #allocation19 [shape = 'u8[8192]{0}', space=vmem, size = 0x2000, scoped, tag = 'input window, operand 10, single buffered']
    #allocation20 [shape = 'u8[512]{0}', space=vmem, size = 0x400, scoped, tag = 'input window, operand 11, single buffered']
    #allocation21 [shape = 's32[1]{0}', space=sflag, size = 0x4, scoped, tag = 'scoped memory for petr_transformer_decoder.7']
    #allocation22 [shape = 'u8[512]{0}', space=vmem, size = 0x400, scoped, tag = 'input window, operand 13, single buffered']
    %19 = vsyncpa [#allocation7], 0
    %s20 = scalar_lea.sflag [#allocation7], 1
    %21 = vsyncpa %s20, 0
    %22 = vsyncpa [#allocation9], 0
    %s23 = scalar_lea.sflag [#allocation9], 1
    %24 = vsyncpa %s23, 0
    %25 = vsyncpa [#allocation12], 0
    %26 = vsyncpa [#allocation15], 0
    %27 = vsyncpa [#allocation18], 0
    %28 = vsyncpa [#allocation21], 0
    loop: start=0, step=1, limit=4
    $region2: #{petr_transformer_decoder.7} parent=1 // loop_pre_header
      _
    $region3: #{petr_transformer_decoder.7} parent=1 // loop_header
      %s30 = sphi 0, %s34
      %p31 = scmp.ge.s32.totalorder %s30, 4
      %s37 = sphi 0, %s56
      %s38 = sphi 0, %s52
      %s39 = sphi 0, %s48
      %s40 = sphi 0, %s37
      %s41 = sphi 0, %s38
      %s42 = sphi 0, %s39
      %s43 = sphi 0, %s40
      %s44 = sphi 0, %s41
      %s45 = sphi 0, %s42
      %s61 = sphi 0, %s63
      %s64 = sphi 0, %s61
      %s65 = sphi 0, %s64
      %s81 = sphi 0, %s65
      %s89 = sphi 0, %s91
      %s92 = sphi 0, %s89
      %s93 = sphi 0, %s92
      %s109 = sphi 0, %s93
      %s117 = sphi 0, %s119
      %s120 = sphi 0, %s117
      %s121 = sphi 0, %s120
      %s137 = sphi 0, %s121
      %s145 = sphi 0, %s147
      %s148 = sphi 0, %s145
      %s149 = sphi 0, %s148
      %s165 = sphi 0, %s149
      %s169 = sphi 0, %s169
      %s171 = sphi 0, %s169
      %s172 = sphi 0, %s171
      %s186 = sphi 0, %s172
      %s190 = sphi 0, %s190
      %s192 = sphi 0, %s190
      %s193 = sphi 0, %s192
      %s207 = sphi 0, %s193
      %s211 = sphi 0, %s211
      %s213 = sphi 0, %s211
      %s214 = sphi 0, %s213
      %s228 = sphi 0, %s214
      %s232 = sphi 0, %s232
      %s234 = sphi 0, %s232
      %s235 = sphi 0, %s234
      %s249 = sphi 0, %s235
      %s253 = sphi 0, %s253
      %s255 = sphi 0, %s253
      %s256 = sphi 0, %s255
      %s270 = sphi 0, %s256
      %s274 = sphi 0, %s274
      %s276 = sphi 0, %s274
      %s277 = sphi 0, %s276
      %s291 = sphi 0, %s277
      %s295 = sphi 0, %s295
      %s297 = sphi 0, %s295
      %s298 = sphi 0, %s297
      %s312 = sphi 0, %s298
      %s316 = sphi 0, %s316
      %s318 = sphi 0, %s316
      %s319 = sphi 0, %s318
      %s333 = sphi 0, %s319
      %s337 = sphi 0, %s337
      %s339 = sphi 0, %s337
      %s340 = sphi 0, %s339
      %s354 = sphi 0, %s340
      %s358 = sphi 0, %s358
      %s360 = sphi 0, %s358
      %s361 = sphi 0, %s360
      %s375 = sphi 0, %s361
      %s383 = sphi 0, %s385
      %s386 = sphi 0, %s383
      %s387 = sphi 0, %s386
      %s403 = sphi 0, %s387
    $region4: #{petr_transformer_decoder.7} parent=1 // loop_header_branch
      %33 = sbr.rel (%p31) target = $region8
    $region5: #{petr_transformer_decoder.7} parent=1 // loop_body
      %s35 = ssub.s32 %s30, 1
      %s36 = ssub.s32 %s30, 2
      %s46 = sadd.s32 1, %s39
      %p47 = scmp.ge.s32.totalorder %s46, 1
      %s48 = scalar_select %p47, 0, %s46
      %s49 = sadd.s32 1, %s38
      %s50 = scalar_select %p47, %s49, %s38
      %p51 = scmp.ge.s32.totalorder %s50, 1
      %s52 = scalar_select %p51, 0, %s50
      %s53 = sadd.s32 1, %s37
      %s54 = scalar_select %p51, %s53, %s37
      %p55 = scmp.ge.s32.totalorder %s54, 2
      %s56 = scalar_select %p55, 0, %s54
      %s57 = ssub.s32 %s37, %s56
      %s58 = ssub.s32 %s38, %s52
      %s59 = sor.u32 %s57, %s58
      %p60 = scmp.eq.s32.totalorder %s59, 0
      %s62 = sadd.s32 %s61, 1
      %s63 = scalar_select %p60, %s61, %s62
      %p66 = pneg %p60
      %p67 = scmp.eq.s32.totalorder %s30, 1
      %p68 = por %p66, %p67
      %p69 = scmp.ne.s32.totalorder %s61, %s64
      %p70 = scmp.eq.s32.totalorder %s30, 0
      %p71 = por %p69, %p70
      %p72 = scmp.ne.s32.totalorder %s61, %s64
      %p73 = scmp.eq.s32.totalorder %s35, 1
      %p74 = por %p72, %p73
      %p75 = scmp.ne.s32.totalorder %s64, %s65
      %p76 = scmp.eq.s32.totalorder %s35, 0
      %p77 = por %p75, %p76
      %p78 = scmp.ne.s32.totalorder %s64, %s65
      %p79 = scmp.eq.s32.totalorder %s36, 1
      %p80 = por %p78, %p79
      %p82 = scmp.ne.s32.totalorder %s65, %s81
      %p83 = scmp.eq.s32.totalorder %s36, 0
      %p84 = por %p82, %p83
      %s85 = ssub.s32 %s37, %s56
      %s86 = ssub.s32 %s38, %s52
      %s87 = sor.u32 %s85, %s86
      %p88 = scmp.eq.s32.totalorder %s87, 0
      %s90 = sadd.s32 %s89, 1
      %s91 = scalar_select %p88, %s89, %s90
      %p94 = pneg %p88
      %p95 = scmp.eq.s32.totalorder %s30, 1
      %p96 = por %p94, %p95
      %p97 = scmp.ne.s32.totalorder %s89, %s92
      %p98 = scmp.eq.s32.totalorder %s30, 0
      %p99 = por %p97, %p98
      %p100 = scmp.ne.s32.totalorder %s89, %s92
      %p101 = scmp.eq.s32.totalorder %s35, 1
      %p102 = por %p100, %p101
      %p103 = scmp.ne.s32.totalorder %s92, %s93
      %p104 = scmp.eq.s32.totalorder %s35, 0
      %p105 = por %p103, %p104
      %p106 = scmp.ne.s32.totalorder %s92, %s93
      %p107 = scmp.eq.s32.totalorder %s36, 1
      %p108 = por %p106, %p107
      %p110 = scmp.ne.s32.totalorder %s93, %s109
      %p111 = scmp.eq.s32.totalorder %s36, 0
      %p112 = por %p110, %p111
      %s113 = ssub.s32 %s37, %s56
      %s114 = ssub.s32 %s39, %s48
      %s115 = sor.u32 %s113, %s114
      %p116 = scmp.eq.s32.totalorder %s115, 0
      %s118 = sadd.s32 %s117, 1
      %s119 = scalar_select %p116, %s117, %s118
      %p122 = pneg %p116
      %p123 = scmp.eq.s32.totalorder %s30, 1
      %p124 = por %p122, %p123
      %p125 = scmp.ne.s32.totalorder %s117, %s120
      %p126 = scmp.eq.s32.totalorder %s30, 0
      %p127 = por %p125, %p126
      %p128 = scmp.ne.s32.totalorder %s117, %s120
      %p129 = scmp.eq.s32.totalorder %s35, 1
      %p130 = por %p128, %p129
      %p131 = scmp.ne.s32.totalorder %s120, %s121
      %p132 = scmp.eq.s32.totalorder %s35, 0
      %p133 = por %p131, %p132
      %p134 = scmp.ne.s32.totalorder %s120, %s121
      %p135 = scmp.eq.s32.totalorder %s36, 1
      %p136 = por %p134, %p135
      %p138 = scmp.ne.s32.totalorder %s121, %s137
      %p139 = scmp.eq.s32.totalorder %s36, 0
      %p140 = por %p138, %p139
      %s141 = ssub.s32 %s37, %s56
      %s142 = ssub.s32 %s39, %s48
      %s143 = sor.u32 %s141, %s142
      %p144 = scmp.eq.s32.totalorder %s143, 0
      %s146 = sadd.s32 %s145, 1
      %s147 = scalar_select %p144, %s145, %s146
      %p150 = pneg %p144
      %p151 = scmp.eq.s32.totalorder %s30, 1
      %p152 = por %p150, %p151
      %p153 = scmp.ne.s32.totalorder %s145, %s148
      %p154 = scmp.eq.s32.totalorder %s30, 0
      %p155 = por %p153, %p154
      %p156 = scmp.ne.s32.totalorder %s145, %s148
      %p157 = scmp.eq.s32.totalorder %s35, 1
      %p158 = por %p156, %p157
      %p159 = scmp.ne.s32.totalorder %s148, %s149
      %p160 = scmp.eq.s32.totalorder %s35, 0
      %p161 = por %p159, %p160
      %p162 = scmp.ne.s32.totalorder %s148, %s149
      %p163 = scmp.eq.s32.totalorder %s36, 1
      %p164 = por %p162, %p163
      %p166 = scmp.ne.s32.totalorder %s149, %s165
      %p167 = scmp.eq.s32.totalorder %s36, 0
      %p168 = por %p166, %p167
      %s170 = sadd.s32 %s169, 1
      %p173 = scmp.eq.s32.totalorder %s30, 1
      %p174 = scmp.ne.s32.totalorder %s169, %s171
      %p175 = scmp.eq.s32.totalorder %s30, 0
      %p176 = por %p174, %p175
      %p177 = scmp.ne.s32.totalorder %s169, %s171
      %p178 = scmp.eq.s32.totalorder %s35, 1
      %p179 = por %p177, %p178
      %p180 = scmp.ne.s32.totalorder %s171, %s172
      %p181 = scmp.eq.s32.totalorder %s35, 0
      %p182 = por %p180, %p181
      %p183 = scmp.ne.s32.totalorder %s171, %s172
      %p184 = scmp.eq.s32.totalorder %s36, 1
      %p185 = por %p183, %p184
      %p187 = scmp.ne.s32.totalorder %s172, %s186
      %p188 = scmp.eq.s32.totalorder %s36, 0
      %p189 = por %p187, %p188
      %s191 = sadd.s32 %s190, 1
      %p194 = scmp.eq.s32.totalorder %s30, 1
      %p195 = scmp.ne.s32.totalorder %s190, %s192
      %p196 = scmp.eq.s32.totalorder %s30, 0
      %p197 = por %p195, %p196
      %p198 = scmp.ne.s32.totalorder %s190, %s192
      %p199 = scmp.eq.s32.totalorder %s35, 1
      %p200 = por %p198, %p199
      %p201 = scmp.ne.s32.totalorder %s192, %s193
      %p202 = scmp.eq.s32.totalorder %s35, 0
      %p203 = por %p201, %p202
      %p204 = scmp.ne.s32.totalorder %s192, %s193
      %p205 = scmp.eq.s32.totalorder %s36, 1
      %p206 = por %p204, %p205
      %p208 = scmp.ne.s32.totalorder %s193, %s207
      %p209 = scmp.eq.s32.totalorder %s36, 0
      %p210 = por %p208, %p209
      %s212 = sadd.s32 %s211, 1
      %p215 = scmp.eq.s32.totalorder %s30, 1
      %p216 = scmp.ne.s32.totalorder %s211, %s213
      %p217 = scmp.eq.s32.totalorder %s30, 0
      %p218 = por %p216, %p217
      %p219 = scmp.ne.s32.totalorder %s211, %s213
      %p220 = scmp.eq.s32.totalorder %s35, 1
      %p221 = por %p219, %p220
      %p222 = scmp.ne.s32.totalorder %s213, %s214
      %p223 = scmp.eq.s32.totalorder %s35, 0
      %p224 = por %p222, %p223
      %p225 = scmp.ne.s32.totalorder %s213, %s214
      %p226 = scmp.eq.s32.totalorder %s36, 1
      %p227 = por %p225, %p226
      %p229 = scmp.ne.s32.totalorder %s214, %s228
      %p230 = scmp.eq.s32.totalorder %s36, 0
      %p231 = por %p229, %p230
      %s233 = sadd.s32 %s232, 1
      %p236 = scmp.eq.s32.totalorder %s30, 1
      %p237 = scmp.ne.s32.totalorder %s232, %s234
      %p238 = scmp.eq.s32.totalorder %s30, 0
      %p239 = por %p237, %p238
      %p240 = scmp.ne.s32.totalorder %s232, %s234
      %p241 = scmp.eq.s32.totalorder %s35, 1
      %p242 = por %p240, %p241
      %p243 = scmp.ne.s32.totalorder %s234, %s235
      %p244 = scmp.eq.s32.totalorder %s35, 0
      %p245 = por %p243, %p244
      %p246 = scmp.ne.s32.totalorder %s234, %s235
      %p247 = scmp.eq.s32.totalorder %s36, 1
      %p248 = por %p246, %p247
      %p250 = scmp.ne.s32.totalorder %s235, %s249
      %p251 = scmp.eq.s32.totalorder %s36, 0
      %p252 = por %p250, %p251
      %s254 = sadd.s32 %s253, 1
      %p257 = scmp.eq.s32.totalorder %s30, 1
      %p258 = scmp.ne.s32.totalorder %s253, %s255
      %p259 = scmp.eq.s32.totalorder %s30, 0
      %p260 = por %p258, %p259
      %p261 = scmp.ne.s32.totalorder %s253, %s255
      %p262 = scmp.eq.s32.totalorder %s35, 1
      %p263 = por %p261, %p262
      %p264 = scmp.ne.s32.totalorder %s255, %s256
      %p265 = scmp.eq.s32.totalorder %s35, 0
      %p266 = por %p264, %p265
      %p267 = scmp.ne.s32.totalorder %s255, %s256
      %p268 = scmp.eq.s32.totalorder %s36, 1
      %p269 = por %p267, %p268
      %p271 = scmp.ne.s32.totalorder %s256, %s270
      %p272 = scmp.eq.s32.totalorder %s36, 0
      %p273 = por %p271, %p272
      %s275 = sadd.s32 %s274, 1
      %p278 = scmp.eq.s32.totalorder %s30, 1
      %p279 = scmp.ne.s32.totalorder %s274, %s276
      %p280 = scmp.eq.s32.totalorder %s30, 0
      %p281 = por %p279, %p280
      %p282 = scmp.ne.s32.totalorder %s274, %s276
      %p283 = scmp.eq.s32.totalorder %s35, 1
      %p284 = por %p282, %p283
      %p285 = scmp.ne.s32.totalorder %s276, %s277
      %p286 = scmp.eq.s32.totalorder %s35, 0
      %p287 = por %p285, %p286
      %p288 = scmp.ne.s32.totalorder %s276, %s277
      %p289 = scmp.eq.s32.totalorder %s36, 1
      %p290 = por %p288, %p289
      %p292 = scmp.ne.s32.totalorder %s277, %s291
      %p293 = scmp.eq.s32.totalorder %s36, 0
      %p294 = por %p292, %p293
      %s296 = sadd.s32 %s295, 1
      %p299 = scmp.eq.s32.totalorder %s30, 1
      %p300 = scmp.ne.s32.totalorder %s295, %s297
      %p301 = scmp.eq.s32.totalorder %s30, 0
      %p302 = por %p300, %p301
      %p303 = scmp.ne.s32.totalorder %s295, %s297
      %p304 = scmp.eq.s32.totalorder %s35, 1
      %p305 = por %p303, %p304
      %p306 = scmp.ne.s32.totalorder %s297, %s298
      %p307 = scmp.eq.s32.totalorder %s35, 0
      %p308 = por %p306, %p307
      %p309 = scmp.ne.s32.totalorder %s297, %s298
      %p310 = scmp.eq.s32.totalorder %s36, 1
      %p311 = por %p309, %p310
      %p313 = scmp.ne.s32.totalorder %s298, %s312
      %p314 = scmp.eq.s32.totalorder %s36, 0
      %p315 = por %p313, %p314
      %s317 = sadd.s32 %s316, 1
      %p320 = scmp.eq.s32.totalorder %s30, 1
      %p321 = scmp.ne.s32.totalorder %s316, %s318
      %p322 = scmp.eq.s32.totalorder %s30, 0
      %p323 = por %p321, %p322
      %p324 = scmp.ne.s32.totalorder %s316, %s318
      %p325 = scmp.eq.s32.totalorder %s35, 1
      %p326 = por %p324, %p325
      %p327 = scmp.ne.s32.totalorder %s318, %s319
      %p328 = scmp.eq.s32.totalorder %s35, 0
      %p329 = por %p327, %p328
      %p330 = scmp.ne.s32.totalorder %s318, %s319
      %p331 = scmp.eq.s32.totalorder %s36, 1
      %p332 = por %p330, %p331
      %p334 = scmp.ne.s32.totalorder %s319, %s333
      %p335 = scmp.eq.s32.totalorder %s36, 0
      %p336 = por %p334, %p335
      %s338 = sadd.s32 %s337, 1
      %p341 = scmp.eq.s32.totalorder %s30, 1
      %p342 = scmp.ne.s32.totalorder %s337, %s339
      %p343 = scmp.eq.s32.totalorder %s30, 0
      %p344 = por %p342, %p343
      %p345 = scmp.ne.s32.totalorder %s337, %s339
      %p346 = scmp.eq.s32.totalorder %s35, 1
      %p347 = por %p345, %p346
      %p348 = scmp.ne.s32.totalorder %s339, %s340
      %p349 = scmp.eq.s32.totalorder %s35, 0
      %p350 = por %p348, %p349
      %p351 = scmp.ne.s32.totalorder %s339, %s340
      %p352 = scmp.eq.s32.totalorder %s36, 1
      %p353 = por %p351, %p352
      %p355 = scmp.ne.s32.totalorder %s340, %s354
      %p356 = scmp.eq.s32.totalorder %s36, 0
      %p357 = por %p355, %p356
      %s359 = sadd.s32 %s358, 1
      %p362 = scmp.eq.s32.totalorder %s30, 1
      %p363 = scmp.ne.s32.totalorder %s358, %s360
      %p364 = scmp.eq.s32.totalorder %s30, 0
      %p365 = por %p363, %p364
      %p366 = scmp.ne.s32.totalorder %s358, %s360
      %p367 = scmp.eq.s32.totalorder %s35, 1
      %p368 = por %p366, %p367
      %p369 = scmp.ne.s32.totalorder %s360, %s361
      %p370 = scmp.eq.s32.totalorder %s35, 0
      %p371 = por %p369, %p370
      %p372 = scmp.ne.s32.totalorder %s360, %s361
      %p373 = scmp.eq.s32.totalorder %s36, 1
      %p374 = por %p372, %p373
      %p376 = scmp.ne.s32.totalorder %s361, %s375
      %p377 = scmp.eq.s32.totalorder %s36, 0
      %p378 = por %p376, %p377
      %s379 = ssub.s32 %s37, %s56
      %s380 = ssub.s32 %s38, %s52
      %s381 = sor.u32 %s379, %s380
      %p382 = scmp.eq.s32.totalorder %s381, 0
      %s384 = sadd.s32 %s383, 1
      %s385 = scalar_select %p382, %s383, %s384
      %p388 = pneg %p382
      %p389 = scmp.eq.s32.totalorder %s30, 1
      %p390 = por %p388, %p389
      %p391 = scmp.ne.s32.totalorder %s383, %s386
      %p392 = scmp.eq.s32.totalorder %s30, 0
      %p393 = por %p391, %p392
      %p394 = scmp.ne.s32.totalorder %s383, %s386
      %p395 = scmp.eq.s32.totalorder %s35, 1
      %p396 = por %p394, %p395
      %p397 = scmp.ne.s32.totalorder %s386, %s387
      %p398 = scmp.eq.s32.totalorder %s35, 0
      %p399 = por %p397, %p398
      %p400 = scmp.ne.s32.totalorder %s386, %s387
      %p401 = scmp.eq.s32.totalorder %s36, 1
      %p402 = por %p400, %p401
      %p404 = scmp.ne.s32.totalorder %s387, %s403
      %p405 = scmp.eq.s32.totalorder %s36, 0
      %p406 = por %p404, %p405
      %p407 = scmp.le.s32.totalorder 1, %s30
      %p408 = scmp.lt.s32.totalorder %s30, 3
      %p409 = pnand %p407, %p408
      %p410 = pneg %p409
      // Predicated region
      $region9: #{petr_transformer_decoder.7} parent=5 // pred_check
        _
      $region10: #{petr_transformer_decoder.7} parent=5 // pred_check_branch
        %412 = sbr.rel (%p409) target = $region12
      $region11: #{petr_transformer_decoder.7} parent=5 // pred_region
        %s413 = ssub.s32 %s30, 1
        // Predicated region
        $region13: #{petr_transformer_decoder.7} parent=11 // pred_check
          %p414 = pneg %p182
        $region14: #{petr_transformer_decoder.7} parent=11 // pred_check_branch
          %416 = sbr.rel (%p414) target = $region16
        $region15: #{petr_transformer_decoder.7} parent=11 // pred_region
          %418 = vsyncadd [#allocation9], 0
          %s419 = sshll.u32 %s4, 4
          %s420 = int_to_ptr.hbm [resolvable:$true] %s419
          %s421 = sshll.u32 [#allocation10], 4
          %s422 = int_to_ptr.vmem [resolvable:$true] %s421
          %427 = dma.hbm_to_vmem [thread:$0]  %s420, 256, %s422, [#allocation9], 64, 64, 4
        $region16: #{petr_transformer_decoder.7} parent=11 // pred_fallthru
          _
        // Predicated region
        $region17: #{petr_transformer_decoder.7} parent=11 // pred_check
          %p428 = pneg %p203
        $region18: #{petr_transformer_decoder.7} parent=11 // pred_check_branch
          %430 = sbr.rel (%p428) target = $region20
        $region19: #{petr_transformer_decoder.7} parent=11 // pred_region
          %432 = vsyncadd [#allocation12], 0
          %s434 = sshll.u32 %s5, 4
          %s435 = int_to_ptr.hbm [resolvable:$true] %s434
          %s436 = sshll.u32 [#allocation11], 4
          %s437 = int_to_ptr.vmem [resolvable:$true] %s436
          %439 = dma.hbm_to_vmem [thread:$0]  %s435, 16, %s437, [#allocation12]
        $region20: #{petr_transformer_decoder.7} parent=11 // pred_fallthru
          _
        // Predicated region
        $region21: #{petr_transformer_decoder.7} parent=11 // pred_check
          %p440 = pneg %p224
        $region22: #{petr_transformer_decoder.7} parent=11 // pred_check_branch
          %442 = sbr.rel (%p440) target = $region24
        $region23: #{petr_transformer_decoder.7} parent=11 // pred_region
          %444 = vsyncadd [#allocation12], 0
          %s445 = sshll.u32 %s6, 4
          %s446 = int_to_ptr.hbm [resolvable:$true] %s445
          %s447 = sshll.u32 [#allocation13], 4
          %s448 = int_to_ptr.vmem [resolvable:$true] %s447
          %453 = dma.hbm_to_vmem [thread:$0]  %s446, 256, %s448, [#allocation12], 64, 64, 4
        $region24: #{petr_transformer_decoder.7} parent=11 // pred_fallthru
          _
        // Predicated region
        $region25: #{petr_transformer_decoder.7} parent=11 // pred_check
          %p454 = pneg %p245
        $region26: #{petr_transformer_decoder.7} parent=11 // pred_check_branch
          %456 = sbr.rel (%p454) target = $region28
        $region27: #{petr_transformer_decoder.7} parent=11 // pred_region
          %458 = vsyncadd [#allocation15], 0
          %s460 = sshll.u32 %s7, 4
          %s461 = int_to_ptr.hbm [resolvable:$true] %s460
          %s462 = sshll.u32 [#allocation14], 4
          %s463 = int_to_ptr.vmem [resolvable:$true] %s462
          %465 = dma.hbm_to_vmem [thread:$0]  %s461, 16, %s463, [#allocation15]
        $region28: #{petr_transformer_decoder.7} parent=11 // pred_fallthru
          _
        // Predicated region
        $region29: #{petr_transformer_decoder.7} parent=11 // pred_check
          %p466 = pneg %p266
        $region30: #{petr_transformer_decoder.7} parent=11 // pred_check_branch
          %468 = sbr.rel (%p466) target = $region32
        $region31: #{petr_transformer_decoder.7} parent=11 // pred_region
          %470 = vsyncadd [#allocation15], 0
          %s471 = sshll.u32 %s8, 4
          %s472 = int_to_ptr.hbm [resolvable:$true] %s471
          %s473 = sshll.u32 [#allocation16], 4
          %s474 = int_to_ptr.vmem [resolvable:$true] %s473
          %479 = dma.hbm_to_vmem [thread:$0]  %s472, 256, %s474, [#allocation15], 64, 64, 4
        $region32: #{petr_transformer_decoder.7} parent=11 // pred_fallthru
          _
        // Predicated region
        $region33: #{petr_transformer_decoder.7} parent=11 // pred_check
          %p480 = pneg %p287
        $region34: #{petr_transformer_decoder.7} parent=11 // pred_check_branch
          %482 = sbr.rel (%p480) target = $region36
        $region35: #{petr_transformer_decoder.7} parent=11 // pred_region
          %484 = vsyncadd [#allocation18], 0
          %s486 = sshll.u32 %s9, 4
          %s487 = int_to_ptr.hbm [resolvable:$true] %s486
          %s488 = sshll.u32 [#allocation17], 4
          %s489 = int_to_ptr.vmem [resolvable:$true] %s488
          %491 = dma.hbm_to_vmem [thread:$0]  %s487, 16, %s489, [#allocation18]
        $region36: #{petr_transformer_decoder.7} parent=11 // pred_fallthru
          _
        // Predicated region
        $region37: #{petr_transformer_decoder.7} parent=11 // pred_check
          %p492 = pneg %p308
        $region38: #{petr_transformer_decoder.7} parent=11 // pred_check_branch
          %494 = sbr.rel (%p492) target = $region40
        $region39: #{petr_transformer_decoder.7} parent=11 // pred_region
          %496 = vsyncadd [#allocation18], 0
          %s497 = sshll.u32 %s10, 4
          %s498 = int_to_ptr.hbm [resolvable:$true] %s497
          %s499 = sshll.u32 [#allocation19], 4
          %s500 = int_to_ptr.vmem [resolvable:$true] %s499
          %505 = dma.hbm_to_vmem [thread:$0]  %s498, 256, %s500, [#allocation18], 64, 64, 4
        $region40: #{petr_transformer_decoder.7} parent=11 // pred_fallthru
          _
        // Predicated region
        $region41: #{petr_transformer_decoder.7} parent=11 // pred_check
          %p506 = pneg %p329
        $region42: #{petr_transformer_decoder.7} parent=11 // pred_check_branch
          %508 = sbr.rel (%p506) target = $region44
        $region43: #{petr_transformer_decoder.7} parent=11 // pred_region
          %510 = vsyncadd [#allocation21], 0
          %s512 = sshll.u32 %s11, 4
          %s513 = int_to_ptr.hbm [resolvable:$true] %s512
          %s514 = sshll.u32 [#allocation20], 4
          %s515 = int_to_ptr.vmem [resolvable:$true] %s514
          %517 = dma.hbm_to_vmem [thread:$0]  %s513, 16, %s515, [#allocation21]
        $region44: #{petr_transformer_decoder.7} parent=11 // pred_fallthru
          _
        // Predicated region
        $region45: #{petr_transformer_decoder.7} parent=11 // pred_check
          %p518 = pneg %p350
        $region46: #{petr_transformer_decoder.7} parent=11 // pred_check_branch
          %520 = sbr.rel (%p518) target = $region48
        $region47: #{petr_transformer_decoder.7} parent=11 // pred_region
          _
        $region48: #{petr_transformer_decoder.7} parent=11 // pred_fallthru
          _
        // Predicated region
        $region49: #{petr_transformer_decoder.7} parent=11 // pred_check
          %p521 = pneg %p371
        $region50: #{petr_transformer_decoder.7} parent=11 // pred_check_branch
          %523 = sbr.rel (%p521) target = $region52
        $region51: #{petr_transformer_decoder.7} parent=11 // pred_region
          %525 = vsyncadd [#allocation21], 0
          %s527 = sshll.u32 %s13, 4
          %s528 = int_to_ptr.hbm [resolvable:$true] %s527
          %s529 = sshll.u32 [#allocation22], 4
          %s530 = int_to_ptr.vmem [resolvable:$true] %s529
          %532 = dma.hbm_to_vmem [thread:$0]  %s528, 16, %s530, [#allocation21]
        $region52: #{petr_transformer_decoder.7} parent=11 // pred_fallthru
          _
      $region12: #{petr_transformer_decoder.7} parent=5 // pred_fallthru
        _
      %p533 = scmp.lt.s32.totalorder %s30, 2
      // Predicated region
      $region53: #{petr_transformer_decoder.7} parent=5 // pred_check
        %p534 = pneg %p533
      $region54: #{petr_transformer_decoder.7} parent=5 // pred_check_branch
        %536 = sbr.rel (%p534) target = $region56
      $region55: #{petr_transformer_decoder.7} parent=5 // pred_region
        // Predicated region
        $region57: #{petr_transformer_decoder.7} parent=55 // pred_check
          %p537 = pneg %p71
        $region58: #{petr_transformer_decoder.7} parent=55 // pred_check_branch
          %539 = sbr.rel (%p537) target = $region60
        $region59: #{petr_transformer_decoder.7} parent=55 // pred_region
          %p540 = scmp.lt.s32.totalorder %s37, 1
          %s541 = scalar_select %p540, %s37, 1
          %p542 = scmp.lt.s32.totalorder %s38, 0
          %s543 = scalar_select %p542, %s38, 0
          %s544 = sadd.s32 %s543, %s541
          %s545 = smul.addr %s544, 8
          %s546 = scalar_lea.vmem %s0, %s545
        $region60: #{petr_transformer_decoder.7} parent=55 // pred_fallthru
          _
        // Predicated region
        $region61: #{petr_transformer_decoder.7} parent=55 // pred_check
          %p547 = pneg %p99
        $region62: #{petr_transformer_decoder.7} parent=55 // pred_check_branch
          %549 = sbr.rel (%p547) target = $region64
        $region63: #{petr_transformer_decoder.7} parent=55 // pred_region
          %s550 = sand.u32 %s89, 1
          %s551 = scalar_lea.sflag [#allocation7], %s550
          %s552 = sand.u32 %s89, 1
          %s553 = smul.addr %s552, 8
          %s554 = scalar_lea.vmem [#allocation6], %s553
          %556 = vsyncadd %s551, 0
          %s557 = sadd.s32 %s38, %s37
          %s558 = smul.addr %s557, 8
          %s559 = scalar_lea.hbm %s1, %s558
          %s561 = sshll.u32 %s559, 4
          %s562 = int_to_ptr.hbm [resolvable:$true] %s561
          %s563 = sshll.u32 %s554, 4
          %s564 = int_to_ptr.vmem [resolvable:$true] %s563
          %566 = dma.hbm_to_vmem [thread:$0]  %s562, 128, %s564, %s551
        $region64: #{petr_transformer_decoder.7} parent=55 // pred_fallthru
          _
        // Predicated region
        $region65: #{petr_transformer_decoder.7} parent=55 // pred_check
          %p567 = pneg %p127
        $region66: #{petr_transformer_decoder.7} parent=55 // pred_check_branch
          %569 = sbr.rel (%p567) target = $region68
        $region67: #{petr_transformer_decoder.7} parent=55 // pred_region
          %s570 = smul.u32 2, %s39
          %p571 = scmp.lt.s32.totalorder %s37, 1
          %s572 = scalar_select %p571, %s37, 1
          %p573 = scmp.lt.s32.totalorder %s570, 1
          %s574 = scalar_select %p573, %s570, 1
          %s575 = smul.addr %s572, 2
          %s576 = sadd.s32 %s574, %s575
          %s577 = smul.addr %s576, 8
          %s578 = scalar_lea.vmem %s2, %s577
          %s579 = smul.u32 2, %s39
        $region68: #{petr_transformer_decoder.7} parent=55 // pred_fallthru
          _
        // Predicated region
        $region69: #{petr_transformer_decoder.7} parent=55 // pred_check
          %p580 = pneg %p155
        $region70: #{petr_transformer_decoder.7} parent=55 // pred_check_branch
          %582 = sbr.rel (%p580) target = $region72
        $region71: #{petr_transformer_decoder.7} parent=55 // pred_region
          %s583 = sand.u32 %s30, 1
          %s584 = scalar_lea.sflag [#allocation9], %s583
          %s585 = sand.u32 %s145, 1
          %s586 = smul.addr %s585, 16
          %s587 = scalar_lea.vmem [#allocation8], %s586
          %s588 = smul.u32 2, %s39
          %590 = vsyncadd %s584, 0
          %s591 = smul.addr %s37, 2
          %s592 = sadd.s32 %s588, %s591
          %s593 = smul.addr %s592, 8
          %s594 = scalar_lea.hbm %s3, %s593
          %s595 = sshll.u32 %s594, 4
          %s596 = int_to_ptr.hbm [resolvable:$true] %s595
          %s597 = sshll.u32 %s587, 4
          %s598 = int_to_ptr.vmem [resolvable:$true] %s597
          %603 = dma.hbm_to_vmem [thread:$0]  %s596, 256, %s598, %s584, 128, 128, 8
        $region72: #{petr_transformer_decoder.7} parent=55 // pred_fallthru
          _
      $region56: #{petr_transformer_decoder.7} parent=5 // pred_fallthru
        _
      %p604 = scmp.le.s32.totalorder 1, %s30
      %p605 = scmp.lt.s32.totalorder %s30, 3
      %p606 = pnand %p604, %p605
      %p607 = pneg %p606
      // Predicated region
      $region73: #{petr_transformer_decoder.7} parent=5 // pred_check
        _
      $region74: #{petr_transformer_decoder.7} parent=5 // pred_check_branch
        %609 = sbr.rel (%p606) target = $region76
      $region75: #{petr_transformer_decoder.7} parent=5 // pred_region
        %s610 = ssub.s32 %s30, 1
        %s611 = sand.u32 %s92, 1
        %s612 = scalar_lea.sflag [#allocation7], %s611
        %s613 = sand.u32 %s92, 1
        %s614 = smul.addr %s613, 8
        %s615 = scalar_lea.vmem [#allocation6], %s614
        // Predicated region
        $region77: #{petr_transformer_decoder.7} parent=75 // pred_check
          %p616 = pneg %p105
        $region78: #{petr_transformer_decoder.7} parent=75 // pred_check_branch
          %618 = sbr.rel (%p616) target = $region80
        $region79: #{petr_transformer_decoder.7} parent=75 // pred_region
          %620 = dma.done %s612, 128
        $region80: #{petr_transformer_decoder.7} parent=75 // pred_fallthru
          _
        %s621 = sand.u32 %s35, 1
        %s622 = scalar_lea.sflag [#allocation9], %s621
        %s623 = sand.u32 %s148, 1
        %s624 = smul.addr %s623, 16
        %s625 = scalar_lea.vmem [#allocation8], %s624
        // Predicated region
        $region81: #{petr_transformer_decoder.7} parent=75 // pred_check
          %p626 = pneg %p161
        $region82: #{petr_transformer_decoder.7} parent=75 // pred_check_branch
          %628 = sbr.rel (%p626) target = $region84
        $region83: #{petr_transformer_decoder.7} parent=75 // pred_region
          %630 = dma.done %s622, 256
        $region84: #{petr_transformer_decoder.7} parent=75 // pred_fallthru
          _
        // Predicated region
        $region85: #{petr_transformer_decoder.7} parent=75 // pred_check
          %p631 = pneg %p182
        $region86: #{petr_transformer_decoder.7} parent=75 // pred_check_branch
          %633 = sbr.rel (%p631) target = $region88
        $region87: #{petr_transformer_decoder.7} parent=75 // pred_region
          %635 = dma.done [#allocation9], 256
        $region88: #{petr_transformer_decoder.7} parent=75 // pred_fallthru
          _
        // Predicated region
        $region89: #{petr_transformer_decoder.7} parent=75 // pred_check
          %p636 = pneg %p203
        $region90: #{petr_transformer_decoder.7} parent=75 // pred_check_branch
          %638 = sbr.rel (%p636) target = $region92
        $region91: #{petr_transformer_decoder.7} parent=75 // pred_region
          %640 = dma.done [#allocation12], 16
        $region92: #{petr_transformer_decoder.7} parent=75 // pred_fallthru
          _
        // Predicated region
        $region93: #{petr_transformer_decoder.7} parent=75 // pred_check
          %p641 = pneg %p224
        $region94: #{petr_transformer_decoder.7} parent=75 // pred_check_branch
          %643 = sbr.rel (%p641) target = $region96
        $region95: #{petr_transformer_decoder.7} parent=75 // pred_region
          %645 = dma.done [#allocation12], 256
        $region96: #{petr_transformer_decoder.7} parent=75 // pred_fallthru
          _
        // Predicated region
        $region97: #{petr_transformer_decoder.7} parent=75 // pred_check
          %p646 = pneg %p245
        $region98: #{petr_transformer_decoder.7} parent=75 // pred_check_branch
          %648 = sbr.rel (%p646) target = $region100
        $region99: #{petr_transformer_decoder.7} parent=75 // pred_region
          %650 = dma.done [#allocation15], 16
        $region100: #{petr_transformer_decoder.7} parent=75 // pred_fallthru
          _
        // Predicated region
        $region101: #{petr_transformer_decoder.7} parent=75 // pred_check
          %p651 = pneg %p266
        $region102: #{petr_transformer_decoder.7} parent=75 // pred_check_branch
          %653 = sbr.rel (%p651) target = $region104
        $region103: #{petr_transformer_decoder.7} parent=75 // pred_region
          %655 = dma.done [#allocation15], 256
        $region104: #{petr_transformer_decoder.7} parent=75 // pred_fallthru
          _
        // Predicated region
        $region105: #{petr_transformer_decoder.7} parent=75 // pred_check
          %p656 = pneg %p287
        $region106: #{petr_transformer_decoder.7} parent=75 // pred_check_branch
          %658 = sbr.rel (%p656) target = $region108
        $region107: #{petr_transformer_decoder.7} parent=75 // pred_region
          %660 = dma.done [#allocation18], 16
        $region108: #{petr_transformer_decoder.7} parent=75 // pred_fallthru
          _
        // Predicated region
        $region109: #{petr_transformer_decoder.7} parent=75 // pred_check
          %p661 = pneg %p308
        $region110: #{petr_transformer_decoder.7} parent=75 // pred_check_branch
          %663 = sbr.rel (%p661) target = $region112
        $region111: #{petr_transformer_decoder.7} parent=75 // pred_region
          %665 = dma.done [#allocation18], 256
        $region112: #{petr_transformer_decoder.7} parent=75 // pred_fallthru
          _
        // Predicated region
        $region113: #{petr_transformer_decoder.7} parent=75 // pred_check
          %p666 = pneg %p329
        $region114: #{petr_transformer_decoder.7} parent=75 // pred_check_branch
          %668 = sbr.rel (%p666) target = $region116
        $region115: #{petr_transformer_decoder.7} parent=75 // pred_region
          %670 = dma.done [#allocation21], 16
        $region116: #{petr_transformer_decoder.7} parent=75 // pred_fallthru
          _
        // Predicated region
        $region117: #{petr_transformer_decoder.7} parent=75 // pred_check
          %p671 = pneg %p371
        $region118: #{petr_transformer_decoder.7} parent=75 // pred_check_branch
          %673 = sbr.rel (%p671) target = $region120
        $region119: #{petr_transformer_decoder.7} parent=75 // pred_region
          %675 = dma.done [#allocation21], 16
        $region120: #{petr_transformer_decoder.7} parent=75 // pred_fallthru
          _
        %p676 = scmp.lt.s32.totalorder %s40, 1
        %s677 = scalar_select %p676, %s40, 1
        %p678 = scmp.lt.s32.totalorder %s41, 0
        %s679 = scalar_select %p678, %s41, 0
        %s680 = sadd.s32 %s679, %s677
        %s681 = smul.addr %s680, 8
        %s682 = scalar_lea.vmem %s0, %s681
        %p683 = pneg %p77
        %p684 = pneg %p74
        %s685 = sand.u32 %s92, 1
        %s686 = scalar_lea.sflag [#allocation7], %s685
        %s687 = sand.u32 %s92, 1
        %s688 = smul.addr %s687, 8
        %s689 = scalar_lea.vmem [#allocation6], %s688
        %p690 = pneg %p105
        %p691 = pneg %p102
        %s692 = smul.u32 2, %s42
        %p693 = scmp.lt.s32.totalorder %s40, 1
        %s694 = scalar_select %p693, %s40, 1
        %p695 = scmp.lt.s32.totalorder %s692, 1
        %s696 = scalar_select %p695, %s692, 1
        %s697 = smul.addr %s694, 2
        %s698 = sadd.s32 %s696, %s697
        %s699 = smul.addr %s698, 8
        %s700 = scalar_lea.vmem %s2, %s699
        %p701 = pneg %p133
        %p702 = pneg %p130
        %s703 = sand.u32 %s35, 1
        %s704 = scalar_lea.sflag [#allocation9], %s703
        %s705 = sand.u32 %s148, 1
        %s706 = smul.addr %s705, 16
        %s707 = scalar_lea.vmem [#allocation8], %s706
        %p708 = pneg %p161
        %p709 = pneg %p158
        %p710 = pneg %p182
        %p711 = pneg %p179
        %p712 = pneg %p203
        %p713 = pneg %p200
        %p714 = pneg %p224
        %p715 = pneg %p221
        %p716 = pneg %p245
        %p717 = pneg %p242
        %p718 = pneg %p266
        %p719 = pneg %p263
        %p720 = pneg %p287
        %p721 = pneg %p284
        %p722 = pneg %p308
        %p723 = pneg %p305
        %p724 = pneg %p329
        %p725 = pneg %p326
        %p726 = pneg %p350
        %p727 = pneg %p347
        %p728 = pneg %p371
        %p729 = pneg %p368
        %p730 = pneg %p399
        %p731 = pneg %p396
        %p732 = scmp.lt.s32.totalorder %s40, 1
        %s733 = scalar_select %p732, %s40, 1
        %p734 = scmp.lt.s32.totalorder %s41, 0
        %s735 = scalar_select %p734, %s41, 0
        %s736 = sadd.s32 %s735, %s733
        %s737 = smul.addr %s736, 8
        %s738 = scalar_lea.vmem %s14, %s737
        %p739 = scmp.lt.s32.totalorder %s40, 1
        %s740 = scalar_select %p739, %s40, 1
        %p741 = scmp.lt.s32.totalorder %s41, 0
        %s742 = scalar_select %p741, %s41, 0
        %s743 = sadd.s32 %s742, %s740
        %s744 = smul.addr %s743, 8
        %s745 = scalar_lea.vmem %s0, %s744
        %s746 = smul.u32 2, %s42
        %p747 = scmp.lt.s32.totalorder %s40, 1
        %s748 = scalar_select %p747, %s40, 1
        %p749 = scmp.lt.s32.totalorder %s746, 1
        %s750 = scalar_select %p749, %s746, 1
        %s751 = smul.addr %s748, 2
        %s752 = sadd.s32 %s750, %s751
        %s753 = smul.addr %s752, 8
        %s754 = scalar_lea.vmem %s2, %s753
        %s755 = smul.u32 2, %s42
        %s756 = smul.u32 2, %s42
        %p757 = scmp.lt.s32.totalorder %s40, 1
        %s758 = scalar_select %p757, %s40, 1
        %p759 = scmp.lt.s32.totalorder %s41, 0
        %s760 = scalar_select %p759, %s41, 0
        %s761 = sadd.s32 %s760, %s758
        %s762 = smul.addr %s761, 8
        %s763 = scalar_lea.vmem %s14, %s762
        %p765 = scmp.eq.s32.totalorder %s42, 0
        // Predicated region
        $region121: #{petr_transformer_decoder.7} parent=75 // pred_check
          %p766 = pneg %p765
        $region122: #{petr_transformer_decoder.7} parent=75 // pred_check_branch
          %768 = sbr.rel (%p766) target = $region124
        $region123: #{petr_transformer_decoder.7} parent=75 // pred_region
          %v769 = vld [vmem:[%s745] sm:$0xff]
          %v770 = vld [vmem:[%s615] sm:$0xff]
          %v771 = vadd.f32 %v769, %v770
          %v772 = vpack.c.bf16 %v771, %v771
          %v773 = vld [vmem:[#allocation10] sm:$0xf]
          %v774 = vld [vmem:[#allocation10 + $0x4] sm:$0xf]
          %v775 = vld [vmem:[#allocation10 + $0x8] sm:$0xf]
          %v776 = vld [vmem:[#allocation10 + $0xc] sm:$0xf]
          %v777 = vld [vmem:[#allocation11] sm:$0x1]
          %v779 = vperm.slane %v777, 0
          %v785 = vunpack.c.l.b16 %v773
          %v786 = vunpack.c.l.b16 %v774
          %v787 = vunpack.c.l.b16 %v775
          %v788 = vunpack.c.l.b16 %v776
          %v789 = vpack.c.b16 %v786, %v785
          %v790 = vpack.c.b16 %v788, %v787
          %vm793 = vcmask 261120
          %v795 = vsel %vm793, %v772, 0
          %797 = vmatpush.bf16.msra.mxu0 0
          %798 = vmatpush.bf16.msra.mxu0 0
          %799 = vmatpush.bf16.msra.mxu0 0
          %800 = vmatpush.bf16.msra.mxu0 0
          %801 = vmatpush.bf16.msra.mxu0 0
          %802 = vmatpush.bf16.msra.mxu0 0
          %803 = vmatpush.bf16.msra.mxu0 %v790
          %804 = vmatpush.bf16.msra.mxu0 %v789
          %805 = vmatmul.bf16.gmra.mxu0 %v795
          %v806 = vpop.f32.mrf.mxu0
          %v807 = vadd.f32 %v779, %v806
          %v808 = vpop.f32.mrf.mxu0
          %809 = vdwg.mxu0
          %v810 = vmul.f32 %v807, 0.35355338
          %812 = vrot.lane.b32.xlu0 %v810, 120
          %v813 = vpop.permute.xlu0 %812
          %815 = vrot.lane.b32.xlu0 %v810, 112
          %v816 = vpop.permute.xlu0 %815
          %818 = vrot.lane.b32.xlu0 %v810, 104
          %v819 = vpop.permute.xlu0 %818
          %v821 = vrot.slane %v816, 4
          %vm822 = vcmask 1047556
          %v823 = vsel %vm822, %v821, %v810
          %v824 = vrot.slane %v810, 4
          %v825 = vsel %vm822, %v816, %v824
          %v827 = vunpack.c.l.s4 1983009808
          %v828 = vunpack.c.0.s8 %v827
          %v829 = vperm.slane %v823, %v828
          %v831 = vunpack.c.l.s4 1983009808
          %v832 = vunpack.c.0.s8 %v831
          %v833 = vperm.slane %v825, %v832
          %v834 = vrot.slane %v819, 4
          %v835 = vsel %vm822, %v834, %v813
          %v836 = vrot.slane %v813, 4
          %v837 = vsel %vm822, %v819, %v836
          %v839 = vunpack.c.l.s4 1983009808
          %v840 = vunpack.c.0.s8 %v839
          %v841 = vperm.slane %v835, %v840
          %v843 = vunpack.c.l.s4 1983009808
          %v844 = vunpack.c.0.s8 %v843
          %v845 = vperm.slane %v837, %v844
          %v846 = vrot.slane %v841, 4
          %v847 = vsel %vm822, %v846, %v829
          %v848 = vrot.slane %v829, 4
          %v849 = vsel %vm822, %v841, %v848
          %v851 = vunpack.c.l.s4 1934713408
          %v852 = vunpack.c.0.s8 %v851
          %v853 = vperm.slane %v847, %v852
          %v855 = vunpack.c.l.s4 1934713408
          %v856 = vunpack.c.0.s8 %v855
          %v857 = vperm.slane %v849, %v856
          %v858 = vrot.slane %v845, 4
          %v859 = vsel %vm822, %v858, %v833
          %v860 = vrot.slane %v833, 4
          %v861 = vsel %vm822, %v845, %v860
          %v863 = vunpack.c.l.s4 1934713408
          %v864 = vunpack.c.0.s8 %v863
          %v865 = vperm.slane %v859, %v864
          %v867 = vunpack.c.l.s4 1934713408
          %v868 = vunpack.c.0.s8 %v867
          %v869 = vperm.slane %v861, %v868
          %v870 = vrot.slane %v853, 4
          %v871 = vsel %vm822, 0.0, %v870
          %v872 = vrot.slane %v857, 4
          %v873 = vsel %vm822, 0.0, %v872
          %v874 = vrot.slane %v865, 4
          %v875 = vsel %vm822, 0.0, %v874
          %v876 = vrot.slane %v869, 4
          %v877 = vsel %vm822, 0.0, %v876
          %v878 = vsel %vm822, %v872, %v853
          %v880 = vunpack.c.l.s4 1983009808
          %v881 = vunpack.c.0.s8 %v880
          %v882 = vperm.slane %v878, %v881
          %v883 = vrot.slane %v873, 4
          %v884 = vsel %vm822, %v883, %v871
          %v886 = vunpack.c.l.s4 1983009808
          %v887 = vunpack.c.0.s8 %v886
          %v888 = vperm.slane %v884, %v887
          %v889 = vsel %vm822, %v876, %v865
          %v891 = vunpack.c.l.s4 1983009808
          %v892 = vunpack.c.0.s8 %v891
          %v893 = vperm.slane %v889, %v892
          %v894 = vrot.slane %v877, 4
          %v895 = vsel %vm822, %v894, %v875
          %v897 = vunpack.c.l.s4 1983009808
          %v898 = vunpack.c.0.s8 %v897
          %v899 = vperm.slane %v895, %v898
          %v900 = vrot.slane %v888, 4
          %v901 = vsel %vm822, %v900, %v882
          %v902 = vrot.slane %v882, 4
          %v903 = vsel %vm822, %v888, %v902
          %v905 = vunpack.c.l.s4 1934713408
          %v906 = vunpack.c.0.s8 %v905
          %v907 = vperm.slane %v901, %v906
          %v909 = vunpack.c.l.s4 1934713408
          %v910 = vunpack.c.0.s8 %v909
          %v911 = vperm.slane %v903, %v910
          %v912 = vrot.slane %v899, 4
          %v913 = vsel %vm822, %v912, %v893
          %v914 = vrot.slane %v893, 4
          %v915 = vsel %vm822, %v899, %v914
          %v917 = vunpack.c.l.s4 1934713408
          %v918 = vunpack.c.0.s8 %v917
          %v919 = vperm.slane %v913, %v918
          %v921 = vunpack.c.l.s4 1934713408
          %v922 = vunpack.c.0.s8 %v921
          %v923 = vperm.slane %v915, %v922
          %v924 = vrot.slane %v919, 4
          %v925 = vsel %vm822, %v924, %v907
          %v926 = vrot.slane %v907, 4
          %v927 = vsel %vm822, %v919, %v926
          %v928 = vrot.slane %v923, 4
          %v929 = vsel %vm822, %v928, %v911
          %v930 = vrot.slane %v911, 4
          %v931 = vsel %vm822, %v923, %v930
          %v932 = vpack.c.bf16 %v925, %v925
          %v933 = vpack.c.bf16 %v927, %v927
          %v934 = vpack.c.bf16 %v929, %v929
          %v935 = vpack.c.bf16 %v931, %v931
          %vm936 = vcmask 60416
          %937 = vst.msk [vmem:[#allocation2] sm:$0xf] %vm936, %v932
          %938 = vst.msk [vmem:[#allocation2 + $0x4] sm:$0xf] %vm936, %v933
          %939 = vst.msk [vmem:[#allocation2 + $0x8] sm:$0xf] %vm936, %v934
          %940 = vst.msk [vmem:[#allocation2 + $0xc] sm:$0xf] %vm936, %v935
          %vm941 = vcmask 7168
          %942 = vst.msk [vmem:[#allocation3] sm:$0xff] %vm941, -inf
          %943 = vst.msk [vmem:[#allocation3 + $0x8] sm:$0xff] %vm941, -inf
          %944 = vst.msk [vmem:[#allocation3 + $0x10] sm:$0xff] %vm941, -inf
          %945 = vst.msk [vmem:[#allocation3 + $0x18] sm:$0xff] %vm941, -inf
          %946 = vst.msk [vmem:[#allocation4] sm:$0xff] %vm941, 0.0
          %947 = vst.msk [vmem:[#allocation4 + $0x8] sm:$0xff] %vm941, 0.0
          %948 = vst.msk [vmem:[#allocation4 + $0x10] sm:$0xff] %vm941, 0.0
          %949 = vst.msk [vmem:[#allocation4 + $0x18] sm:$0xff] %vm941, 0.0
          %vm950 = vcmask 64512
          %951 = vst.msk [vmem:[#allocation5] sm:$0xff] %vm950, 0.0
          %952 = vst.msk [vmem:[#allocation5 + $0x8] sm:$0xff] %vm950, 0.0
          %953 = vst.msk [vmem:[#allocation5 + $0x10] sm:$0xff] %vm950, 0.0
          %954 = vst.msk [vmem:[#allocation5 + $0x18] sm:$0xff] %vm950, 0.0
        $region124: #{petr_transformer_decoder.7} parent=75 // pred_fallthru
          _
        %v955 = vld [vmem:[%s754] sm:$0xff]
        %v956 = vld [vmem:[%s754 + $0x8] sm:$0xff]
        %v957 = vld [vmem:[%s625] sm:$0xff]
        %v958 = vld [vmem:[%s625 + $0x8] sm:$0xff]
        %v959 = vadd.f32 %v955, %v957
        %v960 = vadd.f32 %v956, %v958
        %v961 = vpack.c.bf16 %v960, %v959
        %v962 = vld [vmem:[#allocation13] sm:$0xf]
        %v963 = vld [vmem:[#allocation13 + $0x4] sm:$0xf]
        %v964 = vld [vmem:[#allocation13 + $0x8] sm:$0xf]
        %v965 = vld [vmem:[#allocation13 + $0xc] sm:$0xf]
        %v966 = vld [vmem:[#allocation14] sm:$0x1]
        %v968 = vperm.slane %v966, 0
        %v974 = vunpack.c.l.b16 %v962
        %v975 = vunpack.c.l.b16 %v963
        %v976 = vunpack.c.l.b16 %v964
        %v977 = vunpack.c.l.b16 %v965
        %v978 = vpack.c.b16 %v975, %v974
        %v979 = vpack.c.b16 %v977, %v976
        %vm982 = vcmask 261120
        %v984 = vsel %vm982, %v961, 0
        %986 = vmatpush.bf16.msra.mxu0 0
        %987 = vmatpush.bf16.msra.mxu0 0
        %988 = vmatpush.bf16.msra.mxu0 0
        %989 = vmatpush.bf16.msra.mxu0 0
        %990 = vmatpush.bf16.msra.mxu0 0
        %991 = vmatpush.bf16.msra.mxu0 0
        %992 = vmatpush.bf16.msra.mxu0 %v979
        %993 = vmatpush.bf16.msra.mxu0 %v978
        %994 = vmatmul.bf16.gmra.mxu0 %v984
        %v995 = vpop.f32.mrf.mxu0
        %v996 = vadd.f32 %v968, %v995
        %v997 = vpop.f32.mrf.mxu0
        %v998 = vadd.f32 %v968, %v997
        %999 = vdwg.mxu0
        %v1000 = vpack.c.bf16 %v956, %v955
        %v1001 = vld [vmem:[#allocation16] sm:$0xf]
        %v1002 = vld [vmem:[#allocation16 + $0x4] sm:$0xf]
        %v1003 = vld [vmem:[#allocation16 + $0x8] sm:$0xf]
        %v1004 = vld [vmem:[#allocation16 + $0xc] sm:$0xf]
        %v1005 = vld [vmem:[#allocation17] sm:$0x1]
        %v1007 = vperm.slane %v1005, 0
        %v1013 = vunpack.c.l.b16 %v1001
        %v1014 = vunpack.c.l.b16 %v1002
        %v1015 = vunpack.c.l.b16 %v1003
        %v1016 = vunpack.c.l.b16 %v1004
        %v1017 = vpack.c.b16 %v1014, %v1013
        %v1018 = vpack.c.b16 %v1016, %v1015
        %v1022 = vsel %vm982, %v1000, 0
        %1024 = vmatpush.bf16.msra.mxu0 0
        %1025 = vmatpush.bf16.msra.mxu0 0
        %1026 = vmatpush.bf16.msra.mxu0 0
        %1027 = vmatpush.bf16.msra.mxu0 0
        %1028 = vmatpush.bf16.msra.mxu0 0
        %1029 = vmatpush.bf16.msra.mxu0 0
        %1030 = vmatpush.bf16.msra.mxu0 %v1018
        %1031 = vmatpush.bf16.msra.mxu0 %v1017
        %1032 = vmatmul.bf16.gmra.mxu0 %v1022
        %v1033 = vpop.f32.mrf.mxu0
        %v1034 = vadd.f32 %v1007, %v1033
        %v1035 = vpop.f32.mrf.mxu0
        %v1036 = vadd.f32 %v1007, %v1035
        %1037 = vdwg.mxu0
        %1040 = vrot.lane.b32.xlu0 %v996, 120
        %v1041 = vpop.permute.xlu0 %1040
        %1042 = vrot.lane.b32.xlu0 %v998, 120
        %v1043 = vpop.permute.xlu0 %1042
        %1046 = vrot.lane.b32.xlu0 %v996, 112
        %v1047 = vpop.permute.xlu0 %1046
        %1048 = vrot.lane.b32.xlu0 %v998, 112
        %v1049 = vpop.permute.xlu0 %1048
        %1052 = vrot.lane.b32.xlu0 %v996, 104
        %v1053 = vpop.permute.xlu0 %1052
        %1054 = vrot.lane.b32.xlu0 %v998, 104
        %v1055 = vpop.permute.xlu0 %1054
        %v1058 = vrot.slane %v1047, 4
        %vm1059 = vcmask 1047556
        %v1060 = vsel %vm1059, %v1058, %v996
        %v1061 = vrot.slane %v996, 4
        %v1062 = vsel %vm1059, %v1047, %v1061
        %v1064 = vunpack.c.l.s4 1983009808
        %v1065 = vunpack.c.0.s8 %v1064
        %v1066 = vperm.slane %v1060, %v1065
        %v1068 = vunpack.c.l.s4 1983009808
        %v1069 = vunpack.c.0.s8 %v1068
        %v1070 = vperm.slane %v1062, %v1069
        %v1071 = vrot.slane %v1053, 4
        %v1072 = vsel %vm1059, %v1071, %v1041
        %v1073 = vrot.slane %v1041, 4
        %v1074 = vsel %vm1059, %v1053, %v1073
        %v1076 = vunpack.c.l.s4 1983009808
        %v1077 = vunpack.c.0.s8 %v1076
        %v1078 = vperm.slane %v1072, %v1077
        %v1080 = vunpack.c.l.s4 1983009808
        %v1081 = vunpack.c.0.s8 %v1080
        %v1082 = vperm.slane %v1074, %v1081
        %v1083 = vrot.slane %v1078, 4
        %v1084 = vsel %vm1059, %v1083, %v1066
        %v1085 = vrot.slane %v1066, 4
        %v1086 = vsel %vm1059, %v1078, %v1085
        %v1088 = vunpack.c.l.s4 1934713408
        %v1089 = vunpack.c.0.s8 %v1088
        %v1090 = vperm.slane %v1084, %v1089
        %v1092 = vunpack.c.l.s4 1934713408
        %v1093 = vunpack.c.0.s8 %v1092
        %v1094 = vperm.slane %v1086, %v1093
        %v1095 = vrot.slane %v1082, 4
        %v1096 = vsel %vm1059, %v1095, %v1070
        %v1097 = vrot.slane %v1070, 4
        %v1098 = vsel %vm1059, %v1082, %v1097
        %v1100 = vunpack.c.l.s4 1934713408
        %v1101 = vunpack.c.0.s8 %v1100
        %v1102 = vperm.slane %v1096, %v1101
        %v1104 = vunpack.c.l.s4 1934713408
        %v1105 = vunpack.c.0.s8 %v1104
        %v1106 = vperm.slane %v1098, %v1105
        %v1107 = vrot.slane %v1090, 4
        %v1108 = vsel %vm1059, 0.0, %v1107
        %v1109 = vrot.slane %v1094, 4
        %v1110 = vsel %vm1059, 0.0, %v1109
        %v1111 = vrot.slane %v1102, 4
        %v1112 = vsel %vm1059, 0.0, %v1111
        %v1113 = vrot.slane %v1106, 4
        %v1114 = vsel %vm1059, 0.0, %v1113
        %v1115 = vrot.slane %v1049, 4
        %v1116 = vsel %vm1059, %v1115, %v998
        %v1117 = vrot.slane %v998, 4
        %v1118 = vsel %vm1059, %v1049, %v1117
        %v1120 = vunpack.c.l.s4 1983009808
        %v1121 = vunpack.c.0.s8 %v1120
        %v1122 = vperm.slane %v1116, %v1121
        %v1124 = vunpack.c.l.s4 1983009808
        %v1125 = vunpack.c.0.s8 %v1124
        %v1126 = vperm.slane %v1118, %v1125
        %v1127 = vrot.slane %v1055, 4
        %v1128 = vsel %vm1059, %v1127, %v1043
        %v1129 = vrot.slane %v1043, 4
        %v1130 = vsel %vm1059, %v1055, %v1129
        %v1132 = vunpack.c.l.s4 1983009808
        %v1133 = vunpack.c.0.s8 %v1132
        %v1134 = vperm.slane %v1128, %v1133
        %v1136 = vunpack.c.l.s4 1983009808
        %v1137 = vunpack.c.0.s8 %v1136
        %v1138 = vperm.slane %v1130, %v1137
        %v1139 = vrot.slane %v1134, 4
        %v1140 = vsel %vm1059, %v1139, %v1122
        %v1141 = vrot.slane %v1122, 4
        %v1142 = vsel %vm1059, %v1134, %v1141
        %v1144 = vunpack.c.l.s4 1934713408
        %v1145 = vunpack.c.0.s8 %v1144
        %v1146 = vperm.slane %v1140, %v1145
        %v1148 = vunpack.c.l.s4 1934713408
        %v1149 = vunpack.c.0.s8 %v1148
        %v1150 = vperm.slane %v1142, %v1149
        %v1151 = vrot.slane %v1138, 4
        %v1152 = vsel %vm1059, %v1151, %v1126
        %v1153 = vrot.slane %v1126, 4
        %v1154 = vsel %vm1059, %v1138, %v1153
        %v1156 = vunpack.c.l.s4 1934713408
        %v1157 = vunpack.c.0.s8 %v1156
        %v1158 = vperm.slane %v1152, %v1157
        %v1160 = vunpack.c.l.s4 1934713408
        %v1161 = vunpack.c.0.s8 %v1160
        %v1162 = vperm.slane %v1154, %v1161
        %v1163 = vrot.slane %v1146, 4
        %v1164 = vsel %vm1059, 0.0, %v1163
        %v1165 = vrot.slane %v1150, 4
        %v1166 = vsel %vm1059, 0.0, %v1165
        %v1167 = vrot.slane %v1158, 4
        %v1168 = vsel %vm1059, 0.0, %v1167
        %v1169 = vrot.slane %v1162, 4
        %v1170 = vsel %vm1059, 0.0, %v1169
        %v1171 = vsel %vm1059, %v1109, %v1090
        %v1173 = vunpack.c.l.s4 1983009808
        %v1174 = vunpack.c.0.s8 %v1173
        %v1175 = vperm.slane %v1171, %v1174
        %v1176 = vrot.slane %v1110, 4
        %v1177 = vsel %vm1059, %v1176, %v1108
        %v1179 = vunpack.c.l.s4 1983009808
        %v1180 = vunpack.c.0.s8 %v1179
        %v1181 = vperm.slane %v1177, %v1180
        %v1182 = vsel %vm1059, %v1113, %v1102
        %v1184 = vunpack.c.l.s4 1983009808
        %v1185 = vunpack.c.0.s8 %v1184
        %v1186 = vperm.slane %v1182, %v1185
        %v1187 = vrot.slane %v1114, 4
        %v1188 = vsel %vm1059, %v1187, %v1112
        %v1190 = vunpack.c.l.s4 1983009808
        %v1191 = vunpack.c.0.s8 %v1190
        %v1192 = vperm.slane %v1188, %v1191
        %v1193 = vrot.slane %v1181, 4
        %v1194 = vsel %vm1059, %v1193, %v1175
        %v1195 = vrot.slane %v1175, 4
        %v1196 = vsel %vm1059, %v1181, %v1195
        %v1198 = vunpack.c.l.s4 1934713408
        %v1199 = vunpack.c.0.s8 %v1198
        %v1200 = vperm.slane %v1194, %v1199
        %v1202 = vunpack.c.l.s4 1934713408
        %v1203 = vunpack.c.0.s8 %v1202
        %v1204 = vperm.slane %v1196, %v1203
        %v1205 = vrot.slane %v1192, 4
        %v1206 = vsel %vm1059, %v1205, %v1186
        %v1207 = vrot.slane %v1186, 4
        %v1208 = vsel %vm1059, %v1192, %v1207
        %v1210 = vunpack.c.l.s4 1934713408
        %v1211 = vunpack.c.0.s8 %v1210
        %v1212 = vperm.slane %v1206, %v1211
        %v1214 = vunpack.c.l.s4 1934713408
        %v1215 = vunpack.c.0.s8 %v1214
        %v1216 = vperm.slane %v1208, %v1215
        %v1217 = vrot.slane %v1212, 4
        %v1218 = vsel %vm1059, %v1217, %v1200
        %v1219 = vrot.slane %v1200, 4
        %v1220 = vsel %vm1059, %v1212, %v1219
        %v1221 = vrot.slane %v1216, 4
        %v1222 = vsel %vm1059, %v1221, %v1204
        %v1223 = vrot.slane %v1204, 4
        %v1224 = vsel %vm1059, %v1216, %v1223
        %v1225 = vsel %vm1059, %v1165, %v1146
        %v1227 = vunpack.c.l.s4 1983009808
        %v1228 = vunpack.c.0.s8 %v1227
        %v1229 = vperm.slane %v1225, %v1228
        %v1230 = vrot.slane %v1166, 4
        %v1231 = vsel %vm1059, %v1230, %v1164
        %v1233 = vunpack.c.l.s4 1983009808
        %v1234 = vunpack.c.0.s8 %v1233
        %v1235 = vperm.slane %v1231, %v1234
        %v1236 = vsel %vm1059, %v1169, %v1158
        %v1238 = vunpack.c.l.s4 1983009808
        %v1239 = vunpack.c.0.s8 %v1238
        %v1240 = vperm.slane %v1236, %v1239
        %v1241 = vrot.slane %v1170, 4
        %v1242 = vsel %vm1059, %v1241, %v1168
        %v1244 = vunpack.c.l.s4 1983009808
        %v1245 = vunpack.c.0.s8 %v1244
        %v1246 = vperm.slane %v1242, %v1245
        %v1247 = vrot.slane %v1235, 4
        %v1248 = vsel %vm1059, %v1247, %v1229
        %v1249 = vrot.slane %v1229, 4
        %v1250 = vsel %vm1059, %v1235, %v1249
        %v1252 = vunpack.c.l.s4 1934713408
        %v1253 = vunpack.c.0.s8 %v1252
        %v1254 = vperm.slane %v1248, %v1253
        %v1256 = vunpack.c.l.s4 1934713408
        %v1257 = vunpack.c.0.s8 %v1256
        %v1258 = vperm.slane %v1250, %v1257
        %v1259 = vrot.slane %v1246, 4
        %v1260 = vsel %vm1059, %v1259, %v1240
        %v1261 = vrot.slane %v1240, 4
        %v1262 = vsel %vm1059, %v1246, %v1261
        %v1264 = vunpack.c.l.s4 1934713408
        %v1265 = vunpack.c.0.s8 %v1264
        %v1266 = vperm.slane %v1260, %v1265
        %v1268 = vunpack.c.l.s4 1934713408
        %v1269 = vunpack.c.0.s8 %v1268
        %v1270 = vperm.slane %v1262, %v1269
        %v1271 = vrot.slane %v1266, 4
        %v1272 = vsel %vm1059, %v1271, %v1254
        %v1273 = vrot.slane %v1254, 4
        %v1274 = vsel %vm1059, %v1266, %v1273
        %v1275 = vrot.slane %v1270, 4
        %v1276 = vsel %vm1059, %v1275, %v1258
        %v1277 = vrot.slane %v1258, 4
        %v1278 = vsel %vm1059, %v1270, %v1277
        %v1279 = vpack.c.bf16 %v1218, %v1218
        %v1280 = vpack.c.bf16 %v1272, %v1272
        %v1281 = vpack.c.bf16 %v1220, %v1220
        %v1282 = vpack.c.bf16 %v1274, %v1274
        %v1283 = vpack.c.bf16 %v1222, %v1222
        %v1284 = vpack.c.bf16 %v1276, %v1276
        %v1285 = vpack.c.bf16 %v1224, %v1224
        %v1286 = vpack.c.bf16 %v1278, %v1278
        %1289 = vrot.lane.b32.xlu0 %v1034, 120
        %v1290 = vpop.permute.xlu0 %1289
        %1291 = vrot.lane.b32.xlu0 %v1036, 120
        %v1292 = vpop.permute.xlu0 %1291
        %1295 = vrot.lane.b32.xlu0 %v1034, 112
        %v1296 = vpop.permute.xlu0 %1295
        %1297 = vrot.lane.b32.xlu0 %v1036, 112
        %v1298 = vpop.permute.xlu0 %1297
        %1301 = vrot.lane.b32.xlu0 %v1034, 104
        %v1302 = vpop.permute.xlu0 %1301
        %1303 = vrot.lane.b32.xlu0 %v1036, 104
        %v1304 = vpop.permute.xlu0 %1303
        %v1307 = vrot.slane %v1296, 4
        %v1308 = vsel %vm1059, %v1307, %v1034
        %v1309 = vrot.slane %v1034, 4
        %v1310 = vsel %vm1059, %v1296, %v1309
        %v1312 = vunpack.c.l.s4 1983009808
        %v1313 = vunpack.c.0.s8 %v1312
        %v1314 = vperm.slane %v1308, %v1313
        %v1316 = vunpack.c.l.s4 1983009808
        %v1317 = vunpack.c.0.s8 %v1316
        %v1318 = vperm.slane %v1310, %v1317
        %v1319 = vrot.slane %v1302, 4
        %v1320 = vsel %vm1059, %v1319, %v1290
        %v1321 = vrot.slane %v1290, 4
        %v1322 = vsel %vm1059, %v1302, %v1321
        %v1324 = vunpack.c.l.s4 1983009808
        %v1325 = vunpack.c.0.s8 %v1324
        %v1326 = vperm.slane %v1320, %v1325
        %v1328 = vunpack.c.l.s4 1983009808
        %v1329 = vunpack.c.0.s8 %v1328
        %v1330 = vperm.slane %v1322, %v1329
        %v1331 = vrot.slane %v1326, 4
        %v1332 = vsel %vm1059, %v1331, %v1314
        %v1333 = vrot.slane %v1314, 4
        %v1334 = vsel %vm1059, %v1326, %v1333
        %v1336 = vunpack.c.l.s4 1934713408
        %v1337 = vunpack.c.0.s8 %v1336
        %v1338 = vperm.slane %v1332, %v1337
        %v1340 = vunpack.c.l.s4 1934713408
        %v1341 = vunpack.c.0.s8 %v1340
        %v1342 = vperm.slane %v1334, %v1341
        %v1343 = vrot.slane %v1330, 4
        %v1344 = vsel %vm1059, %v1343, %v1318
        %v1345 = vrot.slane %v1318, 4
        %v1346 = vsel %vm1059, %v1330, %v1345
        %v1348 = vunpack.c.l.s4 1934713408
        %v1349 = vunpack.c.0.s8 %v1348
        %v1350 = vperm.slane %v1344, %v1349
        %v1352 = vunpack.c.l.s4 1934713408
        %v1353 = vunpack.c.0.s8 %v1352
        %v1354 = vperm.slane %v1346, %v1353
        %v1355 = vrot.slane %v1338, 4
        %v1356 = vsel %vm1059, 0.0, %v1355
        %v1357 = vrot.slane %v1342, 4
        %v1358 = vsel %vm1059, 0.0, %v1357
        %v1359 = vrot.slane %v1350, 4
        %v1360 = vsel %vm1059, 0.0, %v1359
        %v1361 = vrot.slane %v1354, 4
        %v1362 = vsel %vm1059, 0.0, %v1361
        %v1363 = vrot.slane %v1298, 4
        %v1364 = vsel %vm1059, %v1363, %v1036
        %v1365 = vrot.slane %v1036, 4
        %v1366 = vsel %vm1059, %v1298, %v1365
        %v1368 = vunpack.c.l.s4 1983009808
        %v1369 = vunpack.c.0.s8 %v1368
        %v1370 = vperm.slane %v1364, %v1369
        %v1372 = vunpack.c.l.s4 1983009808
        %v1373 = vunpack.c.0.s8 %v1372
        %v1374 = vperm.slane %v1366, %v1373
        %v1375 = vrot.slane %v1304, 4
        %v1376 = vsel %vm1059, %v1375, %v1292
        %v1377 = vrot.slane %v1292, 4
        %v1378 = vsel %vm1059, %v1304, %v1377
        %v1380 = vunpack.c.l.s4 1983009808
        %v1381 = vunpack.c.0.s8 %v1380
        %v1382 = vperm.slane %v1376, %v1381
        %v1384 = vunpack.c.l.s4 1983009808
        %v1385 = vunpack.c.0.s8 %v1384
        %v1386 = vperm.slane %v1378, %v1385
        %v1387 = vrot.slane %v1382, 4
        %v1388 = vsel %vm1059, %v1387, %v1370
        %v1389 = vrot.slane %v1370, 4
        %v1390 = vsel %vm1059, %v1382, %v1389
        %v1392 = vunpack.c.l.s4 1934713408
        %v1393 = vunpack.c.0.s8 %v1392
        %v1394 = vperm.slane %v1388, %v1393
        %v1396 = vunpack.c.l.s4 1934713408
        %v1397 = vunpack.c.0.s8 %v1396
        %v1398 = vperm.slane %v1390, %v1397
        %v1399 = vrot.slane %v1386, 4
        %v1400 = vsel %vm1059, %v1399, %v1374
        %v1401 = vrot.slane %v1374, 4
        %v1402 = vsel %vm1059, %v1386, %v1401
        %v1404 = vunpack.c.l.s4 1934713408
        %v1405 = vunpack.c.0.s8 %v1404
        %v1406 = vperm.slane %v1400, %v1405
        %v1408 = vunpack.c.l.s4 1934713408
        %v1409 = vunpack.c.0.s8 %v1408
        %v1410 = vperm.slane %v1402, %v1409
        %v1411 = vrot.slane %v1394, 4
        %v1412 = vsel %vm1059, 0.0, %v1411
        %v1413 = vrot.slane %v1398, 4
        %v1414 = vsel %vm1059, 0.0, %v1413
        %v1415 = vrot.slane %v1406, 4
        %v1416 = vsel %vm1059, 0.0, %v1415
        %v1417 = vrot.slane %v1410, 4
        %v1418 = vsel %vm1059, 0.0, %v1417
        %v1419 = vsel %vm1059, %v1357, %v1338
        %v1421 = vunpack.c.l.s4 1983009808
        %v1422 = vunpack.c.0.s8 %v1421
        %v1423 = vperm.slane %v1419, %v1422
        %v1424 = vrot.slane %v1358, 4
        %v1425 = vsel %vm1059, %v1424, %v1356
        %v1427 = vunpack.c.l.s4 1983009808
        %v1428 = vunpack.c.0.s8 %v1427
        %v1429 = vperm.slane %v1425, %v1428
        %v1430 = vsel %vm1059, %v1361, %v1350
        %v1432 = vunpack.c.l.s4 1983009808
        %v1433 = vunpack.c.0.s8 %v1432
        %v1434 = vperm.slane %v1430, %v1433
        %v1435 = vrot.slane %v1362, 4
        %v1436 = vsel %vm1059, %v1435, %v1360
        %v1438 = vunpack.c.l.s4 1983009808
        %v1439 = vunpack.c.0.s8 %v1438
        %v1440 = vperm.slane %v1436, %v1439
        %v1441 = vrot.slane %v1429, 4
        %v1442 = vsel %vm1059, %v1441, %v1423
        %v1443 = vrot.slane %v1423, 4
        %v1444 = vsel %vm1059, %v1429, %v1443
        %v1446 = vunpack.c.l.s4 1934713408
        %v1447 = vunpack.c.0.s8 %v1446
        %v1448 = vperm.slane %v1442, %v1447
        %v1450 = vunpack.c.l.s4 1934713408
        %v1451 = vunpack.c.0.s8 %v1450
        %v1452 = vperm.slane %v1444, %v1451
        %v1453 = vrot.slane %v1440, 4
        %v1454 = vsel %vm1059, %v1453, %v1434
        %v1455 = vrot.slane %v1434, 4
        %v1456 = vsel %vm1059, %v1440, %v1455
        %v1458 = vunpack.c.l.s4 1934713408
        %v1459 = vunpack.c.0.s8 %v1458
        %v1460 = vperm.slane %v1454, %v1459
        %v1462 = vunpack.c.l.s4 1934713408
        %v1463 = vunpack.c.0.s8 %v1462
        %v1464 = vperm.slane %v1456, %v1463
        %v1465 = vrot.slane %v1460, 4
        %v1466 = vsel %vm1059, %v1465, %v1448
        %v1467 = vrot.slane %v1448, 4
        %v1468 = vsel %vm1059, %v1460, %v1467
        %v1469 = vrot.slane %v1464, 4
        %v1470 = vsel %vm1059, %v1469, %v1452
        %v1471 = vrot.slane %v1452, 4
        %v1472 = vsel %vm1059, %v1464, %v1471
        %v1473 = vsel %vm1059, %v1413, %v1394
        %v1475 = vunpack.c.l.s4 1983009808
        %v1476 = vunpack.c.0.s8 %v1475
        %v1477 = vperm.slane %v1473, %v1476
        %v1478 = vrot.slane %v1414, 4
        %v1479 = vsel %vm1059, %v1478, %v1412
        %v1481 = vunpack.c.l.s4 1983009808
        %v1482 = vunpack.c.0.s8 %v1481
        %v1483 = vperm.slane %v1479, %v1482
        %v1484 = vsel %vm1059, %v1417, %v1406
        %v1486 = vunpack.c.l.s4 1983009808
        %v1487 = vunpack.c.0.s8 %v1486
        %v1488 = vperm.slane %v1484, %v1487
        %v1489 = vrot.slane %v1418, 4
        %v1490 = vsel %vm1059, %v1489, %v1416
        %v1492 = vunpack.c.l.s4 1983009808
        %v1493 = vunpack.c.0.s8 %v1492
        %v1494 = vperm.slane %v1490, %v1493
        %v1495 = vrot.slane %v1483, 4
        %v1496 = vsel %vm1059, %v1495, %v1477
        %v1497 = vrot.slane %v1477, 4
        %v1498 = vsel %vm1059, %v1483, %v1497
        %v1500 = vunpack.c.l.s4 1934713408
        %v1501 = vunpack.c.0.s8 %v1500
        %v1502 = vperm.slane %v1496, %v1501
        %v1504 = vunpack.c.l.s4 1934713408
        %v1505 = vunpack.c.0.s8 %v1504
        %v1506 = vperm.slane %v1498, %v1505
        %v1507 = vrot.slane %v1494, 4
        %v1508 = vsel %vm1059, %v1507, %v1488
        %v1509 = vrot.slane %v1488, 4
        %v1510 = vsel %vm1059, %v1494, %v1509
        %v1512 = vunpack.c.l.s4 1934713408
        %v1513 = vunpack.c.0.s8 %v1512
        %v1514 = vperm.slane %v1508, %v1513
        %v1516 = vunpack.c.l.s4 1934713408
        %v1517 = vunpack.c.0.s8 %v1516
        %v1518 = vperm.slane %v1510, %v1517
        %v1519 = vrot.slane %v1514, 4
        %v1520 = vsel %vm1059, %v1519, %v1502
        %v1521 = vrot.slane %v1502, 4
        %v1522 = vsel %vm1059, %v1514, %v1521
        %v1523 = vrot.slane %v1518, 4
        %v1524 = vsel %vm1059, %v1523, %v1506
        %v1525 = vrot.slane %v1506, 4
        %v1526 = vsel %vm1059, %v1518, %v1525
        %v1527 = vpack.c.bf16 %v1466, %v1466
        %v1528 = vpack.c.bf16 %v1520, %v1520
        %v1529 = vpack.c.bf16 %v1468, %v1468
        %v1530 = vpack.c.bf16 %v1522, %v1522
        %v1531 = vpack.c.bf16 %v1470, %v1470
        %v1532 = vpack.c.bf16 %v1524, %v1524
        %v1533 = vpack.c.bf16 %v1472, %v1472
        %v1534 = vpack.c.bf16 %v1526, %v1526
        %v1535 = vld [vmem:[#allocation2] sm:$0xf]
        %v1536 = vld [vmem:[#allocation2 + $0x4] sm:$0xf]
        %v1537 = vld [vmem:[#allocation2 + $0x8] sm:$0xf]
        %v1538 = vld [vmem:[#allocation2 + $0xc] sm:$0xf]
        %v1541 = vunpack.c.l.b16 %v1279
        %v1542 = vunpack.c.l.b16 %v1280
        %v1543 = vpack.c.b16 %v1542, %v1541
        %vm1544 = vcmask 64512
        %v1546 = vsel %vm1544, %v1535, 0
        %v1549 = vsel %vm1544, %v1543, 0
        %1551 = vmatpush.bf16.xpose.msra.mxu0 0
        %1552 = vmatpush.bf16.xpose.msra.mxu0 0
        %1553 = vmatpush.bf16.xpose.msra.mxu0 0
        %1554 = vmatpush.bf16.xpose.msra.mxu0 0
        %1555 = vmatpush.bf16.xpose.msra.mxu0 0
        %1556 = vmatpush.bf16.xpose.msra.mxu0 0
        %1557 = vmatpush.bf16.xpose.msra.mxu0 0
        %1558 = vmatpush.bf16.xpose.msra.mxu0 %v1549
        %1559 = vmatmul.bf16.gmra.mxu0 %v1546
        %v1560 = vpop.f32.mrf.mxu0
        %v1561 = vadd.f32 0.0, %v1560
        %v1562 = vpop.f32.mrf.mxu0
        %1563 = vdwg.mxu0
        %v1566 = vunpack.c.l.b16 %v1281
        %v1567 = vunpack.c.l.b16 %v1282
        %v1568 = vpack.c.b16 %v1567, %v1566
        %v1570 = vsel %vm1544, %v1536, 0
        %v1573 = vsel %vm1544, %v1568, 0
        %1575 = vmatpush.bf16.xpose.msra.mxu0 0
        %1576 = vmatpush.bf16.xpose.msra.mxu0 0
        %1577 = vmatpush.bf16.xpose.msra.mxu0 0
        %1578 = vmatpush.bf16.xpose.msra.mxu0 0
        %1579 = vmatpush.bf16.xpose.msra.mxu0 0
        %1580 = vmatpush.bf16.xpose.msra.mxu0 0
        %1581 = vmatpush.bf16.xpose.msra.mxu0 0
        %1582 = vmatpush.bf16.xpose.msra.mxu0 %v1573
        %1583 = vmatmul.bf16.gmra.mxu0 %v1570
        %v1584 = vpop.f32.mrf.mxu0
        %v1585 = vadd.f32 0.0, %v1584
        %v1586 = vpop.f32.mrf.mxu0
        %1587 = vdwg.mxu0
        %v1590 = vunpack.c.l.b16 %v1283
        %v1591 = vunpack.c.l.b16 %v1284
        %v1592 = vpack.c.b16 %v1591, %v1590
        %v1594 = vsel %vm1544, %v1537, 0
        %v1597 = vsel %vm1544, %v1592, 0
        %1599 = vmatpush.bf16.xpose.msra.mxu0 0
        %1600 = vmatpush.bf16.xpose.msra.mxu0 0
        %1601 = vmatpush.bf16.xpose.msra.mxu0 0
        %1602 = vmatpush.bf16.xpose.msra.mxu0 0
        %1603 = vmatpush.bf16.xpose.msra.mxu0 0
        %1604 = vmatpush.bf16.xpose.msra.mxu0 0
        %1605 = vmatpush.bf16.xpose.msra.mxu0 0
        %1606 = vmatpush.bf16.xpose.msra.mxu0 %v1597
        %1607 = vmatmul.bf16.gmra.mxu0 %v1594
        %v1608 = vpop.f32.mrf.mxu0
        %v1609 = vadd.f32 0.0, %v1608
        %v1610 = vpop.f32.mrf.mxu0
        %1611 = vdwg.mxu0
        %v1614 = vunpack.c.l.b16 %v1285
        %v1615 = vunpack.c.l.b16 %v1286
        %v1616 = vpack.c.b16 %v1615, %v1614
        %v1618 = vsel %vm1544, %v1538, 0
        %v1621 = vsel %vm1544, %v1616, 0
        %1623 = vmatpush.bf16.xpose.msra.mxu0 0
        %1624 = vmatpush.bf16.xpose.msra.mxu0 0
        %1625 = vmatpush.bf16.xpose.msra.mxu0 0
        %1626 = vmatpush.bf16.xpose.msra.mxu0 0
        %1627 = vmatpush.bf16.xpose.msra.mxu0 0
        %1628 = vmatpush.bf16.xpose.msra.mxu0 0
        %1629 = vmatpush.bf16.xpose.msra.mxu0 0
        %1630 = vmatpush.bf16.xpose.msra.mxu0 %v1621
        %1631 = vmatmul.bf16.gmra.mxu0 %v1618
        %v1632 = vpop.f32.mrf.mxu0
        %v1633 = vadd.f32 0.0, %v1632
        %v1634 = vpop.f32.mrf.mxu0
        %1635 = vdwg.mxu0
        %v1636 = vld [vmem:[#allocation3] sm:$0xff]
        %v1637 = vld [vmem:[#allocation3 + $0x8] sm:$0xff]
        %v1638 = vld [vmem:[#allocation3 + $0x10] sm:$0xff]
        %v1639 = vld [vmem:[#allocation3 + $0x18] sm:$0xff]
        %vm1640 = vcmask 130048
        %v1641 = vsel %vm1640, %v1561, -inf
        %1642 = vmax.xlane.f32.xlu0 %v1641
        %v1643 = vpop.xlane.xlu0 %1642
        %v1644 = vsel %vm1640, %v1585, -inf
        %1645 = vmax.xlane.f32.xlu0 %v1644
        %v1646 = vpop.xlane.xlu0 %1645
        %v1647 = vsel %vm1640, %v1609, -inf
        %1648 = vmax.xlane.f32.xlu0 %v1647
        %v1649 = vpop.xlane.xlu0 %1648
        %v1650 = vsel %vm1640, %v1633, -inf
        %1651 = vmax.xlane.f32.xlu0 %v1650
        %v1652 = vpop.xlane.xlu0 %1651
        %v1653 = vmax.f32 %v1636, %v1643
        %v1654 = vmax.f32 %v1637, %v1646
        %v1655 = vmax.f32 %v1638, %v1649
        %v1656 = vmax.f32 %v1639, %v1652
        %v1657 = vsub.f32 %v1636, %v1653
        %v1658 = vsub.f32 %v1637, %v1654
        %v1659 = vsub.f32 %v1638, %v1655
        %v1660 = vsub.f32 %v1639, %v1656
        %v1661 = vmul.f32 %v1657, 1.442695
        %v1662 = vpow.pop %v1661
        %v1663 = vmul.f32 %v1658, 1.442695
        %v1664 = vpow.pop %v1663
        %v1665 = vmul.f32 %v1659, 1.442695
        %v1666 = vpow.pop %v1665
        %v1667 = vmul.f32 %v1660, 1.442695
        %v1668 = vpow.pop %v1667
        %1670 = vset.pattern.permute.xlu0 0
        %1671 = vperm.xlu0 %1670, %v1653
        %v1672 = vpop.permute.xlu0 %1671
        %1675 = vset.pattern.permute.xlu0 0
        %1676 = vperm.xlu0 %1675, %v1654
        %v1677 = vpop.permute.xlu0 %1676
        %1680 = vset.pattern.permute.xlu0 0
        %1681 = vperm.xlu0 %1680, %v1655
        %v1682 = vpop.permute.xlu0 %1681
        %1685 = vset.pattern.permute.xlu0 0
        %1686 = vperm.xlu0 %1685, %v1656
        %v1687 = vpop.permute.xlu0 %1686
        %v1689 = vsub.f32 %v1561, %v1672
        %v1690 = vsub.f32 %v1585, %v1677
        %v1691 = vsub.f32 %v1609, %v1682
        %v1692 = vsub.f32 %v1633, %v1687
        %v1693 = vmul.f32 %v1689, 1.442695
        %v1694 = vpow.pop %v1693
        %v1695 = vmul.f32 %v1690, 1.442695
        %v1696 = vpow.pop %v1695
        %v1697 = vmul.f32 %v1691, 1.442695
        %v1698 = vpow.pop %v1697
        %v1699 = vmul.f32 %v1692, 1.442695
        %v1700 = vpow.pop %v1699
        %v1701 = vld [vmem:[#allocation4] sm:$0xff]
        %v1702 = vld [vmem:[#allocation4 + $0x8] sm:$0xff]
        %v1703 = vld [vmem:[#allocation4 + $0x10] sm:$0xff]
        %v1704 = vld [vmem:[#allocation4 + $0x18] sm:$0xff]
        %v1705 = vmul.f32 %v1662, %v1701
        %v1706 = vmul.f32 %v1664, %v1702
        %v1707 = vmul.f32 %v1666, %v1703
        %v1708 = vmul.f32 %v1668, %v1704
        %v1709 = vsel %vm1640, %v1694, 0.0
        %1710 = vadd.xlane.f32.xlu0 %v1709
        %v1711 = vpop.xlane.xlu0 %1710
        %v1712 = vsel %vm1640, %v1696, 0.0
        %1713 = vadd.xlane.f32.xlu0 %v1712
        %v1714 = vpop.xlane.xlu0 %1713
        %v1715 = vsel %vm1640, %v1698, 0.0
        %1716 = vadd.xlane.f32.xlu0 %v1715
        %v1717 = vpop.xlane.xlu0 %1716
        %v1718 = vsel %vm1640, %v1700, 0.0
        %1719 = vadd.xlane.f32.xlu0 %v1718
        %v1720 = vpop.xlane.xlu0 %1719
        %v1721 = vadd.f32 %v1705, %v1711
        %v1722 = vadd.f32 %v1706, %v1714
        %v1723 = vadd.f32 %v1707, %v1717
        %v1724 = vadd.f32 %v1708, %v1720
        %vm1725 = vcmask 7168
        %1726 = vst.msk [vmem:[#allocation4] sm:$0xff] %vm1725, %v1721
        %1727 = vst.msk [vmem:[#allocation4 + $0x8] sm:$0xff] %vm1725, %v1722
        %1728 = vst.msk [vmem:[#allocation4 + $0x10] sm:$0xff] %vm1725, %v1723
        %1729 = vst.msk [vmem:[#allocation4 + $0x18] sm:$0xff] %vm1725, %v1724
        %v1730 = vld [vmem:[#allocation5] sm:$0xff]
        %v1731 = vld [vmem:[#allocation5 + $0x8] sm:$0xff]
        %v1732 = vld [vmem:[#allocation5 + $0x10] sm:$0xff]
        %v1733 = vld [vmem:[#allocation5 + $0x18] sm:$0xff]
        %1735 = vset.pattern.permute.xlu0 0
        %1736 = vperm.xlu0 %1735, %v1662
        %v1737 = vpop.permute.xlu0 %1736
        %1740 = vset.pattern.permute.xlu0 0
        %1741 = vperm.xlu0 %1740, %v1664
        %v1742 = vpop.permute.xlu0 %1741
        %1745 = vset.pattern.permute.xlu0 0
        %1746 = vperm.xlu0 %1745, %v1666
        %v1747 = vpop.permute.xlu0 %1746
        %1750 = vset.pattern.permute.xlu0 0
        %1751 = vperm.xlu0 %1750, %v1668
        %v1752 = vpop.permute.xlu0 %1751
        %v1754 = vmul.f32 %v1737, %v1730
        %v1755 = vmul.f32 %v1742, %v1731
        %v1756 = vmul.f32 %v1747, %v1732
        %v1757 = vmul.f32 %v1752, %v1733
        %v1758 = vpack.c.bf16 %v1694, %v1694
        %v1759 = vpack.c.bf16 %v1696, %v1696
        %v1760 = vpack.c.bf16 %v1698, %v1698
        %v1761 = vpack.c.bf16 %v1700, %v1700
        %v1764 = vunpack.c.l.b16 %v1527
        %v1765 = vunpack.c.l.b16 %v1528
        %v1766 = vpack.c.b16 %v1765, %v1764
        %v1769 = vsel %vm1640, %v1758, 0
        %1771 = vmatpush.bf16.msra.mxu0 0
        %1772 = vmatpush.bf16.msra.mxu0 0
        %1773 = vmatpush.bf16.msra.mxu0 0
        %1774 = vmatpush.bf16.msra.mxu0 0
        %1775 = vmatpush.bf16.msra.mxu0 0
        %1776 = vmatpush.bf16.msra.mxu0 0
        %1777 = vmatpush.bf16.msra.mxu0 0
        %1778 = vmatpush.bf16.msra.mxu0 %v1766
        %1779 = vmatmul.bf16.gmra.mxu0 %v1769
        %v1780 = vpop.f32.mrf.mxu0
        %v1781 = vadd.f32 0.0, %v1780
        %v1782 = vpop.f32.mrf.mxu0
        %1783 = vdwg.mxu0
        %v1786 = vunpack.c.l.b16 %v1529
        %v1787 = vunpack.c.l.b16 %v1530
        %v1788 = vpack.c.b16 %v1787, %v1786
        %v1791 = vsel %vm1640, %v1759, 0
        %1793 = vmatpush.bf16.msra.mxu0 0
        %1794 = vmatpush.bf16.msra.mxu0 0
        %1795 = vmatpush.bf16.msra.mxu0 0
        %1796 = vmatpush.bf16.msra.mxu0 0
        %1797 = vmatpush.bf16.msra.mxu0 0
        %1798 = vmatpush.bf16.msra.mxu0 0
        %1799 = vmatpush.bf16.msra.mxu0 0
        %1800 = vmatpush.bf16.msra.mxu0 %v1788
        %1801 = vmatmul.bf16.gmra.mxu0 %v1791
        %v1802 = vpop.f32.mrf.mxu0
        %v1803 = vadd.f32 0.0, %v1802
        %v1804 = vpop.f32.mrf.mxu0
        %1805 = vdwg.mxu0
        %v1808 = vunpack.c.l.b16 %v1531
        %v1809 = vunpack.c.l.b16 %v1532
        %v1810 = vpack.c.b16 %v1809, %v1808
        %v1813 = vsel %vm1640, %v1760, 0
        %1815 = vmatpush.bf16.msra.mxu0 0
        %1816 = vmatpush.bf16.msra.mxu0 0
        %1817 = vmatpush.bf16.msra.mxu0 0
        %1818 = vmatpush.bf16.msra.mxu0 0
        %1819 = vmatpush.bf16.msra.mxu0 0
        %1820 = vmatpush.bf16.msra.mxu0 0
        %1821 = vmatpush.bf16.msra.mxu0 0
        %1822 = vmatpush.bf16.msra.mxu0 %v1810
        %1823 = vmatmul.bf16.gmra.mxu0 %v1813
        %v1824 = vpop.f32.mrf.mxu0
        %v1825 = vadd.f32 0.0, %v1824
        %v1826 = vpop.f32.mrf.mxu0
        %1827 = vdwg.mxu0
        %v1830 = vunpack.c.l.b16 %v1533
        %v1831 = vunpack.c.l.b16 %v1534
        %v1832 = vpack.c.b16 %v1831, %v1830
        %v1835 = vsel %vm1640, %v1761, 0
        %1837 = vmatpush.bf16.msra.mxu0 0
        %1838 = vmatpush.bf16.msra.mxu0 0
        %1839 = vmatpush.bf16.msra.mxu0 0
        %1840 = vmatpush.bf16.msra.mxu0 0
        %1841 = vmatpush.bf16.msra.mxu0 0
        %1842 = vmatpush.bf16.msra.mxu0 0
        %1843 = vmatpush.bf16.msra.mxu0 0
        %1844 = vmatpush.bf16.msra.mxu0 %v1832
        %1845 = vmatmul.bf16.gmra.mxu0 %v1835
        %v1846 = vpop.f32.mrf.mxu0
        %v1847 = vadd.f32 0.0, %v1846
        %v1848 = vpop.f32.mrf.mxu0
        %1849 = vdwg.mxu0
        %v1850 = vadd.f32 %v1754, %v1781
        %v1851 = vadd.f32 %v1755, %v1803
        %v1852 = vadd.f32 %v1756, %v1825
        %v1853 = vadd.f32 %v1757, %v1847
        %1854 = vst.msk [vmem:[#allocation5] sm:$0xff] %vm1544, %v1850
        %1855 = vst.msk [vmem:[#allocation5 + $0x8] sm:$0xff] %vm1544, %v1851
        %1856 = vst.msk [vmem:[#allocation5 + $0x10] sm:$0xff] %vm1544, %v1852
        %1857 = vst.msk [vmem:[#allocation5 + $0x18] sm:$0xff] %vm1544, %v1853
        %1858 = vst.msk [vmem:[#allocation3] sm:$0xff] %vm1725, %v1653
        %1859 = vst.msk [vmem:[#allocation3 + $0x8] sm:$0xff] %vm1725, %v1654
        %1860 = vst.msk [vmem:[#allocation3 + $0x10] sm:$0xff] %vm1725, %v1655
        %1861 = vst.msk [vmem:[#allocation3 + $0x18] sm:$0xff] %vm1725, %v1656
        // Predicated region
        $region125: #{petr_transformer_decoder.7} parent=75 // pred_check
          %p1862 = pneg %p765
        $region126: #{petr_transformer_decoder.7} parent=75 // pred_check_branch
          %1864 = sbr.rel (%p1862) target = $region128
        $region127: #{petr_transformer_decoder.7} parent=75 // pred_region
          %v1865 = vld [vmem:[#allocation4] sm:$0xff]
          %v1866 = vld [vmem:[#allocation4 + $0x8] sm:$0xff]
          %v1867 = vld [vmem:[#allocation4 + $0x10] sm:$0xff]
          %v1868 = vld [vmem:[#allocation4 + $0x18] sm:$0xff]
          %v1869 = vrcp.pop %v1865
          %v1870 = vrcp.pop %v1866
          %v1871 = vrcp.pop %v1867
          %v1872 = vrcp.pop %v1868
          %v1873 = vld [vmem:[#allocation5] sm:$0xff]
          %v1874 = vld [vmem:[#allocation5 + $0x8] sm:$0xff]
          %v1875 = vld [vmem:[#allocation5 + $0x10] sm:$0xff]
          %v1876 = vld [vmem:[#allocation5 + $0x18] sm:$0xff]
          %1878 = vset.pattern.permute.xlu0 0
          %1879 = vperm.xlu0 %1878, %v1869
          %v1880 = vpop.permute.xlu0 %1879
          %1883 = vset.pattern.permute.xlu0 0
          %1884 = vperm.xlu0 %1883, %v1870
          %v1885 = vpop.permute.xlu0 %1884
          %1888 = vset.pattern.permute.xlu0 0
          %1889 = vperm.xlu0 %1888, %v1871
          %v1890 = vpop.permute.xlu0 %1889
          %1893 = vset.pattern.permute.xlu0 0
          %1894 = vperm.xlu0 %1893, %v1872
          %v1895 = vpop.permute.xlu0 %1894
          %v1897 = vmul.f32 %v1873, %v1880
          %v1898 = vmul.f32 %v1874, %v1885
          %v1899 = vmul.f32 %v1875, %v1890
          %v1900 = vmul.f32 %v1876, %v1895
          %v1901 = vrot.slane %v1899, 4
          %v1902 = vsel %vm1059, %v1901, %v1897
          %v1903 = vrot.slane %v1897, 4
          %v1904 = vsel %vm1059, %v1899, %v1903
          %v1906 = vunpack.c.l.s4 1983009808
          %v1907 = vunpack.c.0.s8 %v1906
          %v1908 = vperm.slane %v1902, %v1907
          %v1910 = vunpack.c.l.s4 1983009808
          %v1911 = vunpack.c.0.s8 %v1910
          %v1912 = vperm.slane %v1904, %v1911
          %v1913 = vrot.slane %v1900, 4
          %v1914 = vsel %vm1059, %v1913, %v1898
          %v1915 = vrot.slane %v1898, 4
          %v1916 = vsel %vm1059, %v1900, %v1915
          %v1918 = vunpack.c.l.s4 1983009808
          %v1919 = vunpack.c.0.s8 %v1918
          %v1920 = vperm.slane %v1914, %v1919
          %v1922 = vunpack.c.l.s4 1983009808
          %v1923 = vunpack.c.0.s8 %v1922
          %v1924 = vperm.slane %v1916, %v1923
          %v1925 = vrot.slane %v1920, 4
          %v1926 = vsel %vm1059, %v1925, %v1908
          %v1927 = vrot.slane %v1908, 4
          %v1928 = vsel %vm1059, %v1920, %v1927
          %v1930 = vunpack.c.l.s4 1934713408
          %v1931 = vunpack.c.0.s8 %v1930
          %v1932 = vperm.slane %v1926, %v1931
          %v1934 = vunpack.c.l.s4 1934713408
          %v1935 = vunpack.c.0.s8 %v1934
          %v1936 = vperm.slane %v1928, %v1935
          %v1937 = vrot.slane %v1924, 4
          %v1938 = vsel %vm1059, %v1937, %v1912
          %v1939 = vrot.slane %v1912, 4
          %v1940 = vsel %vm1059, %v1924, %v1939
          %v1942 = vunpack.c.l.s4 1934713408
          %v1943 = vunpack.c.0.s8 %v1942
          %v1944 = vperm.slane %v1938, %v1943
          %v1946 = vunpack.c.l.s4 1934713408
          %v1947 = vunpack.c.0.s8 %v1946
          %v1948 = vperm.slane %v1940, %v1947
          %v1949 = vrot.slane %v1932, 4
          %v1950 = vsel %vm1059, 0.0, %v1949
          %v1951 = vrot.slane %v1936, 4
          %v1952 = vsel %vm1059, 0.0, %v1951
          %v1953 = vrot.slane %v1944, 4
          %v1954 = vsel %vm1059, 0.0, %v1953
          %v1955 = vrot.slane %v1948, 4
          %v1956 = vsel %vm1059, 0.0, %v1955
          %v1957 = vsel %vm1059, %v1951, %v1932
          %v1959 = vunpack.c.l.s4 1983009808
          %v1960 = vunpack.c.0.s8 %v1959
          %v1961 = vperm.slane %v1957, %v1960
          %v1962 = vrot.slane %v1952, 4
          %v1963 = vsel %vm1059, %v1962, %v1950
          %v1965 = vunpack.c.l.s4 1983009808
          %v1966 = vunpack.c.0.s8 %v1965
          %v1967 = vperm.slane %v1963, %v1966
          %v1968 = vsel %vm1059, %v1955, %v1944
          %v1970 = vunpack.c.l.s4 1983009808
          %v1971 = vunpack.c.0.s8 %v1970
          %v1972 = vperm.slane %v1968, %v1971
          %v1973 = vrot.slane %v1956, 4
          %v1974 = vsel %vm1059, %v1973, %v1954
          %v1976 = vunpack.c.l.s4 1983009808
          %v1977 = vunpack.c.0.s8 %v1976
          %v1978 = vperm.slane %v1974, %v1977
          %v1979 = vrot.slane %v1967, 4
          %v1980 = vsel %vm1059, %v1979, %v1961
          %v1981 = vrot.slane %v1961, 4
          %v1982 = vsel %vm1059, %v1967, %v1981
          %v1984 = vunpack.c.l.s4 1934713408
          %v1985 = vunpack.c.0.s8 %v1984
          %v1986 = vperm.slane %v1980, %v1985
          %v1988 = vunpack.c.l.s4 1934713408
          %v1989 = vunpack.c.0.s8 %v1988
          %v1990 = vperm.slane %v1982, %v1989
          %v1991 = vrot.slane %v1978, 4
          %v1992 = vsel %vm1059, %v1991, %v1972
          %v1993 = vrot.slane %v1972, 4
          %v1994 = vsel %vm1059, %v1978, %v1993
          %v1996 = vunpack.c.l.s4 1934713408
          %v1997 = vunpack.c.0.s8 %v1996
          %v1998 = vperm.slane %v1992, %v1997
          %v2000 = vunpack.c.l.s4 1934713408
          %v2001 = vunpack.c.0.s8 %v2000
          %v2002 = vperm.slane %v1994, %v2001
          %v2003 = vrot.slane %v1998, 4
          %v2004 = vsel %vm1059, %v2003, %v1986
          %v2005 = vrot.slane %v1986, 4
          %v2006 = vsel %vm1059, %v1998, %v2005
          %v2007 = vrot.slane %v2002, 4
          %v2008 = vsel %vm1059, %v2007, %v1990
          %v2009 = vrot.slane %v1990, 4
          %v2010 = vsel %vm1059, %v2002, %v2009
          %2012 = vrot.lane.b32.xlu0 %v2006, 8
          %v2013 = vpop.permute.xlu0 %2012
          %2016 = vrot.lane.b32.xlu0 %v2008, 16
          %v2017 = vpop.permute.xlu0 %2016
          %2020 = vrot.lane.b32.xlu0 %v2010, 24
          %v2021 = vpop.permute.xlu0 %2020
          %v2023 = vsel %vm1544, %v2004, %v2013
          %v2024 = vsel %vm1640, %v2023, %v2017
          %vm2025 = vcmask 195584
          %v2026 = vsel %vm2025, %v2024, %v2021
          %v2027 = vpack.c.bf16 %v2026, %v2026
          %v2028 = vld [vmem:[#allocation19] sm:$0xf]
          %v2029 = vld [vmem:[#allocation19 + $0x4] sm:$0xf]
          %v2030 = vld [vmem:[#allocation19 + $0x8] sm:$0xf]
          %v2031 = vld [vmem:[#allocation19 + $0xc] sm:$0xf]
          %v2032 = vld [vmem:[#allocation20] sm:$0x1]
          %v2034 = vperm.slane %v2032, 0
          %v2040 = vunpack.c.l.b16 %v2028
          %v2041 = vunpack.c.l.b16 %v2029
          %v2042 = vunpack.c.l.b16 %v2030
          %v2043 = vunpack.c.l.b16 %v2031
          %v2044 = vpack.c.b16 %v2041, %v2040
          %v2045 = vpack.c.b16 %v2043, %v2042
          %v2049 = vsel %vm982, %v2027, 0
          %2051 = vmatpush.bf16.msra.mxu0 0
          %2052 = vmatpush.bf16.msra.mxu0 0
          %2053 = vmatpush.bf16.msra.mxu0 0
          %2054 = vmatpush.bf16.msra.mxu0 0
          %2055 = vmatpush.bf16.msra.mxu0 0
          %2056 = vmatpush.bf16.msra.mxu0 0
          %2057 = vmatpush.bf16.msra.mxu0 %v2045
          %2058 = vmatpush.bf16.msra.mxu0 %v2044
          %2059 = vmatmul.bf16.gmra.mxu0 %v2049
          %v2060 = vpop.f32.mrf.mxu0
          %v2061 = vadd.f32 %v2034, %v2060
          %v2062 = vpop.f32.mrf.mxu0
          %2063 = vdwg.mxu0
          %v2064 = vld [vmem:[%s745] sm:$0xff]
          %v2065 = vadd.f32 %v2061, %v2064
          %v2066 = vsel %vm982, %v2065, 0.0
          %2067 = vadd.xlane.f32.xlu0 %v2066
          %v2068 = vpop.xlane.xlu0 %2067
          %v2069 = vrcp.pop 32.0
          %v2070 = vmul.f32 32.0, %v2069
          %v2071 = vsub.f32 1.0, %v2070
          %v2072 = vmul.f32 %v2069, %v2071
          %v2073 = vadd.f32 %v2069, %v2072
          %vm2074 = vweird.f32 %v2069
          %v2075 = vsel %vm2074, %v2069, %v2073
          %v2076 = vmul.f32 %v2068, %v2075
          %v2077 = vsub.f32 %v2065, %v2076
          %v2078 = vmul.f32 %v2077, %v2077
          %v2079 = vsel %vm982, %v2078, 0.0
          %2080 = vadd.xlane.f32.xlu0 %v2079
          %v2081 = vpop.xlane.xlu0 %2080
          %v2082 = vmul.f32 %v2081, %v2075
          %v2083 = vadd.f32 %v2082, 1e-05
          %v2084 = vrsqrt.pop %v2083
          %v2085 = vmul.f32 %v2084, %v2083
          %v2086 = vmul.f32 %v2085, %v2084
          %v2087 = vmul.f32 0.5, %v2086
          %v2088 = vsub.f32 1.5, %v2087
          %v2089 = vmul.f32 %v2084, %v2088
          %vm2090 = vweird.f32 %v2083
          %vm2091 = vweird.f32 %v2084
          %vm2092 = vmor %vm2090, %vm2091
          %v2093 = vsel %vm2092, %v2084, %v2089
          %v2094 = vmul.f32 %v2077, %v2093
          %v2095 = vld [vmem:[%s12] sm:$0x1]
          %v2097 = vperm.slane %v2095, 0
          %v2099 = vmul.f32 %v2094, %v2097
          %v2100 = vld [vmem:[#allocation22] sm:$0x1]
          %v2102 = vperm.slane %v2100, 0
          %v2104 = vadd.f32 %v2099, %v2102
          %2105 = vst.msk [vmem:[%s763] sm:$0xff] %vm982, %v2104
        $region128: #{petr_transformer_decoder.7} parent=75 // pred_fallthru
          _
        %p2106 = scmp.lt.s32.totalorder %s40, 1
        %s2107 = scalar_select %p2106, %s40, 1
        %p2108 = scmp.lt.s32.totalorder %s41, 0
        %s2109 = scalar_select %p2108, %s41, 0
        %s2110 = sadd.s32 %s2109, %s2107
        %s2111 = smul.addr %s2110, 8
        %s2112 = scalar_lea.vmem %s14, %s2111
        // Predicated region
        $region129: #{petr_transformer_decoder.7} parent=75 // pred_check
          %p2113 = pneg %p396
        $region130: #{petr_transformer_decoder.7} parent=75 // pred_check_branch
          %2115 = sbr.rel (%p2113) target = $region132
        $region131: #{petr_transformer_decoder.7} parent=75 // pred_region
          _
        $region132: #{petr_transformer_decoder.7} parent=75 // pred_fallthru
          _
      $region76: #{petr_transformer_decoder.7} parent=5 // pred_fallthru
        _
      %p2116 = scmp.le.s32.totalorder 2, %s30
      // Predicated region
      $region133: #{petr_transformer_decoder.7} parent=5 // pred_check
        %p2117 = pneg %p2116
      $region134: #{petr_transformer_decoder.7} parent=5 // pred_check_branch
        %2119 = sbr.rel (%p2117) target = $region136
      $region135: #{petr_transformer_decoder.7} parent=5 // pred_region
        %s2120 = ssub.s32 %s30, 2
        // Predicated region
        $region137: #{petr_transformer_decoder.7} parent=135 // pred_check
          %p2121 = pneg %p402
        $region138: #{petr_transformer_decoder.7} parent=135 // pred_check_branch
          %2123 = sbr.rel (%p2121) target = $region140
        $region139: #{petr_transformer_decoder.7} parent=135 // pred_region
          %p2124 = scmp.lt.s32.totalorder %s43, 1
          %s2125 = scalar_select %p2124, %s43, 1
          %p2126 = scmp.lt.s32.totalorder %s44, 0
          %s2127 = scalar_select %p2126, %s44, 0
          %s2128 = sadd.s32 %s2127, %s2125
          %s2129 = smul.addr %s2128, 8
          %s2130 = scalar_lea.vmem %s14, %s2129
        $region140: #{petr_transformer_decoder.7} parent=135 // pred_fallthru
          _
      $region136: #{petr_transformer_decoder.7} parent=5 // pred_fallthru
        _
    $region6: #{petr_transformer_decoder.7} parent=1 // loop_footer
      %s34 = sadd.s32 1, %s30
    $region7: #{petr_transformer_decoder.7} parent=1 // loop_footer_branch
      %29 = sbr.rel target = $region3
    $region8: #{petr_transformer_decoder.7} parent=1 // loop_exit
      _
    %2131 = vsyncpa [#allocation7], 1
    %s2132 = scalar_lea.sflag [#allocation7], 1
    %2133 = vsyncpa %s2132, 1
    %2134 = vsyncpa [#allocation9], 1
    %s2135 = scalar_lea.sflag [#allocation9], 1
    %2136 = vsyncpa %s2135, 1
    %2137 = vsyncpa [#allocation12], 1
    %2138 = vsyncpa [#allocation15], 1
    %2139 = vsyncpa [#allocation18], 1
    %2140 = vsyncpa [#allocation21], 1

// kernel: petr_transformer_decoder.9
$region0: #{petr_transformer_decoder.9}
  #allocation0 [shape = 'u32[]', space=smem, size = 0x4, offset = 0x4, fixed_abs, tag = 'smem constant byte address 0x4 - core index']
  #allocation1 [shape = 'u32[72,128]{1,0:T(1,128)}', space=vmem, size = 0x9000, scoped, tag = 'internal scratch']
  #allocation2 [shape = 'bf16[4,8,8]{2,1,0:T(8,128)(2,1)}', space=vmem, size = 0x2000, scoped, tag = 'scratch operand']
  #allocation3 [shape = 'f32[4,8,1]{2,1,0:T(8,128)}', space=vmem, size = 0x4000, scoped, tag = 'scratch operand']
  #allocation4 [shape = 'f32[4,8,1]{2,1,0:T(8,128)}', space=vmem, size = 0x4000, scoped, tag = 'scratch operand']
  #allocation5 [shape = 'f32[4,8,8]{2,1,0:T(8,128)}', space=vmem, size = 0x4000, scoped, tag = 'scratch operand']
  %s0 = inlined_call_operand.vmem [shape: f32[2,8,32], index: 0, kind: input, shape index: {}, may-alias: {0,2}]
  %s1 = inlined_call_operand.hbm [shape: f32[2,8,32], index: 1, kind: input, shape index: {}, may-alias: {1,3}]
  %s2 = inlined_call_operand.vmem [shape: f32[2,8,32], index: 2, kind: input, shape index: {}, may-alias: {0,2}]
  %s3 = inlined_call_operand.hbm [shape: f32[2,8,32], index: 3, kind: input, shape index: {}, may-alias: {1,3}]
  %s4 = inlined_call_operand.hbm [shape: bf16[32,32], index: 4, kind: input, shape index: {}]
  %s5 = inlined_call_operand.vmem [shape: f32[1,32], index: 5, kind: input, shape index: {}]
  %s6 = inlined_call_operand.hbm [shape: bf16[32,32], index: 6, kind: input, shape index: {}]
  %s7 = inlined_call_operand.vmem [shape: f32[1,32], index: 7, kind: input, shape index: {}]
  %s8 = inlined_call_operand.hbm [shape: bf16[32,32], index: 8, kind: input, shape index: {}]
  %s9 = inlined_call_operand.vmem [shape: f32[1,32], index: 9, kind: input, shape index: {}]
  %s10 = inlined_call_operand.hbm [shape: bf16[32,32], index: 10, kind: input, shape index: {}]
  %s11 = inlined_call_operand.hbm [shape: f32[1,32], index: 11, kind: input, shape index: {}]
  %s12 = inlined_call_operand.hbm [shape: f32[1,32], index: 12, kind: input, shape index: {}]
  %s13 = inlined_call_operand.hbm [shape: f32[1,32], index: 13, kind: input, shape index: {}]
  %s14 = inlined_call_operand.vmem [shape: f32[2,8,32], index: 14, kind: output, shape index: {}]
  %s15 = sld [smem:[#allocation0]]
  $region133: #{petr_transformer_decoder.9} parent=0
    _
  %s17 = ssub.s32 1, %s15
  %s18 = scalar_select 0, %s17, %s15
  $region1: #{petr_transformer_decoder.9} parent=0
    #allocation6 [shape = 'u8[8192]{0}', space=vmem, size = 0x2000, scoped, tag = 'input window, operand 1']
    #allocation7 [shape = 's32[2]{0}', space=sflag, size = 0x8, scoped, tag = 'scoped memory for petr_transformer_decoder.9']
    #allocation8 [shape = 'u8[8192]{0}', space=vmem, size = 0x2000, scoped, tag = 'input window, operand 3']
    #allocation9 [shape = 's32[2]{0}', space=sflag, size = 0x8, scoped, tag = 'scoped memory for petr_transformer_decoder.9']
    #allocation10 [shape = 'u8[8192]{0}', space=vmem, size = 0x2000, scoped, tag = 'input window, operand 4, single buffered']
    #allocation11 [shape = 'u8[8192]{0}', space=vmem, size = 0x2000, scoped, tag = 'input window, operand 6, single buffered']
    #allocation12 [shape = 's32[1]{0}', space=sflag, size = 0x4, scoped, tag = 'scoped memory for petr_transformer_decoder.9']
    #allocation13 [shape = 'u8[8192]{0}', space=vmem, size = 0x2000, scoped, tag = 'input window, operand 8, single buffered']
    #allocation14 [shape = 'u8[8192]{0}', space=vmem, size = 0x2000, scoped, tag = 'input window, operand 10, single buffered']
    #allocation15 [shape = 's32[1]{0}', space=sflag, size = 0x4, scoped, tag = 'scoped memory for petr_transformer_decoder.9']
    #allocation16 [shape = 'u8[512]{0}', space=vmem, size = 0x400, scoped, tag = 'input window, operand 11, single buffered']
    #allocation17 [shape = 'u8[512]{0}', space=vmem, size = 0x400, scoped, tag = 'input window, operand 12, single buffered']
    #allocation18 [shape = 's32[1]{0}', space=sflag, size = 0x4, scoped, tag = 'scoped memory for petr_transformer_decoder.9']
    #allocation19 [shape = 'u8[512]{0}', space=vmem, size = 0x400, scoped, tag = 'input window, operand 13, single buffered']
    %19 = vsyncpa [#allocation7], 0
    %s20 = scalar_lea.sflag [#allocation7], 1
    %21 = vsyncpa %s20, 0
    %22 = vsyncpa [#allocation9], 0
    %s23 = scalar_lea.sflag [#allocation9], 1
    %24 = vsyncpa %s23, 0
    %25 = vsyncpa [#allocation12], 0
    %26 = vsyncpa [#allocation15], 0
    %27 = vsyncpa [#allocation18], 0
    loop: start=0, step=1, limit=4
    $region2: #{petr_transformer_decoder.9} parent=1 // loop_pre_header
      _
    $region3: #{petr_transformer_decoder.9} parent=1 // loop_header
      %s29 = sphi 0, %s33
      %p30 = scmp.ge.s32.totalorder %s29, 4
      %s36 = sphi 0, %s55
      %s37 = sphi 0, %s51
      %s38 = sphi 0, %s47
      %s39 = sphi 0, %s36
      %s40 = sphi 0, %s37
      %s41 = sphi 0, %s38
      %s42 = sphi 0, %s39
      %s43 = sphi 0, %s40
      %s44 = sphi 0, %s41
      %s60 = sphi 0, %s62
      %s63 = sphi 0, %s60
      %s64 = sphi 0, %s63
      %s80 = sphi 0, %s64
      %s88 = sphi 0, %s90
      %s91 = sphi 0, %s88
      %s92 = sphi 0, %s91
      %s108 = sphi 0, %s92
      %s116 = sphi 0, %s118
      %s119 = sphi 0, %s116
      %s120 = sphi 0, %s119
      %s136 = sphi 0, %s120
      %s144 = sphi 0, %s146
      %s147 = sphi 0, %s144
      %s148 = sphi 0, %s147
      %s164 = sphi 0, %s148
      %s168 = sphi 0, %s168
      %s170 = sphi 0, %s168
      %s171 = sphi 0, %s170
      %s185 = sphi 0, %s171
      %s189 = sphi 0, %s189
      %s191 = sphi 0, %s189
      %s192 = sphi 0, %s191
      %s206 = sphi 0, %s192
      %s210 = sphi 0, %s210
      %s212 = sphi 0, %s210
      %s213 = sphi 0, %s212
      %s227 = sphi 0, %s213
      %s231 = sphi 0, %s231
      %s233 = sphi 0, %s231
      %s234 = sphi 0, %s233
      %s248 = sphi 0, %s234
      %s252 = sphi 0, %s252
      %s254 = sphi 0, %s252
      %s255 = sphi 0, %s254
      %s269 = sphi 0, %s255
      %s273 = sphi 0, %s273
      %s275 = sphi 0, %s273
      %s276 = sphi 0, %s275
      %s290 = sphi 0, %s276
      %s294 = sphi 0, %s294
      %s296 = sphi 0, %s294
      %s297 = sphi 0, %s296
      %s311 = sphi 0, %s297
      %s315 = sphi 0, %s315
      %s317 = sphi 0, %s315
      %s318 = sphi 0, %s317
      %s332 = sphi 0, %s318
      %s336 = sphi 0, %s336
      %s338 = sphi 0, %s336
      %s339 = sphi 0, %s338
      %s353 = sphi 0, %s339
      %s357 = sphi 0, %s357
      %s359 = sphi 0, %s357
      %s360 = sphi 0, %s359
      %s374 = sphi 0, %s360
      %s382 = sphi 0, %s384
      %s385 = sphi 0, %s382
      %s386 = sphi 0, %s385
      %s402 = sphi 0, %s386
    $region4: #{petr_transformer_decoder.9} parent=1 // loop_header_branch
      %32 = sbr.rel (%p30) target = $region8
    $region5: #{petr_transformer_decoder.9} parent=1 // loop_body
      %s34 = ssub.s32 %s29, 1
      %s35 = ssub.s32 %s29, 2
      %s45 = sadd.s32 1, %s38
      %p46 = scmp.ge.s32.totalorder %s45, 1
      %s47 = scalar_select %p46, 0, %s45
      %s48 = sadd.s32 1, %s37
      %s49 = scalar_select %p46, %s48, %s37
      %p50 = scmp.ge.s32.totalorder %s49, 1
      %s51 = scalar_select %p50, 0, %s49
      %s52 = sadd.s32 1, %s36
      %s53 = scalar_select %p50, %s52, %s36
      %p54 = scmp.ge.s32.totalorder %s53, 2
      %s55 = scalar_select %p54, 0, %s53
      %s56 = ssub.s32 %s36, %s55
      %s57 = ssub.s32 %s37, %s51
      %s58 = sor.u32 %s56, %s57
      %p59 = scmp.eq.s32.totalorder %s58, 0
      %s61 = sadd.s32 %s60, 1
      %s62 = scalar_select %p59, %s60, %s61
      %p65 = pneg %p59
      %p66 = scmp.eq.s32.totalorder %s29, 1
      %p67 = por %p65, %p66
      %p68 = scmp.ne.s32.totalorder %s60, %s63
      %p69 = scmp.eq.s32.totalorder %s29, 0
      %p70 = por %p68, %p69
      %p71 = scmp.ne.s32.totalorder %s60, %s63
      %p72 = scmp.eq.s32.totalorder %s34, 1
      %p73 = por %p71, %p72
      %p74 = scmp.ne.s32.totalorder %s63, %s64
      %p75 = scmp.eq.s32.totalorder %s34, 0
      %p76 = por %p74, %p75
      %p77 = scmp.ne.s32.totalorder %s63, %s64
      %p78 = scmp.eq.s32.totalorder %s35, 1
      %p79 = por %p77, %p78
      %p81 = scmp.ne.s32.totalorder %s64, %s80
      %p82 = scmp.eq.s32.totalorder %s35, 0
      %p83 = por %p81, %p82
      %s84 = ssub.s32 %s36, %s55
      %s85 = ssub.s32 %s37, %s51
      %s86 = sor.u32 %s84, %s85
      %p87 = scmp.eq.s32.totalorder %s86, 0
      %s89 = sadd.s32 %s88, 1
      %s90 = scalar_select %p87, %s88, %s89
      %p93 = pneg %p87
      %p94 = scmp.eq.s32.totalorder %s29, 1
      %p95 = por %p93, %p94
      %p96 = scmp.ne.s32.totalorder %s88, %s91
      %p97 = scmp.eq.s32.totalorder %s29, 0
      %p98 = por %p96, %p97
      %p99 = scmp.ne.s32.totalorder %s88, %s91
      %p100 = scmp.eq.s32.totalorder %s34, 1
      %p101 = por %p99, %p100
      %p102 = scmp.ne.s32.totalorder %s91, %s92
      %p103 = scmp.eq.s32.totalorder %s34, 0
      %p104 = por %p102, %p103
      %p105 = scmp.ne.s32.totalorder %s91, %s92
      %p106 = scmp.eq.s32.totalorder %s35, 1
      %p107 = por %p105, %p106
      %p109 = scmp.ne.s32.totalorder %s92, %s108
      %p110 = scmp.eq.s32.totalorder %s35, 0
      %p111 = por %p109, %p110
      %s112 = ssub.s32 %s36, %s55
      %s113 = ssub.s32 %s38, %s47
      %s114 = sor.u32 %s112, %s113
      %p115 = scmp.eq.s32.totalorder %s114, 0
      %s117 = sadd.s32 %s116, 1
      %s118 = scalar_select %p115, %s116, %s117
      %p121 = pneg %p115
      %p122 = scmp.eq.s32.totalorder %s29, 1
      %p123 = por %p121, %p122
      %p124 = scmp.ne.s32.totalorder %s116, %s119
      %p125 = scmp.eq.s32.totalorder %s29, 0
      %p126 = por %p124, %p125
      %p127 = scmp.ne.s32.totalorder %s116, %s119
      %p128 = scmp.eq.s32.totalorder %s34, 1
      %p129 = por %p127, %p128
      %p130 = scmp.ne.s32.totalorder %s119, %s120
      %p131 = scmp.eq.s32.totalorder %s34, 0
      %p132 = por %p130, %p131
      %p133 = scmp.ne.s32.totalorder %s119, %s120
      %p134 = scmp.eq.s32.totalorder %s35, 1
      %p135 = por %p133, %p134
      %p137 = scmp.ne.s32.totalorder %s120, %s136
      %p138 = scmp.eq.s32.totalorder %s35, 0
      %p139 = por %p137, %p138
      %s140 = ssub.s32 %s36, %s55
      %s141 = ssub.s32 %s38, %s47
      %s142 = sor.u32 %s140, %s141
      %p143 = scmp.eq.s32.totalorder %s142, 0
      %s145 = sadd.s32 %s144, 1
      %s146 = scalar_select %p143, %s144, %s145
      %p149 = pneg %p143
      %p150 = scmp.eq.s32.totalorder %s29, 1
      %p151 = por %p149, %p150
      %p152 = scmp.ne.s32.totalorder %s144, %s147
      %p153 = scmp.eq.s32.totalorder %s29, 0
      %p154 = por %p152, %p153
      %p155 = scmp.ne.s32.totalorder %s144, %s147
      %p156 = scmp.eq.s32.totalorder %s34, 1
      %p157 = por %p155, %p156
      %p158 = scmp.ne.s32.totalorder %s147, %s148
      %p159 = scmp.eq.s32.totalorder %s34, 0
      %p160 = por %p158, %p159
      %p161 = scmp.ne.s32.totalorder %s147, %s148
      %p162 = scmp.eq.s32.totalorder %s35, 1
      %p163 = por %p161, %p162
      %p165 = scmp.ne.s32.totalorder %s148, %s164
      %p166 = scmp.eq.s32.totalorder %s35, 0
      %p167 = por %p165, %p166
      %s169 = sadd.s32 %s168, 1
      %p172 = scmp.eq.s32.totalorder %s29, 1
      %p173 = scmp.ne.s32.totalorder %s168, %s170
      %p174 = scmp.eq.s32.totalorder %s29, 0
      %p175 = por %p173, %p174
      %p176 = scmp.ne.s32.totalorder %s168, %s170
      %p177 = scmp.eq.s32.totalorder %s34, 1
      %p178 = por %p176, %p177
      %p179 = scmp.ne.s32.totalorder %s170, %s171
      %p180 = scmp.eq.s32.totalorder %s34, 0
      %p181 = por %p179, %p180
      %p182 = scmp.ne.s32.totalorder %s170, %s171
      %p183 = scmp.eq.s32.totalorder %s35, 1
      %p184 = por %p182, %p183
      %p186 = scmp.ne.s32.totalorder %s171, %s185
      %p187 = scmp.eq.s32.totalorder %s35, 0
      %p188 = por %p186, %p187
      %s190 = sadd.s32 %s189, 1
      %p193 = scmp.eq.s32.totalorder %s29, 1
      %p194 = scmp.ne.s32.totalorder %s189, %s191
      %p195 = scmp.eq.s32.totalorder %s29, 0
      %p196 = por %p194, %p195
      %p197 = scmp.ne.s32.totalorder %s189, %s191
      %p198 = scmp.eq.s32.totalorder %s34, 1
      %p199 = por %p197, %p198
      %p200 = scmp.ne.s32.totalorder %s191, %s192
      %p201 = scmp.eq.s32.totalorder %s34, 0
      %p202 = por %p200, %p201
      %p203 = scmp.ne.s32.totalorder %s191, %s192
      %p204 = scmp.eq.s32.totalorder %s35, 1
      %p205 = por %p203, %p204
      %p207 = scmp.ne.s32.totalorder %s192, %s206
      %p208 = scmp.eq.s32.totalorder %s35, 0
      %p209 = por %p207, %p208
      %s211 = sadd.s32 %s210, 1
      %p214 = scmp.eq.s32.totalorder %s29, 1
      %p215 = scmp.ne.s32.totalorder %s210, %s212
      %p216 = scmp.eq.s32.totalorder %s29, 0
      %p217 = por %p215, %p216
      %p218 = scmp.ne.s32.totalorder %s210, %s212
      %p219 = scmp.eq.s32.totalorder %s34, 1
      %p220 = por %p218, %p219
      %p221 = scmp.ne.s32.totalorder %s212, %s213
      %p222 = scmp.eq.s32.totalorder %s34, 0
      %p223 = por %p221, %p222
      %p224 = scmp.ne.s32.totalorder %s212, %s213
      %p225 = scmp.eq.s32.totalorder %s35, 1
      %p226 = por %p224, %p225
      %p228 = scmp.ne.s32.totalorder %s213, %s227
      %p229 = scmp.eq.s32.totalorder %s35, 0
      %p230 = por %p228, %p229
      %s232 = sadd.s32 %s231, 1
      %p235 = scmp.eq.s32.totalorder %s29, 1
      %p236 = scmp.ne.s32.totalorder %s231, %s233
      %p237 = scmp.eq.s32.totalorder %s29, 0
      %p238 = por %p236, %p237
      %p239 = scmp.ne.s32.totalorder %s231, %s233
      %p240 = scmp.eq.s32.totalorder %s34, 1
      %p241 = por %p239, %p240
      %p242 = scmp.ne.s32.totalorder %s233, %s234
      %p243 = scmp.eq.s32.totalorder %s34, 0
      %p244 = por %p242, %p243
      %p245 = scmp.ne.s32.totalorder %s233, %s234
      %p246 = scmp.eq.s32.totalorder %s35, 1
      %p247 = por %p245, %p246
      %p249 = scmp.ne.s32.totalorder %s234, %s248
      %p250 = scmp.eq.s32.totalorder %s35, 0
      %p251 = por %p249, %p250
      %s253 = sadd.s32 %s252, 1
      %p256 = scmp.eq.s32.totalorder %s29, 1
      %p257 = scmp.ne.s32.totalorder %s252, %s254
      %p258 = scmp.eq.s32.totalorder %s29, 0
      %p259 = por %p257, %p258
      %p260 = scmp.ne.s32.totalorder %s252, %s254
      %p261 = scmp.eq.s32.totalorder %s34, 1
      %p262 = por %p260, %p261
      %p263 = scmp.ne.s32.totalorder %s254, %s255
      %p264 = scmp.eq.s32.totalorder %s34, 0
      %p265 = por %p263, %p264
      %p266 = scmp.ne.s32.totalorder %s254, %s255
      %p267 = scmp.eq.s32.totalorder %s35, 1
      %p268 = por %p266, %p267
      %p270 = scmp.ne.s32.totalorder %s255, %s269
      %p271 = scmp.eq.s32.totalorder %s35, 0
      %p272 = por %p270, %p271
      %s274 = sadd.s32 %s273, 1
      %p277 = scmp.eq.s32.totalorder %s29, 1
      %p278 = scmp.ne.s32.totalorder %s273, %s275
      %p279 = scmp.eq.s32.totalorder %s29, 0
      %p280 = por %p278, %p279
      %p281 = scmp.ne.s32.totalorder %s273, %s275
      %p282 = scmp.eq.s32.totalorder %s34, 1
      %p283 = por %p281, %p282
      %p284 = scmp.ne.s32.totalorder %s275, %s276
      %p285 = scmp.eq.s32.totalorder %s34, 0
      %p286 = por %p284, %p285
      %p287 = scmp.ne.s32.totalorder %s275, %s276
      %p288 = scmp.eq.s32.totalorder %s35, 1
      %p289 = por %p287, %p288
      %p291 = scmp.ne.s32.totalorder %s276, %s290
      %p292 = scmp.eq.s32.totalorder %s35, 0
      %p293 = por %p291, %p292
      %s295 = sadd.s32 %s294, 1
      %p298 = scmp.eq.s32.totalorder %s29, 1
      %p299 = scmp.ne.s32.totalorder %s294, %s296
      %p300 = scmp.eq.s32.totalorder %s29, 0
      %p301 = por %p299, %p300
      %p302 = scmp.ne.s32.totalorder %s294, %s296
      %p303 = scmp.eq.s32.totalorder %s34, 1
      %p304 = por %p302, %p303
      %p305 = scmp.ne.s32.totalorder %s296, %s297
      %p306 = scmp.eq.s32.totalorder %s34, 0
      %p307 = por %p305, %p306
      %p308 = scmp.ne.s32.totalorder %s296, %s297
      %p309 = scmp.eq.s32.totalorder %s35, 1
      %p310 = por %p308, %p309
      %p312 = scmp.ne.s32.totalorder %s297, %s311
      %p313 = scmp.eq.s32.totalorder %s35, 0
      %p314 = por %p312, %p313
      %s316 = sadd.s32 %s315, 1
      %p319 = scmp.eq.s32.totalorder %s29, 1
      %p320 = scmp.ne.s32.totalorder %s315, %s317
      %p321 = scmp.eq.s32.totalorder %s29, 0
      %p322 = por %p320, %p321
      %p323 = scmp.ne.s32.totalorder %s315, %s317
      %p324 = scmp.eq.s32.totalorder %s34, 1
      %p325 = por %p323, %p324
      %p326 = scmp.ne.s32.totalorder %s317, %s318
      %p327 = scmp.eq.s32.totalorder %s34, 0
      %p328 = por %p326, %p327
      %p329 = scmp.ne.s32.totalorder %s317, %s318
      %p330 = scmp.eq.s32.totalorder %s35, 1
      %p331 = por %p329, %p330
      %p333 = scmp.ne.s32.totalorder %s318, %s332
      %p334 = scmp.eq.s32.totalorder %s35, 0
      %p335 = por %p333, %p334
      %s337 = sadd.s32 %s336, 1
      %p340 = scmp.eq.s32.totalorder %s29, 1
      %p341 = scmp.ne.s32.totalorder %s336, %s338
      %p342 = scmp.eq.s32.totalorder %s29, 0
      %p343 = por %p341, %p342
      %p344 = scmp.ne.s32.totalorder %s336, %s338
      %p345 = scmp.eq.s32.totalorder %s34, 1
      %p346 = por %p344, %p345
      %p347 = scmp.ne.s32.totalorder %s338, %s339
      %p348 = scmp.eq.s32.totalorder %s34, 0
      %p349 = por %p347, %p348
      %p350 = scmp.ne.s32.totalorder %s338, %s339
      %p351 = scmp.eq.s32.totalorder %s35, 1
      %p352 = por %p350, %p351
      %p354 = scmp.ne.s32.totalorder %s339, %s353
      %p355 = scmp.eq.s32.totalorder %s35, 0
      %p356 = por %p354, %p355
      %s358 = sadd.s32 %s357, 1
      %p361 = scmp.eq.s32.totalorder %s29, 1
      %p362 = scmp.ne.s32.totalorder %s357, %s359
      %p363 = scmp.eq.s32.totalorder %s29, 0
      %p364 = por %p362, %p363
      %p365 = scmp.ne.s32.totalorder %s357, %s359
      %p366 = scmp.eq.s32.totalorder %s34, 1
      %p367 = por %p365, %p366
      %p368 = scmp.ne.s32.totalorder %s359, %s360
      %p369 = scmp.eq.s32.totalorder %s34, 0
      %p370 = por %p368, %p369
      %p371 = scmp.ne.s32.totalorder %s359, %s360
      %p372 = scmp.eq.s32.totalorder %s35, 1
      %p373 = por %p371, %p372
      %p375 = scmp.ne.s32.totalorder %s360, %s374
      %p376 = scmp.eq.s32.totalorder %s35, 0
      %p377 = por %p375, %p376
      %s378 = ssub.s32 %s36, %s55
      %s379 = ssub.s32 %s37, %s51
      %s380 = sor.u32 %s378, %s379
      %p381 = scmp.eq.s32.totalorder %s380, 0
      %s383 = sadd.s32 %s382, 1
      %s384 = scalar_select %p381, %s382, %s383
      %p387 = pneg %p381
      %p388 = scmp.eq.s32.totalorder %s29, 1
      %p389 = por %p387, %p388
      %p390 = scmp.ne.s32.totalorder %s382, %s385
      %p391 = scmp.eq.s32.totalorder %s29, 0
      %p392 = por %p390, %p391
      %p393 = scmp.ne.s32.totalorder %s382, %s385
      %p394 = scmp.eq.s32.totalorder %s34, 1
      %p395 = por %p393, %p394
      %p396 = scmp.ne.s32.totalorder %s385, %s386
      %p397 = scmp.eq.s32.totalorder %s34, 0
      %p398 = por %p396, %p397
      %p399 = scmp.ne.s32.totalorder %s385, %s386
      %p400 = scmp.eq.s32.totalorder %s35, 1
      %p401 = por %p399, %p400
      %p403 = scmp.ne.s32.totalorder %s386, %s402
      %p404 = scmp.eq.s32.totalorder %s35, 0
      %p405 = por %p403, %p404
      %p406 = scmp.le.s32.totalorder 1, %s29
      %p407 = scmp.lt.s32.totalorder %s29, 3
      %p408 = pnand %p406, %p407
      %p409 = pneg %p408
      // Predicated region
      $region9: #{petr_transformer_decoder.9} parent=5 // pred_check
        _
      $region10: #{petr_transformer_decoder.9} parent=5 // pred_check_branch
        %411 = sbr.rel (%p408) target = $region12
      $region11: #{petr_transformer_decoder.9} parent=5 // pred_region
        %s412 = ssub.s32 %s29, 1
        // Predicated region
        $region13: #{petr_transformer_decoder.9} parent=11 // pred_check
          %p413 = pneg %p181
        $region14: #{petr_transformer_decoder.9} parent=11 // pred_check_branch
          %415 = sbr.rel (%p413) target = $region16
        $region15: #{petr_transformer_decoder.9} parent=11 // pred_region
          %417 = vsyncadd [#allocation9], 0
          %s418 = sshll.u32 %s4, 4
          %s419 = int_to_ptr.hbm [resolvable:$true] %s418
          %s420 = sshll.u32 [#allocation10], 4
          %s421 = int_to_ptr.vmem [resolvable:$true] %s420
          %426 = dma.hbm_to_vmem [thread:$0]  %s419, 256, %s421, [#allocation9], 64, 64, 4
        $region16: #{petr_transformer_decoder.9} parent=11 // pred_fallthru
          _
        // Predicated region
        $region17: #{petr_transformer_decoder.9} parent=11 // pred_check
          %p427 = pneg %p202
        $region18: #{petr_transformer_decoder.9} parent=11 // pred_check_branch
          %429 = sbr.rel (%p427) target = $region20
        $region19: #{petr_transformer_decoder.9} parent=11 // pred_region
          _
        $region20: #{petr_transformer_decoder.9} parent=11 // pred_fallthru
          _
        // Predicated region
        $region21: #{petr_transformer_decoder.9} parent=11 // pred_check
          %p430 = pneg %p223
        $region22: #{petr_transformer_decoder.9} parent=11 // pred_check_branch
          %432 = sbr.rel (%p430) target = $region24
        $region23: #{petr_transformer_decoder.9} parent=11 // pred_region
          %434 = vsyncadd [#allocation12], 0
          %s435 = sshll.u32 %s6, 4
          %s436 = int_to_ptr.hbm [resolvable:$true] %s435
          %s437 = sshll.u32 [#allocation11], 4
          %s438 = int_to_ptr.vmem [resolvable:$true] %s437
          %443 = dma.hbm_to_vmem [thread:$0]  %s436, 256, %s438, [#allocation12], 64, 64, 4
        $region24: #{petr_transformer_decoder.9} parent=11 // pred_fallthru
          _
        // Predicated region
        $region25: #{petr_transformer_decoder.9} parent=11 // pred_check
          %p444 = pneg %p244
        $region26: #{petr_transformer_decoder.9} parent=11 // pred_check_branch
          %446 = sbr.rel (%p444) target = $region28
        $region27: #{petr_transformer_decoder.9} parent=11 // pred_region
          _
        $region28: #{petr_transformer_decoder.9} parent=11 // pred_fallthru
          _
        // Predicated region
        $region29: #{petr_transformer_decoder.9} parent=11 // pred_check
          %p447 = pneg %p265
        $region30: #{petr_transformer_decoder.9} parent=11 // pred_check_branch
          %449 = sbr.rel (%p447) target = $region32
        $region31: #{petr_transformer_decoder.9} parent=11 // pred_region
          %451 = vsyncadd [#allocation12], 0
          %s452 = sshll.u32 %s8, 4
          %s453 = int_to_ptr.hbm [resolvable:$true] %s452
          %s454 = sshll.u32 [#allocation13], 4
          %s455 = int_to_ptr.vmem [resolvable:$true] %s454
          %460 = dma.hbm_to_vmem [thread:$0]  %s453, 256, %s455, [#allocation12], 64, 64, 4
        $region32: #{petr_transformer_decoder.9} parent=11 // pred_fallthru
          _
        // Predicated region
        $region33: #{petr_transformer_decoder.9} parent=11 // pred_check
          %p461 = pneg %p286
        $region34: #{petr_transformer_decoder.9} parent=11 // pred_check_branch
          %463 = sbr.rel (%p461) target = $region36
        $region35: #{petr_transformer_decoder.9} parent=11 // pred_region
          _
        $region36: #{petr_transformer_decoder.9} parent=11 // pred_fallthru
          _
        // Predicated region
        $region37: #{petr_transformer_decoder.9} parent=11 // pred_check
          %p464 = pneg %p307
        $region38: #{petr_transformer_decoder.9} parent=11 // pred_check_branch
          %466 = sbr.rel (%p464) target = $region40
        $region39: #{petr_transformer_decoder.9} parent=11 // pred_region
          %468 = vsyncadd [#allocation15], 0
          %s469 = sshll.u32 %s10, 4
          %s470 = int_to_ptr.hbm [resolvable:$true] %s469
          %s471 = sshll.u32 [#allocation14], 4
          %s472 = int_to_ptr.vmem [resolvable:$true] %s471
          %477 = dma.hbm_to_vmem [thread:$0]  %s470, 256, %s472, [#allocation15], 64, 64, 4
        $region40: #{petr_transformer_decoder.9} parent=11 // pred_fallthru
          _
        // Predicated region
        $region41: #{petr_transformer_decoder.9} parent=11 // pred_check
          %p478 = pneg %p328
        $region42: #{petr_transformer_decoder.9} parent=11 // pred_check_branch
          %480 = sbr.rel (%p478) target = $region44
        $region43: #{petr_transformer_decoder.9} parent=11 // pred_region
          %482 = vsyncadd [#allocation15], 0
          %s484 = sshll.u32 %s11, 4
          %s485 = int_to_ptr.hbm [resolvable:$true] %s484
          %s486 = sshll.u32 [#allocation16], 4
          %s487 = int_to_ptr.vmem [resolvable:$true] %s486
          %489 = dma.hbm_to_vmem [thread:$0]  %s485, 16, %s487, [#allocation15]
        $region44: #{petr_transformer_decoder.9} parent=11 // pred_fallthru
          _
        // Predicated region
        $region45: #{petr_transformer_decoder.9} parent=11 // pred_check
          %p490 = pneg %p349
        $region46: #{petr_transformer_decoder.9} parent=11 // pred_check_branch
          %492 = sbr.rel (%p490) target = $region48
        $region47: #{petr_transformer_decoder.9} parent=11 // pred_region
          %494 = vsyncadd [#allocation18], 0
          %s496 = sshll.u32 %s12, 4
          %s497 = int_to_ptr.hbm [resolvable:$true] %s496
          %s498 = sshll.u32 [#allocation17], 4
          %s499 = int_to_ptr.vmem [resolvable:$true] %s498
          %501 = dma.hbm_to_vmem [thread:$0]  %s497, 16, %s499, [#allocation18]
        $region48: #{petr_transformer_decoder.9} parent=11 // pred_fallthru
          _
        // Predicated region
        $region49: #{petr_transformer_decoder.9} parent=11 // pred_check
          %p502 = pneg %p370
        $region50: #{petr_transformer_decoder.9} parent=11 // pred_check_branch
          %504 = sbr.rel (%p502) target = $region52
        $region51: #{petr_transformer_decoder.9} parent=11 // pred_region
          %506 = vsyncadd [#allocation18], 0
          %s508 = sshll.u32 %s13, 4
          %s509 = int_to_ptr.hbm [resolvable:$true] %s508
          %s510 = sshll.u32 [#allocation19], 4
          %s511 = int_to_ptr.vmem [resolvable:$true] %s510
          %513 = dma.hbm_to_vmem [thread:$0]  %s509, 16, %s511, [#allocation18]
        $region52: #{petr_transformer_decoder.9} parent=11 // pred_fallthru
          _
      $region12: #{petr_transformer_decoder.9} parent=5 // pred_fallthru
        _
      %p514 = scmp.lt.s32.totalorder %s29, 2
      // Predicated region
      $region53: #{petr_transformer_decoder.9} parent=5 // pred_check
        %p515 = pneg %p514
      $region54: #{petr_transformer_decoder.9} parent=5 // pred_check_branch
        %517 = sbr.rel (%p515) target = $region56
      $region55: #{petr_transformer_decoder.9} parent=5 // pred_region
        // Predicated region
        $region57: #{petr_transformer_decoder.9} parent=55 // pred_check
          %p518 = pneg %p70
        $region58: #{petr_transformer_decoder.9} parent=55 // pred_check_branch
          %520 = sbr.rel (%p518) target = $region60
        $region59: #{petr_transformer_decoder.9} parent=55 // pred_region
          %p521 = scmp.lt.s32.totalorder %s36, 1
          %s522 = scalar_select %p521, %s36, 1
          %p523 = scmp.lt.s32.totalorder %s37, 0
          %s524 = scalar_select %p523, %s37, 0
          %s525 = sadd.s32 %s524, %s522
          %s526 = smul.addr %s525, 8
          %s527 = scalar_lea.vmem %s0, %s526
        $region60: #{petr_transformer_decoder.9} parent=55 // pred_fallthru
          _
        // Predicated region
        $region61: #{petr_transformer_decoder.9} parent=55 // pred_check
          %p528 = pneg %p98
        $region62: #{petr_transformer_decoder.9} parent=55 // pred_check_branch
          %530 = sbr.rel (%p528) target = $region64
        $region63: #{petr_transformer_decoder.9} parent=55 // pred_region
          %s531 = sand.u32 %s88, 1
          %s532 = scalar_lea.sflag [#allocation7], %s531
          %s533 = sand.u32 %s88, 1
          %s534 = smul.addr %s533, 8
          %s535 = scalar_lea.vmem [#allocation6], %s534
          %537 = vsyncadd %s532, 0
          %s538 = sadd.s32 %s37, %s36
          %s539 = smul.addr %s538, 8
          %s540 = scalar_lea.hbm %s1, %s539
          %s542 = sshll.u32 %s540, 4
          %s543 = int_to_ptr.hbm [resolvable:$true] %s542
          %s544 = sshll.u32 %s535, 4
          %s545 = int_to_ptr.vmem [resolvable:$true] %s544
          %547 = dma.hbm_to_vmem [thread:$0]  %s543, 128, %s545, %s532
        $region64: #{petr_transformer_decoder.9} parent=55 // pred_fallthru
          _
        // Predicated region
        $region65: #{petr_transformer_decoder.9} parent=55 // pred_check
          %p548 = pneg %p126
        $region66: #{petr_transformer_decoder.9} parent=55 // pred_check_branch
          %550 = sbr.rel (%p548) target = $region68
        $region67: #{petr_transformer_decoder.9} parent=55 // pred_region
          %p551 = scmp.lt.s32.totalorder %s36, 1
          %s552 = scalar_select %p551, %s36, 1
          %p553 = scmp.lt.s32.totalorder %s38, 0
          %s554 = scalar_select %p553, %s38, 0
          %s555 = sadd.s32 %s554, %s552
          %s556 = smul.addr %s555, 8
          %s557 = scalar_lea.vmem %s2, %s556
        $region68: #{petr_transformer_decoder.9} parent=55 // pred_fallthru
          _
        // Predicated region
        $region69: #{petr_transformer_decoder.9} parent=55 // pred_check
          %p558 = pneg %p154
        $region70: #{petr_transformer_decoder.9} parent=55 // pred_check_branch
          %560 = sbr.rel (%p558) target = $region72
        $region71: #{petr_transformer_decoder.9} parent=55 // pred_region
          %s561 = sand.u32 %s29, 1
          %s562 = scalar_lea.sflag [#allocation9], %s561
          %s563 = sand.u32 %s144, 1
          %s564 = smul.addr %s563, 8
          %s565 = scalar_lea.vmem [#allocation8], %s564
          %567 = vsyncadd %s562, 0
          %s568 = sadd.s32 %s38, %s36
          %s569 = smul.addr %s568, 8
          %s570 = scalar_lea.hbm %s3, %s569
          %s572 = sshll.u32 %s570, 4
          %s573 = int_to_ptr.hbm [resolvable:$true] %s572
          %s574 = sshll.u32 %s565, 4
          %s575 = int_to_ptr.vmem [resolvable:$true] %s574
          %577 = dma.hbm_to_vmem [thread:$0]  %s573, 128, %s575, %s562
        $region72: #{petr_transformer_decoder.9} parent=55 // pred_fallthru
          _
      $region56: #{petr_transformer_decoder.9} parent=5 // pred_fallthru
        _
      %p578 = scmp.le.s32.totalorder 1, %s29
      %p579 = scmp.lt.s32.totalorder %s29, 3
      %p580 = pnand %p578, %p579
      %p581 = pneg %p580
      // Predicated region
      $region73: #{petr_transformer_decoder.9} parent=5 // pred_check
        _
      $region74: #{petr_transformer_decoder.9} parent=5 // pred_check_branch
        %583 = sbr.rel (%p580) target = $region76
      $region75: #{petr_transformer_decoder.9} parent=5 // pred_region
        %s584 = ssub.s32 %s29, 1
        %s585 = sand.u32 %s91, 1
        %s586 = scalar_lea.sflag [#allocation7], %s585
        %s587 = sand.u32 %s91, 1
        %s588 = smul.addr %s587, 8
        %s589 = scalar_lea.vmem [#allocation6], %s588
        // Predicated region
        $region77: #{petr_transformer_decoder.9} parent=75 // pred_check
          %p590 = pneg %p104
        $region78: #{petr_transformer_decoder.9} parent=75 // pred_check_branch
          %592 = sbr.rel (%p590) target = $region80
        $region79: #{petr_transformer_decoder.9} parent=75 // pred_region
          %594 = dma.done %s586, 128
        $region80: #{petr_transformer_decoder.9} parent=75 // pred_fallthru
          _
        %s595 = sand.u32 %s34, 1
        %s596 = scalar_lea.sflag [#allocation9], %s595
        %s597 = sand.u32 %s147, 1
        %s598 = smul.addr %s597, 8
        %s599 = scalar_lea.vmem [#allocation8], %s598
        // Predicated region
        $region81: #{petr_transformer_decoder.9} parent=75 // pred_check
          %p600 = pneg %p160
        $region82: #{petr_transformer_decoder.9} parent=75 // pred_check_branch
          %602 = sbr.rel (%p600) target = $region84
        $region83: #{petr_transformer_decoder.9} parent=75 // pred_region
          %604 = dma.done %s596, 128
        $region84: #{petr_transformer_decoder.9} parent=75 // pred_fallthru
          _
        // Predicated region
        $region85: #{petr_transformer_decoder.9} parent=75 // pred_check
          %p605 = pneg %p181
        $region86: #{petr_transformer_decoder.9} parent=75 // pred_check_branch
          %607 = sbr.rel (%p605) target = $region88
        $region87: #{petr_transformer_decoder.9} parent=75 // pred_region
          %609 = dma.done [#allocation9], 256
        $region88: #{petr_transformer_decoder.9} parent=75 // pred_fallthru
          _
        // Predicated region
        $region89: #{petr_transformer_decoder.9} parent=75 // pred_check
          %p610 = pneg %p223
        $region90: #{petr_transformer_decoder.9} parent=75 // pred_check_branch
          %612 = sbr.rel (%p610) target = $region92
        $region91: #{petr_transformer_decoder.9} parent=75 // pred_region
          %614 = dma.done [#allocation12], 256
        $region92: #{petr_transformer_decoder.9} parent=75 // pred_fallthru
          _
        // Predicated region
        $region93: #{petr_transformer_decoder.9} parent=75 // pred_check
          %p615 = pneg %p265
        $region94: #{petr_transformer_decoder.9} parent=75 // pred_check_branch
          %617 = sbr.rel (%p615) target = $region96
        $region95: #{petr_transformer_decoder.9} parent=75 // pred_region
          %619 = dma.done [#allocation12], 256
        $region96: #{petr_transformer_decoder.9} parent=75 // pred_fallthru
          _
        // Predicated region
        $region97: #{petr_transformer_decoder.9} parent=75 // pred_check
          %p620 = pneg %p307
        $region98: #{petr_transformer_decoder.9} parent=75 // pred_check_branch
          %622 = sbr.rel (%p620) target = $region100
        $region99: #{petr_transformer_decoder.9} parent=75 // pred_region
          %624 = dma.done [#allocation15], 256
        $region100: #{petr_transformer_decoder.9} parent=75 // pred_fallthru
          _
        // Predicated region
        $region101: #{petr_transformer_decoder.9} parent=75 // pred_check
          %p625 = pneg %p328
        $region102: #{petr_transformer_decoder.9} parent=75 // pred_check_branch
          %627 = sbr.rel (%p625) target = $region104
        $region103: #{petr_transformer_decoder.9} parent=75 // pred_region
          %629 = dma.done [#allocation15], 16
        $region104: #{petr_transformer_decoder.9} parent=75 // pred_fallthru
          _
        // Predicated region
        $region105: #{petr_transformer_decoder.9} parent=75 // pred_check
          %p630 = pneg %p349
        $region106: #{petr_transformer_decoder.9} parent=75 // pred_check_branch
          %632 = sbr.rel (%p630) target = $region108
        $region107: #{petr_transformer_decoder.9} parent=75 // pred_region
          %634 = dma.done [#allocation18], 16
        $region108: #{petr_transformer_decoder.9} parent=75 // pred_fallthru
          _
        // Predicated region
        $region109: #{petr_transformer_decoder.9} parent=75 // pred_check
          %p635 = pneg %p370
        $region110: #{petr_transformer_decoder.9} parent=75 // pred_check_branch
          %637 = sbr.rel (%p635) target = $region112
        $region111: #{petr_transformer_decoder.9} parent=75 // pred_region
          %639 = dma.done [#allocation18], 16
        $region112: #{petr_transformer_decoder.9} parent=75 // pred_fallthru
          _
        %p640 = scmp.lt.s32.totalorder %s39, 1
        %s641 = scalar_select %p640, %s39, 1
        %p642 = scmp.lt.s32.totalorder %s40, 0
        %s643 = scalar_select %p642, %s40, 0
        %s644 = sadd.s32 %s643, %s641
        %s645 = smul.addr %s644, 8
        %s646 = scalar_lea.vmem %s0, %s645
        %p647 = pneg %p76
        %p648 = pneg %p73
        %s649 = sand.u32 %s91, 1
        %s650 = scalar_lea.sflag [#allocation7], %s649
        %s651 = sand.u32 %s91, 1
        %s652 = smul.addr %s651, 8
        %s653 = scalar_lea.vmem [#allocation6], %s652
        %p654 = pneg %p104
        %p655 = pneg %p101
        %p656 = scmp.lt.s32.totalorder %s39, 1
        %s657 = scalar_select %p656, %s39, 1
        %p658 = scmp.lt.s32.totalorder %s41, 0
        %s659 = scalar_select %p658, %s41, 0
        %s660 = sadd.s32 %s659, %s657
        %s661 = smul.addr %s660, 8
        %s662 = scalar_lea.vmem %s2, %s661
        %p663 = pneg %p132
        %p664 = pneg %p129
        %s665 = sand.u32 %s34, 1
        %s666 = scalar_lea.sflag [#allocation9], %s665
        %s667 = sand.u32 %s147, 1
        %s668 = smul.addr %s667, 8
        %s669 = scalar_lea.vmem [#allocation8], %s668
        %p670 = pneg %p160
        %p671 = pneg %p157
        %p672 = pneg %p181
        %p673 = pneg %p178
        %p674 = pneg %p202
        %p675 = pneg %p199
        %p676 = pneg %p223
        %p677 = pneg %p220
        %p678 = pneg %p244
        %p679 = pneg %p241
        %p680 = pneg %p265
        %p681 = pneg %p262
        %p682 = pneg %p286
        %p683 = pneg %p283
        %p684 = pneg %p307
        %p685 = pneg %p304
        %p686 = pneg %p328
        %p687 = pneg %p325
        %p688 = pneg %p349
        %p689 = pneg %p346
        %p690 = pneg %p370
        %p691 = pneg %p367
        %p692 = pneg %p398
        %p693 = pneg %p395
        %p694 = scmp.lt.s32.totalorder %s39, 1
        %s695 = scalar_select %p694, %s39, 1
        %p696 = scmp.lt.s32.totalorder %s40, 0
        %s697 = scalar_select %p696, %s40, 0
        %s698 = sadd.s32 %s697, %s695
        %s699 = smul.addr %s698, 8
        %s700 = scalar_lea.vmem %s14, %s699
        %p701 = scmp.lt.s32.totalorder %s39, 1
        %s702 = scalar_select %p701, %s39, 1
        %p703 = scmp.lt.s32.totalorder %s40, 0
        %s704 = scalar_select %p703, %s40, 0
        %s705 = sadd.s32 %s704, %s702
        %s706 = smul.addr %s705, 8
        %s707 = scalar_lea.vmem %s0, %s706
        %p708 = scmp.lt.s32.totalorder %s39, 1
        %s709 = scalar_select %p708, %s39, 1
        %p710 = scmp.lt.s32.totalorder %s41, 0
        %s711 = scalar_select %p710, %s41, 0
        %s712 = sadd.s32 %s711, %s709
        %s713 = smul.addr %s712, 8
        %s714 = scalar_lea.vmem %s2, %s713
        %p715 = scmp.lt.s32.totalorder %s39, 1
        %s716 = scalar_select %p715, %s39, 1
        %p717 = scmp.lt.s32.totalorder %s40, 0
        %s718 = scalar_select %p717, %s40, 0
        %s719 = sadd.s32 %s718, %s716
        %s720 = smul.addr %s719, 8
        %s721 = scalar_lea.vmem %s14, %s720
        %p723 = scmp.eq.s32.totalorder %s41, 0
        // Predicated region
        $region113: #{petr_transformer_decoder.9} parent=75 // pred_check
          %p724 = pneg %p723
        $region114: #{petr_transformer_decoder.9} parent=75 // pred_check_branch
          %726 = sbr.rel (%p724) target = $region116
        $region115: #{petr_transformer_decoder.9} parent=75 // pred_region
          %v727 = vld [vmem:[%s707] sm:$0xff]
          %v728 = vld [vmem:[%s589] sm:$0xff]
          %v729 = vadd.f32 %v727, %v728
          %v730 = vpack.c.bf16 %v729, %v729
          %v731 = vld [vmem:[#allocation10] sm:$0xf]
          %v732 = vld [vmem:[#allocation10 + $0x4] sm:$0xf]
          %v733 = vld [vmem:[#allocation10 + $0x8] sm:$0xf]
          %v734 = vld [vmem:[#allocation10 + $0xc] sm:$0xf]
          %v735 = vld [vmem:[%s5] sm:$0x1]
          %v737 = vperm.slane %v735, 0
          %v743 = vunpack.c.l.b16 %v731
          %v744 = vunpack.c.l.b16 %v732
          %v745 = vunpack.c.l.b16 %v733
          %v746 = vunpack.c.l.b16 %v734
          %v747 = vpack.c.b16 %v744, %v743
          %v748 = vpack.c.b16 %v746, %v745
          %vm751 = vcmask 261120
          %v753 = vsel %vm751, %v730, 0
          %755 = vmatpush.bf16.msra.mxu0 0
          %756 = vmatpush.bf16.msra.mxu0 0
          %757 = vmatpush.bf16.msra.mxu0 0
          %758 = vmatpush.bf16.msra.mxu0 0
          %759 = vmatpush.bf16.msra.mxu0 0
          %760 = vmatpush.bf16.msra.mxu0 0
          %761 = vmatpush.bf16.msra.mxu0 %v748
          %762 = vmatpush.bf16.msra.mxu0 %v747
          %763 = vmatmul.bf16.gmra.mxu0 %v753
          %v764 = vpop.f32.mrf.mxu0
          %v765 = vadd.f32 %v737, %v764
          %v766 = vpop.f32.mrf.mxu0
          %767 = vdwg.mxu0
          %v768 = vmul.f32 %v765, 0.35355338
          %770 = vrot.lane.b32.xlu0 %v768, 120
          %v771 = vpop.permute.xlu0 %770
          %773 = vrot.lane.b32.xlu0 %v768, 112
          %v774 = vpop.permute.xlu0 %773
          %776 = vrot.lane.b32.xlu0 %v768, 104
          %v777 = vpop.permute.xlu0 %776
          %v779 = vrot.slane %v774, 4
          %vm780 = vcmask 1047556
          %v781 = vsel %vm780, %v779, %v768
          %v782 = vrot.slane %v768, 4
          %v783 = vsel %vm780, %v774, %v782
          %v785 = vunpack.c.l.s4 1983009808
          %v786 = vunpack.c.0.s8 %v785
          %v787 = vperm.slane %v781, %v786
          %v789 = vunpack.c.l.s4 1983009808
          %v790 = vunpack.c.0.s8 %v789
          %v791 = vperm.slane %v783, %v790
          %v792 = vrot.slane %v777, 4
          %v793 = vsel %vm780, %v792, %v771
          %v794 = vrot.slane %v771, 4
          %v795 = vsel %vm780, %v777, %v794
          %v797 = vunpack.c.l.s4 1983009808
          %v798 = vunpack.c.0.s8 %v797
          %v799 = vperm.slane %v793, %v798
          %v801 = vunpack.c.l.s4 1983009808
          %v802 = vunpack.c.0.s8 %v801
          %v803 = vperm.slane %v795, %v802
          %v804 = vrot.slane %v799, 4
          %v805 = vsel %vm780, %v804, %v787
          %v806 = vrot.slane %v787, 4
          %v807 = vsel %vm780, %v799, %v806
          %v809 = vunpack.c.l.s4 1934713408
          %v810 = vunpack.c.0.s8 %v809
          %v811 = vperm.slane %v805, %v810
          %v813 = vunpack.c.l.s4 1934713408
          %v814 = vunpack.c.0.s8 %v813
          %v815 = vperm.slane %v807, %v814
          %v816 = vrot.slane %v803, 4
          %v817 = vsel %vm780, %v816, %v791
          %v818 = vrot.slane %v791, 4
          %v819 = vsel %vm780, %v803, %v818
          %v821 = vunpack.c.l.s4 1934713408
          %v822 = vunpack.c.0.s8 %v821
          %v823 = vperm.slane %v817, %v822
          %v825 = vunpack.c.l.s4 1934713408
          %v826 = vunpack.c.0.s8 %v825
          %v827 = vperm.slane %v819, %v826
          %v828 = vrot.slane %v811, 4
          %v829 = vsel %vm780, 0.0, %v828
          %v830 = vrot.slane %v815, 4
          %v831 = vsel %vm780, 0.0, %v830
          %v832 = vrot.slane %v823, 4
          %v833 = vsel %vm780, 0.0, %v832
          %v834 = vrot.slane %v827, 4
          %v835 = vsel %vm780, 0.0, %v834
          %v836 = vsel %vm780, %v830, %v811
          %v838 = vunpack.c.l.s4 1983009808
          %v839 = vunpack.c.0.s8 %v838
          %v840 = vperm.slane %v836, %v839
          %v841 = vrot.slane %v831, 4
          %v842 = vsel %vm780, %v841, %v829
          %v844 = vunpack.c.l.s4 1983009808
          %v845 = vunpack.c.0.s8 %v844
          %v846 = vperm.slane %v842, %v845
          %v847 = vsel %vm780, %v834, %v823
          %v849 = vunpack.c.l.s4 1983009808
          %v850 = vunpack.c.0.s8 %v849
          %v851 = vperm.slane %v847, %v850
          %v852 = vrot.slane %v835, 4
          %v853 = vsel %vm780, %v852, %v833
          %v855 = vunpack.c.l.s4 1983009808
          %v856 = vunpack.c.0.s8 %v855
          %v857 = vperm.slane %v853, %v856
          %v858 = vrot.slane %v846, 4
          %v859 = vsel %vm780, %v858, %v840
          %v860 = vrot.slane %v840, 4
          %v861 = vsel %vm780, %v846, %v860
          %v863 = vunpack.c.l.s4 1934713408
          %v864 = vunpack.c.0.s8 %v863
          %v865 = vperm.slane %v859, %v864
          %v867 = vunpack.c.l.s4 1934713408
          %v868 = vunpack.c.0.s8 %v867
          %v869 = vperm.slane %v861, %v868
          %v870 = vrot.slane %v857, 4
          %v871 = vsel %vm780, %v870, %v851
          %v872 = vrot.slane %v851, 4
          %v873 = vsel %vm780, %v857, %v872
          %v875 = vunpack.c.l.s4 1934713408
          %v876 = vunpack.c.0.s8 %v875
          %v877 = vperm.slane %v871, %v876
          %v879 = vunpack.c.l.s4 1934713408
          %v880 = vunpack.c.0.s8 %v879
          %v881 = vperm.slane %v873, %v880
          %v882 = vrot.slane %v877, 4
          %v883 = vsel %vm780, %v882, %v865
          %v884 = vrot.slane %v865, 4
          %v885 = vsel %vm780, %v877, %v884
          %v886 = vrot.slane %v881, 4
          %v887 = vsel %vm780, %v886, %v869
          %v888 = vrot.slane %v869, 4
          %v889 = vsel %vm780, %v881, %v888
          %v890 = vpack.c.bf16 %v883, %v883
          %v891 = vpack.c.bf16 %v885, %v885
          %v892 = vpack.c.bf16 %v887, %v887
          %v893 = vpack.c.bf16 %v889, %v889
          %vm894 = vcmask 60416
          %895 = vst.msk [vmem:[#allocation2] sm:$0xf] %vm894, %v890
          %896 = vst.msk [vmem:[#allocation2 + $0x4] sm:$0xf] %vm894, %v891
          %897 = vst.msk [vmem:[#allocation2 + $0x8] sm:$0xf] %vm894, %v892
          %898 = vst.msk [vmem:[#allocation2 + $0xc] sm:$0xf] %vm894, %v893
          %vm899 = vcmask 7168
          %900 = vst.msk [vmem:[#allocation3] sm:$0xff] %vm899, -inf
          %901 = vst.msk [vmem:[#allocation3 + $0x8] sm:$0xff] %vm899, -inf
          %902 = vst.msk [vmem:[#allocation3 + $0x10] sm:$0xff] %vm899, -inf
          %903 = vst.msk [vmem:[#allocation3 + $0x18] sm:$0xff] %vm899, -inf
          %904 = vst.msk [vmem:[#allocation4] sm:$0xff] %vm899, 0.0
          %905 = vst.msk [vmem:[#allocation4 + $0x8] sm:$0xff] %vm899, 0.0
          %906 = vst.msk [vmem:[#allocation4 + $0x10] sm:$0xff] %vm899, 0.0
          %907 = vst.msk [vmem:[#allocation4 + $0x18] sm:$0xff] %vm899, 0.0
          %vm908 = vcmask 64512
          %909 = vst.msk [vmem:[#allocation5] sm:$0xff] %vm908, 0.0
          %910 = vst.msk [vmem:[#allocation5 + $0x8] sm:$0xff] %vm908, 0.0
          %911 = vst.msk [vmem:[#allocation5 + $0x10] sm:$0xff] %vm908, 0.0
          %912 = vst.msk [vmem:[#allocation5 + $0x18] sm:$0xff] %vm908, 0.0
        $region116: #{petr_transformer_decoder.9} parent=75 // pred_fallthru
          _
        %v913 = vld [vmem:[%s714] sm:$0xff]
        %v914 = vld [vmem:[%s599] sm:$0xff]
        %v915 = vadd.f32 %v913, %v914
        %v916 = vpack.c.bf16 %v915, %v915
        %v917 = vld [vmem:[#allocation11] sm:$0xf]
        %v918 = vld [vmem:[#allocation11 + $0x4] sm:$0xf]
        %v919 = vld [vmem:[#allocation11 + $0x8] sm:$0xf]
        %v920 = vld [vmem:[#allocation11 + $0xc] sm:$0xf]
        %v921 = vld [vmem:[%s7] sm:$0x1]
        %v923 = vperm.slane %v921, 0
        %v929 = vunpack.c.l.b16 %v917
        %v930 = vunpack.c.l.b16 %v918
        %v931 = vunpack.c.l.b16 %v919
        %v932 = vunpack.c.l.b16 %v920
        %v933 = vpack.c.b16 %v930, %v929
        %v934 = vpack.c.b16 %v932, %v931
        %vm937 = vcmask 261120
        %v939 = vsel %vm937, %v916, 0
        %941 = vmatpush.bf16.msra.mxu0 0
        %942 = vmatpush.bf16.msra.mxu0 0
        %943 = vmatpush.bf16.msra.mxu0 0
        %944 = vmatpush.bf16.msra.mxu0 0
        %945 = vmatpush.bf16.msra.mxu0 0
        %946 = vmatpush.bf16.msra.mxu0 0
        %947 = vmatpush.bf16.msra.mxu0 %v934
        %948 = vmatpush.bf16.msra.mxu0 %v933
        %949 = vmatmul.bf16.gmra.mxu0 %v939
        %v950 = vpop.f32.mrf.mxu0
        %v951 = vadd.f32 %v923, %v950
        %v952 = vpop.f32.mrf.mxu0
        %953 = vdwg.mxu0
        %v954 = vpack.c.bf16 %v913, %v913
        %v955 = vld [vmem:[#allocation13] sm:$0xf]
        %v956 = vld [vmem:[#allocation13 + $0x4] sm:$0xf]
        %v957 = vld [vmem:[#allocation13 + $0x8] sm:$0xf]
        %v958 = vld [vmem:[#allocation13 + $0xc] sm:$0xf]
        %v959 = vld [vmem:[%s9] sm:$0x1]
        %v961 = vperm.slane %v959, 0
        %v967 = vunpack.c.l.b16 %v955
        %v968 = vunpack.c.l.b16 %v956
        %v969 = vunpack.c.l.b16 %v957
        %v970 = vunpack.c.l.b16 %v958
        %v971 = vpack.c.b16 %v968, %v967
        %v972 = vpack.c.b16 %v970, %v969
        %v976 = vsel %vm937, %v954, 0
        %978 = vmatpush.bf16.msra.mxu0 0
        %979 = vmatpush.bf16.msra.mxu0 0
        %980 = vmatpush.bf16.msra.mxu0 0
        %981 = vmatpush.bf16.msra.mxu0 0
        %982 = vmatpush.bf16.msra.mxu0 0
        %983 = vmatpush.bf16.msra.mxu0 0
        %984 = vmatpush.bf16.msra.mxu0 %v972
        %985 = vmatpush.bf16.msra.mxu0 %v971
        %986 = vmatmul.bf16.gmra.mxu0 %v976
        %v987 = vpop.f32.mrf.mxu0
        %v988 = vadd.f32 %v961, %v987
        %v989 = vpop.f32.mrf.mxu0
        %990 = vdwg.mxu0
        %992 = vrot.lane.b32.xlu0 %v951, 120
        %v993 = vpop.permute.xlu0 %992
        %995 = vrot.lane.b32.xlu0 %v951, 112
        %v996 = vpop.permute.xlu0 %995
        %998 = vrot.lane.b32.xlu0 %v951, 104
        %v999 = vpop.permute.xlu0 %998
        %v1001 = vrot.slane %v996, 4
        %vm1002 = vcmask 1047556
        %v1003 = vsel %vm1002, %v1001, %v951
        %v1004 = vrot.slane %v951, 4
        %v1005 = vsel %vm1002, %v996, %v1004
        %v1007 = vunpack.c.l.s4 1983009808
        %v1008 = vunpack.c.0.s8 %v1007
        %v1009 = vperm.slane %v1003, %v1008
        %v1011 = vunpack.c.l.s4 1983009808
        %v1012 = vunpack.c.0.s8 %v1011
        %v1013 = vperm.slane %v1005, %v1012
        %v1014 = vrot.slane %v999, 4
        %v1015 = vsel %vm1002, %v1014, %v993
        %v1016 = vrot.slane %v993, 4
        %v1017 = vsel %vm1002, %v999, %v1016
        %v1019 = vunpack.c.l.s4 1983009808
        %v1020 = vunpack.c.0.s8 %v1019
        %v1021 = vperm.slane %v1015, %v1020
        %v1023 = vunpack.c.l.s4 1983009808
        %v1024 = vunpack.c.0.s8 %v1023
        %v1025 = vperm.slane %v1017, %v1024
        %v1026 = vrot.slane %v1021, 4
        %v1027 = vsel %vm1002, %v1026, %v1009
        %v1028 = vrot.slane %v1009, 4
        %v1029 = vsel %vm1002, %v1021, %v1028
        %v1031 = vunpack.c.l.s4 1934713408
        %v1032 = vunpack.c.0.s8 %v1031
        %v1033 = vperm.slane %v1027, %v1032
        %v1035 = vunpack.c.l.s4 1934713408
        %v1036 = vunpack.c.0.s8 %v1035
        %v1037 = vperm.slane %v1029, %v1036
        %v1038 = vrot.slane %v1025, 4
        %v1039 = vsel %vm1002, %v1038, %v1013
        %v1040 = vrot.slane %v1013, 4
        %v1041 = vsel %vm1002, %v1025, %v1040
        %v1043 = vunpack.c.l.s4 1934713408
        %v1044 = vunpack.c.0.s8 %v1043
        %v1045 = vperm.slane %v1039, %v1044
        %v1047 = vunpack.c.l.s4 1934713408
        %v1048 = vunpack.c.0.s8 %v1047
        %v1049 = vperm.slane %v1041, %v1048
        %v1050 = vrot.slane %v1033, 4
        %v1051 = vsel %vm1002, 0.0, %v1050
        %v1052 = vrot.slane %v1037, 4
        %v1053 = vsel %vm1002, 0.0, %v1052
        %v1054 = vrot.slane %v1045, 4
        %v1055 = vsel %vm1002, 0.0, %v1054
        %v1056 = vrot.slane %v1049, 4
        %v1057 = vsel %vm1002, 0.0, %v1056
        %v1058 = vsel %vm1002, %v1052, %v1033
        %v1060 = vunpack.c.l.s4 1983009808
        %v1061 = vunpack.c.0.s8 %v1060
        %v1062 = vperm.slane %v1058, %v1061
        %v1063 = vrot.slane %v1053, 4
        %v1064 = vsel %vm1002, %v1063, %v1051
        %v1066 = vunpack.c.l.s4 1983009808
        %v1067 = vunpack.c.0.s8 %v1066
        %v1068 = vperm.slane %v1064, %v1067
        %v1069 = vsel %vm1002, %v1056, %v1045
        %v1071 = vunpack.c.l.s4 1983009808
        %v1072 = vunpack.c.0.s8 %v1071
        %v1073 = vperm.slane %v1069, %v1072
        %v1074 = vrot.slane %v1057, 4
        %v1075 = vsel %vm1002, %v1074, %v1055
        %v1077 = vunpack.c.l.s4 1983009808
        %v1078 = vunpack.c.0.s8 %v1077
        %v1079 = vperm.slane %v1075, %v1078
        %v1080 = vrot.slane %v1068, 4
        %v1081 = vsel %vm1002, %v1080, %v1062
        %v1082 = vrot.slane %v1062, 4
        %v1083 = vsel %vm1002, %v1068, %v1082
        %v1085 = vunpack.c.l.s4 1934713408
        %v1086 = vunpack.c.0.s8 %v1085
        %v1087 = vperm.slane %v1081, %v1086
        %v1089 = vunpack.c.l.s4 1934713408
        %v1090 = vunpack.c.0.s8 %v1089
        %v1091 = vperm.slane %v1083, %v1090
        %v1092 = vrot.slane %v1079, 4
        %v1093 = vsel %vm1002, %v1092, %v1073
        %v1094 = vrot.slane %v1073, 4
        %v1095 = vsel %vm1002, %v1079, %v1094
        %v1097 = vunpack.c.l.s4 1934713408
        %v1098 = vunpack.c.0.s8 %v1097
        %v1099 = vperm.slane %v1093, %v1098
        %v1101 = vunpack.c.l.s4 1934713408
        %v1102 = vunpack.c.0.s8 %v1101
        %v1103 = vperm.slane %v1095, %v1102
        %v1104 = vrot.slane %v1099, 4
        %v1105 = vsel %vm1002, %v1104, %v1087
        %v1106 = vrot.slane %v1087, 4
        %v1107 = vsel %vm1002, %v1099, %v1106
        %v1108 = vrot.slane %v1103, 4
        %v1109 = vsel %vm1002, %v1108, %v1091
        %v1110 = vrot.slane %v1091, 4
        %v1111 = vsel %vm1002, %v1103, %v1110
        %v1112 = vpack.c.bf16 %v1105, %v1105
        %v1113 = vpack.c.bf16 %v1107, %v1107
        %v1114 = vpack.c.bf16 %v1109, %v1109
        %v1115 = vpack.c.bf16 %v1111, %v1111
        %1117 = vrot.lane.b32.xlu0 %v988, 120
        %v1118 = vpop.permute.xlu0 %1117
        %1120 = vrot.lane.b32.xlu0 %v988, 112
        %v1121 = vpop.permute.xlu0 %1120
        %1123 = vrot.lane.b32.xlu0 %v988, 104
        %v1124 = vpop.permute.xlu0 %1123
        %v1126 = vrot.slane %v1121, 4
        %v1127 = vsel %vm1002, %v1126, %v988
        %v1128 = vrot.slane %v988, 4
        %v1129 = vsel %vm1002, %v1121, %v1128
        %v1131 = vunpack.c.l.s4 1983009808
        %v1132 = vunpack.c.0.s8 %v1131
        %v1133 = vperm.slane %v1127, %v1132
        %v1135 = vunpack.c.l.s4 1983009808
        %v1136 = vunpack.c.0.s8 %v1135
        %v1137 = vperm.slane %v1129, %v1136
        %v1138 = vrot.slane %v1124, 4
        %v1139 = vsel %vm1002, %v1138, %v1118
        %v1140 = vrot.slane %v1118, 4
        %v1141 = vsel %vm1002, %v1124, %v1140
        %v1143 = vunpack.c.l.s4 1983009808
        %v1144 = vunpack.c.0.s8 %v1143
        %v1145 = vperm.slane %v1139, %v1144
        %v1147 = vunpack.c.l.s4 1983009808
        %v1148 = vunpack.c.0.s8 %v1147
        %v1149 = vperm.slane %v1141, %v1148
        %v1150 = vrot.slane %v1145, 4
        %v1151 = vsel %vm1002, %v1150, %v1133
        %v1152 = vrot.slane %v1133, 4
        %v1153 = vsel %vm1002, %v1145, %v1152
        %v1155 = vunpack.c.l.s4 1934713408
        %v1156 = vunpack.c.0.s8 %v1155
        %v1157 = vperm.slane %v1151, %v1156
        %v1159 = vunpack.c.l.s4 1934713408
        %v1160 = vunpack.c.0.s8 %v1159
        %v1161 = vperm.slane %v1153, %v1160
        %v1162 = vrot.slane %v1149, 4
        %v1163 = vsel %vm1002, %v1162, %v1137
        %v1164 = vrot.slane %v1137, 4
        %v1165 = vsel %vm1002, %v1149, %v1164
        %v1167 = vunpack.c.l.s4 1934713408
        %v1168 = vunpack.c.0.s8 %v1167
        %v1169 = vperm.slane %v1163, %v1168
        %v1171 = vunpack.c.l.s4 1934713408
        %v1172 = vunpack.c.0.s8 %v1171
        %v1173 = vperm.slane %v1165, %v1172
        %v1174 = vrot.slane %v1157, 4
        %v1175 = vsel %vm1002, 0.0, %v1174
        %v1176 = vrot.slane %v1161, 4
        %v1177 = vsel %vm1002, 0.0, %v1176
        %v1178 = vrot.slane %v1169, 4
        %v1179 = vsel %vm1002, 0.0, %v1178
        %v1180 = vrot.slane %v1173, 4
        %v1181 = vsel %vm1002, 0.0, %v1180
        %v1182 = vsel %vm1002, %v1176, %v1157
        %v1184 = vunpack.c.l.s4 1983009808
        %v1185 = vunpack.c.0.s8 %v1184
        %v1186 = vperm.slane %v1182, %v1185
        %v1187 = vrot.slane %v1177, 4
        %v1188 = vsel %vm1002, %v1187, %v1175
        %v1190 = vunpack.c.l.s4 1983009808
        %v1191 = vunpack.c.0.s8 %v1190
        %v1192 = vperm.slane %v1188, %v1191
        %v1193 = vsel %vm1002, %v1180, %v1169
        %v1195 = vunpack.c.l.s4 1983009808
        %v1196 = vunpack.c.0.s8 %v1195
        %v1197 = vperm.slane %v1193, %v1196
        %v1198 = vrot.slane %v1181, 4
        %v1199 = vsel %vm1002, %v1198, %v1179
        %v1201 = vunpack.c.l.s4 1983009808
        %v1202 = vunpack.c.0.s8 %v1201
        %v1203 = vperm.slane %v1199, %v1202
        %v1204 = vrot.slane %v1192, 4
        %v1205 = vsel %vm1002, %v1204, %v1186
        %v1206 = vrot.slane %v1186, 4
        %v1207 = vsel %vm1002, %v1192, %v1206
        %v1209 = vunpack.c.l.s4 1934713408
        %v1210 = vunpack.c.0.s8 %v1209
        %v1211 = vperm.slane %v1205, %v1210
        %v1213 = vunpack.c.l.s4 1934713408
        %v1214 = vunpack.c.0.s8 %v1213
        %v1215 = vperm.slane %v1207, %v1214
        %v1216 = vrot.slane %v1203, 4
        %v1217 = vsel %vm1002, %v1216, %v1197
        %v1218 = vrot.slane %v1197, 4
        %v1219 = vsel %vm1002, %v1203, %v1218
        %v1221 = vunpack.c.l.s4 1934713408
        %v1222 = vunpack.c.0.s8 %v1221
        %v1223 = vperm.slane %v1217, %v1222
        %v1225 = vunpack.c.l.s4 1934713408
        %v1226 = vunpack.c.0.s8 %v1225
        %v1227 = vperm.slane %v1219, %v1226
        %v1228 = vrot.slane %v1223, 4
        %v1229 = vsel %vm1002, %v1228, %v1211
        %v1230 = vrot.slane %v1211, 4
        %v1231 = vsel %vm1002, %v1223, %v1230
        %v1232 = vrot.slane %v1227, 4
        %v1233 = vsel %vm1002, %v1232, %v1215
        %v1234 = vrot.slane %v1215, 4
        %v1235 = vsel %vm1002, %v1227, %v1234
        %v1236 = vpack.c.bf16 %v1229, %v1229
        %v1237 = vpack.c.bf16 %v1231, %v1231
        %v1238 = vpack.c.bf16 %v1233, %v1233
        %v1239 = vpack.c.bf16 %v1235, %v1235
        %v1240 = vld [vmem:[#allocation2] sm:$0xf]
        %v1241 = vld [vmem:[#allocation2 + $0x4] sm:$0xf]
        %v1242 = vld [vmem:[#allocation2 + $0x8] sm:$0xf]
        %v1243 = vld [vmem:[#allocation2 + $0xc] sm:$0xf]
        %vm1244 = vcmask 64512
        %v1246 = vsel %vm1244, %v1240, 0
        %v1249 = vsel %vm1244, %v1112, 0
        %1251 = vmatpush.bf16.xpose.msra.mxu0 0
        %1252 = vmatpush.bf16.xpose.msra.mxu0 0
        %1253 = vmatpush.bf16.xpose.msra.mxu0 0
        %1254 = vmatpush.bf16.xpose.msra.mxu0 0
        %1255 = vmatpush.bf16.xpose.msra.mxu0 0
        %1256 = vmatpush.bf16.xpose.msra.mxu0 0
        %1257 = vmatpush.bf16.xpose.msra.mxu0 0
        %1258 = vmatpush.bf16.xpose.msra.mxu0 %v1249
        %1259 = vmatmul.bf16.gmra.mxu0 %v1246
        %v1260 = vpop.f32.mrf.mxu0
        %v1261 = vadd.f32 0.0, %v1260
        %v1262 = vpop.f32.mrf.mxu0
        %1263 = vdwg.mxu0
        %v1265 = vsel %vm1244, %v1241, 0
        %v1268 = vsel %vm1244, %v1113, 0
        %1270 = vmatpush.bf16.xpose.msra.mxu0 0
        %1271 = vmatpush.bf16.xpose.msra.mxu0 0
        %1272 = vmatpush.bf16.xpose.msra.mxu0 0
        %1273 = vmatpush.bf16.xpose.msra.mxu0 0
        %1274 = vmatpush.bf16.xpose.msra.mxu0 0
        %1275 = vmatpush.bf16.xpose.msra.mxu0 0
        %1276 = vmatpush.bf16.xpose.msra.mxu0 0
        %1277 = vmatpush.bf16.xpose.msra.mxu0 %v1268
        %1278 = vmatmul.bf16.gmra.mxu0 %v1265
        %v1279 = vpop.f32.mrf.mxu0
        %v1280 = vadd.f32 0.0, %v1279
        %v1281 = vpop.f32.mrf.mxu0
        %1282 = vdwg.mxu0
        %v1284 = vsel %vm1244, %v1242, 0
        %v1287 = vsel %vm1244, %v1114, 0
        %1289 = vmatpush.bf16.xpose.msra.mxu0 0
        %1290 = vmatpush.bf16.xpose.msra.mxu0 0
        %1291 = vmatpush.bf16.xpose.msra.mxu0 0
        %1292 = vmatpush.bf16.xpose.msra.mxu0 0
        %1293 = vmatpush.bf16.xpose.msra.mxu0 0
        %1294 = vmatpush.bf16.xpose.msra.mxu0 0
        %1295 = vmatpush.bf16.xpose.msra.mxu0 0
        %1296 = vmatpush.bf16.xpose.msra.mxu0 %v1287
        %1297 = vmatmul.bf16.gmra.mxu0 %v1284
        %v1298 = vpop.f32.mrf.mxu0
        %v1299 = vadd.f32 0.0, %v1298
        %v1300 = vpop.f32.mrf.mxu0
        %1301 = vdwg.mxu0
        %v1303 = vsel %vm1244, %v1243, 0
        %v1306 = vsel %vm1244, %v1115, 0
        %1308 = vmatpush.bf16.xpose.msra.mxu0 0
        %1309 = vmatpush.bf16.xpose.msra.mxu0 0
        %1310 = vmatpush.bf16.xpose.msra.mxu0 0
        %1311 = vmatpush.bf16.xpose.msra.mxu0 0
        %1312 = vmatpush.bf16.xpose.msra.mxu0 0
        %1313 = vmatpush.bf16.xpose.msra.mxu0 0
        %1314 = vmatpush.bf16.xpose.msra.mxu0 0
        %1315 = vmatpush.bf16.xpose.msra.mxu0 %v1306
        %1316 = vmatmul.bf16.gmra.mxu0 %v1303
        %v1317 = vpop.f32.mrf.mxu0
        %v1318 = vadd.f32 0.0, %v1317
        %v1319 = vpop.f32.mrf.mxu0
        %1320 = vdwg.mxu0
        %v1321 = vld [vmem:[#allocation3] sm:$0xff]
        %v1322 = vld [vmem:[#allocation3 + $0x8] sm:$0xff]
        %v1323 = vld [vmem:[#allocation3 + $0x10] sm:$0xff]
        %v1324 = vld [vmem:[#allocation3 + $0x18] sm:$0xff]
        %v1325 = vsel %vm1244, %v1261, -inf
        %1326 = vmax.xlane.f32.xlu0 %v1325
        %v1327 = vpop.xlane.xlu0 %1326
        %v1328 = vsel %vm1244, %v1280, -inf
        %1329 = vmax.xlane.f32.xlu0 %v1328
        %v1330 = vpop.xlane.xlu0 %1329
        %v1331 = vsel %vm1244, %v1299, -inf
        %1332 = vmax.xlane.f32.xlu0 %v1331
        %v1333 = vpop.xlane.xlu0 %1332
        %v1334 = vsel %vm1244, %v1318, -inf
        %1335 = vmax.xlane.f32.xlu0 %v1334
        %v1336 = vpop.xlane.xlu0 %1335
        %v1337 = vmax.f32 %v1321, %v1327
        %v1338 = vmax.f32 %v1322, %v1330
        %v1339 = vmax.f32 %v1323, %v1333
        %v1340 = vmax.f32 %v1324, %v1336
        %v1341 = vsub.f32 %v1321, %v1337
        %v1342 = vsub.f32 %v1322, %v1338
        %v1343 = vsub.f32 %v1323, %v1339
        %v1344 = vsub.f32 %v1324, %v1340
        %v1345 = vmul.f32 %v1341, 1.442695
        %v1346 = vpow.pop %v1345
        %v1347 = vmul.f32 %v1342, 1.442695
        %v1348 = vpow.pop %v1347
        %v1349 = vmul.f32 %v1343, 1.442695
        %v1350 = vpow.pop %v1349
        %v1351 = vmul.f32 %v1344, 1.442695
        %v1352 = vpow.pop %v1351
        %1354 = vset.pattern.permute.xlu0 0
        %1355 = vperm.xlu0 %1354, %v1337
        %v1356 = vpop.permute.xlu0 %1355
        %1359 = vset.pattern.permute.xlu0 0
        %1360 = vperm.xlu0 %1359, %v1338
        %v1361 = vpop.permute.xlu0 %1360
        %1364 = vset.pattern.permute.xlu0 0
        %1365 = vperm.xlu0 %1364, %v1339
        %v1366 = vpop.permute.xlu0 %1365
        %1369 = vset.pattern.permute.xlu0 0
        %1370 = vperm.xlu0 %1369, %v1340
        %v1371 = vpop.permute.xlu0 %1370
        %v1373 = vsub.f32 %v1261, %v1356
        %v1374 = vsub.f32 %v1280, %v1361
        %v1375 = vsub.f32 %v1299, %v1366
        %v1376 = vsub.f32 %v1318, %v1371
        %v1377 = vmul.f32 %v1373, 1.442695
        %v1378 = vpow.pop %v1377
        %v1379 = vmul.f32 %v1374, 1.442695
        %v1380 = vpow.pop %v1379
        %v1381 = vmul.f32 %v1375, 1.442695
        %v1382 = vpow.pop %v1381
        %v1383 = vmul.f32 %v1376, 1.442695
        %v1384 = vpow.pop %v1383
        %v1385 = vld [vmem:[#allocation4] sm:$0xff]
        %v1386 = vld [vmem:[#allocation4 + $0x8] sm:$0xff]
        %v1387 = vld [vmem:[#allocation4 + $0x10] sm:$0xff]
        %v1388 = vld [vmem:[#allocation4 + $0x18] sm:$0xff]
        %v1389 = vmul.f32 %v1346, %v1385
        %v1390 = vmul.f32 %v1348, %v1386
        %v1391 = vmul.f32 %v1350, %v1387
        %v1392 = vmul.f32 %v1352, %v1388
        %v1393 = vsel %vm1244, %v1378, 0.0
        %1394 = vadd.xlane.f32.xlu0 %v1393
        %v1395 = vpop.xlane.xlu0 %1394
        %v1396 = vsel %vm1244, %v1380, 0.0
        %1397 = vadd.xlane.f32.xlu0 %v1396
        %v1398 = vpop.xlane.xlu0 %1397
        %v1399 = vsel %vm1244, %v1382, 0.0
        %1400 = vadd.xlane.f32.xlu0 %v1399
        %v1401 = vpop.xlane.xlu0 %1400
        %v1402 = vsel %vm1244, %v1384, 0.0
        %1403 = vadd.xlane.f32.xlu0 %v1402
        %v1404 = vpop.xlane.xlu0 %1403
        %v1405 = vadd.f32 %v1389, %v1395
        %v1406 = vadd.f32 %v1390, %v1398
        %v1407 = vadd.f32 %v1391, %v1401
        %v1408 = vadd.f32 %v1392, %v1404
        %vm1409 = vcmask 7168
        %1410 = vst.msk [vmem:[#allocation4] sm:$0xff] %vm1409, %v1405
        %1411 = vst.msk [vmem:[#allocation4 + $0x8] sm:$0xff] %vm1409, %v1406
        %1412 = vst.msk [vmem:[#allocation4 + $0x10] sm:$0xff] %vm1409, %v1407
        %1413 = vst.msk [vmem:[#allocation4 + $0x18] sm:$0xff] %vm1409, %v1408
        %v1414 = vld [vmem:[#allocation5] sm:$0xff]
        %v1415 = vld [vmem:[#allocation5 + $0x8] sm:$0xff]
        %v1416 = vld [vmem:[#allocation5 + $0x10] sm:$0xff]
        %v1417 = vld [vmem:[#allocation5 + $0x18] sm:$0xff]
        %1419 = vset.pattern.permute.xlu0 0
        %1420 = vperm.xlu0 %1419, %v1346
        %v1421 = vpop.permute.xlu0 %1420
        %1424 = vset.pattern.permute.xlu0 0
        %1425 = vperm.xlu0 %1424, %v1348
        %v1426 = vpop.permute.xlu0 %1425
        %1429 = vset.pattern.permute.xlu0 0
        %1430 = vperm.xlu0 %1429, %v1350
        %v1431 = vpop.permute.xlu0 %1430
        %1434 = vset.pattern.permute.xlu0 0
        %1435 = vperm.xlu0 %1434, %v1352
        %v1436 = vpop.permute.xlu0 %1435
        %v1438 = vmul.f32 %v1421, %v1414
        %v1439 = vmul.f32 %v1426, %v1415
        %v1440 = vmul.f32 %v1431, %v1416
        %v1441 = vmul.f32 %v1436, %v1417
        %v1442 = vpack.c.bf16 %v1378, %v1378
        %v1443 = vpack.c.bf16 %v1380, %v1380
        %v1444 = vpack.c.bf16 %v1382, %v1382
        %v1445 = vpack.c.bf16 %v1384, %v1384
        %v1447 = vsel %vm1244, %v1442, 0
        %vm1449 = vcmask 1043456
        %v1451 = vsel %vm1449, %v1236, 0
        %1453 = vmatpush.bf16.msra.mxu0 0
        %1454 = vmatpush.bf16.msra.mxu0 0
        %1455 = vmatpush.bf16.msra.mxu0 0
        %1456 = vmatpush.bf16.msra.mxu0 0
        %1457 = vmatpush.bf16.msra.mxu0 0
        %1458 = vmatpush.bf16.msra.mxu0 0
        %1459 = vmatpush.bf16.msra.mxu0 0
        %1460 = vmatpush.bf16.msra.mxu0 %v1451
        %1461 = vmatmul.bf16.gmra.mxu0 %v1447
        %v1462 = vpop.f32.mrf.mxu0
        %v1463 = vadd.f32 0.0, %v1462
        %v1464 = vpop.f32.mrf.mxu0
        %1465 = vdwg.mxu0
        %v1467 = vsel %vm1244, %v1443, 0
        %v1470 = vsel %vm1449, %v1237, 0
        %1472 = vmatpush.bf16.msra.mxu0 0
        %1473 = vmatpush.bf16.msra.mxu0 0
        %1474 = vmatpush.bf16.msra.mxu0 0
        %1475 = vmatpush.bf16.msra.mxu0 0
        %1476 = vmatpush.bf16.msra.mxu0 0
        %1477 = vmatpush.bf16.msra.mxu0 0
        %1478 = vmatpush.bf16.msra.mxu0 0
        %1479 = vmatpush.bf16.msra.mxu0 %v1470
        %1480 = vmatmul.bf16.gmra.mxu0 %v1467
        %v1481 = vpop.f32.mrf.mxu0
        %v1482 = vadd.f32 0.0, %v1481
        %v1483 = vpop.f32.mrf.mxu0
        %1484 = vdwg.mxu0
        %v1486 = vsel %vm1244, %v1444, 0
        %v1489 = vsel %vm1449, %v1238, 0
        %1491 = vmatpush.bf16.msra.mxu0 0
        %1492 = vmatpush.bf16.msra.mxu0 0
        %1493 = vmatpush.bf16.msra.mxu0 0
        %1494 = vmatpush.bf16.msra.mxu0 0
        %1495 = vmatpush.bf16.msra.mxu0 0
        %1496 = vmatpush.bf16.msra.mxu0 0
        %1497 = vmatpush.bf16.msra.mxu0 0
        %1498 = vmatpush.bf16.msra.mxu0 %v1489
        %1499 = vmatmul.bf16.gmra.mxu0 %v1486
        %v1500 = vpop.f32.mrf.mxu0
        %v1501 = vadd.f32 0.0, %v1500
        %v1502 = vpop.f32.mrf.mxu0
        %1503 = vdwg.mxu0
        %v1505 = vsel %vm1244, %v1445, 0
        %v1508 = vsel %vm1449, %v1239, 0
        %1510 = vmatpush.bf16.msra.mxu0 0
        %1511 = vmatpush.bf16.msra.mxu0 0
        %1512 = vmatpush.bf16.msra.mxu0 0
        %1513 = vmatpush.bf16.msra.mxu0 0
        %1514 = vmatpush.bf16.msra.mxu0 0
        %1515 = vmatpush.bf16.msra.mxu0 0
        %1516 = vmatpush.bf16.msra.mxu0 0
        %1517 = vmatpush.bf16.msra.mxu0 %v1508
        %1518 = vmatmul.bf16.gmra.mxu0 %v1505
        %v1519 = vpop.f32.mrf.mxu0
        %v1520 = vadd.f32 0.0, %v1519
        %v1521 = vpop.f32.mrf.mxu0
        %1522 = vdwg.mxu0
        %v1523 = vadd.f32 %v1438, %v1463
        %v1524 = vadd.f32 %v1439, %v1482
        %v1525 = vadd.f32 %v1440, %v1501
        %v1526 = vadd.f32 %v1441, %v1520
        %1527 = vst.msk [vmem:[#allocation5] sm:$0xff] %vm1244, %v1523
        %1528 = vst.msk [vmem:[#allocation5 + $0x8] sm:$0xff] %vm1244, %v1524
        %1529 = vst.msk [vmem:[#allocation5 + $0x10] sm:$0xff] %vm1244, %v1525
        %1530 = vst.msk [vmem:[#allocation5 + $0x18] sm:$0xff] %vm1244, %v1526
        %1531 = vst.msk [vmem:[#allocation3] sm:$0xff] %vm1409, %v1337
        %1532 = vst.msk [vmem:[#allocation3 + $0x8] sm:$0xff] %vm1409, %v1338
        %1533 = vst.msk [vmem:[#allocation3 + $0x10] sm:$0xff] %vm1409, %v1339
        %1534 = vst.msk [vmem:[#allocation3 + $0x18] sm:$0xff] %vm1409, %v1340
        // Predicated region
        $region117: #{petr_transformer_decoder.9} parent=75 // pred_check
          %p1535 = pneg %p723
        $region118: #{petr_transformer_decoder.9} parent=75 // pred_check_branch
          %1537 = sbr.rel (%p1535) target = $region120
        $region119: #{petr_transformer_decoder.9} parent=75 // pred_region
          %v1538 = vld [vmem:[#allocation4] sm:$0xff]
          %v1539 = vld [vmem:[#allocation4 + $0x8] sm:$0xff]
          %v1540 = vld [vmem:[#allocation4 + $0x10] sm:$0xff]
          %v1541 = vld [vmem:[#allocation4 + $0x18] sm:$0xff]
          %v1542 = vrcp.pop %v1538
          %v1543 = vrcp.pop %v1539
          %v1544 = vrcp.pop %v1540
          %v1545 = vrcp.pop %v1541
          %v1546 = vld [vmem:[#allocation5] sm:$0xff]
          %v1547 = vld [vmem:[#allocation5 + $0x8] sm:$0xff]
          %v1548 = vld [vmem:[#allocation5 + $0x10] sm:$0xff]
          %v1549 = vld [vmem:[#allocation5 + $0x18] sm:$0xff]
          %1551 = vset.pattern.permute.xlu0 0
          %1552 = vperm.xlu0 %1551, %v1542
          %v1553 = vpop.permute.xlu0 %1552
          %1556 = vset.pattern.permute.xlu0 0
          %1557 = vperm.xlu0 %1556, %v1543
          %v1558 = vpop.permute.xlu0 %1557
          %1561 = vset.pattern.permute.xlu0 0
          %1562 = vperm.xlu0 %1561, %v1544
          %v1563 = vpop.permute.xlu0 %1562
          %1566 = vset.pattern.permute.xlu0 0
          %1567 = vperm.xlu0 %1566, %v1545
          %v1568 = vpop.permute.xlu0 %1567
          %v1570 = vmul.f32 %v1546, %v1553
          %v1571 = vmul.f32 %v1547, %v1558
          %v1572 = vmul.f32 %v1548, %v1563
          %v1573 = vmul.f32 %v1549, %v1568
          %v1574 = vrot.slane %v1572, 4
          %v1575 = vsel %vm1002, %v1574, %v1570
          %v1576 = vrot.slane %v1570, 4
          %v1577 = vsel %vm1002, %v1572, %v1576
          %v1579 = vunpack.c.l.s4 1983009808
          %v1580 = vunpack.c.0.s8 %v1579
          %v1581 = vperm.slane %v1575, %v1580
          %v1583 = vunpack.c.l.s4 1983009808
          %v1584 = vunpack.c.0.s8 %v1583
          %v1585 = vperm.slane %v1577, %v1584
          %v1586 = vrot.slane %v1573, 4
          %v1587 = vsel %vm1002, %v1586, %v1571
          %v1588 = vrot.slane %v1571, 4
          %v1589 = vsel %vm1002, %v1573, %v1588
          %v1591 = vunpack.c.l.s4 1983009808
          %v1592 = vunpack.c.0.s8 %v1591
          %v1593 = vperm.slane %v1587, %v1592
          %v1595 = vunpack.c.l.s4 1983009808
          %v1596 = vunpack.c.0.s8 %v1595
          %v1597 = vperm.slane %v1589, %v1596
          %v1598 = vrot.slane %v1593, 4
          %v1599 = vsel %vm1002, %v1598, %v1581
          %v1600 = vrot.slane %v1581, 4
          %v1601 = vsel %vm1002, %v1593, %v1600
          %v1603 = vunpack.c.l.s4 1934713408
          %v1604 = vunpack.c.0.s8 %v1603
          %v1605 = vperm.slane %v1599, %v1604
          %v1607 = vunpack.c.l.s4 1934713408
          %v1608 = vunpack.c.0.s8 %v1607
          %v1609 = vperm.slane %v1601, %v1608
          %v1610 = vrot.slane %v1597, 4
          %v1611 = vsel %vm1002, %v1610, %v1585
          %v1612 = vrot.slane %v1585, 4
          %v1613 = vsel %vm1002, %v1597, %v1612
          %v1615 = vunpack.c.l.s4 1934713408
          %v1616 = vunpack.c.0.s8 %v1615
          %v1617 = vperm.slane %v1611, %v1616
          %v1619 = vunpack.c.l.s4 1934713408
          %v1620 = vunpack.c.0.s8 %v1619
          %v1621 = vperm.slane %v1613, %v1620
          %v1622 = vrot.slane %v1605, 4
          %v1623 = vsel %vm1002, 0.0, %v1622
          %v1624 = vrot.slane %v1609, 4
          %v1625 = vsel %vm1002, 0.0, %v1624
          %v1626 = vrot.slane %v1617, 4
          %v1627 = vsel %vm1002, 0.0, %v1626
          %v1628 = vrot.slane %v1621, 4
          %v1629 = vsel %vm1002, 0.0, %v1628
          %v1630 = vsel %vm1002, %v1624, %v1605
          %v1632 = vunpack.c.l.s4 1983009808
          %v1633 = vunpack.c.0.s8 %v1632
          %v1634 = vperm.slane %v1630, %v1633
          %v1635 = vrot.slane %v1625, 4
          %v1636 = vsel %vm1002, %v1635, %v1623
          %v1638 = vunpack.c.l.s4 1983009808
          %v1639 = vunpack.c.0.s8 %v1638
          %v1640 = vperm.slane %v1636, %v1639
          %v1641 = vsel %vm1002, %v1628, %v1617
          %v1643 = vunpack.c.l.s4 1983009808
          %v1644 = vunpack.c.0.s8 %v1643
          %v1645 = vperm.slane %v1641, %v1644
          %v1646 = vrot.slane %v1629, 4
          %v1647 = vsel %vm1002, %v1646, %v1627
          %v1649 = vunpack.c.l.s4 1983009808
          %v1650 = vunpack.c.0.s8 %v1649
          %v1651 = vperm.slane %v1647, %v1650
          %v1652 = vrot.slane %v1640, 4
          %v1653 = vsel %vm1002, %v1652, %v1634
          %v1654 = vrot.slane %v1634, 4
          %v1655 = vsel %vm1002, %v1640, %v1654
          %v1657 = vunpack.c.l.s4 1934713408
          %v1658 = vunpack.c.0.s8 %v1657
          %v1659 = vperm.slane %v1653, %v1658
          %v1661 = vunpack.c.l.s4 1934713408
          %v1662 = vunpack.c.0.s8 %v1661
          %v1663 = vperm.slane %v1655, %v1662
          %v1664 = vrot.slane %v1651, 4
          %v1665 = vsel %vm1002, %v1664, %v1645
          %v1666 = vrot.slane %v1645, 4
          %v1667 = vsel %vm1002, %v1651, %v1666
          %v1669 = vunpack.c.l.s4 1934713408
          %v1670 = vunpack.c.0.s8 %v1669
          %v1671 = vperm.slane %v1665, %v1670
          %v1673 = vunpack.c.l.s4 1934713408
          %v1674 = vunpack.c.0.s8 %v1673
          %v1675 = vperm.slane %v1667, %v1674
          %v1676 = vrot.slane %v1671, 4
          %v1677 = vsel %vm1002, %v1676, %v1659
          %v1678 = vrot.slane %v1659, 4
          %v1679 = vsel %vm1002, %v1671, %v1678
          %v1680 = vrot.slane %v1675, 4
          %v1681 = vsel %vm1002, %v1680, %v1663
          %v1682 = vrot.slane %v1663, 4
          %v1683 = vsel %vm1002, %v1675, %v1682
          %1685 = vrot.lane.b32.xlu0 %v1679, 8
          %v1686 = vpop.permute.xlu0 %1685
          %1689 = vrot.lane.b32.xlu0 %v1681, 16
          %v1690 = vpop.permute.xlu0 %1689
          %1693 = vrot.lane.b32.xlu0 %v1683, 24
          %v1694 = vpop.permute.xlu0 %1693
          %v1696 = vsel %vm1244, %v1677, %v1686
          %vm1697 = vcmask 130048
          %v1698 = vsel %vm1697, %v1696, %v1690
          %vm1699 = vcmask 195584
          %v1700 = vsel %vm1699, %v1698, %v1694
          %v1701 = vpack.c.bf16 %v1700, %v1700
          %v1702 = vld [vmem:[#allocation14] sm:$0xf]
          %v1703 = vld [vmem:[#allocation14 + $0x4] sm:$0xf]
          %v1704 = vld [vmem:[#allocation14 + $0x8] sm:$0xf]
          %v1705 = vld [vmem:[#allocation14 + $0xc] sm:$0xf]
          %v1706 = vld [vmem:[#allocation16] sm:$0x1]
          %v1708 = vperm.slane %v1706, 0
          %v1714 = vunpack.c.l.b16 %v1702
          %v1715 = vunpack.c.l.b16 %v1703
          %v1716 = vunpack.c.l.b16 %v1704
          %v1717 = vunpack.c.l.b16 %v1705
          %v1718 = vpack.c.b16 %v1715, %v1714
          %v1719 = vpack.c.b16 %v1717, %v1716
          %v1723 = vsel %vm937, %v1701, 0
          %1725 = vmatpush.bf16.msra.mxu0 0
          %1726 = vmatpush.bf16.msra.mxu0 0
          %1727 = vmatpush.bf16.msra.mxu0 0
          %1728 = vmatpush.bf16.msra.mxu0 0
          %1729 = vmatpush.bf16.msra.mxu0 0
          %1730 = vmatpush.bf16.msra.mxu0 0
          %1731 = vmatpush.bf16.msra.mxu0 %v1719
          %1732 = vmatpush.bf16.msra.mxu0 %v1718
          %1733 = vmatmul.bf16.gmra.mxu0 %v1723
          %v1734 = vpop.f32.mrf.mxu0
          %v1735 = vadd.f32 %v1708, %v1734
          %v1736 = vpop.f32.mrf.mxu0
          %1737 = vdwg.mxu0
          %v1738 = vld [vmem:[%s707] sm:$0xff]
          %v1739 = vadd.f32 %v1735, %v1738
          %v1740 = vsel %vm937, %v1739, 0.0
          %1741 = vadd.xlane.f32.xlu0 %v1740
          %v1742 = vpop.xlane.xlu0 %1741
          %v1743 = vrcp.pop 32.0
          %v1744 = vmul.f32 32.0, %v1743
          %v1745 = vsub.f32 1.0, %v1744
          %v1746 = vmul.f32 %v1743, %v1745
          %v1747 = vadd.f32 %v1743, %v1746
          %vm1748 = vweird.f32 %v1743
          %v1749 = vsel %vm1748, %v1743, %v1747
          %v1750 = vmul.f32 %v1742, %v1749
          %v1751 = vsub.f32 %v1739, %v1750
          %v1752 = vmul.f32 %v1751, %v1751
          %v1753 = vsel %vm937, %v1752, 0.0
          %1754 = vadd.xlane.f32.xlu0 %v1753
          %v1755 = vpop.xlane.xlu0 %1754
          %v1756 = vmul.f32 %v1755, %v1749
          %v1757 = vadd.f32 %v1756, 1e-05
          %v1758 = vrsqrt.pop %v1757
          %v1759 = vmul.f32 %v1758, %v1757
          %v1760 = vmul.f32 %v1759, %v1758
          %v1761 = vmul.f32 0.5, %v1760
          %v1762 = vsub.f32 1.5, %v1761
          %v1763 = vmul.f32 %v1758, %v1762
          %vm1764 = vweird.f32 %v1757
          %vm1765 = vweird.f32 %v1758
          %vm1766 = vmor %vm1764, %vm1765
          %v1767 = vsel %vm1766, %v1758, %v1763
          %v1768 = vmul.f32 %v1751, %v1767
          %v1769 = vld [vmem:[#allocation17] sm:$0x1]
          %v1771 = vperm.slane %v1769, 0
          %v1773 = vmul.f32 %v1768, %v1771
          %v1774 = vld [vmem:[#allocation19] sm:$0x1]
          %v1776 = vperm.slane %v1774, 0
          %v1778 = vadd.f32 %v1773, %v1776
          %1779 = vst.msk [vmem:[%s721] sm:$0xff] %vm937, %v1778
        $region120: #{petr_transformer_decoder.9} parent=75 // pred_fallthru
          _
        %p1780 = scmp.lt.s32.totalorder %s39, 1
        %s1781 = scalar_select %p1780, %s39, 1
        %p1782 = scmp.lt.s32.totalorder %s40, 0
        %s1783 = scalar_select %p1782, %s40, 0
        %s1784 = sadd.s32 %s1783, %s1781
        %s1785 = smul.addr %s1784, 8
        %s1786 = scalar_lea.vmem %s14, %s1785
        // Predicated region
        $region121: #{petr_transformer_decoder.9} parent=75 // pred_check
          %p1787 = pneg %p395
        $region122: #{petr_transformer_decoder.9} parent=75 // pred_check_branch
          %1789 = sbr.rel (%p1787) target = $region124
        $region123: #{petr_transformer_decoder.9} parent=75 // pred_region
          _
        $region124: #{petr_transformer_decoder.9} parent=75 // pred_fallthru
          _
      $region76: #{petr_transformer_decoder.9} parent=5 // pred_fallthru
        _
      %p1790 = scmp.le.s32.totalorder 2, %s29
      // Predicated region
      $region125: #{petr_transformer_decoder.9} parent=5 // pred_check
        %p1791 = pneg %p1790
      $region126: #{petr_transformer_decoder.9} parent=5 // pred_check_branch
        %1793 = sbr.rel (%p1791) target = $region128
      $region127: #{petr_transformer_decoder.9} parent=5 // pred_region
        %s1794 = ssub.s32 %s29, 2
        // Predicated region
        $region129: #{petr_transformer_decoder.9} parent=127 // pred_check
          %p1795 = pneg %p401
        $region130: #{petr_transformer_decoder.9} parent=127 // pred_check_branch
          %1797 = sbr.rel (%p1795) target = $region132
        $region131: #{petr_transformer_decoder.9} parent=127 // pred_region
          %p1798 = scmp.lt.s32.totalorder %s42, 1
          %s1799 = scalar_select %p1798, %s42, 1
          %p1800 = scmp.lt.s32.totalorder %s43, 0
          %s1801 = scalar_select %p1800, %s43, 0
          %s1802 = sadd.s32 %s1801, %s1799
          %s1803 = smul.addr %s1802, 8
          %s1804 = scalar_lea.vmem %s14, %s1803
        $region132: #{petr_transformer_decoder.9} parent=127 // pred_fallthru
          _
      $region128: #{petr_transformer_decoder.9} parent=5 // pred_fallthru
        _
    $region6: #{petr_transformer_decoder.9} parent=1 // loop_footer
      %s33 = sadd.s32 1, %s29
    $region7: #{petr_transformer_decoder.9} parent=1 // loop_footer_branch
      %28 = sbr.rel target = $region3
    $region8: #{petr_transformer_decoder.9} parent=1 // loop_exit
      _
    %1805 = vsyncpa [#allocation7], 1
    %s1806 = scalar_lea.sflag [#allocation7], 1
    %1807 = vsyncpa %s1806, 1
    %1808 = vsyncpa [#allocation9], 1
    %s1809 = scalar_lea.sflag [#allocation9], 1
    %1810 = vsyncpa %s1809, 1
    %1811 = vsyncpa [#allocation12], 1
    %1812 = vsyncpa [#allocation15], 1
    %1813 = vsyncpa [#allocation18], 1

// kernel: petr_transformer_decoder.10
$region0: #{petr_transformer_decoder.10}
  #allocation0 [shape = 'u32[]', space=smem, size = 0x4, offset = 0x4, fixed_abs, tag = 'smem constant byte address 0x4 - core index']
  #allocation1 [shape = 'u32[72,128]{1,0:T(1,128)}', space=vmem, size = 0x9000, scoped, tag = 'internal scratch']
  #allocation2 [shape = 'bf16[4,8,8]{2,1,0:T(8,128)(2,1)}', space=vmem, size = 0x2000, scoped, tag = 'scratch operand']
  #allocation3 [shape = 'f32[4,8,1]{2,1,0:T(8,128)}', space=vmem, size = 0x4000, scoped, tag = 'scratch operand']
  #allocation4 [shape = 'f32[4,8,1]{2,1,0:T(8,128)}', space=vmem, size = 0x4000, scoped, tag = 'scratch operand']
  #allocation5 [shape = 'f32[4,8,8]{2,1,0:T(8,128)}', space=vmem, size = 0x4000, scoped, tag = 'scratch operand']
  %s0 = inlined_call_operand.vmem [shape: f32[2,8,32], index: 0, kind: input, shape index: {}]
  %s1 = inlined_call_operand.hbm [shape: f32[2,8,32], index: 1, kind: input, shape index: {}]
  %s2 = inlined_call_operand.vmem [shape: f32[2,16,32], index: 2, kind: input, shape index: {}]
  %s3 = inlined_call_operand.vmem [shape: f32[2,16,32], index: 3, kind: input, shape index: {}]
  %s4 = inlined_call_operand.hbm [shape: bf16[32,32], index: 4, kind: input, shape index: {}]
  %s5 = inlined_call_operand.vmem [shape: f32[1,32], index: 5, kind: input, shape index: {}]
  %s6 = inlined_call_operand.hbm [shape: bf16[32,32], index: 6, kind: input, shape index: {}]
  %s7 = inlined_call_operand.hbm [shape: f32[1,32], index: 7, kind: input, shape index: {}]
  %s8 = inlined_call_operand.hbm [shape: bf16[32,32], index: 8, kind: input, shape index: {}]
  %s9 = inlined_call_operand.hbm [shape: f32[1,32], index: 9, kind: input, shape index: {}]
  %s10 = inlined_call_operand.hbm [shape: bf16[32,32], index: 10, kind: input, shape index: {}]
  %s11 = inlined_call_operand.hbm [shape: f32[1,32], index: 11, kind: input, shape index: {}]
  %s12 = inlined_call_operand.hbm [shape: f32[1,32], index: 12, kind: input, shape index: {}]
  %s13 = inlined_call_operand.hbm [shape: f32[1,32], index: 13, kind: input, shape index: {}]
  %s14 = inlined_call_operand.vmem [shape: f32[2,8,32], index: 14, kind: output, shape index: {}]
  %s15 = sld [smem:[#allocation0]]
  $region137: #{petr_transformer_decoder.10} parent=0
    _
  %s17 = ssub.s32 1, %s15
  %s18 = scalar_select 0, %s17, %s15
  $region1: #{petr_transformer_decoder.10} parent=0
    #allocation6 [shape = 'u8[8192]{0}', space=vmem, size = 0x2000, scoped, tag = 'input window, operand 1']
    #allocation7 [shape = 's32[2]{0}', space=sflag, size = 0x8, scoped, tag = 'scoped memory for petr_transformer_decoder.10']
    #allocation8 [shape = 'u8[8192]{0}', space=vmem, size = 0x2000, scoped, tag = 'input window, operand 4, single buffered']
    #allocation9 [shape = 's32[1]{0}', space=sflag, size = 0x4, scoped, tag = 'scoped memory for petr_transformer_decoder.10']
    #allocation10 [shape = 'u8[8192]{0}', space=vmem, size = 0x2000, scoped, tag = 'input window, operand 6, single buffered']
    #allocation11 [shape = 'u8[512]{0}', space=vmem, size = 0x400, scoped, tag = 'input window, operand 7, single buffered']
    #allocation12 [shape = 's32[1]{0}', space=sflag, size = 0x4, scoped, tag = 'scoped memory for petr_transformer_decoder.10']
    #allocation13 [shape = 'u8[8192]{0}', space=vmem, size = 0x2000, scoped, tag = 'input window, operand 8, single buffered']
    #allocation14 [shape = 'u8[512]{0}', space=vmem, size = 0x400, scoped, tag = 'input window, operand 9, single buffered']
    #allocation15 [shape = 's32[1]{0}', space=sflag, size = 0x4, scoped, tag = 'scoped memory for petr_transformer_decoder.10']
    #allocation16 [shape = 'u8[8192]{0}', space=vmem, size = 0x2000, scoped, tag = 'input window, operand 10, single buffered']
    #allocation17 [shape = 'u8[512]{0}', space=vmem, size = 0x400, scoped, tag = 'input window, operand 11, single buffered']
    #allocation18 [shape = 's32[1]{0}', space=sflag, size = 0x4, scoped, tag = 'scoped memory for petr_transformer_decoder.10']
    #allocation19 [shape = 'u8[512]{0}', space=vmem, size = 0x400, scoped, tag = 'input window, operand 12, single buffered']
    #allocation20 [shape = 'u8[512]{0}', space=vmem, size = 0x400, scoped, tag = 'input window, operand 13, single buffered']
    #allocation21 [shape = 's32[1]{0}', space=sflag, size = 0x4, scoped, tag = 'scoped memory for petr_transformer_decoder.10']
    %19 = vsyncpa [#allocation7], 0
    %s20 = scalar_lea.sflag [#allocation7], 1
    %21 = vsyncpa %s20, 0
    %22 = vsyncpa [#allocation9], 0
    %23 = vsyncpa [#allocation12], 0
    %24 = vsyncpa [#allocation15], 0
    %25 = vsyncpa [#allocation18], 0
    %26 = vsyncpa [#allocation21], 0
    loop: start=0, step=1, limit=4
    $region2: #{petr_transformer_decoder.10} parent=1 // loop_pre_header
      _
    $region3: #{petr_transformer_decoder.10} parent=1 // loop_header
      %s28 = sphi 0, %s32
      %p29 = scmp.ge.s32.totalorder %s28, 4
      %s35 = sphi 0, %s54
      %s36 = sphi 0, %s50
      %s37 = sphi 0, %s46
      %s38 = sphi 0, %s35
      %s39 = sphi 0, %s36
      %s40 = sphi 0, %s37
      %s41 = sphi 0, %s38
      %s42 = sphi 0, %s39
      %s43 = sphi 0, %s40
      %s59 = sphi 0, %s61
      %s62 = sphi 0, %s59
      %s63 = sphi 0, %s62
      %s79 = sphi 0, %s63
      %s87 = sphi 0, %s89
      %s90 = sphi 0, %s87
      %s91 = sphi 0, %s90
      %s107 = sphi 0, %s91
      %s115 = sphi 0, %s117
      %s118 = sphi 0, %s115
      %s119 = sphi 0, %s118
      %s135 = sphi 0, %s119
      %s143 = sphi 0, %s145
      %s146 = sphi 0, %s143
      %s147 = sphi 0, %s146
      %s163 = sphi 0, %s147
      %s167 = sphi 0, %s167
      %s169 = sphi 0, %s167
      %s170 = sphi 0, %s169
      %s184 = sphi 0, %s170
      %s188 = sphi 0, %s188
      %s190 = sphi 0, %s188
      %s191 = sphi 0, %s190
      %s205 = sphi 0, %s191
      %s209 = sphi 0, %s209
      %s211 = sphi 0, %s209
      %s212 = sphi 0, %s211
      %s226 = sphi 0, %s212
      %s230 = sphi 0, %s230
      %s232 = sphi 0, %s230
      %s233 = sphi 0, %s232
      %s247 = sphi 0, %s233
      %s251 = sphi 0, %s251
      %s253 = sphi 0, %s251
      %s254 = sphi 0, %s253
      %s268 = sphi 0, %s254
      %s272 = sphi 0, %s272
      %s274 = sphi 0, %s272
      %s275 = sphi 0, %s274
      %s289 = sphi 0, %s275
      %s293 = sphi 0, %s293
      %s295 = sphi 0, %s293
      %s296 = sphi 0, %s295
      %s310 = sphi 0, %s296
      %s314 = sphi 0, %s314
      %s316 = sphi 0, %s314
      %s317 = sphi 0, %s316
      %s331 = sphi 0, %s317
      %s335 = sphi 0, %s335
      %s337 = sphi 0, %s335
      %s338 = sphi 0, %s337
      %s352 = sphi 0, %s338
      %s356 = sphi 0, %s356
      %s358 = sphi 0, %s356
      %s359 = sphi 0, %s358
      %s373 = sphi 0, %s359
      %s381 = sphi 0, %s383
      %s384 = sphi 0, %s381
      %s385 = sphi 0, %s384
      %s401 = sphi 0, %s385
    $region4: #{petr_transformer_decoder.10} parent=1 // loop_header_branch
      %31 = sbr.rel (%p29) target = $region8
    $region5: #{petr_transformer_decoder.10} parent=1 // loop_body
      %s33 = ssub.s32 %s28, 1
      %s34 = ssub.s32 %s28, 2
      %s44 = sadd.s32 1, %s37
      %p45 = scmp.ge.s32.totalorder %s44, 1
      %s46 = scalar_select %p45, 0, %s44
      %s47 = sadd.s32 1, %s36
      %s48 = scalar_select %p45, %s47, %s36
      %p49 = scmp.ge.s32.totalorder %s48, 1
      %s50 = scalar_select %p49, 0, %s48
      %s51 = sadd.s32 1, %s35
      %s52 = scalar_select %p49, %s51, %s35
      %p53 = scmp.ge.s32.totalorder %s52, 2
      %s54 = scalar_select %p53, 0, %s52
      %s55 = ssub.s32 %s35, %s54
      %s56 = ssub.s32 %s36, %s50
      %s57 = sor.u32 %s55, %s56
      %p58 = scmp.eq.s32.totalorder %s57, 0
      %s60 = sadd.s32 %s59, 1
      %s61 = scalar_select %p58, %s59, %s60
      %p64 = pneg %p58
      %p65 = scmp.eq.s32.totalorder %s28, 1
      %p66 = por %p64, %p65
      %p67 = scmp.ne.s32.totalorder %s59, %s62
      %p68 = scmp.eq.s32.totalorder %s28, 0
      %p69 = por %p67, %p68
      %p70 = scmp.ne.s32.totalorder %s59, %s62
      %p71 = scmp.eq.s32.totalorder %s33, 1
      %p72 = por %p70, %p71
      %p73 = scmp.ne.s32.totalorder %s62, %s63
      %p74 = scmp.eq.s32.totalorder %s33, 0
      %p75 = por %p73, %p74
      %p76 = scmp.ne.s32.totalorder %s62, %s63
      %p77 = scmp.eq.s32.totalorder %s34, 1
      %p78 = por %p76, %p77
      %p80 = scmp.ne.s32.totalorder %s63, %s79
      %p81 = scmp.eq.s32.totalorder %s34, 0
      %p82 = por %p80, %p81
      %s83 = ssub.s32 %s35, %s54
      %s84 = ssub.s32 %s36, %s50
      %s85 = sor.u32 %s83, %s84
      %p86 = scmp.eq.s32.totalorder %s85, 0
      %s88 = sadd.s32 %s87, 1
      %s89 = scalar_select %p86, %s87, %s88
      %p92 = pneg %p86
      %p93 = scmp.eq.s32.totalorder %s28, 1
      %p94 = por %p92, %p93
      %p95 = scmp.ne.s32.totalorder %s87, %s90
      %p96 = scmp.eq.s32.totalorder %s28, 0
      %p97 = por %p95, %p96
      %p98 = scmp.ne.s32.totalorder %s87, %s90
      %p99 = scmp.eq.s32.totalorder %s33, 1
      %p100 = por %p98, %p99
      %p101 = scmp.ne.s32.totalorder %s90, %s91
      %p102 = scmp.eq.s32.totalorder %s33, 0
      %p103 = por %p101, %p102
      %p104 = scmp.ne.s32.totalorder %s90, %s91
      %p105 = scmp.eq.s32.totalorder %s34, 1
      %p106 = por %p104, %p105
      %p108 = scmp.ne.s32.totalorder %s91, %s107
      %p109 = scmp.eq.s32.totalorder %s34, 0
      %p110 = por %p108, %p109
      %s111 = ssub.s32 %s35, %s54
      %s112 = ssub.s32 %s37, %s46
      %s113 = sor.u32 %s111, %s112
      %p114 = scmp.eq.s32.totalorder %s113, 0
      %s116 = sadd.s32 %s115, 1
      %s117 = scalar_select %p114, %s115, %s116
      %p120 = pneg %p114
      %p121 = scmp.eq.s32.totalorder %s28, 1
      %p122 = por %p120, %p121
      %p123 = scmp.ne.s32.totalorder %s115, %s118
      %p124 = scmp.eq.s32.totalorder %s28, 0
      %p125 = por %p123, %p124
      %p126 = scmp.ne.s32.totalorder %s115, %s118
      %p127 = scmp.eq.s32.totalorder %s33, 1
      %p128 = por %p126, %p127
      %p129 = scmp.ne.s32.totalorder %s118, %s119
      %p130 = scmp.eq.s32.totalorder %s33, 0
      %p131 = por %p129, %p130
      %p132 = scmp.ne.s32.totalorder %s118, %s119
      %p133 = scmp.eq.s32.totalorder %s34, 1
      %p134 = por %p132, %p133
      %p136 = scmp.ne.s32.totalorder %s119, %s135
      %p137 = scmp.eq.s32.totalorder %s34, 0
      %p138 = por %p136, %p137
      %s139 = ssub.s32 %s35, %s54
      %s140 = ssub.s32 %s37, %s46
      %s141 = sor.u32 %s139, %s140
      %p142 = scmp.eq.s32.totalorder %s141, 0
      %s144 = sadd.s32 %s143, 1
      %s145 = scalar_select %p142, %s143, %s144
      %p148 = pneg %p142
      %p149 = scmp.eq.s32.totalorder %s28, 1
      %p150 = por %p148, %p149
      %p151 = scmp.ne.s32.totalorder %s143, %s146
      %p152 = scmp.eq.s32.totalorder %s28, 0
      %p153 = por %p151, %p152
      %p154 = scmp.ne.s32.totalorder %s143, %s146
      %p155 = scmp.eq.s32.totalorder %s33, 1
      %p156 = por %p154, %p155
      %p157 = scmp.ne.s32.totalorder %s146, %s147
      %p158 = scmp.eq.s32.totalorder %s33, 0
      %p159 = por %p157, %p158
      %p160 = scmp.ne.s32.totalorder %s146, %s147
      %p161 = scmp.eq.s32.totalorder %s34, 1
      %p162 = por %p160, %p161
      %p164 = scmp.ne.s32.totalorder %s147, %s163
      %p165 = scmp.eq.s32.totalorder %s34, 0
      %p166 = por %p164, %p165
      %s168 = sadd.s32 %s167, 1
      %p171 = scmp.eq.s32.totalorder %s28, 1
      %p172 = scmp.ne.s32.totalorder %s167, %s169
      %p173 = scmp.eq.s32.totalorder %s28, 0
      %p174 = por %p172, %p173
      %p175 = scmp.ne.s32.totalorder %s167, %s169
      %p176 = scmp.eq.s32.totalorder %s33, 1
      %p177 = por %p175, %p176
      %p178 = scmp.ne.s32.totalorder %s169, %s170
      %p179 = scmp.eq.s32.totalorder %s33, 0
      %p180 = por %p178, %p179
      %p181 = scmp.ne.s32.totalorder %s169, %s170
      %p182 = scmp.eq.s32.totalorder %s34, 1
      %p183 = por %p181, %p182
      %p185 = scmp.ne.s32.totalorder %s170, %s184
      %p186 = scmp.eq.s32.totalorder %s34, 0
      %p187 = por %p185, %p186
      %s189 = sadd.s32 %s188, 1
      %p192 = scmp.eq.s32.totalorder %s28, 1
      %p193 = scmp.ne.s32.totalorder %s188, %s190
      %p194 = scmp.eq.s32.totalorder %s28, 0
      %p195 = por %p193, %p194
      %p196 = scmp.ne.s32.totalorder %s188, %s190
      %p197 = scmp.eq.s32.totalorder %s33, 1
      %p198 = por %p196, %p197
      %p199 = scmp.ne.s32.totalorder %s190, %s191
      %p200 = scmp.eq.s32.totalorder %s33, 0
      %p201 = por %p199, %p200
      %p202 = scmp.ne.s32.totalorder %s190, %s191
      %p203 = scmp.eq.s32.totalorder %s34, 1
      %p204 = por %p202, %p203
      %p206 = scmp.ne.s32.totalorder %s191, %s205
      %p207 = scmp.eq.s32.totalorder %s34, 0
      %p208 = por %p206, %p207
      %s210 = sadd.s32 %s209, 1
      %p213 = scmp.eq.s32.totalorder %s28, 1
      %p214 = scmp.ne.s32.totalorder %s209, %s211
      %p215 = scmp.eq.s32.totalorder %s28, 0
      %p216 = por %p214, %p215
      %p217 = scmp.ne.s32.totalorder %s209, %s211
      %p218 = scmp.eq.s32.totalorder %s33, 1
      %p219 = por %p217, %p218
      %p220 = scmp.ne.s32.totalorder %s211, %s212
      %p221 = scmp.eq.s32.totalorder %s33, 0
      %p222 = por %p220, %p221
      %p223 = scmp.ne.s32.totalorder %s211, %s212
      %p224 = scmp.eq.s32.totalorder %s34, 1
      %p225 = por %p223, %p224
      %p227 = scmp.ne.s32.totalorder %s212, %s226
      %p228 = scmp.eq.s32.totalorder %s34, 0
      %p229 = por %p227, %p228
      %s231 = sadd.s32 %s230, 1
      %p234 = scmp.eq.s32.totalorder %s28, 1
      %p235 = scmp.ne.s32.totalorder %s230, %s232
      %p236 = scmp.eq.s32.totalorder %s28, 0
      %p237 = por %p235, %p236
      %p238 = scmp.ne.s32.totalorder %s230, %s232
      %p239 = scmp.eq.s32.totalorder %s33, 1
      %p240 = por %p238, %p239
      %p241 = scmp.ne.s32.totalorder %s232, %s233
      %p242 = scmp.eq.s32.totalorder %s33, 0
      %p243 = por %p241, %p242
      %p244 = scmp.ne.s32.totalorder %s232, %s233
      %p245 = scmp.eq.s32.totalorder %s34, 1
      %p246 = por %p244, %p245
      %p248 = scmp.ne.s32.totalorder %s233, %s247
      %p249 = scmp.eq.s32.totalorder %s34, 0
      %p250 = por %p248, %p249
      %s252 = sadd.s32 %s251, 1
      %p255 = scmp.eq.s32.totalorder %s28, 1
      %p256 = scmp.ne.s32.totalorder %s251, %s253
      %p257 = scmp.eq.s32.totalorder %s28, 0
      %p258 = por %p256, %p257
      %p259 = scmp.ne.s32.totalorder %s251, %s253
      %p260 = scmp.eq.s32.totalorder %s33, 1
      %p261 = por %p259, %p260
      %p262 = scmp.ne.s32.totalorder %s253, %s254
      %p263 = scmp.eq.s32.totalorder %s33, 0
      %p264 = por %p262, %p263
      %p265 = scmp.ne.s32.totalorder %s253, %s254
      %p266 = scmp.eq.s32.totalorder %s34, 1
      %p267 = por %p265, %p266
      %p269 = scmp.ne.s32.totalorder %s254, %s268
      %p270 = scmp.eq.s32.totalorder %s34, 0
      %p271 = por %p269, %p270
      %s273 = sadd.s32 %s272, 1
      %p276 = scmp.eq.s32.totalorder %s28, 1
      %p277 = scmp.ne.s32.totalorder %s272, %s274
      %p278 = scmp.eq.s32.totalorder %s28, 0
      %p279 = por %p277, %p278
      %p280 = scmp.ne.s32.totalorder %s272, %s274
      %p281 = scmp.eq.s32.totalorder %s33, 1
      %p282 = por %p280, %p281
      %p283 = scmp.ne.s32.totalorder %s274, %s275
      %p284 = scmp.eq.s32.totalorder %s33, 0
      %p285 = por %p283, %p284
      %p286 = scmp.ne.s32.totalorder %s274, %s275
      %p287 = scmp.eq.s32.totalorder %s34, 1
      %p288 = por %p286, %p287
      %p290 = scmp.ne.s32.totalorder %s275, %s289
      %p291 = scmp.eq.s32.totalorder %s34, 0
      %p292 = por %p290, %p291
      %s294 = sadd.s32 %s293, 1
      %p297 = scmp.eq.s32.totalorder %s28, 1
      %p298 = scmp.ne.s32.totalorder %s293, %s295
      %p299 = scmp.eq.s32.totalorder %s28, 0
      %p300 = por %p298, %p299
      %p301 = scmp.ne.s32.totalorder %s293, %s295
      %p302 = scmp.eq.s32.totalorder %s33, 1
      %p303 = por %p301, %p302
      %p304 = scmp.ne.s32.totalorder %s295, %s296
      %p305 = scmp.eq.s32.totalorder %s33, 0
      %p306 = por %p304, %p305
      %p307 = scmp.ne.s32.totalorder %s295, %s296
      %p308 = scmp.eq.s32.totalorder %s34, 1
      %p309 = por %p307, %p308
      %p311 = scmp.ne.s32.totalorder %s296, %s310
      %p312 = scmp.eq.s32.totalorder %s34, 0
      %p313 = por %p311, %p312
      %s315 = sadd.s32 %s314, 1
      %p318 = scmp.eq.s32.totalorder %s28, 1
      %p319 = scmp.ne.s32.totalorder %s314, %s316
      %p320 = scmp.eq.s32.totalorder %s28, 0
      %p321 = por %p319, %p320
      %p322 = scmp.ne.s32.totalorder %s314, %s316
      %p323 = scmp.eq.s32.totalorder %s33, 1
      %p324 = por %p322, %p323
      %p325 = scmp.ne.s32.totalorder %s316, %s317
      %p326 = scmp.eq.s32.totalorder %s33, 0
      %p327 = por %p325, %p326
      %p328 = scmp.ne.s32.totalorder %s316, %s317
      %p329 = scmp.eq.s32.totalorder %s34, 1
      %p330 = por %p328, %p329
      %p332 = scmp.ne.s32.totalorder %s317, %s331
      %p333 = scmp.eq.s32.totalorder %s34, 0
      %p334 = por %p332, %p333
      %s336 = sadd.s32 %s335, 1
      %p339 = scmp.eq.s32.totalorder %s28, 1
      %p340 = scmp.ne.s32.totalorder %s335, %s337
      %p341 = scmp.eq.s32.totalorder %s28, 0
      %p342 = por %p340, %p341
      %p343 = scmp.ne.s32.totalorder %s335, %s337
      %p344 = scmp.eq.s32.totalorder %s33, 1
      %p345 = por %p343, %p344
      %p346 = scmp.ne.s32.totalorder %s337, %s338
      %p347 = scmp.eq.s32.totalorder %s33, 0
      %p348 = por %p346, %p347
      %p349 = scmp.ne.s32.totalorder %s337, %s338
      %p350 = scmp.eq.s32.totalorder %s34, 1
      %p351 = por %p349, %p350
      %p353 = scmp.ne.s32.totalorder %s338, %s352
      %p354 = scmp.eq.s32.totalorder %s34, 0
      %p355 = por %p353, %p354
      %s357 = sadd.s32 %s356, 1
      %p360 = scmp.eq.s32.totalorder %s28, 1
      %p361 = scmp.ne.s32.totalorder %s356, %s358
      %p362 = scmp.eq.s32.totalorder %s28, 0
      %p363 = por %p361, %p362
      %p364 = scmp.ne.s32.totalorder %s356, %s358
      %p365 = scmp.eq.s32.totalorder %s33, 1
      %p366 = por %p364, %p365
      %p367 = scmp.ne.s32.totalorder %s358, %s359
      %p368 = scmp.eq.s32.totalorder %s33, 0
      %p369 = por %p367, %p368
      %p370 = scmp.ne.s32.totalorder %s358, %s359
      %p371 = scmp.eq.s32.totalorder %s34, 1
      %p372 = por %p370, %p371
      %p374 = scmp.ne.s32.totalorder %s359, %s373
      %p375 = scmp.eq.s32.totalorder %s34, 0
      %p376 = por %p374, %p375
      %s377 = ssub.s32 %s35, %s54
      %s378 = ssub.s32 %s36, %s50
      %s379 = sor.u32 %s377, %s378
      %p380 = scmp.eq.s32.totalorder %s379, 0
      %s382 = sadd.s32 %s381, 1
      %s383 = scalar_select %p380, %s381, %s382
      %p386 = pneg %p380
      %p387 = scmp.eq.s32.totalorder %s28, 1
      %p388 = por %p386, %p387
      %p389 = scmp.ne.s32.totalorder %s381, %s384
      %p390 = scmp.eq.s32.totalorder %s28, 0
      %p391 = por %p389, %p390
      %p392 = scmp.ne.s32.totalorder %s381, %s384
      %p393 = scmp.eq.s32.totalorder %s33, 1
      %p394 = por %p392, %p393
      %p395 = scmp.ne.s32.totalorder %s384, %s385
      %p396 = scmp.eq.s32.totalorder %s33, 0
      %p397 = por %p395, %p396
      %p398 = scmp.ne.s32.totalorder %s384, %s385
      %p399 = scmp.eq.s32.totalorder %s34, 1
      %p400 = por %p398, %p399
      %p402 = scmp.ne.s32.totalorder %s385, %s401
      %p403 = scmp.eq.s32.totalorder %s34, 0
      %p404 = por %p402, %p403
      %p405 = scmp.le.s32.totalorder 1, %s28
      %p406 = scmp.lt.s32.totalorder %s28, 3
      %p407 = pnand %p405, %p406
      %p408 = pneg %p407
      // Predicated region
      $region9: #{petr_transformer_decoder.10} parent=5 // pred_check
        _
      $region10: #{petr_transformer_decoder.10} parent=5 // pred_check_branch
        %410 = sbr.rel (%p407) target = $region12
      $region11: #{petr_transformer_decoder.10} parent=5 // pred_region
        %s411 = ssub.s32 %s28, 1
        // Predicated region
        $region13: #{petr_transformer_decoder.10} parent=11 // pred_check
          %p412 = pneg %p180
        $region14: #{petr_transformer_decoder.10} parent=11 // pred_check_branch
          %414 = sbr.rel (%p412) target = $region16
        $region15: #{petr_transformer_decoder.10} parent=11 // pred_region
          %416 = vsyncadd [#allocation9], 0
          %s417 = sshll.u32 %s4, 4
          %s418 = int_to_ptr.hbm [resolvable:$true] %s417
          %s419 = sshll.u32 [#allocation8], 4
          %s420 = int_to_ptr.vmem [resolvable:$true] %s419
          %425 = dma.hbm_to_vmem [thread:$0]  %s418, 256, %s420, [#allocation9], 64, 64, 4
        $region16: #{petr_transformer_decoder.10} parent=11 // pred_fallthru
          _
        // Predicated region
        $region17: #{petr_transformer_decoder.10} parent=11 // pred_check
          %p426 = pneg %p201
        $region18: #{petr_transformer_decoder.10} parent=11 // pred_check_branch
          %428 = sbr.rel (%p426) target = $region20
        $region19: #{petr_transformer_decoder.10} parent=11 // pred_region
          _
        $region20: #{petr_transformer_decoder.10} parent=11 // pred_fallthru
          _
        // Predicated region
        $region21: #{petr_transformer_decoder.10} parent=11 // pred_check
          %p429 = pneg %p222
        $region22: #{petr_transformer_decoder.10} parent=11 // pred_check_branch
          %431 = sbr.rel (%p429) target = $region24
        $region23: #{petr_transformer_decoder.10} parent=11 // pred_region
          %433 = vsyncadd [#allocation9], 0
          %s434 = sshll.u32 %s6, 4
          %s435 = int_to_ptr.hbm [resolvable:$true] %s434
          %s436 = sshll.u32 [#allocation10], 4
          %s437 = int_to_ptr.vmem [resolvable:$true] %s436
          %442 = dma.hbm_to_vmem [thread:$0]  %s435, 256, %s437, [#allocation9], 64, 64, 4
        $region24: #{petr_transformer_decoder.10} parent=11 // pred_fallthru
          _
        // Predicated region
        $region25: #{petr_transformer_decoder.10} parent=11 // pred_check
          %p443 = pneg %p243
        $region26: #{petr_transformer_decoder.10} parent=11 // pred_check_branch
          %445 = sbr.rel (%p443) target = $region28
        $region27: #{petr_transformer_decoder.10} parent=11 // pred_region
          %447 = vsyncadd [#allocation12], 0
          %s449 = sshll.u32 %s7, 4
          %s450 = int_to_ptr.hbm [resolvable:$true] %s449
          %s451 = sshll.u32 [#allocation11], 4
          %s452 = int_to_ptr.vmem [resolvable:$true] %s451
          %454 = dma.hbm_to_vmem [thread:$0]  %s450, 16, %s452, [#allocation12]
        $region28: #{petr_transformer_decoder.10} parent=11 // pred_fallthru
          _
        // Predicated region
        $region29: #{petr_transformer_decoder.10} parent=11 // pred_check
          %p455 = pneg %p264
        $region30: #{petr_transformer_decoder.10} parent=11 // pred_check_branch
          %457 = sbr.rel (%p455) target = $region32
        $region31: #{petr_transformer_decoder.10} parent=11 // pred_region
          %459 = vsyncadd [#allocation12], 0
          %s460 = sshll.u32 %s8, 4
          %s461 = int_to_ptr.hbm [resolvable:$true] %s460
          %s462 = sshll.u32 [#allocation13], 4
          %s463 = int_to_ptr.vmem [resolvable:$true] %s462
          %468 = dma.hbm_to_vmem [thread:$0]  %s461, 256, %s463, [#allocation12], 64, 64, 4
        $region32: #{petr_transformer_decoder.10} parent=11 // pred_fallthru
          _
        // Predicated region
        $region33: #{petr_transformer_decoder.10} parent=11 // pred_check
          %p469 = pneg %p285
        $region34: #{petr_transformer_decoder.10} parent=11 // pred_check_branch
          %471 = sbr.rel (%p469) target = $region36
        $region35: #{petr_transformer_decoder.10} parent=11 // pred_region
          %473 = vsyncadd [#allocation15], 0
          %s475 = sshll.u32 %s9, 4
          %s476 = int_to_ptr.hbm [resolvable:$true] %s475
          %s477 = sshll.u32 [#allocation14], 4
          %s478 = int_to_ptr.vmem [resolvable:$true] %s477
          %480 = dma.hbm_to_vmem [thread:$0]  %s476, 16, %s478, [#allocation15]
        $region36: #{petr_transformer_decoder.10} parent=11 // pred_fallthru
          _
        // Predicated region
        $region37: #{petr_transformer_decoder.10} parent=11 // pred_check
          %p481 = pneg %p306
        $region38: #{petr_transformer_decoder.10} parent=11 // pred_check_branch
          %483 = sbr.rel (%p481) target = $region40
        $region39: #{petr_transformer_decoder.10} parent=11 // pred_region
          %485 = vsyncadd [#allocation15], 0
          %s486 = sshll.u32 %s10, 4
          %s487 = int_to_ptr.hbm [resolvable:$true] %s486
          %s488 = sshll.u32 [#allocation16], 4
          %s489 = int_to_ptr.vmem [resolvable:$true] %s488
          %494 = dma.hbm_to_vmem [thread:$0]  %s487, 256, %s489, [#allocation15], 64, 64, 4
        $region40: #{petr_transformer_decoder.10} parent=11 // pred_fallthru
          _
        // Predicated region
        $region41: #{petr_transformer_decoder.10} parent=11 // pred_check
          %p495 = pneg %p327
        $region42: #{petr_transformer_decoder.10} parent=11 // pred_check_branch
          %497 = sbr.rel (%p495) target = $region44
        $region43: #{petr_transformer_decoder.10} parent=11 // pred_region
          %499 = vsyncadd [#allocation18], 0
          %s501 = sshll.u32 %s11, 4
          %s502 = int_to_ptr.hbm [resolvable:$true] %s501
          %s503 = sshll.u32 [#allocation17], 4
          %s504 = int_to_ptr.vmem [resolvable:$true] %s503
          %506 = dma.hbm_to_vmem [thread:$0]  %s502, 16, %s504, [#allocation18]
        $region44: #{petr_transformer_decoder.10} parent=11 // pred_fallthru
          _
        // Predicated region
        $region45: #{petr_transformer_decoder.10} parent=11 // pred_check
          %p507 = pneg %p348
        $region46: #{petr_transformer_decoder.10} parent=11 // pred_check_branch
          %509 = sbr.rel (%p507) target = $region48
        $region47: #{petr_transformer_decoder.10} parent=11 // pred_region
          %511 = vsyncadd [#allocation18], 0
          %s513 = sshll.u32 %s12, 4
          %s514 = int_to_ptr.hbm [resolvable:$true] %s513
          %s515 = sshll.u32 [#allocation19], 4
          %s516 = int_to_ptr.vmem [resolvable:$true] %s515
          %518 = dma.hbm_to_vmem [thread:$0]  %s514, 16, %s516, [#allocation18]
        $region48: #{petr_transformer_decoder.10} parent=11 // pred_fallthru
          _
        // Predicated region
        $region49: #{petr_transformer_decoder.10} parent=11 // pred_check
          %p519 = pneg %p369
        $region50: #{petr_transformer_decoder.10} parent=11 // pred_check_branch
          %521 = sbr.rel (%p519) target = $region52
        $region51: #{petr_transformer_decoder.10} parent=11 // pred_region
          %523 = vsyncadd [#allocation21], 0
          %s525 = sshll.u32 %s13, 4
          %s526 = int_to_ptr.hbm [resolvable:$true] %s525
          %s527 = sshll.u32 [#allocation20], 4
          %s528 = int_to_ptr.vmem [resolvable:$true] %s527
          %530 = dma.hbm_to_vmem [thread:$0]  %s526, 16, %s528, [#allocation21]
        $region52: #{petr_transformer_decoder.10} parent=11 // pred_fallthru
          _
      $region12: #{petr_transformer_decoder.10} parent=5 // pred_fallthru
        _
      %p531 = scmp.lt.s32.totalorder %s28, 2
      // Predicated region
      $region53: #{petr_transformer_decoder.10} parent=5 // pred_check
        %p532 = pneg %p531
      $region54: #{petr_transformer_decoder.10} parent=5 // pred_check_branch
        %534 = sbr.rel (%p532) target = $region56
      $region55: #{petr_transformer_decoder.10} parent=5 // pred_region
        // Predicated region
        $region57: #{petr_transformer_decoder.10} parent=55 // pred_check
          %p535 = pneg %p69
        $region58: #{petr_transformer_decoder.10} parent=55 // pred_check_branch
          %537 = sbr.rel (%p535) target = $region60
        $region59: #{petr_transformer_decoder.10} parent=55 // pred_region
          %p538 = scmp.lt.s32.totalorder %s35, 1
          %s539 = scalar_select %p538, %s35, 1
          %p540 = scmp.lt.s32.totalorder %s36, 0
          %s541 = scalar_select %p540, %s36, 0
          %s542 = sadd.s32 %s541, %s539
          %s543 = smul.addr %s542, 8
          %s544 = scalar_lea.vmem %s0, %s543
        $region60: #{petr_transformer_decoder.10} parent=55 // pred_fallthru
          _
        // Predicated region
        $region61: #{petr_transformer_decoder.10} parent=55 // pred_check
          %p545 = pneg %p97
        $region62: #{petr_transformer_decoder.10} parent=55 // pred_check_branch
          %547 = sbr.rel (%p545) target = $region64
        $region63: #{petr_transformer_decoder.10} parent=55 // pred_region
          %s548 = sand.u32 %s87, 1
          %s549 = scalar_lea.sflag [#allocation7], %s548
          %s550 = sand.u32 %s87, 1
          %s551 = smul.addr %s550, 8
          %s552 = scalar_lea.vmem [#allocation6], %s551
          %554 = vsyncadd %s549, 0
          %s555 = sadd.s32 %s36, %s35
          %s556 = smul.addr %s555, 8
          %s557 = scalar_lea.hbm %s1, %s556
          %s559 = sshll.u32 %s557, 4
          %s560 = int_to_ptr.hbm [resolvable:$true] %s559
          %s561 = sshll.u32 %s552, 4
          %s562 = int_to_ptr.vmem [resolvable:$true] %s561
          %564 = dma.hbm_to_vmem [thread:$0]  %s560, 128, %s562, %s549
        $region64: #{petr_transformer_decoder.10} parent=55 // pred_fallthru
          _
        // Predicated region
        $region65: #{petr_transformer_decoder.10} parent=55 // pred_check
          %p565 = pneg %p125
        $region66: #{petr_transformer_decoder.10} parent=55 // pred_check_branch
          %567 = sbr.rel (%p565) target = $region68
        $region67: #{petr_transformer_decoder.10} parent=55 // pred_region
          %s568 = smul.u32 2, %s37
          %p569 = scmp.lt.s32.totalorder %s35, 1
          %s570 = scalar_select %p569, %s35, 1
          %p571 = scmp.lt.s32.totalorder %s568, 1
          %s572 = scalar_select %p571, %s568, 1
          %s573 = smul.addr %s570, 2
          %s574 = sadd.s32 %s572, %s573
          %s575 = smul.addr %s574, 8
          %s576 = scalar_lea.vmem %s2, %s575
          %s577 = smul.u32 2, %s37
        $region68: #{petr_transformer_decoder.10} parent=55 // pred_fallthru
          _
        // Predicated region
        $region69: #{petr_transformer_decoder.10} parent=55 // pred_check
          %p578 = pneg %p153
        $region70: #{petr_transformer_decoder.10} parent=55 // pred_check_branch
          %580 = sbr.rel (%p578) target = $region72
        $region71: #{petr_transformer_decoder.10} parent=55 // pred_region
          %s581 = smul.u32 2, %s37
          %p582 = scmp.lt.s32.totalorder %s35, 1
          %s583 = scalar_select %p582, %s35, 1
          %p584 = scmp.lt.s32.totalorder %s581, 1
          %s585 = scalar_select %p584, %s581, 1
          %s586 = smul.addr %s583, 2
          %s587 = sadd.s32 %s585, %s586
          %s588 = smul.addr %s587, 8
          %s589 = scalar_lea.vmem %s3, %s588
          %s590 = smul.u32 2, %s37
        $region72: #{petr_transformer_decoder.10} parent=55 // pred_fallthru
          _
      $region56: #{petr_transformer_decoder.10} parent=5 // pred_fallthru
        _
      %p591 = scmp.le.s32.totalorder 1, %s28
      %p592 = scmp.lt.s32.totalorder %s28, 3
      %p593 = pnand %p591, %p592
      %p594 = pneg %p593
      // Predicated region
      $region73: #{petr_transformer_decoder.10} parent=5 // pred_check
        _
      $region74: #{petr_transformer_decoder.10} parent=5 // pred_check_branch
        %596 = sbr.rel (%p593) target = $region76
      $region75: #{petr_transformer_decoder.10} parent=5 // pred_region
        %s597 = ssub.s32 %s28, 1
        %s598 = sand.u32 %s90, 1
        %s599 = scalar_lea.sflag [#allocation7], %s598
        %s600 = sand.u32 %s90, 1
        %s601 = smul.addr %s600, 8
        %s602 = scalar_lea.vmem [#allocation6], %s601
        // Predicated region
        $region77: #{petr_transformer_decoder.10} parent=75 // pred_check
          %p603 = pneg %p103
        $region78: #{petr_transformer_decoder.10} parent=75 // pred_check_branch
          %605 = sbr.rel (%p603) target = $region80
        $region79: #{petr_transformer_decoder.10} parent=75 // pred_region
          %607 = dma.done %s599, 128
        $region80: #{petr_transformer_decoder.10} parent=75 // pred_fallthru
          _
        // Predicated region
        $region81: #{petr_transformer_decoder.10} parent=75 // pred_check
          %p608 = pneg %p180
        $region82: #{petr_transformer_decoder.10} parent=75 // pred_check_branch
          %610 = sbr.rel (%p608) target = $region84
        $region83: #{petr_transformer_decoder.10} parent=75 // pred_region
          %612 = dma.done [#allocation9], 256
        $region84: #{petr_transformer_decoder.10} parent=75 // pred_fallthru
          _
        // Predicated region
        $region85: #{petr_transformer_decoder.10} parent=75 // pred_check
          %p613 = pneg %p222
        $region86: #{petr_transformer_decoder.10} parent=75 // pred_check_branch
          %615 = sbr.rel (%p613) target = $region88
        $region87: #{petr_transformer_decoder.10} parent=75 // pred_region
          %617 = dma.done [#allocation9], 256
        $region88: #{petr_transformer_decoder.10} parent=75 // pred_fallthru
          _
        // Predicated region
        $region89: #{petr_transformer_decoder.10} parent=75 // pred_check
          %p618 = pneg %p243
        $region90: #{petr_transformer_decoder.10} parent=75 // pred_check_branch
          %620 = sbr.rel (%p618) target = $region92
        $region91: #{petr_transformer_decoder.10} parent=75 // pred_region
          %622 = dma.done [#allocation12], 16
        $region92: #{petr_transformer_decoder.10} parent=75 // pred_fallthru
          _
        // Predicated region
        $region93: #{petr_transformer_decoder.10} parent=75 // pred_check
          %p623 = pneg %p264
        $region94: #{petr_transformer_decoder.10} parent=75 // pred_check_branch
          %625 = sbr.rel (%p623) target = $region96
        $region95: #{petr_transformer_decoder.10} parent=75 // pred_region
          %627 = dma.done [#allocation12], 256
        $region96: #{petr_transformer_decoder.10} parent=75 // pred_fallthru
          _
        // Predicated region
        $region97: #{petr_transformer_decoder.10} parent=75 // pred_check
          %p628 = pneg %p285
        $region98: #{petr_transformer_decoder.10} parent=75 // pred_check_branch
          %630 = sbr.rel (%p628) target = $region100
        $region99: #{petr_transformer_decoder.10} parent=75 // pred_region
          %632 = dma.done [#allocation15], 16
        $region100: #{petr_transformer_decoder.10} parent=75 // pred_fallthru
          _
        // Predicated region
        $region101: #{petr_transformer_decoder.10} parent=75 // pred_check
          %p633 = pneg %p306
        $region102: #{petr_transformer_decoder.10} parent=75 // pred_check_branch
          %635 = sbr.rel (%p633) target = $region104
        $region103: #{petr_transformer_decoder.10} parent=75 // pred_region
          %637 = dma.done [#allocation15], 256
        $region104: #{petr_transformer_decoder.10} parent=75 // pred_fallthru
          _
        // Predicated region
        $region105: #{petr_transformer_decoder.10} parent=75 // pred_check
          %p638 = pneg %p327
        $region106: #{petr_transformer_decoder.10} parent=75 // pred_check_branch
          %640 = sbr.rel (%p638) target = $region108
        $region107: #{petr_transformer_decoder.10} parent=75 // pred_region
          %642 = dma.done [#allocation18], 16
        $region108: #{petr_transformer_decoder.10} parent=75 // pred_fallthru
          _
        // Predicated region
        $region109: #{petr_transformer_decoder.10} parent=75 // pred_check
          %p643 = pneg %p348
        $region110: #{petr_transformer_decoder.10} parent=75 // pred_check_branch
          %645 = sbr.rel (%p643) target = $region112
        $region111: #{petr_transformer_decoder.10} parent=75 // pred_region
          %647 = dma.done [#allocation18], 16
        $region112: #{petr_transformer_decoder.10} parent=75 // pred_fallthru
          _
        // Predicated region
        $region113: #{petr_transformer_decoder.10} parent=75 // pred_check
          %p648 = pneg %p369
        $region114: #{petr_transformer_decoder.10} parent=75 // pred_check_branch
          %650 = sbr.rel (%p648) target = $region116
        $region115: #{petr_transformer_decoder.10} parent=75 // pred_region
          %652 = dma.done [#allocation21], 16
        $region116: #{petr_transformer_decoder.10} parent=75 // pred_fallthru
          _
        %p653 = scmp.lt.s32.totalorder %s38, 1
        %s654 = scalar_select %p653, %s38, 1
        %p655 = scmp.lt.s32.totalorder %s39, 0
        %s656 = scalar_select %p655, %s39, 0
        %s657 = sadd.s32 %s656, %s654
        %s658 = smul.addr %s657, 8
        %s659 = scalar_lea.vmem %s0, %s658
        %p660 = pneg %p75
        %p661 = pneg %p72
        %s662 = sand.u32 %s90, 1
        %s663 = scalar_lea.sflag [#allocation7], %s662
        %s664 = sand.u32 %s90, 1
        %s665 = smul.addr %s664, 8
        %s666 = scalar_lea.vmem [#allocation6], %s665
        %p667 = pneg %p103
        %p668 = pneg %p100
        %s669 = smul.u32 2, %s40
        %p670 = scmp.lt.s32.totalorder %s38, 1
        %s671 = scalar_select %p670, %s38, 1
        %p672 = scmp.lt.s32.totalorder %s669, 1
        %s673 = scalar_select %p672, %s669, 1
        %s674 = smul.addr %s671, 2
        %s675 = sadd.s32 %s673, %s674
        %s676 = smul.addr %s675, 8
        %s677 = scalar_lea.vmem %s2, %s676
        %p678 = pneg %p131
        %p679 = pneg %p128
        %s680 = smul.u32 2, %s40
        %p681 = scmp.lt.s32.totalorder %s38, 1
        %s682 = scalar_select %p681, %s38, 1
        %p683 = scmp.lt.s32.totalorder %s680, 1
        %s684 = scalar_select %p683, %s680, 1
        %s685 = smul.addr %s682, 2
        %s686 = sadd.s32 %s684, %s685
        %s687 = smul.addr %s686, 8
        %s688 = scalar_lea.vmem %s3, %s687
        %p689 = pneg %p159
        %p690 = pneg %p156
        %p691 = pneg %p180
        %p692 = pneg %p177
        %p693 = pneg %p201
        %p694 = pneg %p198
        %p695 = pneg %p222
        %p696 = pneg %p219
        %p697 = pneg %p243
        %p698 = pneg %p240
        %p699 = pneg %p264
        %p700 = pneg %p261
        %p701 = pneg %p285
        %p702 = pneg %p282
        %p703 = pneg %p306
        %p704 = pneg %p303
        %p705 = pneg %p327
        %p706 = pneg %p324
        %p707 = pneg %p348
        %p708 = pneg %p345
        %p709 = pneg %p369
        %p710 = pneg %p366
        %p711 = pneg %p397
        %p712 = pneg %p394
        %p713 = scmp.lt.s32.totalorder %s38, 1
        %s714 = scalar_select %p713, %s38, 1
        %p715 = scmp.lt.s32.totalorder %s39, 0
        %s716 = scalar_select %p715, %s39, 0
        %s717 = sadd.s32 %s716, %s714
        %s718 = smul.addr %s717, 8
        %s719 = scalar_lea.vmem %s14, %s718
        %p720 = scmp.lt.s32.totalorder %s38, 1
        %s721 = scalar_select %p720, %s38, 1
        %p722 = scmp.lt.s32.totalorder %s39, 0
        %s723 = scalar_select %p722, %s39, 0
        %s724 = sadd.s32 %s723, %s721
        %s725 = smul.addr %s724, 8
        %s726 = scalar_lea.vmem %s0, %s725
        %s727 = smul.u32 2, %s40
        %p728 = scmp.lt.s32.totalorder %s38, 1
        %s729 = scalar_select %p728, %s38, 1
        %p730 = scmp.lt.s32.totalorder %s727, 1
        %s731 = scalar_select %p730, %s727, 1
        %s732 = smul.addr %s729, 2
        %s733 = sadd.s32 %s731, %s732
        %s734 = smul.addr %s733, 8
        %s735 = scalar_lea.vmem %s2, %s734
        %s736 = smul.u32 2, %s40
        %s737 = smul.u32 2, %s40
        %p738 = scmp.lt.s32.totalorder %s38, 1
        %s739 = scalar_select %p738, %s38, 1
        %p740 = scmp.lt.s32.totalorder %s737, 1
        %s741 = scalar_select %p740, %s737, 1
        %s742 = smul.addr %s739, 2
        %s743 = sadd.s32 %s741, %s742
        %s744 = smul.addr %s743, 8
        %s745 = scalar_lea.vmem %s3, %s744
        %s746 = smul.u32 2, %s40
        %p747 = scmp.lt.s32.totalorder %s38, 1
        %s748 = scalar_select %p747, %s38, 1
        %p749 = scmp.lt.s32.totalorder %s39, 0
        %s750 = scalar_select %p749, %s39, 0
        %s751 = sadd.s32 %s750, %s748
        %s752 = smul.addr %s751, 8
        %s753 = scalar_lea.vmem %s14, %s752
        %p755 = scmp.eq.s32.totalorder %s40, 0
        // Predicated region
        $region117: #{petr_transformer_decoder.10} parent=75 // pred_check
          %p756 = pneg %p755
        $region118: #{petr_transformer_decoder.10} parent=75 // pred_check_branch
          %758 = sbr.rel (%p756) target = $region120
        $region119: #{petr_transformer_decoder.10} parent=75 // pred_region
          %v759 = vld [vmem:[%s726] sm:$0xff]
          %v760 = vld [vmem:[%s602] sm:$0xff]
          %v761 = vadd.f32 %v759, %v760
          %v762 = vpack.c.bf16 %v761, %v761
          %v763 = vld [vmem:[#allocation8] sm:$0xf]
          %v764 = vld [vmem:[#allocation8 + $0x4] sm:$0xf]
          %v765 = vld [vmem:[#allocation8 + $0x8] sm:$0xf]
          %v766 = vld [vmem:[#allocation8 + $0xc] sm:$0xf]
          %v767 = vld [vmem:[%s5] sm:$0x1]
          %v769 = vperm.slane %v767, 0
          %v775 = vunpack.c.l.b16 %v763
          %v776 = vunpack.c.l.b16 %v764
          %v777 = vunpack.c.l.b16 %v765
          %v778 = vunpack.c.l.b16 %v766
          %v779 = vpack.c.b16 %v776, %v775
          %v780 = vpack.c.b16 %v778, %v777
          %vm783 = vcmask 261120
          %v785 = vsel %vm783, %v762, 0
          %787 = vmatpush.bf16.msra.mxu0 0
          %788 = vmatpush.bf16.msra.mxu0 0
          %789 = vmatpush.bf16.msra.mxu0 0
          %790 = vmatpush.bf16.msra.mxu0 0
          %791 = vmatpush.bf16.msra.mxu0 0
          %792 = vmatpush.bf16.msra.mxu0 0
          %793 = vmatpush.bf16.msra.mxu0 %v780
          %794 = vmatpush.bf16.msra.mxu0 %v779
          %795 = vmatmul.bf16.gmra.mxu0 %v785
          %v796 = vpop.f32.mrf.mxu0
          %v797 = vadd.f32 %v769, %v796
          %v798 = vpop.f32.mrf.mxu0
          %799 = vdwg.mxu0
          %v800 = vmul.f32 %v797, 0.35355338
          %802 = vrot.lane.b32.xlu0 %v800, 120
          %v803 = vpop.permute.xlu0 %802
          %805 = vrot.lane.b32.xlu0 %v800, 112
          %v806 = vpop.permute.xlu0 %805
          %808 = vrot.lane.b32.xlu0 %v800, 104
          %v809 = vpop.permute.xlu0 %808
          %v811 = vrot.slane %v806, 4
          %vm812 = vcmask 1047556
          %v813 = vsel %vm812, %v811, %v800
          %v814 = vrot.slane %v800, 4
          %v815 = vsel %vm812, %v806, %v814
          %v817 = vunpack.c.l.s4 1983009808
          %v818 = vunpack.c.0.s8 %v817
          %v819 = vperm.slane %v813, %v818
          %v821 = vunpack.c.l.s4 1983009808
          %v822 = vunpack.c.0.s8 %v821
          %v823 = vperm.slane %v815, %v822
          %v824 = vrot.slane %v809, 4
          %v825 = vsel %vm812, %v824, %v803
          %v826 = vrot.slane %v803, 4
          %v827 = vsel %vm812, %v809, %v826
          %v829 = vunpack.c.l.s4 1983009808
          %v830 = vunpack.c.0.s8 %v829
          %v831 = vperm.slane %v825, %v830
          %v833 = vunpack.c.l.s4 1983009808
          %v834 = vunpack.c.0.s8 %v833
          %v835 = vperm.slane %v827, %v834
          %v836 = vrot.slane %v831, 4
          %v837 = vsel %vm812, %v836, %v819
          %v838 = vrot.slane %v819, 4
          %v839 = vsel %vm812, %v831, %v838
          %v841 = vunpack.c.l.s4 1934713408
          %v842 = vunpack.c.0.s8 %v841
          %v843 = vperm.slane %v837, %v842
          %v845 = vunpack.c.l.s4 1934713408
          %v846 = vunpack.c.0.s8 %v845
          %v847 = vperm.slane %v839, %v846
          %v848 = vrot.slane %v835, 4
          %v849 = vsel %vm812, %v848, %v823
          %v850 = vrot.slane %v823, 4
          %v851 = vsel %vm812, %v835, %v850
          %v853 = vunpack.c.l.s4 1934713408
          %v854 = vunpack.c.0.s8 %v853
          %v855 = vperm.slane %v849, %v854
          %v857 = vunpack.c.l.s4 1934713408
          %v858 = vunpack.c.0.s8 %v857
          %v859 = vperm.slane %v851, %v858
          %v860 = vrot.slane %v843, 4
          %v861 = vsel %vm812, 0.0, %v860
          %v862 = vrot.slane %v847, 4
          %v863 = vsel %vm812, 0.0, %v862
          %v864 = vrot.slane %v855, 4
          %v865 = vsel %vm812, 0.0, %v864
          %v866 = vrot.slane %v859, 4
          %v867 = vsel %vm812, 0.0, %v866
          %v868 = vsel %vm812, %v862, %v843
          %v870 = vunpack.c.l.s4 1983009808
          %v871 = vunpack.c.0.s8 %v870
          %v872 = vperm.slane %v868, %v871
          %v873 = vrot.slane %v863, 4
          %v874 = vsel %vm812, %v873, %v861
          %v876 = vunpack.c.l.s4 1983009808
          %v877 = vunpack.c.0.s8 %v876
          %v878 = vperm.slane %v874, %v877
          %v879 = vsel %vm812, %v866, %v855
          %v881 = vunpack.c.l.s4 1983009808
          %v882 = vunpack.c.0.s8 %v881
          %v883 = vperm.slane %v879, %v882
          %v884 = vrot.slane %v867, 4
          %v885 = vsel %vm812, %v884, %v865
          %v887 = vunpack.c.l.s4 1983009808
          %v888 = vunpack.c.0.s8 %v887
          %v889 = vperm.slane %v885, %v888
          %v890 = vrot.slane %v878, 4
          %v891 = vsel %vm812, %v890, %v872
          %v892 = vrot.slane %v872, 4
          %v893 = vsel %vm812, %v878, %v892
          %v895 = vunpack.c.l.s4 1934713408
          %v896 = vunpack.c.0.s8 %v895
          %v897 = vperm.slane %v891, %v896
          %v899 = vunpack.c.l.s4 1934713408
          %v900 = vunpack.c.0.s8 %v899
          %v901 = vperm.slane %v893, %v900
          %v902 = vrot.slane %v889, 4
          %v903 = vsel %vm812, %v902, %v883
          %v904 = vrot.slane %v883, 4
          %v905 = vsel %vm812, %v889, %v904
          %v907 = vunpack.c.l.s4 1934713408
          %v908 = vunpack.c.0.s8 %v907
          %v909 = vperm.slane %v903, %v908
          %v911 = vunpack.c.l.s4 1934713408
          %v912 = vunpack.c.0.s8 %v911
          %v913 = vperm.slane %v905, %v912
          %v914 = vrot.slane %v909, 4
          %v915 = vsel %vm812, %v914, %v897
          %v916 = vrot.slane %v897, 4
          %v917 = vsel %vm812, %v909, %v916
          %v918 = vrot.slane %v913, 4
          %v919 = vsel %vm812, %v918, %v901
          %v920 = vrot.slane %v901, 4
          %v921 = vsel %vm812, %v913, %v920
          %v922 = vpack.c.bf16 %v915, %v915
          %v923 = vpack.c.bf16 %v917, %v917
          %v924 = vpack.c.bf16 %v919, %v919
          %v925 = vpack.c.bf16 %v921, %v921
          %vm926 = vcmask 60416
          %927 = vst.msk [vmem:[#allocation2] sm:$0xf] %vm926, %v922
          %928 = vst.msk [vmem:[#allocation2 + $0x4] sm:$0xf] %vm926, %v923
          %929 = vst.msk [vmem:[#allocation2 + $0x8] sm:$0xf] %vm926, %v924
          %930 = vst.msk [vmem:[#allocation2 + $0xc] sm:$0xf] %vm926, %v925
          %vm931 = vcmask 7168
          %932 = vst.msk [vmem:[#allocation3] sm:$0xff] %vm931, -inf
          %933 = vst.msk [vmem:[#allocation3 + $0x8] sm:$0xff] %vm931, -inf
          %934 = vst.msk [vmem:[#allocation3 + $0x10] sm:$0xff] %vm931, -inf
          %935 = vst.msk [vmem:[#allocation3 + $0x18] sm:$0xff] %vm931, -inf
          %936 = vst.msk [vmem:[#allocation4] sm:$0xff] %vm931, 0.0
          %937 = vst.msk [vmem:[#allocation4 + $0x8] sm:$0xff] %vm931, 0.0
          %938 = vst.msk [vmem:[#allocation4 + $0x10] sm:$0xff] %vm931, 0.0
          %939 = vst.msk [vmem:[#allocation4 + $0x18] sm:$0xff] %vm931, 0.0
          %vm940 = vcmask 64512
          %941 = vst.msk [vmem:[#allocation5] sm:$0xff] %vm940, 0.0
          %942 = vst.msk [vmem:[#allocation5 + $0x8] sm:$0xff] %vm940, 0.0
          %943 = vst.msk [vmem:[#allocation5 + $0x10] sm:$0xff] %vm940, 0.0
          %944 = vst.msk [vmem:[#allocation5 + $0x18] sm:$0xff] %vm940, 0.0
        $region120: #{petr_transformer_decoder.10} parent=75 // pred_fallthru
          _
        %v945 = vld [vmem:[%s735] sm:$0xff]
        %v946 = vld [vmem:[%s735 + $0x8] sm:$0xff]
        %v947 = vld [vmem:[%s745] sm:$0xff]
        %v948 = vld [vmem:[%s745 + $0x8] sm:$0xff]
        %v949 = vadd.f32 %v945, %v947
        %v950 = vadd.f32 %v946, %v948
        %v951 = vpack.c.bf16 %v950, %v949
        %v952 = vld [vmem:[#allocation10] sm:$0xf]
        %v953 = vld [vmem:[#allocation10 + $0x4] sm:$0xf]
        %v954 = vld [vmem:[#allocation10 + $0x8] sm:$0xf]
        %v955 = vld [vmem:[#allocation10 + $0xc] sm:$0xf]
        %v956 = vld [vmem:[#allocation11] sm:$0x1]
        %v958 = vperm.slane %v956, 0
        %v964 = vunpack.c.l.b16 %v952
        %v965 = vunpack.c.l.b16 %v953
        %v966 = vunpack.c.l.b16 %v954
        %v967 = vunpack.c.l.b16 %v955
        %v968 = vpack.c.b16 %v965, %v964
        %v969 = vpack.c.b16 %v967, %v966
        %vm972 = vcmask 261120
        %v974 = vsel %vm972, %v951, 0
        %976 = vmatpush.bf16.msra.mxu0 0
        %977 = vmatpush.bf16.msra.mxu0 0
        %978 = vmatpush.bf16.msra.mxu0 0
        %979 = vmatpush.bf16.msra.mxu0 0
        %980 = vmatpush.bf16.msra.mxu0 0
        %981 = vmatpush.bf16.msra.mxu0 0
        %982 = vmatpush.bf16.msra.mxu0 %v969
        %983 = vmatpush.bf16.msra.mxu0 %v968
        %984 = vmatmul.bf16.gmra.mxu0 %v974
        %v985 = vpop.f32.mrf.mxu0
        %v986 = vadd.f32 %v958, %v985
        %v987 = vpop.f32.mrf.mxu0
        %v988 = vadd.f32 %v958, %v987
        %989 = vdwg.mxu0
        %v990 = vpack.c.bf16 %v946, %v945
        %v991 = vld [vmem:[#allocation13] sm:$0xf]
        %v992 = vld [vmem:[#allocation13 + $0x4] sm:$0xf]
        %v993 = vld [vmem:[#allocation13 + $0x8] sm:$0xf]
        %v994 = vld [vmem:[#allocation13 + $0xc] sm:$0xf]
        %v995 = vld [vmem:[#allocation14] sm:$0x1]
        %v997 = vperm.slane %v995, 0
        %v1003 = vunpack.c.l.b16 %v991
        %v1004 = vunpack.c.l.b16 %v992
        %v1005 = vunpack.c.l.b16 %v993
        %v1006 = vunpack.c.l.b16 %v994
        %v1007 = vpack.c.b16 %v1004, %v1003
        %v1008 = vpack.c.b16 %v1006, %v1005
        %v1012 = vsel %vm972, %v990, 0
        %1014 = vmatpush.bf16.msra.mxu0 0
        %1015 = vmatpush.bf16.msra.mxu0 0
        %1016 = vmatpush.bf16.msra.mxu0 0
        %1017 = vmatpush.bf16.msra.mxu0 0
        %1018 = vmatpush.bf16.msra.mxu0 0
        %1019 = vmatpush.bf16.msra.mxu0 0
        %1020 = vmatpush.bf16.msra.mxu0 %v1008
        %1021 = vmatpush.bf16.msra.mxu0 %v1007
        %1022 = vmatmul.bf16.gmra.mxu0 %v1012
        %v1023 = vpop.f32.mrf.mxu0
        %v1024 = vadd.f32 %v997, %v1023
        %v1025 = vpop.f32.mrf.mxu0
        %v1026 = vadd.f32 %v997, %v1025
        %1027 = vdwg.mxu0
        %1030 = vrot.lane.b32.xlu0 %v986, 120
        %v1031 = vpop.permute.xlu0 %1030
        %1032 = vrot.lane.b32.xlu0 %v988, 120
        %v1033 = vpop.permute.xlu0 %1032
        %1036 = vrot.lane.b32.xlu0 %v986, 112
        %v1037 = vpop.permute.xlu0 %1036
        %1038 = vrot.lane.b32.xlu0 %v988, 112
        %v1039 = vpop.permute.xlu0 %1038
        %1042 = vrot.lane.b32.xlu0 %v986, 104
        %v1043 = vpop.permute.xlu0 %1042
        %1044 = vrot.lane.b32.xlu0 %v988, 104
        %v1045 = vpop.permute.xlu0 %1044
        %v1048 = vrot.slane %v1037, 4
        %vm1049 = vcmask 1047556
        %v1050 = vsel %vm1049, %v1048, %v986
        %v1051 = vrot.slane %v986, 4
        %v1052 = vsel %vm1049, %v1037, %v1051
        %v1054 = vunpack.c.l.s4 1983009808
        %v1055 = vunpack.c.0.s8 %v1054
        %v1056 = vperm.slane %v1050, %v1055
        %v1058 = vunpack.c.l.s4 1983009808
        %v1059 = vunpack.c.0.s8 %v1058
        %v1060 = vperm.slane %v1052, %v1059
        %v1061 = vrot.slane %v1043, 4
        %v1062 = vsel %vm1049, %v1061, %v1031
        %v1063 = vrot.slane %v1031, 4
        %v1064 = vsel %vm1049, %v1043, %v1063
        %v1066 = vunpack.c.l.s4 1983009808
        %v1067 = vunpack.c.0.s8 %v1066
        %v1068 = vperm.slane %v1062, %v1067
        %v1070 = vunpack.c.l.s4 1983009808
        %v1071 = vunpack.c.0.s8 %v1070
        %v1072 = vperm.slane %v1064, %v1071
        %v1073 = vrot.slane %v1068, 4
        %v1074 = vsel %vm1049, %v1073, %v1056
        %v1075 = vrot.slane %v1056, 4
        %v1076 = vsel %vm1049, %v1068, %v1075
        %v1078 = vunpack.c.l.s4 1934713408
        %v1079 = vunpack.c.0.s8 %v1078
        %v1080 = vperm.slane %v1074, %v1079
        %v1082 = vunpack.c.l.s4 1934713408
        %v1083 = vunpack.c.0.s8 %v1082
        %v1084 = vperm.slane %v1076, %v1083
        %v1085 = vrot.slane %v1072, 4
        %v1086 = vsel %vm1049, %v1085, %v1060
        %v1087 = vrot.slane %v1060, 4
        %v1088 = vsel %vm1049, %v1072, %v1087
        %v1090 = vunpack.c.l.s4 1934713408
        %v1091 = vunpack.c.0.s8 %v1090
        %v1092 = vperm.slane %v1086, %v1091
        %v1094 = vunpack.c.l.s4 1934713408
        %v1095 = vunpack.c.0.s8 %v1094
        %v1096 = vperm.slane %v1088, %v1095
        %v1097 = vrot.slane %v1080, 4
        %v1098 = vsel %vm1049, 0.0, %v1097
        %v1099 = vrot.slane %v1084, 4
        %v1100 = vsel %vm1049, 0.0, %v1099
        %v1101 = vrot.slane %v1092, 4
        %v1102 = vsel %vm1049, 0.0, %v1101
        %v1103 = vrot.slane %v1096, 4
        %v1104 = vsel %vm1049, 0.0, %v1103
        %v1105 = vrot.slane %v1039, 4
        %v1106 = vsel %vm1049, %v1105, %v988
        %v1107 = vrot.slane %v988, 4
        %v1108 = vsel %vm1049, %v1039, %v1107
        %v1110 = vunpack.c.l.s4 1983009808
        %v1111 = vunpack.c.0.s8 %v1110
        %v1112 = vperm.slane %v1106, %v1111
        %v1114 = vunpack.c.l.s4 1983009808
        %v1115 = vunpack.c.0.s8 %v1114
        %v1116 = vperm.slane %v1108, %v1115
        %v1117 = vrot.slane %v1045, 4
        %v1118 = vsel %vm1049, %v1117, %v1033
        %v1119 = vrot.slane %v1033, 4
        %v1120 = vsel %vm1049, %v1045, %v1119
        %v1122 = vunpack.c.l.s4 1983009808
        %v1123 = vunpack.c.0.s8 %v1122
        %v1124 = vperm.slane %v1118, %v1123
        %v1126 = vunpack.c.l.s4 1983009808
        %v1127 = vunpack.c.0.s8 %v1126
        %v1128 = vperm.slane %v1120, %v1127
        %v1129 = vrot.slane %v1124, 4
        %v1130 = vsel %vm1049, %v1129, %v1112
        %v1131 = vrot.slane %v1112, 4
        %v1132 = vsel %vm1049, %v1124, %v1131
        %v1134 = vunpack.c.l.s4 1934713408
        %v1135 = vunpack.c.0.s8 %v1134
        %v1136 = vperm.slane %v1130, %v1135
        %v1138 = vunpack.c.l.s4 1934713408
        %v1139 = vunpack.c.0.s8 %v1138
        %v1140 = vperm.slane %v1132, %v1139
        %v1141 = vrot.slane %v1128, 4
        %v1142 = vsel %vm1049, %v1141, %v1116
        %v1143 = vrot.slane %v1116, 4
        %v1144 = vsel %vm1049, %v1128, %v1143
        %v1146 = vunpack.c.l.s4 1934713408
        %v1147 = vunpack.c.0.s8 %v1146
        %v1148 = vperm.slane %v1142, %v1147
        %v1150 = vunpack.c.l.s4 1934713408
        %v1151 = vunpack.c.0.s8 %v1150
        %v1152 = vperm.slane %v1144, %v1151
        %v1153 = vrot.slane %v1136, 4
        %v1154 = vsel %vm1049, 0.0, %v1153
        %v1155 = vrot.slane %v1140, 4
        %v1156 = vsel %vm1049, 0.0, %v1155
        %v1157 = vrot.slane %v1148, 4
        %v1158 = vsel %vm1049, 0.0, %v1157
        %v1159 = vrot.slane %v1152, 4
        %v1160 = vsel %vm1049, 0.0, %v1159
        %v1161 = vsel %vm1049, %v1099, %v1080
        %v1163 = vunpack.c.l.s4 1983009808
        %v1164 = vunpack.c.0.s8 %v1163
        %v1165 = vperm.slane %v1161, %v1164
        %v1166 = vrot.slane %v1100, 4
        %v1167 = vsel %vm1049, %v1166, %v1098
        %v1169 = vunpack.c.l.s4 1983009808
        %v1170 = vunpack.c.0.s8 %v1169
        %v1171 = vperm.slane %v1167, %v1170
        %v1172 = vsel %vm1049, %v1103, %v1092
        %v1174 = vunpack.c.l.s4 1983009808
        %v1175 = vunpack.c.0.s8 %v1174
        %v1176 = vperm.slane %v1172, %v1175
        %v1177 = vrot.slane %v1104, 4
        %v1178 = vsel %vm1049, %v1177, %v1102
        %v1180 = vunpack.c.l.s4 1983009808
        %v1181 = vunpack.c.0.s8 %v1180
        %v1182 = vperm.slane %v1178, %v1181
        %v1183 = vrot.slane %v1171, 4
        %v1184 = vsel %vm1049, %v1183, %v1165
        %v1185 = vrot.slane %v1165, 4
        %v1186 = vsel %vm1049, %v1171, %v1185
        %v1188 = vunpack.c.l.s4 1934713408
        %v1189 = vunpack.c.0.s8 %v1188
        %v1190 = vperm.slane %v1184, %v1189
        %v1192 = vunpack.c.l.s4 1934713408
        %v1193 = vunpack.c.0.s8 %v1192
        %v1194 = vperm.slane %v1186, %v1193
        %v1195 = vrot.slane %v1182, 4
        %v1196 = vsel %vm1049, %v1195, %v1176
        %v1197 = vrot.slane %v1176, 4
        %v1198 = vsel %vm1049, %v1182, %v1197
        %v1200 = vunpack.c.l.s4 1934713408
        %v1201 = vunpack.c.0.s8 %v1200
        %v1202 = vperm.slane %v1196, %v1201
        %v1204 = vunpack.c.l.s4 1934713408
        %v1205 = vunpack.c.0.s8 %v1204
        %v1206 = vperm.slane %v1198, %v1205
        %v1207 = vrot.slane %v1202, 4
        %v1208 = vsel %vm1049, %v1207, %v1190
        %v1209 = vrot.slane %v1190, 4
        %v1210 = vsel %vm1049, %v1202, %v1209
        %v1211 = vrot.slane %v1206, 4
        %v1212 = vsel %vm1049, %v1211, %v1194
        %v1213 = vrot.slane %v1194, 4
        %v1214 = vsel %vm1049, %v1206, %v1213
        %v1215 = vsel %vm1049, %v1155, %v1136
        %v1217 = vunpack.c.l.s4 1983009808
        %v1218 = vunpack.c.0.s8 %v1217
        %v1219 = vperm.slane %v1215, %v1218
        %v1220 = vrot.slane %v1156, 4
        %v1221 = vsel %vm1049, %v1220, %v1154
        %v1223 = vunpack.c.l.s4 1983009808
        %v1224 = vunpack.c.0.s8 %v1223
        %v1225 = vperm.slane %v1221, %v1224
        %v1226 = vsel %vm1049, %v1159, %v1148
        %v1228 = vunpack.c.l.s4 1983009808
        %v1229 = vunpack.c.0.s8 %v1228
        %v1230 = vperm.slane %v1226, %v1229
        %v1231 = vrot.slane %v1160, 4
        %v1232 = vsel %vm1049, %v1231, %v1158
        %v1234 = vunpack.c.l.s4 1983009808
        %v1235 = vunpack.c.0.s8 %v1234
        %v1236 = vperm.slane %v1232, %v1235
        %v1237 = vrot.slane %v1225, 4
        %v1238 = vsel %vm1049, %v1237, %v1219
        %v1239 = vrot.slane %v1219, 4
        %v1240 = vsel %vm1049, %v1225, %v1239
        %v1242 = vunpack.c.l.s4 1934713408
        %v1243 = vunpack.c.0.s8 %v1242
        %v1244 = vperm.slane %v1238, %v1243
        %v1246 = vunpack.c.l.s4 1934713408
        %v1247 = vunpack.c.0.s8 %v1246
        %v1248 = vperm.slane %v1240, %v1247
        %v1249 = vrot.slane %v1236, 4
        %v1250 = vsel %vm1049, %v1249, %v1230
        %v1251 = vrot.slane %v1230, 4
        %v1252 = vsel %vm1049, %v1236, %v1251
        %v1254 = vunpack.c.l.s4 1934713408
        %v1255 = vunpack.c.0.s8 %v1254
        %v1256 = vperm.slane %v1250, %v1255
        %v1258 = vunpack.c.l.s4 1934713408
        %v1259 = vunpack.c.0.s8 %v1258
        %v1260 = vperm.slane %v1252, %v1259
        %v1261 = vrot.slane %v1256, 4
        %v1262 = vsel %vm1049, %v1261, %v1244
        %v1263 = vrot.slane %v1244, 4
        %v1264 = vsel %vm1049, %v1256, %v1263
        %v1265 = vrot.slane %v1260, 4
        %v1266 = vsel %vm1049, %v1265, %v1248
        %v1267 = vrot.slane %v1248, 4
        %v1268 = vsel %vm1049, %v1260, %v1267
        %v1269 = vpack.c.bf16 %v1208, %v1208
        %v1270 = vpack.c.bf16 %v1262, %v1262
        %v1271 = vpack.c.bf16 %v1210, %v1210
        %v1272 = vpack.c.bf16 %v1264, %v1264
        %v1273 = vpack.c.bf16 %v1212, %v1212
        %v1274 = vpack.c.bf16 %v1266, %v1266
        %v1275 = vpack.c.bf16 %v1214, %v1214
        %v1276 = vpack.c.bf16 %v1268, %v1268
        %1279 = vrot.lane.b32.xlu0 %v1024, 120
        %v1280 = vpop.permute.xlu0 %1279
        %1281 = vrot.lane.b32.xlu0 %v1026, 120
        %v1282 = vpop.permute.xlu0 %1281
        %1285 = vrot.lane.b32.xlu0 %v1024, 112
        %v1286 = vpop.permute.xlu0 %1285
        %1287 = vrot.lane.b32.xlu0 %v1026, 112
        %v1288 = vpop.permute.xlu0 %1287
        %1291 = vrot.lane.b32.xlu0 %v1024, 104
        %v1292 = vpop.permute.xlu0 %1291
        %1293 = vrot.lane.b32.xlu0 %v1026, 104
        %v1294 = vpop.permute.xlu0 %1293
        %v1297 = vrot.slane %v1286, 4
        %v1298 = vsel %vm1049, %v1297, %v1024
        %v1299 = vrot.slane %v1024, 4
        %v1300 = vsel %vm1049, %v1286, %v1299
        %v1302 = vunpack.c.l.s4 1983009808
        %v1303 = vunpack.c.0.s8 %v1302
        %v1304 = vperm.slane %v1298, %v1303
        %v1306 = vunpack.c.l.s4 1983009808
        %v1307 = vunpack.c.0.s8 %v1306
        %v1308 = vperm.slane %v1300, %v1307
        %v1309 = vrot.slane %v1292, 4
        %v1310 = vsel %vm1049, %v1309, %v1280
        %v1311 = vrot.slane %v1280, 4
        %v1312 = vsel %vm1049, %v1292, %v1311
        %v1314 = vunpack.c.l.s4 1983009808
        %v1315 = vunpack.c.0.s8 %v1314
        %v1316 = vperm.slane %v1310, %v1315
        %v1318 = vunpack.c.l.s4 1983009808
        %v1319 = vunpack.c.0.s8 %v1318
        %v1320 = vperm.slane %v1312, %v1319
        %v1321 = vrot.slane %v1316, 4
        %v1322 = vsel %vm1049, %v1321, %v1304
        %v1323 = vrot.slane %v1304, 4
        %v1324 = vsel %vm1049, %v1316, %v1323
        %v1326 = vunpack.c.l.s4 1934713408
        %v1327 = vunpack.c.0.s8 %v1326
        %v1328 = vperm.slane %v1322, %v1327
        %v1330 = vunpack.c.l.s4 1934713408
        %v1331 = vunpack.c.0.s8 %v1330
        %v1332 = vperm.slane %v1324, %v1331
        %v1333 = vrot.slane %v1320, 4
        %v1334 = vsel %vm1049, %v1333, %v1308
        %v1335 = vrot.slane %v1308, 4
        %v1336 = vsel %vm1049, %v1320, %v1335
        %v1338 = vunpack.c.l.s4 1934713408
        %v1339 = vunpack.c.0.s8 %v1338
        %v1340 = vperm.slane %v1334, %v1339
        %v1342 = vunpack.c.l.s4 1934713408
        %v1343 = vunpack.c.0.s8 %v1342
        %v1344 = vperm.slane %v1336, %v1343
        %v1345 = vrot.slane %v1328, 4
        %v1346 = vsel %vm1049, 0.0, %v1345
        %v1347 = vrot.slane %v1332, 4
        %v1348 = vsel %vm1049, 0.0, %v1347
        %v1349 = vrot.slane %v1340, 4
        %v1350 = vsel %vm1049, 0.0, %v1349
        %v1351 = vrot.slane %v1344, 4
        %v1352 = vsel %vm1049, 0.0, %v1351
        %v1353 = vrot.slane %v1288, 4
        %v1354 = vsel %vm1049, %v1353, %v1026
        %v1355 = vrot.slane %v1026, 4
        %v1356 = vsel %vm1049, %v1288, %v1355
        %v1358 = vunpack.c.l.s4 1983009808
        %v1359 = vunpack.c.0.s8 %v1358
        %v1360 = vperm.slane %v1354, %v1359
        %v1362 = vunpack.c.l.s4 1983009808
        %v1363 = vunpack.c.0.s8 %v1362
        %v1364 = vperm.slane %v1356, %v1363
        %v1365 = vrot.slane %v1294, 4
        %v1366 = vsel %vm1049, %v1365, %v1282
        %v1367 = vrot.slane %v1282, 4
        %v1368 = vsel %vm1049, %v1294, %v1367
        %v1370 = vunpack.c.l.s4 1983009808
        %v1371 = vunpack.c.0.s8 %v1370
        %v1372 = vperm.slane %v1366, %v1371
        %v1374 = vunpack.c.l.s4 1983009808
        %v1375 = vunpack.c.0.s8 %v1374
        %v1376 = vperm.slane %v1368, %v1375
        %v1377 = vrot.slane %v1372, 4
        %v1378 = vsel %vm1049, %v1377, %v1360
        %v1379 = vrot.slane %v1360, 4
        %v1380 = vsel %vm1049, %v1372, %v1379
        %v1382 = vunpack.c.l.s4 1934713408
        %v1383 = vunpack.c.0.s8 %v1382
        %v1384 = vperm.slane %v1378, %v1383
        %v1386 = vunpack.c.l.s4 1934713408
        %v1387 = vunpack.c.0.s8 %v1386
        %v1388 = vperm.slane %v1380, %v1387
        %v1389 = vrot.slane %v1376, 4
        %v1390 = vsel %vm1049, %v1389, %v1364
        %v1391 = vrot.slane %v1364, 4
        %v1392 = vsel %vm1049, %v1376, %v1391
        %v1394 = vunpack.c.l.s4 1934713408
        %v1395 = vunpack.c.0.s8 %v1394
        %v1396 = vperm.slane %v1390, %v1395
        %v1398 = vunpack.c.l.s4 1934713408
        %v1399 = vunpack.c.0.s8 %v1398
        %v1400 = vperm.slane %v1392, %v1399
        %v1401 = vrot.slane %v1384, 4
        %v1402 = vsel %vm1049, 0.0, %v1401
        %v1403 = vrot.slane %v1388, 4
        %v1404 = vsel %vm1049, 0.0, %v1403
        %v1405 = vrot.slane %v1396, 4
        %v1406 = vsel %vm1049, 0.0, %v1405
        %v1407 = vrot.slane %v1400, 4
        %v1408 = vsel %vm1049, 0.0, %v1407
        %v1409 = vsel %vm1049, %v1347, %v1328
        %v1411 = vunpack.c.l.s4 1983009808
        %v1412 = vunpack.c.0.s8 %v1411
        %v1413 = vperm.slane %v1409, %v1412
        %v1414 = vrot.slane %v1348, 4
        %v1415 = vsel %vm1049, %v1414, %v1346
        %v1417 = vunpack.c.l.s4 1983009808
        %v1418 = vunpack.c.0.s8 %v1417
        %v1419 = vperm.slane %v1415, %v1418
        %v1420 = vsel %vm1049, %v1351, %v1340
        %v1422 = vunpack.c.l.s4 1983009808
        %v1423 = vunpack.c.0.s8 %v1422
        %v1424 = vperm.slane %v1420, %v1423
        %v1425 = vrot.slane %v1352, 4
        %v1426 = vsel %vm1049, %v1425, %v1350
        %v1428 = vunpack.c.l.s4 1983009808
        %v1429 = vunpack.c.0.s8 %v1428
        %v1430 = vperm.slane %v1426, %v1429
        %v1431 = vrot.slane %v1419, 4
        %v1432 = vsel %vm1049, %v1431, %v1413
        %v1433 = vrot.slane %v1413, 4
        %v1434 = vsel %vm1049, %v1419, %v1433
        %v1436 = vunpack.c.l.s4 1934713408
        %v1437 = vunpack.c.0.s8 %v1436
        %v1438 = vperm.slane %v1432, %v1437
        %v1440 = vunpack.c.l.s4 1934713408
        %v1441 = vunpack.c.0.s8 %v1440
        %v1442 = vperm.slane %v1434, %v1441
        %v1443 = vrot.slane %v1430, 4
        %v1444 = vsel %vm1049, %v1443, %v1424
        %v1445 = vrot.slane %v1424, 4
        %v1446 = vsel %vm1049, %v1430, %v1445
        %v1448 = vunpack.c.l.s4 1934713408
        %v1449 = vunpack.c.0.s8 %v1448
        %v1450 = vperm.slane %v1444, %v1449
        %v1452 = vunpack.c.l.s4 1934713408
        %v1453 = vunpack.c.0.s8 %v1452
        %v1454 = vperm.slane %v1446, %v1453
        %v1455 = vrot.slane %v1450, 4
        %v1456 = vsel %vm1049, %v1455, %v1438
        %v1457 = vrot.slane %v1438, 4
        %v1458 = vsel %vm1049, %v1450, %v1457
        %v1459 = vrot.slane %v1454, 4
        %v1460 = vsel %vm1049, %v1459, %v1442
        %v1461 = vrot.slane %v1442, 4
        %v1462 = vsel %vm1049, %v1454, %v1461
        %v1463 = vsel %vm1049, %v1403, %v1384
        %v1465 = vunpack.c.l.s4 1983009808
        %v1466 = vunpack.c.0.s8 %v1465
        %v1467 = vperm.slane %v1463, %v1466
        %v1468 = vrot.slane %v1404, 4
        %v1469 = vsel %vm1049, %v1468, %v1402
        %v1471 = vunpack.c.l.s4 1983009808
        %v1472 = vunpack.c.0.s8 %v1471
        %v1473 = vperm.slane %v1469, %v1472
        %v1474 = vsel %vm1049, %v1407, %v1396
        %v1476 = vunpack.c.l.s4 1983009808
        %v1477 = vunpack.c.0.s8 %v1476
        %v1478 = vperm.slane %v1474, %v1477
        %v1479 = vrot.slane %v1408, 4
        %v1480 = vsel %vm1049, %v1479, %v1406
        %v1482 = vunpack.c.l.s4 1983009808
        %v1483 = vunpack.c.0.s8 %v1482
        %v1484 = vperm.slane %v1480, %v1483
        %v1485 = vrot.slane %v1473, 4
        %v1486 = vsel %vm1049, %v1485, %v1467
        %v1487 = vrot.slane %v1467, 4
        %v1488 = vsel %vm1049, %v1473, %v1487
        %v1490 = vunpack.c.l.s4 1934713408
        %v1491 = vunpack.c.0.s8 %v1490
        %v1492 = vperm.slane %v1486, %v1491
        %v1494 = vunpack.c.l.s4 1934713408
        %v1495 = vunpack.c.0.s8 %v1494
        %v1496 = vperm.slane %v1488, %v1495
        %v1497 = vrot.slane %v1484, 4
        %v1498 = vsel %vm1049, %v1497, %v1478
        %v1499 = vrot.slane %v1478, 4
        %v1500 = vsel %vm1049, %v1484, %v1499
        %v1502 = vunpack.c.l.s4 1934713408
        %v1503 = vunpack.c.0.s8 %v1502
        %v1504 = vperm.slane %v1498, %v1503
        %v1506 = vunpack.c.l.s4 1934713408
        %v1507 = vunpack.c.0.s8 %v1506
        %v1508 = vperm.slane %v1500, %v1507
        %v1509 = vrot.slane %v1504, 4
        %v1510 = vsel %vm1049, %v1509, %v1492
        %v1511 = vrot.slane %v1492, 4
        %v1512 = vsel %vm1049, %v1504, %v1511
        %v1513 = vrot.slane %v1508, 4
        %v1514 = vsel %vm1049, %v1513, %v1496
        %v1515 = vrot.slane %v1496, 4
        %v1516 = vsel %vm1049, %v1508, %v1515
        %v1517 = vpack.c.bf16 %v1456, %v1456
        %v1518 = vpack.c.bf16 %v1510, %v1510
        %v1519 = vpack.c.bf16 %v1458, %v1458
        %v1520 = vpack.c.bf16 %v1512, %v1512
        %v1521 = vpack.c.bf16 %v1460, %v1460
        %v1522 = vpack.c.bf16 %v1514, %v1514
        %v1523 = vpack.c.bf16 %v1462, %v1462
        %v1524 = vpack.c.bf16 %v1516, %v1516
        %v1525 = vld [vmem:[#allocation2] sm:$0xf]
        %v1526 = vld [vmem:[#allocation2 + $0x4] sm:$0xf]
        %v1527 = vld [vmem:[#allocation2 + $0x8] sm:$0xf]
        %v1528 = vld [vmem:[#allocation2 + $0xc] sm:$0xf]
        %v1531 = vunpack.c.l.b16 %v1269
        %v1532 = vunpack.c.l.b16 %v1270
        %v1533 = vpack.c.b16 %v1532, %v1531
        %vm1534 = vcmask 64512
        %v1536 = vsel %vm1534, %v1525, 0
        %v1539 = vsel %vm1534, %v1533, 0
        %1541 = vmatpush.bf16.xpose.msra.mxu0 0
        %1542 = vmatpush.bf16.xpose.msra.mxu0 0
        %1543 = vmatpush.bf16.xpose.msra.mxu0 0
        %1544 = vmatpush.bf16.xpose.msra.mxu0 0
        %1545 = vmatpush.bf16.xpose.msra.mxu0 0
        %1546 = vmatpush.bf16.xpose.msra.mxu0 0
        %1547 = vmatpush.bf16.xpose.msra.mxu0 0
        %1548 = vmatpush.bf16.xpose.msra.mxu0 %v1539
        %1549 = vmatmul.bf16.gmra.mxu0 %v1536
        %v1550 = vpop.f32.mrf.mxu0
        %v1551 = vadd.f32 0.0, %v1550
        %v1552 = vpop.f32.mrf.mxu0
        %1553 = vdwg.mxu0
        %v1556 = vunpack.c.l.b16 %v1271
        %v1557 = vunpack.c.l.b16 %v1272
        %v1558 = vpack.c.b16 %v1557, %v1556
        %v1560 = vsel %vm1534, %v1526, 0
        %v1563 = vsel %vm1534, %v1558, 0
        %1565 = vmatpush.bf16.xpose.msra.mxu0 0
        %1566 = vmatpush.bf16.xpose.msra.mxu0 0
        %1567 = vmatpush.bf16.xpose.msra.mxu0 0
        %1568 = vmatpush.bf16.xpose.msra.mxu0 0
        %1569 = vmatpush.bf16.xpose.msra.mxu0 0
        %1570 = vmatpush.bf16.xpose.msra.mxu0 0
        %1571 = vmatpush.bf16.xpose.msra.mxu0 0
        %1572 = vmatpush.bf16.xpose.msra.mxu0 %v1563
        %1573 = vmatmul.bf16.gmra.mxu0 %v1560
        %v1574 = vpop.f32.mrf.mxu0
        %v1575 = vadd.f32 0.0, %v1574
        %v1576 = vpop.f32.mrf.mxu0
        %1577 = vdwg.mxu0
        %v1580 = vunpack.c.l.b16 %v1273
        %v1581 = vunpack.c.l.b16 %v1274
        %v1582 = vpack.c.b16 %v1581, %v1580
        %v1584 = vsel %vm1534, %v1527, 0
        %v1587 = vsel %vm1534, %v1582, 0
        %1589 = vmatpush.bf16.xpose.msra.mxu0 0
        %1590 = vmatpush.bf16.xpose.msra.mxu0 0
        %1591 = vmatpush.bf16.xpose.msra.mxu0 0
        %1592 = vmatpush.bf16.xpose.msra.mxu0 0
        %1593 = vmatpush.bf16.xpose.msra.mxu0 0
        %1594 = vmatpush.bf16.xpose.msra.mxu0 0
        %1595 = vmatpush.bf16.xpose.msra.mxu0 0
        %1596 = vmatpush.bf16.xpose.msra.mxu0 %v1587
        %1597 = vmatmul.bf16.gmra.mxu0 %v1584
        %v1598 = vpop.f32.mrf.mxu0
        %v1599 = vadd.f32 0.0, %v1598
        %v1600 = vpop.f32.mrf.mxu0
        %1601 = vdwg.mxu0
        %v1604 = vunpack.c.l.b16 %v1275
        %v1605 = vunpack.c.l.b16 %v1276
        %v1606 = vpack.c.b16 %v1605, %v1604
        %v1608 = vsel %vm1534, %v1528, 0
        %v1611 = vsel %vm1534, %v1606, 0
        %1613 = vmatpush.bf16.xpose.msra.mxu0 0
        %1614 = vmatpush.bf16.xpose.msra.mxu0 0
        %1615 = vmatpush.bf16.xpose.msra.mxu0 0
        %1616 = vmatpush.bf16.xpose.msra.mxu0 0
        %1617 = vmatpush.bf16.xpose.msra.mxu0 0
        %1618 = vmatpush.bf16.xpose.msra.mxu0 0
        %1619 = vmatpush.bf16.xpose.msra.mxu0 0
        %1620 = vmatpush.bf16.xpose.msra.mxu0 %v1611
        %1621 = vmatmul.bf16.gmra.mxu0 %v1608
        %v1622 = vpop.f32.mrf.mxu0
        %v1623 = vadd.f32 0.0, %v1622
        %v1624 = vpop.f32.mrf.mxu0
        %1625 = vdwg.mxu0
        %v1626 = vld [vmem:[#allocation3] sm:$0xff]
        %v1627 = vld [vmem:[#allocation3 + $0x8] sm:$0xff]
        %v1628 = vld [vmem:[#allocation3 + $0x10] sm:$0xff]
        %v1629 = vld [vmem:[#allocation3 + $0x18] sm:$0xff]
        %vm1630 = vcmask 130048
        %v1631 = vsel %vm1630, %v1551, -inf
        %1632 = vmax.xlane.f32.xlu0 %v1631
        %v1633 = vpop.xlane.xlu0 %1632
        %v1634 = vsel %vm1630, %v1575, -inf
        %1635 = vmax.xlane.f32.xlu0 %v1634
        %v1636 = vpop.xlane.xlu0 %1635
        %v1637 = vsel %vm1630, %v1599, -inf
        %1638 = vmax.xlane.f32.xlu0 %v1637
        %v1639 = vpop.xlane.xlu0 %1638
        %v1640 = vsel %vm1630, %v1623, -inf
        %1641 = vmax.xlane.f32.xlu0 %v1640
        %v1642 = vpop.xlane.xlu0 %1641
        %v1643 = vmax.f32 %v1626, %v1633
        %v1644 = vmax.f32 %v1627, %v1636
        %v1645 = vmax.f32 %v1628, %v1639
        %v1646 = vmax.f32 %v1629, %v1642
        %v1647 = vsub.f32 %v1626, %v1643
        %v1648 = vsub.f32 %v1627, %v1644
        %v1649 = vsub.f32 %v1628, %v1645
        %v1650 = vsub.f32 %v1629, %v1646
        %v1651 = vmul.f32 %v1647, 1.442695
        %v1652 = vpow.pop %v1651
        %v1653 = vmul.f32 %v1648, 1.442695
        %v1654 = vpow.pop %v1653
        %v1655 = vmul.f32 %v1649, 1.442695
        %v1656 = vpow.pop %v1655
        %v1657 = vmul.f32 %v1650, 1.442695
        %v1658 = vpow.pop %v1657
        %1660 = vset.pattern.permute.xlu0 0
        %1661 = vperm.xlu0 %1660, %v1643
        %v1662 = vpop.permute.xlu0 %1661
        %1665 = vset.pattern.permute.xlu0 0
        %1666 = vperm.xlu0 %1665, %v1644
        %v1667 = vpop.permute.xlu0 %1666
        %1670 = vset.pattern.permute.xlu0 0
        %1671 = vperm.xlu0 %1670, %v1645
        %v1672 = vpop.permute.xlu0 %1671
        %1675 = vset.pattern.permute.xlu0 0
        %1676 = vperm.xlu0 %1675, %v1646
        %v1677 = vpop.permute.xlu0 %1676
        %v1679 = vsub.f32 %v1551, %v1662
        %v1680 = vsub.f32 %v1575, %v1667
        %v1681 = vsub.f32 %v1599, %v1672
        %v1682 = vsub.f32 %v1623, %v1677
        %v1683 = vmul.f32 %v1679, 1.442695
        %v1684 = vpow.pop %v1683
        %v1685 = vmul.f32 %v1680, 1.442695
        %v1686 = vpow.pop %v1685
        %v1687 = vmul.f32 %v1681, 1.442695
        %v1688 = vpow.pop %v1687
        %v1689 = vmul.f32 %v1682, 1.442695
        %v1690 = vpow.pop %v1689
        %v1691 = vld [vmem:[#allocation4] sm:$0xff]
        %v1692 = vld [vmem:[#allocation4 + $0x8] sm:$0xff]
        %v1693 = vld [vmem:[#allocation4 + $0x10] sm:$0xff]
        %v1694 = vld [vmem:[#allocation4 + $0x18] sm:$0xff]
        %v1695 = vmul.f32 %v1652, %v1691
        %v1696 = vmul.f32 %v1654, %v1692
        %v1697 = vmul.f32 %v1656, %v1693
        %v1698 = vmul.f32 %v1658, %v1694
        %v1699 = vsel %vm1630, %v1684, 0.0
        %1700 = vadd.xlane.f32.xlu0 %v1699
        %v1701 = vpop.xlane.xlu0 %1700
        %v1702 = vsel %vm1630, %v1686, 0.0
        %1703 = vadd.xlane.f32.xlu0 %v1702
        %v1704 = vpop.xlane.xlu0 %1703
        %v1705 = vsel %vm1630, %v1688, 0.0
        %1706 = vadd.xlane.f32.xlu0 %v1705
        %v1707 = vpop.xlane.xlu0 %1706
        %v1708 = vsel %vm1630, %v1690, 0.0
        %1709 = vadd.xlane.f32.xlu0 %v1708
        %v1710 = vpop.xlane.xlu0 %1709
        %v1711 = vadd.f32 %v1695, %v1701
        %v1712 = vadd.f32 %v1696, %v1704
        %v1713 = vadd.f32 %v1697, %v1707
        %v1714 = vadd.f32 %v1698, %v1710
        %vm1715 = vcmask 7168
        %1716 = vst.msk [vmem:[#allocation4] sm:$0xff] %vm1715, %v1711
        %1717 = vst.msk [vmem:[#allocation4 + $0x8] sm:$0xff] %vm1715, %v1712
        %1718 = vst.msk [vmem:[#allocation4 + $0x10] sm:$0xff] %vm1715, %v1713
        %1719 = vst.msk [vmem:[#allocation4 + $0x18] sm:$0xff] %vm1715, %v1714
        %v1720 = vld [vmem:[#allocation5] sm:$0xff]
        %v1721 = vld [vmem:[#allocation5 + $0x8] sm:$0xff]
        %v1722 = vld [vmem:[#allocation5 + $0x10] sm:$0xff]
        %v1723 = vld [vmem:[#allocation5 + $0x18] sm:$0xff]
        %1725 = vset.pattern.permute.xlu0 0
        %1726 = vperm.xlu0 %1725, %v1652
        %v1727 = vpop.permute.xlu0 %1726
        %1730 = vset.pattern.permute.xlu0 0
        %1731 = vperm.xlu0 %1730, %v1654
        %v1732 = vpop.permute.xlu0 %1731
        %1735 = vset.pattern.permute.xlu0 0
        %1736 = vperm.xlu0 %1735, %v1656
        %v1737 = vpop.permute.xlu0 %1736
        %1740 = vset.pattern.permute.xlu0 0
        %1741 = vperm.xlu0 %1740, %v1658
        %v1742 = vpop.permute.xlu0 %1741
        %v1744 = vmul.f32 %v1727, %v1720
        %v1745 = vmul.f32 %v1732, %v1721
        %v1746 = vmul.f32 %v1737, %v1722
        %v1747 = vmul.f32 %v1742, %v1723
        %v1748 = vpack.c.bf16 %v1684, %v1684
        %v1749 = vpack.c.bf16 %v1686, %v1686
        %v1750 = vpack.c.bf16 %v1688, %v1688
        %v1751 = vpack.c.bf16 %v1690, %v1690
        %v1754 = vunpack.c.l.b16 %v1517
        %v1755 = vunpack.c.l.b16 %v1518
        %v1756 = vpack.c.b16 %v1755, %v1754
        %v1759 = vsel %vm1630, %v1748, 0
        %1761 = vmatpush.bf16.msra.mxu0 0
        %1762 = vmatpush.bf16.msra.mxu0 0
        %1763 = vmatpush.bf16.msra.mxu0 0
        %1764 = vmatpush.bf16.msra.mxu0 0
        %1765 = vmatpush.bf16.msra.mxu0 0
        %1766 = vmatpush.bf16.msra.mxu0 0
        %1767 = vmatpush.bf16.msra.mxu0 0
        %1768 = vmatpush.bf16.msra.mxu0 %v1756
        %1769 = vmatmul.bf16.gmra.mxu0 %v1759
        %v1770 = vpop.f32.mrf.mxu0
        %v1771 = vadd.f32 0.0, %v1770
        %v1772 = vpop.f32.mrf.mxu0
        %1773 = vdwg.mxu0
        %v1776 = vunpack.c.l.b16 %v1519
        %v1777 = vunpack.c.l.b16 %v1520
        %v1778 = vpack.c.b16 %v1777, %v1776
        %v1781 = vsel %vm1630, %v1749, 0
        %1783 = vmatpush.bf16.msra.mxu0 0
        %1784 = vmatpush.bf16.msra.mxu0 0
        %1785 = vmatpush.bf16.msra.mxu0 0
        %1786 = vmatpush.bf16.msra.mxu0 0
        %1787 = vmatpush.bf16.msra.mxu0 0
        %1788 = vmatpush.bf16.msra.mxu0 0
        %1789 = vmatpush.bf16.msra.mxu0 0
        %1790 = vmatpush.bf16.msra.mxu0 %v1778
        %1791 = vmatmul.bf16.gmra.mxu0 %v1781
        %v1792 = vpop.f32.mrf.mxu0
        %v1793 = vadd.f32 0.0, %v1792
        %v1794 = vpop.f32.mrf.mxu0
        %1795 = vdwg.mxu0
        %v1798 = vunpack.c.l.b16 %v1521
        %v1799 = vunpack.c.l.b16 %v1522
        %v1800 = vpack.c.b16 %v1799, %v1798
        %v1803 = vsel %vm1630, %v1750, 0
        %1805 = vmatpush.bf16.msra.mxu0 0
        %1806 = vmatpush.bf16.msra.mxu0 0
        %1807 = vmatpush.bf16.msra.mxu0 0
        %1808 = vmatpush.bf16.msra.mxu0 0
        %1809 = vmatpush.bf16.msra.mxu0 0
        %1810 = vmatpush.bf16.msra.mxu0 0
        %1811 = vmatpush.bf16.msra.mxu0 0
        %1812 = vmatpush.bf16.msra.mxu0 %v1800
        %1813 = vmatmul.bf16.gmra.mxu0 %v1803
        %v1814 = vpop.f32.mrf.mxu0
        %v1815 = vadd.f32 0.0, %v1814
        %v1816 = vpop.f32.mrf.mxu0
        %1817 = vdwg.mxu0
        %v1820 = vunpack.c.l.b16 %v1523
        %v1821 = vunpack.c.l.b16 %v1524
        %v1822 = vpack.c.b16 %v1821, %v1820
        %v1825 = vsel %vm1630, %v1751, 0
        %1827 = vmatpush.bf16.msra.mxu0 0
        %1828 = vmatpush.bf16.msra.mxu0 0
        %1829 = vmatpush.bf16.msra.mxu0 0
        %1830 = vmatpush.bf16.msra.mxu0 0
        %1831 = vmatpush.bf16.msra.mxu0 0
        %1832 = vmatpush.bf16.msra.mxu0 0
        %1833 = vmatpush.bf16.msra.mxu0 0
        %1834 = vmatpush.bf16.msra.mxu0 %v1822
        %1835 = vmatmul.bf16.gmra.mxu0 %v1825
        %v1836 = vpop.f32.mrf.mxu0
        %v1837 = vadd.f32 0.0, %v1836
        %v1838 = vpop.f32.mrf.mxu0
        %1839 = vdwg.mxu0
        %v1840 = vadd.f32 %v1744, %v1771
        %v1841 = vadd.f32 %v1745, %v1793
        %v1842 = vadd.f32 %v1746, %v1815
        %v1843 = vadd.f32 %v1747, %v1837
        %1844 = vst.msk [vmem:[#allocation5] sm:$0xff] %vm1534, %v1840
        %1845 = vst.msk [vmem:[#allocation5 + $0x8] sm:$0xff] %vm1534, %v1841
        %1846 = vst.msk [vmem:[#allocation5 + $0x10] sm:$0xff] %vm1534, %v1842
        %1847 = vst.msk [vmem:[#allocation5 + $0x18] sm:$0xff] %vm1534, %v1843
        %1848 = vst.msk [vmem:[#allocation3] sm:$0xff] %vm1715, %v1643
        %1849 = vst.msk [vmem:[#allocation3 + $0x8] sm:$0xff] %vm1715, %v1644
        %1850 = vst.msk [vmem:[#allocation3 + $0x10] sm:$0xff] %vm1715, %v1645
        %1851 = vst.msk [vmem:[#allocation3 + $0x18] sm:$0xff] %vm1715, %v1646
        // Predicated region
        $region121: #{petr_transformer_decoder.10} parent=75 // pred_check
          %p1852 = pneg %p755
        $region122: #{petr_transformer_decoder.10} parent=75 // pred_check_branch
          %1854 = sbr.rel (%p1852) target = $region124
        $region123: #{petr_transformer_decoder.10} parent=75 // pred_region
          %v1855 = vld [vmem:[#allocation4] sm:$0xff]
          %v1856 = vld [vmem:[#allocation4 + $0x8] sm:$0xff]
          %v1857 = vld [vmem:[#allocation4 + $0x10] sm:$0xff]
          %v1858 = vld [vmem:[#allocation4 + $0x18] sm:$0xff]
          %v1859 = vrcp.pop %v1855
          %v1860 = vrcp.pop %v1856
          %v1861 = vrcp.pop %v1857
          %v1862 = vrcp.pop %v1858
          %v1863 = vld [vmem:[#allocation5] sm:$0xff]
          %v1864 = vld [vmem:[#allocation5 + $0x8] sm:$0xff]
          %v1865 = vld [vmem:[#allocation5 + $0x10] sm:$0xff]
          %v1866 = vld [vmem:[#allocation5 + $0x18] sm:$0xff]
          %1868 = vset.pattern.permute.xlu0 0
          %1869 = vperm.xlu0 %1868, %v1859
          %v1870 = vpop.permute.xlu0 %1869
          %1873 = vset.pattern.permute.xlu0 0
          %1874 = vperm.xlu0 %1873, %v1860
          %v1875 = vpop.permute.xlu0 %1874
          %1878 = vset.pattern.permute.xlu0 0
          %1879 = vperm.xlu0 %1878, %v1861
          %v1880 = vpop.permute.xlu0 %1879
          %1883 = vset.pattern.permute.xlu0 0
          %1884 = vperm.xlu0 %1883, %v1862
          %v1885 = vpop.permute.xlu0 %1884
          %v1887 = vmul.f32 %v1863, %v1870
          %v1888 = vmul.f32 %v1864, %v1875
          %v1889 = vmul.f32 %v1865, %v1880
          %v1890 = vmul.f32 %v1866, %v1885
          %v1891 = vrot.slane %v1889, 4
          %v1892 = vsel %vm1049, %v1891, %v1887
          %v1893 = vrot.slane %v1887, 4
          %v1894 = vsel %vm1049, %v1889, %v1893
          %v1896 = vunpack.c.l.s4 1983009808
          %v1897 = vunpack.c.0.s8 %v1896
          %v1898 = vperm.slane %v1892, %v1897
          %v1900 = vunpack.c.l.s4 1983009808
          %v1901 = vunpack.c.0.s8 %v1900
          %v1902 = vperm.slane %v1894, %v1901
          %v1903 = vrot.slane %v1890, 4
          %v1904 = vsel %vm1049, %v1903, %v1888
          %v1905 = vrot.slane %v1888, 4
          %v1906 = vsel %vm1049, %v1890, %v1905
          %v1908 = vunpack.c.l.s4 1983009808
          %v1909 = vunpack.c.0.s8 %v1908
          %v1910 = vperm.slane %v1904, %v1909
          %v1912 = vunpack.c.l.s4 1983009808
          %v1913 = vunpack.c.0.s8 %v1912
          %v1914 = vperm.slane %v1906, %v1913
          %v1915 = vrot.slane %v1910, 4
          %v1916 = vsel %vm1049, %v1915, %v1898
          %v1917 = vrot.slane %v1898, 4
          %v1918 = vsel %vm1049, %v1910, %v1917
          %v1920 = vunpack.c.l.s4 1934713408
          %v1921 = vunpack.c.0.s8 %v1920
          %v1922 = vperm.slane %v1916, %v1921
          %v1924 = vunpack.c.l.s4 1934713408
          %v1925 = vunpack.c.0.s8 %v1924
          %v1926 = vperm.slane %v1918, %v1925
          %v1927 = vrot.slane %v1914, 4
          %v1928 = vsel %vm1049, %v1927, %v1902
          %v1929 = vrot.slane %v1902, 4
          %v1930 = vsel %vm1049, %v1914, %v1929
          %v1932 = vunpack.c.l.s4 1934713408
          %v1933 = vunpack.c.0.s8 %v1932
          %v1934 = vperm.slane %v1928, %v1933
          %v1936 = vunpack.c.l.s4 1934713408
          %v1937 = vunpack.c.0.s8 %v1936
          %v1938 = vperm.slane %v1930, %v1937
          %v1939 = vrot.slane %v1922, 4
          %v1940 = vsel %vm1049, 0.0, %v1939
          %v1941 = vrot.slane %v1926, 4
          %v1942 = vsel %vm1049, 0.0, %v1941
          %v1943 = vrot.slane %v1934, 4
          %v1944 = vsel %vm1049, 0.0, %v1943
          %v1945 = vrot.slane %v1938, 4
          %v1946 = vsel %vm1049, 0.0, %v1945
          %v1947 = vsel %vm1049, %v1941, %v1922
          %v1949 = vunpack.c.l.s4 1983009808
          %v1950 = vunpack.c.0.s8 %v1949
          %v1951 = vperm.slane %v1947, %v1950
          %v1952 = vrot.slane %v1942, 4
          %v1953 = vsel %vm1049, %v1952, %v1940
          %v1955 = vunpack.c.l.s4 1983009808
          %v1956 = vunpack.c.0.s8 %v1955
          %v1957 = vperm.slane %v1953, %v1956
          %v1958 = vsel %vm1049, %v1945, %v1934
          %v1960 = vunpack.c.l.s4 1983009808
          %v1961 = vunpack.c.0.s8 %v1960
          %v1962 = vperm.slane %v1958, %v1961
          %v1963 = vrot.slane %v1946, 4
          %v1964 = vsel %vm1049, %v1963, %v1944
          %v1966 = vunpack.c.l.s4 1983009808
          %v1967 = vunpack.c.0.s8 %v1966
          %v1968 = vperm.slane %v1964, %v1967
          %v1969 = vrot.slane %v1957, 4
          %v1970 = vsel %vm1049, %v1969, %v1951
          %v1971 = vrot.slane %v1951, 4
          %v1972 = vsel %vm1049, %v1957, %v1971
          %v1974 = vunpack.c.l.s4 1934713408
          %v1975 = vunpack.c.0.s8 %v1974
          %v1976 = vperm.slane %v1970, %v1975
          %v1978 = vunpack.c.l.s4 1934713408
          %v1979 = vunpack.c.0.s8 %v1978
          %v1980 = vperm.slane %v1972, %v1979
          %v1981 = vrot.slane %v1968, 4
          %v1982 = vsel %vm1049, %v1981, %v1962
          %v1983 = vrot.slane %v1962, 4
          %v1984 = vsel %vm1049, %v1968, %v1983
          %v1986 = vunpack.c.l.s4 1934713408
          %v1987 = vunpack.c.0.s8 %v1986
          %v1988 = vperm.slane %v1982, %v1987
          %v1990 = vunpack.c.l.s4 1934713408
          %v1991 = vunpack.c.0.s8 %v1990
          %v1992 = vperm.slane %v1984, %v1991
          %v1993 = vrot.slane %v1988, 4
          %v1994 = vsel %vm1049, %v1993, %v1976
          %v1995 = vrot.slane %v1976, 4
          %v1996 = vsel %vm1049, %v1988, %v1995
          %v1997 = vrot.slane %v1992, 4
          %v1998 = vsel %vm1049, %v1997, %v1980
          %v1999 = vrot.slane %v1980, 4
          %v2000 = vsel %vm1049, %v1992, %v1999
          %2002 = vrot.lane.b32.xlu0 %v1996, 8
          %v2003 = vpop.permute.xlu0 %2002
          %2006 = vrot.lane.b32.xlu0 %v1998, 16
          %v2007 = vpop.permute.xlu0 %2006
          %2010 = vrot.lane.b32.xlu0 %v2000, 24
          %v2011 = vpop.permute.xlu0 %2010
          %v2013 = vsel %vm1534, %v1994, %v2003
          %v2014 = vsel %vm1630, %v2013, %v2007
          %vm2015 = vcmask 195584
          %v2016 = vsel %vm2015, %v2014, %v2011
          %v2017 = vpack.c.bf16 %v2016, %v2016
          %v2018 = vld [vmem:[#allocation16] sm:$0xf]
          %v2019 = vld [vmem:[#allocation16 + $0x4] sm:$0xf]
          %v2020 = vld [vmem:[#allocation16 + $0x8] sm:$0xf]
          %v2021 = vld [vmem:[#allocation16 + $0xc] sm:$0xf]
          %v2022 = vld [vmem:[#allocation17] sm:$0x1]
          %v2024 = vperm.slane %v2022, 0
          %v2030 = vunpack.c.l.b16 %v2018
          %v2031 = vunpack.c.l.b16 %v2019
          %v2032 = vunpack.c.l.b16 %v2020
          %v2033 = vunpack.c.l.b16 %v2021
          %v2034 = vpack.c.b16 %v2031, %v2030
          %v2035 = vpack.c.b16 %v2033, %v2032
          %v2039 = vsel %vm972, %v2017, 0
          %2041 = vmatpush.bf16.msra.mxu0 0
          %2042 = vmatpush.bf16.msra.mxu0 0
          %2043 = vmatpush.bf16.msra.mxu0 0
          %2044 = vmatpush.bf16.msra.mxu0 0
          %2045 = vmatpush.bf16.msra.mxu0 0
          %2046 = vmatpush.bf16.msra.mxu0 0
          %2047 = vmatpush.bf16.msra.mxu0 %v2035
          %2048 = vmatpush.bf16.msra.mxu0 %v2034
          %2049 = vmatmul.bf16.gmra.mxu0 %v2039
          %v2050 = vpop.f32.mrf.mxu0
          %v2051 = vadd.f32 %v2024, %v2050
          %v2052 = vpop.f32.mrf.mxu0
          %2053 = vdwg.mxu0
          %v2054 = vld [vmem:[%s726] sm:$0xff]
          %v2055 = vadd.f32 %v2051, %v2054
          %v2056 = vsel %vm972, %v2055, 0.0
          %2057 = vadd.xlane.f32.xlu0 %v2056
          %v2058 = vpop.xlane.xlu0 %2057
          %v2059 = vrcp.pop 32.0
          %v2060 = vmul.f32 32.0, %v2059
          %v2061 = vsub.f32 1.0, %v2060
          %v2062 = vmul.f32 %v2059, %v2061
          %v2063 = vadd.f32 %v2059, %v2062
          %vm2064 = vweird.f32 %v2059
          %v2065 = vsel %vm2064, %v2059, %v2063
          %v2066 = vmul.f32 %v2058, %v2065
          %v2067 = vsub.f32 %v2055, %v2066
          %v2068 = vmul.f32 %v2067, %v2067
          %v2069 = vsel %vm972, %v2068, 0.0
          %2070 = vadd.xlane.f32.xlu0 %v2069
          %v2071 = vpop.xlane.xlu0 %2070
          %v2072 = vmul.f32 %v2071, %v2065
          %v2073 = vadd.f32 %v2072, 1e-05
          %v2074 = vrsqrt.pop %v2073
          %v2075 = vmul.f32 %v2074, %v2073
          %v2076 = vmul.f32 %v2075, %v2074
          %v2077 = vmul.f32 0.5, %v2076
          %v2078 = vsub.f32 1.5, %v2077
          %v2079 = vmul.f32 %v2074, %v2078
          %vm2080 = vweird.f32 %v2073
          %vm2081 = vweird.f32 %v2074
          %vm2082 = vmor %vm2080, %vm2081
          %v2083 = vsel %vm2082, %v2074, %v2079
          %v2084 = vmul.f32 %v2067, %v2083
          %v2085 = vld [vmem:[#allocation19] sm:$0x1]
          %v2087 = vperm.slane %v2085, 0
          %v2089 = vmul.f32 %v2084, %v2087
          %v2090 = vld [vmem:[#allocation20] sm:$0x1]
          %v2092 = vperm.slane %v2090, 0
          %v2094 = vadd.f32 %v2089, %v2092
          %2095 = vst.msk [vmem:[%s753] sm:$0xff] %vm972, %v2094
        $region124: #{petr_transformer_decoder.10} parent=75 // pred_fallthru
          _
        %p2096 = scmp.lt.s32.totalorder %s38, 1
        %s2097 = scalar_select %p2096, %s38, 1
        %p2098 = scmp.lt.s32.totalorder %s39, 0
        %s2099 = scalar_select %p2098, %s39, 0
        %s2100 = sadd.s32 %s2099, %s2097
        %s2101 = smul.addr %s2100, 8
        %s2102 = scalar_lea.vmem %s14, %s2101
        // Predicated region
        $region125: #{petr_transformer_decoder.10} parent=75 // pred_check
          %p2103 = pneg %p394
        $region126: #{petr_transformer_decoder.10} parent=75 // pred_check_branch
          %2105 = sbr.rel (%p2103) target = $region128
        $region127: #{petr_transformer_decoder.10} parent=75 // pred_region
          _
        $region128: #{petr_transformer_decoder.10} parent=75 // pred_fallthru
          _
      $region76: #{petr_transformer_decoder.10} parent=5 // pred_fallthru
        _
      %p2106 = scmp.le.s32.totalorder 2, %s28
      // Predicated region
      $region129: #{petr_transformer_decoder.10} parent=5 // pred_check
        %p2107 = pneg %p2106
      $region130: #{petr_transformer_decoder.10} parent=5 // pred_check_branch
        %2109 = sbr.rel (%p2107) target = $region132
      $region131: #{petr_transformer_decoder.10} parent=5 // pred_region
        %s2110 = ssub.s32 %s28, 2
        // Predicated region
        $region133: #{petr_transformer_decoder.10} parent=131 // pred_check
          %p2111 = pneg %p400
        $region134: #{petr_transformer_decoder.10} parent=131 // pred_check_branch
          %2113 = sbr.rel (%p2111) target = $region136
        $region135: #{petr_transformer_decoder.10} parent=131 // pred_region
          %p2114 = scmp.lt.s32.totalorder %s41, 1
          %s2115 = scalar_select %p2114, %s41, 1
          %p2116 = scmp.lt.s32.totalorder %s42, 0
          %s2117 = scalar_select %p2116, %s42, 0
          %s2118 = sadd.s32 %s2117, %s2115
          %s2119 = smul.addr %s2118, 8
          %s2120 = scalar_lea.vmem %s14, %s2119
        $region136: #{petr_transformer_decoder.10} parent=131 // pred_fallthru
          _
      $region132: #{petr_transformer_decoder.10} parent=5 // pred_fallthru
        _
    $region6: #{petr_transformer_decoder.10} parent=1 // loop_footer
      %s32 = sadd.s32 1, %s28
    $region7: #{petr_transformer_decoder.10} parent=1 // loop_footer_branch
      %27 = sbr.rel target = $region3
    $region8: #{petr_transformer_decoder.10} parent=1 // loop_exit
      _
    %2121 = vsyncpa [#allocation7], 1
    %s2122 = scalar_lea.sflag [#allocation7], 1
    %2123 = vsyncpa %s2122, 1
    %2124 = vsyncpa [#allocation9], 1
    %2125 = vsyncpa [#allocation12], 1
    %2126 = vsyncpa [#allocation15], 1
    %2127 = vsyncpa [#allocation18], 1
    %2128 = vsyncpa [#allocation21], 1

// kernel: petr_transformer_decoder.11
$region0: #{petr_transformer_decoder.11}
  #allocation0 [shape = 'u32[]', space=smem, size = 0x4, offset = 0x4, fixed_abs, tag = 'smem constant byte address 0x4 - core index']
  #allocation1 [shape = 'u32[72,128]{1,0:T(1,128)}', space=vmem, size = 0x9000, scoped, tag = 'internal scratch']
  %s0 = inlined_call_operand.vmem [shape: f32[16,32], index: 0, kind: input, shape index: {}]
  %s1 = inlined_call_operand.vmem [shape: bf16[32,64], index: 1, kind: input, shape index: {}]
  %s2 = inlined_call_operand.vmem [shape: f32[1,64], index: 2, kind: input, shape index: {}]
  %s3 = inlined_call_operand.vmem [shape: bf16[64,32], index: 3, kind: input, shape index: {}]
  %s4 = inlined_call_operand.vmem [shape: f32[1,32], index: 4, kind: input, shape index: {}]
  %s5 = inlined_call_operand.vmem [shape: f32[1,32], index: 5, kind: input, shape index: {}]
  %s6 = inlined_call_operand.vmem [shape: f32[1,32], index: 6, kind: input, shape index: {}]
  %s7 = inlined_call_operand.vmem [shape: f32[16,32], index: 7, kind: output, shape index: {}]
  %s8 = sld [smem:[#allocation0]]
  $region38: #{petr_transformer_decoder.11} parent=0
    _
  %s10 = ssub.s32 1, %s8
  %s11 = scalar_select 0, %s10, %s8
  // Predicated region
  $region2: #{petr_transformer_decoder.11} parent=0 // pred_check
    _
  $region3: #{petr_transformer_decoder.11} parent=0 // pred_check_branch
    %13 = sbr.rel (0) target = $region5
  $region4: #{petr_transformer_decoder.11} parent=0 // pred_region
    _
  $region5: #{petr_transformer_decoder.11} parent=0 // pred_fallthru
    _
  // Predicated region
  $region6: #{petr_transformer_decoder.11} parent=0 // pred_check
    _
  $region7: #{petr_transformer_decoder.11} parent=0 // pred_check_branch
    %15 = sbr.rel (0) target = $region9
  $region8: #{petr_transformer_decoder.11} parent=0 // pred_region
    _
  $region9: #{petr_transformer_decoder.11} parent=0 // pred_fallthru
    _
  // Predicated region
  $region10: #{petr_transformer_decoder.11} parent=0 // pred_check
    _
  $region11: #{petr_transformer_decoder.11} parent=0 // pred_check_branch
    %17 = sbr.rel (0) target = $region13
  $region12: #{petr_transformer_decoder.11} parent=0 // pred_region
    _
  $region13: #{petr_transformer_decoder.11} parent=0 // pred_fallthru
    _
  // Predicated region
  $region14: #{petr_transformer_decoder.11} parent=0 // pred_check
    _
  $region15: #{petr_transformer_decoder.11} parent=0 // pred_check_branch
    %19 = sbr.rel (0) target = $region17
  $region16: #{petr_transformer_decoder.11} parent=0 // pred_region
    _
  $region17: #{petr_transformer_decoder.11} parent=0 // pred_fallthru
    _
  // Predicated region
  $region18: #{petr_transformer_decoder.11} parent=0 // pred_check
    _
  $region19: #{petr_transformer_decoder.11} parent=0 // pred_check_branch
    %21 = sbr.rel (0) target = $region21
  $region20: #{petr_transformer_decoder.11} parent=0 // pred_region
    _
  $region21: #{petr_transformer_decoder.11} parent=0 // pred_fallthru
    _
  // Predicated region
  $region22: #{petr_transformer_decoder.11} parent=0 // pred_check
    _
  $region23: #{petr_transformer_decoder.11} parent=0 // pred_check_branch
    %23 = sbr.rel (0) target = $region25
  $region24: #{petr_transformer_decoder.11} parent=0 // pred_region
    _
  $region25: #{petr_transformer_decoder.11} parent=0 // pred_fallthru
    _
  // Predicated region
  $region26: #{petr_transformer_decoder.11} parent=0 // pred_check
    _
  $region27: #{petr_transformer_decoder.11} parent=0 // pred_check_branch
    %25 = sbr.rel (0) target = $region29
  $region28: #{petr_transformer_decoder.11} parent=0 // pred_region
    _
  $region29: #{petr_transformer_decoder.11} parent=0 // pred_fallthru
    _
  %v27 = vld [vmem:[%s0] sm:$0xff]
  %v28 = vld [vmem:[%s0 + $0x8] sm:$0xff]
  %v29 = vpack.c.bf16 %v28, %v27
  %v30 = vld [vmem:[%s1] sm:$0xf]
  %v31 = vld [vmem:[%s1 + $0x4] sm:$0xf]
  %v32 = vld [vmem:[%s1 + $0x8] sm:$0xf]
  %v33 = vld [vmem:[%s1 + $0xc] sm:$0xf]
  %v34 = vld [vmem:[%s2] sm:$0x1]
  %v36 = vperm.slane %v34, 0
  %v42 = vunpack.c.l.b16 %v30
  %v43 = vunpack.c.l.b16 %v31
  %v44 = vunpack.c.l.b16 %v32
  %v45 = vunpack.c.l.b16 %v33
  %v46 = vpack.c.b16 %v43, %v42
  %v47 = vpack.c.b16 %v45, %v44
  %vm50 = vcmask 261120
  %v52 = vsel %vm50, %v29, 0
  %54 = vmatpush.bf16.msra.mxu0 0
  %55 = vmatpush.bf16.msra.mxu0 0
  %56 = vmatpush.bf16.msra.mxu0 0
  %57 = vmatpush.bf16.msra.mxu0 0
  %58 = vmatpush.bf16.msra.mxu0 0
  %59 = vmatpush.bf16.msra.mxu0 0
  %60 = vmatpush.bf16.msra.mxu0 %v47
  %61 = vmatpush.bf16.msra.mxu0 %v46
  %62 = vmatmul.bf16.gmra.mxu0 %v52
  %v63 = vpop.f32.mrf.mxu0
  %v64 = vadd.f32 %v36, %v63
  %v65 = vpop.f32.mrf.mxu0
  %v66 = vadd.f32 %v36, %v65
  %67 = vdwg.mxu0
  %v68 = vmax.f32 %v64, 0.0
  %v69 = vmax.f32 %v66, 0.0
  %v70 = vpack.c.bf16 %v69, %v68
  %v71 = vld [vmem:[%s3] sm:$0xf]
  %v72 = vld [vmem:[%s3 + $0x4] sm:$0xf]
  %v73 = vld [vmem:[%s3 + $0x8] sm:$0xf]
  %v74 = vld [vmem:[%s3 + $0xc] sm:$0xf]
  %v75 = vld [vmem:[%s3 + $0x10] sm:$0xf]
  %v76 = vld [vmem:[%s3 + $0x14] sm:$0xf]
  %v77 = vld [vmem:[%s3 + $0x18] sm:$0xf]
  %v78 = vld [vmem:[%s3 + $0x1c] sm:$0xf]
  %v79 = vld [vmem:[%s4] sm:$0x1]
  %v81 = vperm.slane %v79, 0
  %v91 = vunpack.c.l.b16 %v71
  %v92 = vunpack.c.l.b16 %v72
  %v93 = vunpack.c.l.b16 %v73
  %v94 = vunpack.c.l.b16 %v74
  %v95 = vunpack.c.l.b16 %v75
  %v96 = vunpack.c.l.b16 %v76
  %v97 = vunpack.c.l.b16 %v77
  %v98 = vunpack.c.l.b16 %v78
  %v99 = vpack.c.b16 %v92, %v91
  %v100 = vpack.c.b16 %v94, %v93
  %v101 = vpack.c.b16 %v96, %v95
  %v102 = vpack.c.b16 %v98, %v97
  %vm107 = vcmask 523264
  %v109 = vsel %vm107, %v70, 0
  %111 = vmatpush.bf16.msra.mxu0 0
  %112 = vmatpush.bf16.msra.mxu0 0
  %113 = vmatpush.bf16.msra.mxu0 0
  %114 = vmatpush.bf16.msra.mxu0 0
  %115 = vmatpush.bf16.msra.mxu0 %v102
  %116 = vmatpush.bf16.msra.mxu0 %v101
  %117 = vmatpush.bf16.msra.mxu0 %v100
  %118 = vmatpush.bf16.msra.mxu0 %v99
  %119 = vmatmul.bf16.gmra.mxu0 %v109
  %v120 = vpop.f32.mrf.mxu0
  %v121 = vadd.f32 %v81, %v120
  %v122 = vpop.f32.mrf.mxu0
  %v123 = vadd.f32 %v81, %v122
  %124 = vdwg.mxu0
  %v125 = vadd.f32 %v121, %v27
  %v126 = vadd.f32 %v123, %v28
  %v127 = vsel %vm50, %v125, 0.0
  %128 = vadd.xlane.f32.xlu0 %v127
  %v129 = vpop.xlane.xlu0 %128
  %v130 = vsel %vm50, %v126, 0.0
  %131 = vadd.xlane.f32.xlu0 %v130
  %v132 = vpop.xlane.xlu0 %131
  %v133 = vrcp.pop 32.0
  %v134 = vmul.f32 32.0, %v133
  %v135 = vsub.f32 1.0, %v134
  %v136 = vmul.f32 %v133, %v135
  %v137 = vadd.f32 %v133, %v136
  %vm138 = vweird.f32 %v133
  %v139 = vsel %vm138, %v133, %v137
  %v140 = vmul.f32 %v129, %v139
  %v141 = vmul.f32 %v132, %v139
  %v142 = vsub.f32 %v125, %v140
  %v143 = vsub.f32 %v126, %v141
  %v144 = vmul.f32 %v142, %v142
  %v145 = vmul.f32 %v143, %v143
  %v146 = vsel %vm50, %v144, 0.0
  %147 = vadd.xlane.f32.xlu0 %v146
  %v148 = vpop.xlane.xlu0 %147
  %v149 = vsel %vm50, %v145, 0.0
  %150 = vadd.xlane.f32.xlu0 %v149
  %v151 = vpop.xlane.xlu0 %150
  %v152 = vmul.f32 %v148, %v139
  %v153 = vmul.f32 %v151, %v139
  %v154 = vadd.f32 %v152, 1e-05
  %v155 = vadd.f32 %v153, 1e-05
  %v156 = vrsqrt.pop %v154
  %v157 = vmul.f32 %v156, %v154
  %v158 = vmul.f32 %v157, %v156
  %v159 = vmul.f32 0.5, %v158
  %v160 = vsub.f32 1.5, %v159
  %v161 = vmul.f32 %v156, %v160
  %vm162 = vweird.f32 %v154
  %vm163 = vweird.f32 %v156
  %vm164 = vmor %vm162, %vm163
  %v165 = vsel %vm164, %v156, %v161
  %v166 = vrsqrt.pop %v155
  %v167 = vmul.f32 %v166, %v155
  %v168 = vmul.f32 %v167, %v166
  %v169 = vmul.f32 0.5, %v168
  %v170 = vsub.f32 1.5, %v169
  %v171 = vmul.f32 %v166, %v170
  %vm172 = vweird.f32 %v155
  %vm173 = vweird.f32 %v166
  %vm174 = vmor %vm172, %vm173
  %v175 = vsel %vm174, %v166, %v171
  %v176 = vmul.f32 %v142, %v165
  %v177 = vmul.f32 %v143, %v175
  %v178 = vld [vmem:[%s5] sm:$0x1]
  %v180 = vperm.slane %v178, 0
  %v182 = vmul.f32 %v176, %v180
  %v183 = vmul.f32 %v177, %v180
  %v184 = vld [vmem:[%s6] sm:$0x1]
  %v186 = vperm.slane %v184, 0
  %v188 = vadd.f32 %v182, %v186
  %v189 = vadd.f32 %v183, %v186
  %190 = vst.msk [vmem:[%s7] sm:$0xff] %vm50, %v188
  %191 = vst.msk [vmem:[%s7 + $0x8] sm:$0xff] %vm50, %v189
  // Predicated region
  $region30: #{petr_transformer_decoder.11} parent=0 // pred_check
    _
  $region31: #{petr_transformer_decoder.11} parent=0 // pred_check_branch
    %193 = sbr.rel (0) target = $region33
  $region32: #{petr_transformer_decoder.11} parent=0 // pred_region
    _
  $region33: #{petr_transformer_decoder.11} parent=0 // pred_fallthru
    _
  // Predicated region
  $region34: #{petr_transformer_decoder.11} parent=0 // pred_check
    _
  $region35: #{petr_transformer_decoder.11} parent=0 // pred_check_branch
    %195 = sbr.rel (0) target = $region37
  $region36: #{petr_transformer_decoder.11} parent=0 // pred_region
    _
  $region37: #{petr_transformer_decoder.11} parent=0 // pred_fallthru
    _

</llo_original>
